<compile_context>
chip_gen: v7x
topology: tpu7x:2x2x1
jax: 0.10.0
libtpu: 0.0.40
codegen_flags: <defaults>
</compile_context>

<pallas_src>
import functools

import jax
import jax.numpy as jnp
from jax import lax
from jax.experimental import pallas as pl
from jax.experimental.pallas import tpu as pltpu

EPS = 1e-5    # PyTorch InstanceNorm2d default (affine=False, biased variance)
LANE = 128    # TPU lane width


def _round_up(x, m):
    return (x + m - 1) // m * m


def residual_block_kernel(x_ref, w1_ref, w2_ref, out_ref, pad_ref,
                          *, H, W, C, compute_dtype):
    """One batch element per grid step.

    x_ref   : (1, H, W, C)     input dtype
    w?_ref  : (3, 3, C, C)     compute_dtype, HWIO
    out_ref : (1, H, W, C)     input dtype
    pad_ref : (H+2, W+2, C)    compute_dtype VMEM scratch, reused for both
                               reflection pads.
    """
    HW = H * W

    def write_mirror_strips():
        # ReflectionPad2d(1) mirror strips, sourced from the already-written
        # center (image row/col i lives at pad index i+1). Columns are written
        # last so the corners pick up the already-mirrored rows.
        pad_ref[0:1, 1:W + 1, :] = pad_ref[2:3, 1:W + 1, :]              # top    = row 1
        pad_ref[H + 1:H + 2, 1:W + 1, :] = pad_ref[H - 1:H, 1:W + 1, :]  # bottom = row H-2
        pad_ref[:, 0:1, :] = pad_ref[:, 2:3, :]                          # left   = col 1
        pad_ref[:, W + 1:W + 2, :] = pad_ref[:, W - 1:W, :]              # right  = col W-2

    def conv3x3(w_ref):
        # 3x3 VALID conv on the padded slab as 9 shifted matmuls on the MXU.
        # dx (sublane-axis) shifts are hoisted: each column window is loaded
        # straight from the scratch ref (3 windows per conv, never the full
        # slab), and the per-tap dy slice is a cheap major-axis slice.
        # NOTE: col[dy:dy+H].reshape(HW, C) is layout-preserving only when W
        # is a multiple of the sublane packing (8 f32 / 16 bf16); misaligned W
        # is still correct but pays one relayout per tap.
        acc = None
        for dx in range(3):
            col = pad_ref[:, dx:dx + W, :]                  # (H+2, W, C)
            for dy in range(3):
                patch = col[dy:dy + H].reshape(HW, C)
                tap = jnp.dot(patch, w_ref[dy, dx],
                              preferred_element_type=jnp.float32)
                acc = tap if acc is None else acc + tap     # no zero-init pass
        return acc                                          # (HW, C) f32

    def in_scale_shift(y):
        # Single-pass InstanceNorm statistics in f32: var = E[y^2] - mean^2,
        # clamped at 0. (Cancellation only bites when |mean| >> std, which
        # CycleGAN conv activations do not hit.)
        inv_n = 1.0 / HW
        s = jnp.sum(y, axis=0, keepdims=True)
        sq = jnp.sum(y * y, axis=0, keepdims=True)
        mean = s * inv_n
        var = jnp.maximum(sq * inv_n - mean * mean, 0.0)
        scale = lax.rsqrt(var + EPS)                        # (1, C)
        return scale, -mean * scale

    x = x_ref[0]                                            # (H, W, C)

    # --- pad(x) -> conv1 -> IN stats. (Conv bias dropped: a per-channel bias
    #     is cancelled exactly by the non-affine InstanceNorm mean.)
    pad_ref[1:H + 1, 1:W + 1, :] = x.astype(compute_dtype)
    write_mirror_strips()
    y = conv3x3(w1_ref)                                     # (HW, C) f32
    scale1, shift1 = in_scale_shift(y)

    # --- IN-apply + ReLU + cast + pad-center write fused into one pass,
    #     written straight into the reused pad scratch.
    pad_ref[1:H + 1, 1:W + 1, :] = jnp.maximum(
        y * scale1 + shift1, 0.0).reshape(H, W, C).astype(compute_dtype)
    write_mirror_strips()

    # --- conv2 -> IN -> residual add in f32 from the unpadded input block.
    z = conv3x3(w2_ref)                                     # (HW, C) f32
    scale2, shift2 = in_scale_shift(z)
    out = x.astype(jnp.float32) + (z * scale2 + shift2).reshape(H, W, C)
    out_ref[0] = out.astype(out_ref.dtype)


def residual_block_nhwc(x_nhwc, w1, w2, *, compute_dtype=jnp.bfloat16):
    """x_nhwc: (N,H,W,C); w1,w2: (3,3,C,C) HWIO.

    Conv biases are intentionally not taken: bias + non-affine InstanceNorm
    is mathematically identical to no bias at all.
    """
    N, H, W, C = x_nhwc.shape
    assert H >= 2 and W >= 2, "ReflectionPad2d(1) needs H, W >= 2"

    # Lane-dense channels: pad C up to a multiple of 128 (exact no-op for the
    # padded channels: zero conv output -> zero after IN -> zero residual).
    Cp = _round_up(C, LANE)
    if Cp != C:
        x_in = jnp.pad(x_nhwc, ((0, 0), (0, 0), (0, 0), (0, Cp - C)))
        w1 = jnp.pad(w1, ((0, 0), (0, 0), (0, Cp - C), (0, Cp - C)))
        w2 = jnp.pad(w2, ((0, 0), (0, 0), (0, Cp - C), (0, Cp - C)))
    else:
        x_in = x_nhwc
    w1c = w1.astype(compute_dtype)
    w2c = w2.astype(compute_dtype)

    kernel = functools.partial(residual_block_kernel, H=H, W=W, C=Cp,
                               compute_dtype=compute_dtype)

    # ----- VMEM budget: real itemsizes, clamped to the device's capacity.
    io_isize = jnp.dtype(x_nhwc.dtype).itemsize
    csize = jnp.dtype(compute_dtype).itemsize
    img_io_bytes = H * W * Cp * io_isize            # one in/out block
    w_bytes = 9 * Cp * Cp * csize                   # one weight tensor
    pad_bytes = (H + 2) * (W + 2) * Cp * csize      # reflect-pad scratch
    f32_img = H * W * Cp * 4                        # one live f32 temporary
    # in/out double-buffered (2 each), weights single-buffered, pad scratch,
    # headroom for live f32 temporaries (conv acc, IN apply, residual).
    vmem_est = 4 * img_io_bytes + 2 * w_bytes + pad_bytes + 6 * f32_img
    try:
        vmem_cap = pltpu.get_tpu_info().vmem_capacity_bytes
    except Exception:
        vmem_cap = 64 * 1024 * 1024                 # conservative (v7x per-TC)
    vmem_limit = min(max(int(vmem_est), 32 * 1024 * 1024),
                     int(0.9 * vmem_cap))

    # ----- Advisory cost for XLA's scheduler around the custom call.
    flops = N * 2 * (2 * H * W * Cp * Cp * 9)       # two 3x3 convs as matmuls
    bytes_accessed = 2 * N * H * W * Cp * io_isize + 2 * 9 * Cp * Cp * csize
    cost = pl.CostEstimate(flops=flops, transcendentals=N * 2 * Cp,
                           bytes_accessed=bytes_accessed)

    out = pl.pallas_call(
        kernel,
        out_shape=jax.ShapeDtypeStruct((N, H, W, Cp), x_nhwc.dtype),
        grid_spec=pltpu.PrefetchScalarGridSpec(
            num_scalar_prefetch=0,
            grid=(N,),
            in_specs=[
                pl.BlockSpec((1, H, W, Cp), lambda n: (n, 0, 0, 0)),
                # Grid-invariant weights: single-buffer them — double-
                # buffering a constant block only burns VMEM (matters most
                # under v7x's 64 MiB budget).
                pl.BlockSpec((3, 3, Cp, Cp), lambda n: (0, 0, 0, 0),
                             pipeline_mode=pl.Buffered(1)),
                pl.BlockSpec((3, 3, Cp, Cp), lambda n: (0, 0, 0, 0),
                             pipeline_mode=pl.Buffered(1)),
            ],
            out_specs=pl.BlockSpec((1, H, W, Cp), lambda n: (n, 0, 0, 0)),
            scratch_shapes=[pltpu.VMEM((H + 2, W + 2, Cp), compute_dtype)],
        ),
        compiler_params=pltpu.CompilerParams(
            dimension_semantics=("parallel",),
            vmem_limit_bytes=vmem_limit),
        cost_estimate=cost,
    )(x_in, w1c, w2c)

    if Cp != C:
        out = out[..., :C]
    return out


def residual_block_nchw(x_nchw, w1, w2, *, compute_dtype=jnp.bfloat16):
    """PyTorch-layout entry point: x (N,C,H,W), weights HWIO.

    Prefer residual_block_nhwc when the surrounding model runs NHWC — the two
    transposes here are full HBM relayout passes.
    """
    x_nhwc = jnp.transpose(x_nchw, (0, 2, 3, 1))
    y = residual_block_nhwc(x_nhwc, w1, w2, compute_dtype=compute_dtype)
    return jnp.transpose(y, (0, 3, 1, 2))


# ---------------- pure-JAX reference (for correctness check) ----------------
def _ref_nhwc(x, w1, b1, w2, b2, conv_dtype=jnp.float32):
    """Faithful reference of the PyTorch forward (biases included)."""
    def conv(h, w, b):
        hp = jnp.pad(h, ((0, 0), (1, 1), (1, 1), (0, 0)), mode="reflect")
        y = lax.conv_general_dilated(
            hp.astype(conv_dtype), w.astype(conv_dtype), (1, 1), "VALID",
            dimension_numbers=("NHWC", "HWIO", "NHWC"),
            preferred_element_type=jnp.float32)
        return y + b

    def inorm(y):
        m = jnp.mean(y, axis=(1, 2), keepdims=True)
        v = jnp.mean((y - m) ** 2, axis=(1, 2), keepdims=True)
        return (y - m) * lax.rsqrt(v + EPS)

    h = jax.nn.relu(inorm(conv(x, w1, b1)))
    z = inorm(conv(h, w2, b2))
    return x + z


if __name__ == "__main__":
    key = jax.random.PRNGKey(0)
    N, C, H, W = 2, 4, 16, 16
    k_x, k_w1, k_b1, k_w2, k_b2 = jax.random.split(key, 5)

    x = jax.random.normal(k_x, (N, C, H, W), dtype=jnp.float32)
    # Conv2d(C, C, 3) weights in HWIO (PyTorch OIHW -> transpose(2, 3, 1, 0)).
    w1 = jax.random.normal(k_w1, (3, 3, C, C), dtype=jnp.float32) * 0.1
    b1 = jax.random.normal(k_b1, (C,), dtype=jnp.float32) * 0.1
    w2 = jax.random.normal(k_w2, (3, 3, C, C), dtype=jnp.float32) * 0.1
    b2 = jax.random.normal(k_b2, (C,), dtype=jnp.float32) * 0.1

    x_nhwc = jnp.transpose(x, (0, 2, 3, 1))

    # Exact-precision path: f32 matmuls vs. f32 reference. The reference keeps
    # the conv biases -> also verifies they are cancelled by InstanceNorm.
    out_f32 = jax.block_until_ready(
        residual_block_nchw(x, w1, w2, compute_dtype=jnp.float32))
    ref_f32 = jnp.transpose(_ref_nhwc(x_nhwc, w1, b1, w2, b2, jnp.float32),
                            (0, 3, 1, 2))
    assert out_f32.shape == (N, C, H, W)
    assert jnp.allclose(out_f32, ref_f32, atol=1e-4, rtol=1e-4), \
        "f32 kernel mismatch vs f32 reference"

    # Fast path (default): bf16 MXU operands, f32 accumulation / elementwise.
    out_bf16 = jax.block_until_ready(residual_block_nchw(x, w1, w2))
    ref_bf16 = jnp.transpose(_ref_nhwc(x_nhwc, w1, b1, w2, b2, jnp.bfloat16),
                             (0, 3, 1, 2))
    assert jnp.allclose(out_bf16, ref_bf16, atol=1e-2, rtol=1e-2), \
        "bf16 kernel mismatch vs bf16-operand reference"
    assert jnp.allclose(out_bf16, ref_f32, atol=5e-2, rtol=5e-2), \
        "bf16 kernel drifted too far from f32 reference"

    print("KERNEL_OK")
</pallas_src>

<mosaic_0001>
module attributes {stable_mosaic.version = 11 : i64} {
  func.func @residual_block_kernel(%arg0: i32, %arg1: memref<1x16x16x128xf32, #tpu.memory_space<vmem>>, %arg2: memref<3x3x128x128xf32, #tpu.memory_space<vmem>>, %arg3: memref<3x3x128x128xf32, #tpu.memory_space<vmem>>, %arg4: memref<1x16x16x128xf32, #tpu.memory_space<vmem>>, %arg5: memref<18x18x128xf32, #tpu.memory_space<vmem>>) attributes {dimension_semantics = [#tpu.dimension_semantics<parallel>], iteration_bounds = array<i64: 2>, scalar_prefetch = 0 : i64, scratch_operands = 1 : i64, tpu.core_type = #tpu.core_type<tc>, window_params = [{transform_indices = @transform_0, window_bounds = array<i64: 1, 16, 16, 128>}, {pipeline_mode = #tpu.pipeline_mode<synchronous>, transform_indices = @transform_1, window_bounds = array<i64: 3, 3, 128, 128>}, {pipeline_mode = #tpu.pipeline_mode<synchronous>, transform_indices = @transform_2, window_bounds = array<i64: 3, 3, 128, 128>}, {transform_indices = @transform_3, window_bounds = array<i64: 1, 16, 16, 128>}]} {
    %c0 = arith.constant 0 : index
    %c0_0 = arith.constant 0 : index
    %c0_1 = arith.constant 0 : index
    %c0_2 = arith.constant 0 : index
    %0 = vector.load %arg1[%c0, %c0_0, %c0_1, %c0_2] : memref<1x16x16x128xf32, #tpu.memory_space<vmem>>, vector<1x16x16x128xf32>
    %1 = vector.shape_cast %0 : vector<1x16x16x128xf32> to vector<16x16x128xf32>
    %c1 = arith.constant 1 : index
    %c1_3 = arith.constant 1 : index
    %c0_4 = arith.constant 0 : index
    %2 = vector.load %arg5[%c1, %c1_3, %c0_4] : memref<18x18x128xf32, #tpu.memory_space<vmem>>, vector<16x16x128xf32>
    tpu.vector_store %arg5[%c1, %c1_3, %c0_4], %1 {strides = array<i32>} : memref<18x18x128xf32, #tpu.memory_space<vmem>>, vector<16x16x128xf32>,
    %c2 = arith.constant 2 : index
    %c1_5 = arith.constant 1 : index
    %c0_6 = arith.constant 0 : index
    %3 = vector.load %arg5[%c2, %c1_5, %c0_6] : memref<18x18x128xf32, #tpu.memory_space<vmem>>, vector<1x16x128xf32>
    %c0_7 = arith.constant 0 : index
    %c1_8 = arith.constant 1 : index
    %c0_9 = arith.constant 0 : index
    %4 = vector.load %arg5[%c0_7, %c1_8, %c0_9] : memref<18x18x128xf32, #tpu.memory_space<vmem>>, vector<1x16x128xf32>
    tpu.vector_store %arg5[%c0_7, %c1_8, %c0_9], %3 {strides = array<i32>} : memref<18x18x128xf32, #tpu.memory_space<vmem>>, vector<1x16x128xf32>,
    %c15 = arith.constant 15 : index
    %c1_10 = arith.constant 1 : index
    %c0_11 = arith.constant 0 : index
    %5 = vector.load %arg5[%c15, %c1_10, %c0_11] : memref<18x18x128xf32, #tpu.memory_space<vmem>>, vector<1x16x128xf32>
    %c17 = arith.constant 17 : index
    %c1_12 = arith.constant 1 : index
    %c0_13 = arith.constant 0 : index
    %6 = vector.load %arg5[%c17, %c1_12, %c0_13] : memref<18x18x128xf32, #tpu.memory_space<vmem>>, vector<1x16x128xf32>
    tpu.vector_store %arg5[%c17, %c1_12, %c0_13], %5 {strides = array<i32>} : memref<18x18x128xf32, #tpu.memory_space<vmem>>, vector<1x16x128xf32>,
    %c0_14 = arith.constant 0 : index
    %c2_15 = arith.constant 2 : index
    %c0_16 = arith.constant 0 : index
    %7 = vector.load %arg5[%c0_14, %c2_15, %c0_16] : memref<18x18x128xf32, #tpu.memory_space<vmem>>, vector<18x1x128xf32>
    %c0_17 = arith.constant 0 : index
    %c0_18 = arith.constant 0 : index
    %c0_19 = arith.constant 0 : index
    %8 = vector.load %arg5[%c0_17, %c0_18, %c0_19] : memref<18x18x128xf32, #tpu.memory_space<vmem>>, vector<18x1x128xf32>
    tpu.vector_store %arg5[%c0_17, %c0_18, %c0_19], %7 {strides = array<i32>} : memref<18x18x128xf32, #tpu.memory_space<vmem>>, vector<18x1x128xf32>,
    %c0_20 = arith.constant 0 : index
    %c15_21 = arith.constant 15 : index
    %c0_22 = arith.constant 0 : index
    %9 = vector.load %arg5[%c0_20, %c15_21, %c0_22] : memref<18x18x128xf32, #tpu.memory_space<vmem>>, vector<18x1x128xf32>
    %c0_23 = arith.constant 0 : index
    %c17_24 = arith.constant 17 : index
    %c0_25 = arith.constant 0 : index
    %10 = vector.load %arg5[%c0_23, %c17_24, %c0_25] : memref<18x18x128xf32, #tpu.memory_space<vmem>>, vector<18x1x128xf32>
    tpu.vector_store %arg5[%c0_23, %c17_24, %c0_25], %9 {strides = array<i32>} : memref<18x18x128xf32, #tpu.memory_space<vmem>>, vector<18x1x128xf32>,
    %c0_26 = arith.constant 0 : index
    %c0_27 = arith.constant 0 : index
    %c0_28 = arith.constant 0 : index
    %11 = vector.load %arg5[%c0_26, %c0_27, %c0_28] : memref<18x18x128xf32, #tpu.memory_space<vmem>>, vector<18x16x128xf32>
    %12 = vector.extract_strided_slice %11 {offsets = [0, 0, 0], sizes = [16, 16, 128], strides = [1, 1, 1]} : vector<18x16x128xf32> to vector<16x16x128xf32>
    %13 = vector.shape_cast %12 : vector<16x16x128xf32> to vector<256x128xf32>
    %c0_29 = arith.constant 0 : index
    %c0_30 = arith.constant 0 : index
    %c0_31 = arith.constant 0 : index
    %c0_32 = arith.constant 0 : index
    %14 = vector.load %arg2[%c0_29, %c0_30, %c0_31, %c0_32] : memref<3x3x128x128xf32, #tpu.memory_space<vmem>>, vector<1x1x128x128xf32>
    %15 = vector.shape_cast %14 : vector<1x1x128x128xf32> to vector<128x128xf32>
    %cst = arith.constant dense<0.000000e+00> : vector<256x128xf32>
    %16 = tpu.matmul %13, %15, %cst {dimension_numbers = #tpu.dot_dimension_numbers<[1], [0], [0], [1], [0, 0, 1, 1], [], []>} : vector<256x128xf32>, vector<128x128xf32>, vector<256x128xf32> -> vector<256x128xf32>
    %17 = vector.extract_strided_slice %11 {offsets = [1, 0, 0], sizes = [16, 16, 128], strides = [1, 1, 1]} : vector<18x16x128xf32> to vector<16x16x128xf32>
    %18 = vector.shape_cast %17 : vector<16x16x128xf32> to vector<256x128xf32>
    %c1_33 = arith.constant 1 : index
    %c0_34 = arith.constant 0 : index
    %c0_35 = arith.constant 0 : index
    %c0_36 = arith.constant 0 : index
    %19 = vector.load %arg2[%c1_33, %c0_34, %c0_35, %c0_36] : memref<3x3x128x128xf32, #tpu.memory_space<vmem>>, vector<1x1x128x128xf32>
    %20 = vector.shape_cast %19 : vector<1x1x128x128xf32> to vector<128x128xf32>
    %cst_37 = arith.constant dense<0.000000e+00> : vector<256x128xf32>
    %21 = tpu.matmul %18, %20, %cst_37 {dimension_numbers = #tpu.dot_dimension_numbers<[1], [0], [0], [1], [0, 0, 1, 1], [], []>} : vector<256x128xf32>, vector<128x128xf32>, vector<256x128xf32> -> vector<256x128xf32>
    %22 = arith.addf %16, %21 : vector<256x128xf32>
    %23 = vector.extract_strided_slice %11 {offsets = [2, 0, 0], sizes = [16, 16, 128], strides = [1, 1, 1]} : vector<18x16x128xf32> to vector<16x16x128xf32>
    %24 = vector.shape_cast %23 : vector<16x16x128xf32> to vector<256x128xf32>
    %c2_38 = arith.constant 2 : index
    %c0_39 = arith.constant 0 : index
    %c0_40 = arith.constant 0 : index
    %c0_41 = arith.constant 0 : index
    %25 = vector.load %arg2[%c2_38, %c0_39, %c0_40, %c0_41] : memref<3x3x128x128xf32, #tpu.memory_space<vmem>>, vector<1x1x128x128xf32>
    %26 = vector.shape_cast %25 : vector<1x1x128x128xf32> to vector<128x128xf32>
    %cst_42 = arith.constant dense<0.000000e+00> : vector<256x128xf32>
    %27 = tpu.matmul %24, %26, %cst_42 {dimension_numbers = #tpu.dot_dimension_numbers<[1], [0], [0], [1], [0, 0, 1, 1], [], []>} : vector<256x128xf32>, vector<128x128xf32>, vector<256x128xf32> -> vector<256x128xf32>
    %28 = arith.addf %22, %27 : vector<256x128xf32>
    %c0_43 = arith.constant 0 : index
    %c1_44 = arith.constant 1 : index
    %c0_45 = arith.constant 0 : index
    %29 = vector.load %arg5[%c0_43, %c1_44, %c0_45] : memref<18x18x128xf32, #tpu.memory_space<vmem>>, vector<18x16x128xf32>
    %30 = vector.extract_strided_slice %29 {offsets = [0, 0, 0], sizes = [16, 16, 128], strides = [1, 1, 1]} : vector<18x16x128xf32> to vector<16x16x128xf32>
    %31 = vector.shape_cast %30 : vector<16x16x128xf32> to vector<256x128xf32>
    %c0_46 = arith.constant 0 : index
    %c1_47 = arith.constant 1 : index
    %c0_48 = arith.constant 0 : index
    %c0_49 = arith.constant 0 : index
    %32 = vector.load %arg2[%c0_46, %c1_47, %c0_48, %c0_49] : memref<3x3x128x128xf32, #tpu.memory_space<vmem>>, vector<1x1x128x128xf32>
    %33 = vector.shape_cast %32 : vector<1x1x128x128xf32> to vector<128x128xf32>
    %cst_50 = arith.constant dense<0.000000e+00> : vector<256x128xf32>
    %34 = tpu.matmul %31, %33, %cst_50 {dimension_numbers = #tpu.dot_dimension_numbers<[1], [0], [0], [1], [0, 0, 1, 1], [], []>} : vector<256x128xf32>, vector<128x128xf32>, vector<256x128xf32> -> vector<256x128xf32>
    %35 = arith.addf %28, %34 : vector<256x128xf32>
    %36 = vector.extract_strided_slice %29 {offsets = [1, 0, 0], sizes = [16, 16, 128], strides = [1, 1, 1]} : vector<18x16x128xf32> to vector<16x16x128xf32>
    %37 = vector.shape_cast %36 : vector<16x16x128xf32> to vector<256x128xf32>
    %c1_51 = arith.constant 1 : index
    %c1_52 = arith.constant 1 : index
    %c0_53 = arith.constant 0 : index
    %c0_54 = arith.constant 0 : index
    %38 = vector.load %arg2[%c1_51, %c1_52, %c0_53, %c0_54] : memref<3x3x128x128xf32, #tpu.memory_space<vmem>>, vector<1x1x128x128xf32>
    %39 = vector.shape_cast %38 : vector<1x1x128x128xf32> to vector<128x128xf32>
    %cst_55 = arith.constant dense<0.000000e+00> : vector<256x128xf32>
    %40 = tpu.matmul %37, %39, %cst_55 {dimension_numbers = #tpu.dot_dimension_numbers<[1], [0], [0], [1], [0, 0, 1, 1], [], []>} : vector<256x128xf32>, vector<128x128xf32>, vector<256x128xf32> -> vector<256x128xf32>
    %41 = arith.addf %35, %40 : vector<256x128xf32>
    %42 = vector.extract_strided_slice %29 {offsets = [2, 0, 0], sizes = [16, 16, 128], strides = [1, 1, 1]} : vector<18x16x128xf32> to vector<16x16x128xf32>
    %43 = vector.shape_cast %42 : vector<16x16x128xf32> to vector<256x128xf32>
    %c2_56 = arith.constant 2 : index
    %c1_57 = arith.constant 1 : index
    %c0_58 = arith.constant 0 : index
    %c0_59 = arith.constant 0 : index
    %44 = vector.load %arg2[%c2_56, %c1_57, %c0_58, %c0_59] : memref<3x3x128x128xf32, #tpu.memory_space<vmem>>, vector<1x1x128x128xf32>
    %45 = vector.shape_cast %44 : vector<1x1x128x128xf32> to vector<128x128xf32>
    %cst_60 = arith.constant dense<0.000000e+00> : vector<256x128xf32>
    %46 = tpu.matmul %43, %45, %cst_60 {dimension_numbers = #tpu.dot_dimension_numbers<[1], [0], [0], [1], [0, 0, 1, 1], [], []>} : vector<256x128xf32>, vector<128x128xf32>, vector<256x128xf32> -> vector<256x128xf32>
    %47 = arith.addf %41, %46 : vector<256x128xf32>
    %c0_61 = arith.constant 0 : index
    %c2_62 = arith.constant 2 : index
    %c0_63 = arith.constant 0 : index
    %48 = vector.load %arg5[%c0_61, %c2_62, %c0_63] : memref<18x18x128xf32, #tpu.memory_space<vmem>>, vector<18x16x128xf32>
    %49 = vector.extract_strided_slice %48 {offsets = [0, 0, 0], sizes = [16, 16, 128], strides = [1, 1, 1]} : vector<18x16x128xf32> to vector<16x16x128xf32>
    %50 = vector.shape_cast %49 : vector<16x16x128xf32> to vector<256x128xf32>
    %c0_64 = arith.constant 0 : index
    %c2_65 = arith.constant 2 : index
    %c0_66 = arith.constant 0 : index
    %c0_67 = arith.constant 0 : index
    %51 = vector.load %arg2[%c0_64, %c2_65, %c0_66, %c0_67] : memref<3x3x128x128xf32, #tpu.memory_space<vmem>>, vector<1x1x128x128xf32>
    %52 = vector.shape_cast %51 : vector<1x1x128x128xf32> to vector<128x128xf32>
    %cst_68 = arith.constant dense<0.000000e+00> : vector<256x128xf32>
    %53 = tpu.matmul %50, %52, %cst_68 {dimension_numbers = #tpu.dot_dimension_numbers<[1], [0], [0], [1], [0, 0, 1, 1], [], []>} : vector<256x128xf32>, vector<128x128xf32>, vector<256x128xf32> -> vector<256x128xf32>
    %54 = arith.addf %47, %53 : vector<256x128xf32>
    %55 = vector.extract_strided_slice %48 {offsets = [1, 0, 0], sizes = [16, 16, 128], strides = [1, 1, 1]} : vector<18x16x128xf32> to vector<16x16x128xf32>
    %56 = vector.shape_cast %55 : vector<16x16x128xf32> to vector<256x128xf32>
    %c1_69 = arith.constant 1 : index
    %c2_70 = arith.constant 2 : index
    %c0_71 = arith.constant 0 : index
    %c0_72 = arith.constant 0 : index
    %57 = vector.load %arg2[%c1_69, %c2_70, %c0_71, %c0_72] : memref<3x3x128x128xf32, #tpu.memory_space<vmem>>, vector<1x1x128x128xf32>
    %58 = vector.shape_cast %57 : vector<1x1x128x128xf32> to vector<128x128xf32>
    %cst_73 = arith.constant dense<0.000000e+00> : vector<256x128xf32>
    %59 = tpu.matmul %56, %58, %cst_73 {dimension_numbers = #tpu.dot_dimension_numbers<[1], [0], [0], [1], [0, 0, 1, 1], [], []>} : vector<256x128xf32>, vector<128x128xf32>, vector<256x128xf32> -> vector<256x128xf32>
    %60 = arith.addf %54, %59 : vector<256x128xf32>
    %61 = vector.extract_strided_slice %48 {offsets = [2, 0, 0], sizes = [16, 16, 128], strides = [1, 1, 1]} : vector<18x16x128xf32> to vector<16x16x128xf32>
    %62 = vector.shape_cast %61 : vector<16x16x128xf32> to vector<256x128xf32>
    %c2_74 = arith.constant 2 : index
    %c2_75 = arith.constant 2 : index
    %c0_76 = arith.constant 0 : index
    %c0_77 = arith.constant 0 : index
    %63 = vector.load %arg2[%c2_74, %c2_75, %c0_76, %c0_77] : memref<3x3x128x128xf32, #tpu.memory_space<vmem>>, vector<1x1x128x128xf32>
    %64 = vector.shape_cast %63 : vector<1x1x128x128xf32> to vector<128x128xf32>
    %cst_78 = arith.constant dense<0.000000e+00> : vector<256x128xf32>
    %65 = tpu.matmul %62, %64, %cst_78 {dimension_numbers = #tpu.dot_dimension_numbers<[1], [0], [0], [1], [0, 0, 1, 1], [], []>} : vector<256x128xf32>, vector<128x128xf32>, vector<256x128xf32> -> vector<256x128xf32>
    %66 = arith.addf %60, %65 : vector<256x128xf32>
    %cst_79 = arith.constant dense<0.000000e+00> : vector<128xf32>
    %67 = vector.multi_reduction <add>, %66, %cst_79 [0] : vector<256x128xf32> to vector<128xf32>
    %68 = vector.shape_cast %67 : vector<128xf32> to vector<1x128xf32>
    %69 = arith.mulf %66, %66 : vector<256x128xf32>
    %cst_80 = arith.constant dense<0.000000e+00> : vector<128xf32>
    %70 = vector.multi_reduction <add>, %69, %cst_80 [0] : vector<256x128xf32> to vector<128xf32>
    %71 = vector.shape_cast %70 : vector<128xf32> to vector<1x128xf32>
    %cst_81 = arith.constant 3.906250e-03 : f32
    %72 = vector.broadcast %cst_81 : f32 to vector<1x128xf32>
    %73 = arith.mulf %68, %72 : vector<1x128xf32>
    %cst_82 = arith.constant 3.906250e-03 : f32
    %74 = vector.broadcast %cst_82 : f32 to vector<1x128xf32>
    %75 = arith.mulf %71, %74 : vector<1x128xf32>
    %76 = arith.mulf %73, %73 : vector<1x128xf32>
    %77 = arith.subf %75, %76 : vector<1x128xf32>
    %cst_83 = arith.constant 0.000000e+00 : f32
    %78 = vector.broadcast %cst_83 : f32 to vector<1x128xf32>
    %79 = arith.maximumf %77, %78 : vector<1x128xf32>
    %cst_84 = arith.constant 9.99999974E-6 : f32
    %80 = vector.broadcast %cst_84 : f32 to vector<1x128xf32>
    %81 = arith.addf %79, %80 : vector<1x128xf32>
    %82 = math.rsqrt %81 : vector<1x128xf32>
    %cst_85 = arith.constant 0.000000e+00 : f32
    %83 = vector.broadcast %cst_85 : f32 to vector<1x128xf32>
    %84 = arith.subf %83, %73 : vector<1x128xf32>
    %85 = arith.mulf %84, %82 : vector<1x128xf32>
    %86 = vector.broadcast %82 : vector<1x128xf32> to vector<256x128xf32>
    %87 = arith.mulf %66, %86 : vector<256x128xf32>
    %88 = vector.broadcast %85 : vector<1x128xf32> to vector<256x128xf32>
    %89 = arith.addf %87, %88 : vector<256x128xf32>
    %cst_86 = arith.constant 0.000000e+00 : f32
    %90 = vector.broadcast %cst_86 : f32 to vector<256x128xf32>
    %91 = arith.maximumf %89, %90 : vector<256x128xf32>
    %92 = vector.shape_cast %91 : vector<256x128xf32> to vector<16x16x128xf32>
    %c1_87 = arith.constant 1 : index
    %c1_88 = arith.constant 1 : index
    %c0_89 = arith.constant 0 : index
    %93 = vector.load %arg5[%c1_87, %c1_88, %c0_89] : memref<18x18x128xf32, #tpu.memory_space<vmem>>, vector<16x16x128xf32>
    tpu.vector_store %arg5[%c1_87, %c1_88, %c0_89], %92 {strides = array<i32>} : memref<18x18x128xf32, #tpu.memory_space<vmem>>, vector<16x16x128xf32>,
    %c2_90 = arith.constant 2 : index
    %c1_91 = arith.constant 1 : index
    %c0_92 = arith.constant 0 : index
    %94 = vector.load %arg5[%c2_90, %c1_91, %c0_92] : memref<18x18x128xf32, #tpu.memory_space<vmem>>, vector<1x16x128xf32>
    %c0_93 = arith.constant 0 : index
    %c1_94 = arith.constant 1 : index
    %c0_95 = arith.constant 0 : index
    %95 = vector.load %arg5[%c0_93, %c1_94, %c0_95] : memref<18x18x128xf32, #tpu.memory_space<vmem>>, vector<1x16x128xf32>
    tpu.vector_store %arg5[%c0_93, %c1_94, %c0_95], %94 {strides = array<i32>} : memref<18x18x128xf32, #tpu.memory_space<vmem>>, vector<1x16x128xf32>,
    %c15_96 = arith.constant 15 : index
    %c1_97 = arith.constant 1 : index
    %c0_98 = arith.constant 0 : index
    %96 = vector.load %arg5[%c15_96, %c1_97, %c0_98] : memref<18x18x128xf32, #tpu.memory_space<vmem>>, vector<1x16x128xf32>
    %c17_99 = arith.constant 17 : index
    %c1_100 = arith.constant 1 : index
    %c0_101 = arith.constant 0 : index
    %97 = vector.load %arg5[%c17_99, %c1_100, %c0_101] : memref<18x18x128xf32, #tpu.memory_space<vmem>>, vector<1x16x128xf32>
    tpu.vector_store %arg5[%c17_99, %c1_100, %c0_101], %96 {strides = array<i32>} : memref<18x18x128xf32, #tpu.memory_space<vmem>>, vector<1x16x128xf32>,
    %c0_102 = arith.constant 0 : index
    %c2_103 = arith.constant 2 : index
    %c0_104 = arith.constant 0 : index
    %98 = vector.load %arg5[%c0_102, %c2_103, %c0_104] : memref<18x18x128xf32, #tpu.memory_space<vmem>>, vector<18x1x128xf32>
    %c0_105 = arith.constant 0 : index
    %c0_106 = arith.constant 0 : index
    %c0_107 = arith.constant 0 : index
    %99 = vector.load %arg5[%c0_105, %c0_106, %c0_107] : memref<18x18x128xf32, #tpu.memory_space<vmem>>, vector<18x1x128xf32>
    tpu.vector_store %arg5[%c0_105, %c0_106, %c0_107], %98 {strides = array<i32>} : memref<18x18x128xf32, #tpu.memory_space<vmem>>, vector<18x1x128xf32>,
    %c0_108 = arith.constant 0 : index
    %c15_109 = arith.constant 15 : index
    %c0_110 = arith.constant 0 : index
    %100 = vector.load %arg5[%c0_108, %c15_109, %c0_110] : memref<18x18x128xf32, #tpu.memory_space<vmem>>, vector<18x1x128xf32>
    %c0_111 = arith.constant 0 : index
    %c17_112 = arith.constant 17 : index
    %c0_113 = arith.constant 0 : index
    %101 = vector.load %arg5[%c0_111, %c17_112, %c0_113] : memref<18x18x128xf32, #tpu.memory_space<vmem>>, vector<18x1x128xf32>
    tpu.vector_store %arg5[%c0_111, %c17_112, %c0_113], %100 {strides = array<i32>} : memref<18x18x128xf32, #tpu.memory_space<vmem>>, vector<18x1x128xf32>,
    %c0_114 = arith.constant 0 : index
    %c0_115 = arith.constant 0 : index
    %c0_116 = arith.constant 0 : index
    %102 = vector.load %arg5[%c0_114, %c0_115, %c0_116] : memref<18x18x128xf32, #tpu.memory_space<vmem>>, vector<18x16x128xf32>
    %103 = vector.extract_strided_slice %102 {offsets = [0, 0, 0], sizes = [16, 16, 128], strides = [1, 1, 1]} : vector<18x16x128xf32> to vector<16x16x128xf32>
    %104 = vector.shape_cast %103 : vector<16x16x128xf32> to vector<256x128xf32>
    %c0_117 = arith.constant 0 : index
    %c0_118 = arith.constant 0 : index
    %c0_119 = arith.constant 0 : index
    %c0_120 = arith.constant 0 : index
    %105 = vector.load %arg3[%c0_117, %c0_118, %c0_119, %c0_120] : memref<3x3x128x128xf32, #tpu.memory_space<vmem>>, vector<1x1x128x128xf32>
    %106 = vector.shape_cast %105 : vector<1x1x128x128xf32> to vector<128x128xf32>
    %cst_121 = arith.constant dense<0.000000e+00> : vector<256x128xf32>
    %107 = tpu.matmul %104, %106, %cst_121 {dimension_numbers = #tpu.dot_dimension_numbers<[1], [0], [0], [1], [0, 0, 1, 1], [], []>} : vector<256x128xf32>, vector<128x128xf32>, vector<256x128xf32> -> vector<256x128xf32>
    %108 = vector.extract_strided_slice %102 {offsets = [1, 0, 0], sizes = [16, 16, 128], strides = [1, 1, 1]} : vector<18x16x128xf32> to vector<16x16x128xf32>
    %109 = vector.shape_cast %108 : vector<16x16x128xf32> to vector<256x128xf32>
    %c1_122 = arith.constant 1 : index
    %c0_123 = arith.constant 0 : index
    %c0_124 = arith.constant 0 : index
    %c0_125 = arith.constant 0 : index
    %110 = vector.load %arg3[%c1_122, %c0_123, %c0_124, %c0_125] : memref<3x3x128x128xf32, #tpu.memory_space<vmem>>, vector<1x1x128x128xf32>
    %111 = vector.shape_cast %110 : vector<1x1x128x128xf32> to vector<128x128xf32>
    %cst_126 = arith.constant dense<0.000000e+00> : vector<256x128xf32>
    %112 = tpu.matmul %109, %111, %cst_126 {dimension_numbers = #tpu.dot_dimension_numbers<[1], [0], [0], [1], [0, 0, 1, 1], [], []>} : vector<256x128xf32>, vector<128x128xf32>, vector<256x128xf32> -> vector<256x128xf32>
    %113 = arith.addf %107, %112 : vector<256x128xf32>
    %114 = vector.extract_strided_slice %102 {offsets = [2, 0, 0], sizes = [16, 16, 128], strides = [1, 1, 1]} : vector<18x16x128xf32> to vector<16x16x128xf32>
    %115 = vector.shape_cast %114 : vector<16x16x128xf32> to vector<256x128xf32>
    %c2_127 = arith.constant 2 : index
    %c0_128 = arith.constant 0 : index
    %c0_129 = arith.constant 0 : index
    %c0_130 = arith.constant 0 : index
    %116 = vector.load %arg3[%c2_127, %c0_128, %c0_129, %c0_130] : memref<3x3x128x128xf32, #tpu.memory_space<vmem>>, vector<1x1x128x128xf32>
    %117 = vector.shape_cast %116 : vector<1x1x128x128xf32> to vector<128x128xf32>
    %cst_131 = arith.constant dense<0.000000e+00> : vector<256x128xf32>
    %118 = tpu.matmul %115, %117, %cst_131 {dimension_numbers = #tpu.dot_dimension_numbers<[1], [0], [0], [1], [0, 0, 1, 1], [], []>} : vector<256x128xf32>, vector<128x128xf32>, vector<256x128xf32> -> vector<256x128xf32>
    %119 = arith.addf %113, %118 : vector<256x128xf32>
    %c0_132 = arith.constant 0 : index
    %c1_133 = arith.constant 1 : index
    %c0_134 = arith.constant 0 : index
    %120 = vector.load %arg5[%c0_132, %c1_133, %c0_134] : memref<18x18x128xf32, #tpu.memory_space<vmem>>, vector<18x16x128xf32>
    %121 = vector.extract_strided_slice %120 {offsets = [0, 0, 0], sizes = [16, 16, 128], strides = [1, 1, 1]} : vector<18x16x128xf32> to vector<16x16x128xf32>
    %122 = vector.shape_cast %121 : vector<16x16x128xf32> to vector<256x128xf32>
    %c0_135 = arith.constant 0 : index
    %c1_136 = arith.constant 1 : index
    %c0_137 = arith.constant 0 : index
    %c0_138 = arith.constant 0 : index
    %123 = vector.load %arg3[%c0_135, %c1_136, %c0_137, %c0_138] : memref<3x3x128x128xf32, #tpu.memory_space<vmem>>, vector<1x1x128x128xf32>
    %124 = vector.shape_cast %123 : vector<1x1x128x128xf32> to vector<128x128xf32>
    %cst_139 = arith.constant dense<0.000000e+00> : vector<256x128xf32>
    %125 = tpu.matmul %122, %124, %cst_139 {dimension_numbers = #tpu.dot_dimension_numbers<[1], [0], [0], [1], [0, 0, 1, 1], [], []>} : vector<256x128xf32>, vector<128x128xf32>, vector<256x128xf32> -> vector<256x128xf32>
    %126 = arith.addf %119, %125 : vector<256x128xf32>
    %127 = vector.extract_strided_slice %120 {offsets = [1, 0, 0], sizes = [16, 16, 128], strides = [1, 1, 1]} : vector<18x16x128xf32> to vector<16x16x128xf32>
    %128 = vector.shape_cast %127 : vector<16x16x128xf32> to vector<256x128xf32>
    %c1_140 = arith.constant 1 : index
    %c1_141 = arith.constant 1 : index
    %c0_142 = arith.constant 0 : index
    %c0_143 = arith.constant 0 : index
    %129 = vector.load %arg3[%c1_140, %c1_141, %c0_142, %c0_143] : memref<3x3x128x128xf32, #tpu.memory_space<vmem>>, vector<1x1x128x128xf32>
    %130 = vector.shape_cast %129 : vector<1x1x128x128xf32> to vector<128x128xf32>
    %cst_144 = arith.constant dense<0.000000e+00> : vector<256x128xf32>
    %131 = tpu.matmul %128, %130, %cst_144 {dimension_numbers = #tpu.dot_dimension_numbers<[1], [0], [0], [1], [0, 0, 1, 1], [], []>} : vector<256x128xf32>, vector<128x128xf32>, vector<256x128xf32> -> vector<256x128xf32>
    %132 = arith.addf %126, %131 : vector<256x128xf32>
    %133 = vector.extract_strided_slice %120 {offsets = [2, 0, 0], sizes = [16, 16, 128], strides = [1, 1, 1]} : vector<18x16x128xf32> to vector<16x16x128xf32>
    %134 = vector.shape_cast %133 : vector<16x16x128xf32> to vector<256x128xf32>
    %c2_145 = arith.constant 2 : index
    %c1_146 = arith.constant 1 : index
    %c0_147 = arith.constant 0 : index
    %c0_148 = arith.constant 0 : index
    %135 = vector.load %arg3[%c2_145, %c1_146, %c0_147, %c0_148] : memref<3x3x128x128xf32, #tpu.memory_space<vmem>>, vector<1x1x128x128xf32>
    %136 = vector.shape_cast %135 : vector<1x1x128x128xf32> to vector<128x128xf32>
    %cst_149 = arith.constant dense<0.000000e+00> : vector<256x128xf32>
    %137 = tpu.matmul %134, %136, %cst_149 {dimension_numbers = #tpu.dot_dimension_numbers<[1], [0], [0], [1], [0, 0, 1, 1], [], []>} : vector<256x128xf32>, vector<128x128xf32>, vector<256x128xf32> -> vector<256x128xf32>
    %138 = arith.addf %132, %137 : vector<256x128xf32>
    %c0_150 = arith.constant 0 : index
    %c2_151 = arith.constant 2 : index
    %c0_152 = arith.constant 0 : index
    %139 = vector.load %arg5[%c0_150, %c2_151, %c0_152] : memref<18x18x128xf32, #tpu.memory_space<vmem>>, vector<18x16x128xf32>
    %140 = vector.extract_strided_slice %139 {offsets = [0, 0, 0], sizes = [16, 16, 128], strides = [1, 1, 1]} : vector<18x16x128xf32> to vector<16x16x128xf32>
    %141 = vector.shape_cast %140 : vector<16x16x128xf32> to vector<256x128xf32>
    %c0_153 = arith.constant 0 : index
    %c2_154 = arith.constant 2 : index
    %c0_155 = arith.constant 0 : index
    %c0_156 = arith.constant 0 : index
    %142 = vector.load %arg3[%c0_153, %c2_154, %c0_155, %c0_156] : memref<3x3x128x128xf32, #tpu.memory_space<vmem>>, vector<1x1x128x128xf32>
    %143 = vector.shape_cast %142 : vector<1x1x128x128xf32> to vector<128x128xf32>
    %cst_157 = arith.constant dense<0.000000e+00> : vector<256x128xf32>
    %144 = tpu.matmul %141, %143, %cst_157 {dimension_numbers = #tpu.dot_dimension_numbers<[1], [0], [0], [1], [0, 0, 1, 1], [], []>} : vector<256x128xf32>, vector<128x128xf32>, vector<256x128xf32> -> vector<256x128xf32>
    %145 = arith.addf %138, %144 : vector<256x128xf32>
    %146 = vector.extract_strided_slice %139 {offsets = [1, 0, 0], sizes = [16, 16, 128], strides = [1, 1, 1]} : vector<18x16x128xf32> to vector<16x16x128xf32>
    %147 = vector.shape_cast %146 : vector<16x16x128xf32> to vector<256x128xf32>
    %c1_158 = arith.constant 1 : index
    %c2_159 = arith.constant 2 : index
    %c0_160 = arith.constant 0 : index
    %c0_161 = arith.constant 0 : index
    %148 = vector.load %arg3[%c1_158, %c2_159, %c0_160, %c0_161] : memref<3x3x128x128xf32, #tpu.memory_space<vmem>>, vector<1x1x128x128xf32>
    %149 = vector.shape_cast %148 : vector<1x1x128x128xf32> to vector<128x128xf32>
    %cst_162 = arith.constant dense<0.000000e+00> : vector<256x128xf32>
    %150 = tpu.matmul %147, %149, %cst_162 {dimension_numbers = #tpu.dot_dimension_numbers<[1], [0], [0], [1], [0, 0, 1, 1], [], []>} : vector<256x128xf32>, vector<128x128xf32>, vector<256x128xf32> -> vector<256x128xf32>
    %151 = arith.addf %145, %150 : vector<256x128xf32>
    %152 = vector.extract_strided_slice %139 {offsets = [2, 0, 0], sizes = [16, 16, 128], strides = [1, 1, 1]} : vector<18x16x128xf32> to vector<16x16x128xf32>
    %153 = vector.shape_cast %152 : vector<16x16x128xf32> to vector<256x128xf32>
    %c2_163 = arith.constant 2 : index
    %c2_164 = arith.constant 2 : index
    %c0_165 = arith.constant 0 : index
    %c0_166 = arith.constant 0 : index
    %154 = vector.load %arg3[%c2_163, %c2_164, %c0_165, %c0_166] : memref<3x3x128x128xf32, #tpu.memory_space<vmem>>, vector<1x1x128x128xf32>
    %155 = vector.shape_cast %154 : vector<1x1x128x128xf32> to vector<128x128xf32>
    %cst_167 = arith.constant dense<0.000000e+00> : vector<256x128xf32>
    %156 = tpu.matmul %153, %155, %cst_167 {dimension_numbers = #tpu.dot_dimension_numbers<[1], [0], [0], [1], [0, 0, 1, 1], [], []>} : vector<256x128xf32>, vector<128x128xf32>, vector<256x128xf32> -> vector<256x128xf32>
    %157 = arith.addf %151, %156 : vector<256x128xf32>
    %cst_168 = arith.constant dense<0.000000e+00> : vector<128xf32>
    %158 = vector.multi_reduction <add>, %157, %cst_168 [0] : vector<256x128xf32> to vector<128xf32>
    %159 = vector.shape_cast %158 : vector<128xf32> to vector<1x128xf32>
    %160 = arith.mulf %157, %157 : vector<256x128xf32>
    %cst_169 = arith.constant dense<0.000000e+00> : vector<128xf32>
    %161 = vector.multi_reduction <add>, %160, %cst_169 [0] : vector<256x128xf32> to vector<128xf32>
    %162 = vector.shape_cast %161 : vector<128xf32> to vector<1x128xf32>
    %cst_170 = arith.constant 3.906250e-03 : f32
    %163 = vector.broadcast %cst_170 : f32 to vector<1x128xf32>
    %164 = arith.mulf %159, %163 : vector<1x128xf32>
    %cst_171 = arith.constant 3.906250e-03 : f32
    %165 = vector.broadcast %cst_171 : f32 to vector<1x128xf32>
    %166 = arith.mulf %162, %165 : vector<1x128xf32>
    %167 = arith.mulf %164, %164 : vector<1x128xf32>
    %168 = arith.subf %166, %167 : vector<1x128xf32>
    %cst_172 = arith.constant 0.000000e+00 : f32
    %169 = vector.broadcast %cst_172 : f32 to vector<1x128xf32>
    %170 = arith.maximumf %168, %169 : vector<1x128xf32>
    %cst_173 = arith.constant 9.99999974E-6 : f32
    %171 = vector.broadcast %cst_173 : f32 to vector<1x128xf32>
    %172 = arith.addf %170, %171 : vector<1x128xf32>
    %173 = math.rsqrt %172 : vector<1x128xf32>
    %cst_174 = arith.constant 0.000000e+00 : f32
    %174 = vector.broadcast %cst_174 : f32 to vector<1x128xf32>
    %175 = arith.subf %174, %164 : vector<1x128xf32>
    %176 = arith.mulf %175, %173 : vector<1x128xf32>
    %177 = vector.broadcast %173 : vector<1x128xf32> to vector<256x128xf32>
    %178 = arith.mulf %157, %177 : vector<256x128xf32>
    %179 = vector.broadcast %176 : vector<1x128xf32> to vector<256x128xf32>
    %180 = arith.addf %178, %179 : vector<256x128xf32>
    %181 = vector.shape_cast %180 : vector<256x128xf32> to vector<16x16x128xf32>
    %182 = arith.addf %1, %181 : vector<16x16x128xf32>
    %c0_175 = arith.constant 0 : index
    %c0_176 = arith.constant 0 : index
    %c0_177 = arith.constant 0 : index
    %c0_178 = arith.constant 0 : index
    %183 = vector.load %arg4[%c0_175, %c0_176, %c0_177, %c0_178] : memref<1x16x16x128xf32, #tpu.memory_space<vmem>>, vector<1x16x16x128xf32>
    %184 = vector.shape_cast %183 : vector<1x16x16x128xf32> to vector<16x16x128xf32>
    %185 = vector.shape_cast %182 : vector<16x16x128xf32> to vector<1x16x16x128xf32>
    tpu.vector_store %arg4[%c0_175, %c0_176, %c0_177, %c0_178], %185 {strides = array<i32>} : memref<1x16x16x128xf32, #tpu.memory_space<vmem>>, vector<1x16x16x128xf32>,
    return
  }
  func.func @transform_0(%arg0: i32) -> (i32, i32, i32, i32) {
    %c0_i32 = arith.constant 0 : i32
    %c0_i32_0 = arith.constant 0 : i32
    %c0_i32_1 = arith.constant 0 : i32
    %c0_i32_2 = arith.constant 0 : i32
    return %arg0, %c0_i32, %c0_i32_0, %c0_i32_1 : i32, i32, i32, i32
  }
  func.func @transform_1(%arg0: i32) -> (i32, i32, i32, i32) {
    %c0_i32 = arith.constant 0 : i32
    %c0_i32_0 = arith.constant 0 : i32
    %c0_i32_1 = arith.constant 0 : i32
    %c0_i32_2 = arith.constant 0 : i32
    %c0_i32_3 = arith.constant 0 : i32
    return %c0_i32, %c0_i32_0, %c0_i32_1, %c0_i32_2 : i32, i32, i32, i32
  }
  func.func @transform_2(%arg0: i32) -> (i32, i32, i32, i32) {
    %c0_i32 = arith.constant 0 : i32
    %c0_i32_0 = arith.constant 0 : i32
    %c0_i32_1 = arith.constant 0 : i32
    %c0_i32_2 = arith.constant 0 : i32
    %c0_i32_3 = arith.constant 0 : i32
    return %c0_i32, %c0_i32_0, %c0_i32_1, %c0_i32_2 : i32, i32, i32, i32
  }
  func.func @transform_3(%arg0: i32) -> (i32, i32, i32, i32) {
    %c0_i32 = arith.constant 0 : i32
    %c0_i32_0 = arith.constant 0 : i32
    %c0_i32_1 = arith.constant 0 : i32
    %c0_i32_2 = arith.constant 0 : i32
    return %arg0, %c0_i32, %c0_i32_0, %c0_i32_1 : i32, i32, i32, i32
  }
}

</mosaic_0001>

<llo_original>
// kernel: tpu_custom_call.1
$region0: #{tpu_custom_call.1}
  #allocation0 [shape = 'u32[]', space=smem, size = 0x4, offset = 0x4, fixed_abs, tag = 'smem constant byte address 0x4 - core index']
  #allocation1 [shape = 'u32[144,128]{1,0:T(1,128)}', space=vmem, size = 0x12000, scoped, tag = 'internal scratch']
  #allocation2 [shape = 'f32[18,18,128]{2,1,0:T(8,128)}', space=vmem, size = 0x36000, scoped, tag = 'scratch operand']
  %s0 = inlined_call_operand.hbm [shape: f32[2,16,16,128], index: 0, kind: input, shape index: {}]
  %s1 = inlined_call_operand.hbm [shape: f32[3,3,128,128], index: 1, kind: input, shape index: {}]
  %s2 = inlined_call_operand.hbm [shape: f32[3,3,128,128], index: 2, kind: input, shape index: {}]
  %s3 = inlined_call_operand.hbm [shape: f32[2,16,16,128], index: 3, kind: output, shape index: {}]
  %s4 = sld [smem:[#allocation0]]
  $region57: #{tpu_custom_call.1} parent=0
    _
  %s6 = ssub.s32 1, %s4
  %s7 = scalar_select 0, %s6, %s4
  $region1: #{tpu_custom_call.1} parent=0
    #allocation3 [shape = 'u8[262144]{0}', space=vmem, size = 0x40000, scoped, tag = 'input window, operand 0']
    #allocation4 [shape = 's32[2]{0}', space=sflag, size = 0x8, scoped, tag = 'scoped memory for tpu_custom_call.1']
    #allocation5 [shape = 's32[2]{0}', space=sflag, size = 0x8, scoped, tag = 'scoped memory for tpu_custom_call.1']
    #allocation6 [shape = 'u8[589824]{0}', space=vmem, size = 0x90000, scoped, tag = 'input window, operand 1, single buffered']
    #allocation7 [shape = 's32[1]{0}', space=sflag, size = 0x4, scoped, tag = 'scoped memory for tpu_custom_call.1']
    #allocation8 [shape = 'u8[589824]{0}', space=vmem, size = 0x90000, scoped, tag = 'input window, operand 2, single buffered']
    #allocation9 [shape = 'u8[262144]{0}', space=vmem, size = 0x40000, scoped, tag = 'output window, operand 0']
    %8 = vsyncpa [#allocation4], 0
    %s9 = scalar_lea.sflag [#allocation4], 1
    %10 = vsyncpa %s9, 0
    %11 = vsyncpa [#allocation7], 0
    %12 = vsyncpa [#allocation5], 0
    %s13 = scalar_lea.sflag [#allocation5], 1
    %14 = vsyncpa %s13, 0
    loop: start=0, step=1, limit=4
    $region2: #{tpu_custom_call.1} parent=1 // loop_pre_header
      _
    $region3: #{tpu_custom_call.1} parent=1 // loop_header
      %s16 = sphi 0, %s20
      %p17 = scmp.ge.s32.totalorder %s16, 4
      %s26 = sphi 0, %s28
      %s29 = sphi 0, %s26
      %s30 = sphi 0, %s29
      %s46 = sphi 0, %s30
      %s50 = sphi 0, %s50
      %s52 = sphi 0, %s50
      %s53 = sphi 0, %s52
      %s67 = sphi 0, %s53
      %s71 = sphi 0, %s71
      %s73 = sphi 0, %s71
      %s74 = sphi 0, %s73
      %s88 = sphi 0, %s74
      %s94 = sphi 0, %s96
      %s97 = sphi 0, %s94
      %s98 = sphi 0, %s97
      %s114 = sphi 0, %s98
    $region4: #{tpu_custom_call.1} parent=1 // loop_header_branch
      %19 = sbr.rel (%p17) target = $region8
    $region5: #{tpu_custom_call.1} parent=1 // loop_body
      %s21 = ssub.s32 %s16, 1
      %s22 = ssub.s32 %s16, 2
      %s23 = sadd.s32 %s16, 1
      %s24 = ssub.s32 %s16, %s23
      %p25 = scmp.eq.s32.totalorder %s24, 0
      %s27 = sadd.s32 %s26, 1
      %s28 = scalar_select %p25, %s26, %s27
      %p31 = pneg %p25
      %p32 = scmp.eq.s32.totalorder %s16, 1
      %p33 = por %p31, %p32
      %p34 = scmp.ne.s32.totalorder %s26, %s29
      %p35 = scmp.eq.s32.totalorder %s16, 0
      %p36 = por %p34, %p35
      %p37 = scmp.ne.s32.totalorder %s26, %s29
      %p38 = scmp.eq.s32.totalorder %s21, 1
      %p39 = por %p37, %p38
      %p40 = scmp.ne.s32.totalorder %s29, %s30
      %p41 = scmp.eq.s32.totalorder %s21, 0
      %p42 = por %p40, %p41
      %p43 = scmp.ne.s32.totalorder %s29, %s30
      %p44 = scmp.eq.s32.totalorder %s22, 1
      %p45 = por %p43, %p44
      %p47 = scmp.ne.s32.totalorder %s30, %s46
      %p48 = scmp.eq.s32.totalorder %s22, 0
      %p49 = por %p47, %p48
      %s51 = sadd.s32 %s50, 1
      %p54 = scmp.eq.s32.totalorder %s16, 1
      %p55 = scmp.ne.s32.totalorder %s50, %s52
      %p56 = scmp.eq.s32.totalorder %s16, 0
      %p57 = por %p55, %p56
      %p58 = scmp.ne.s32.totalorder %s50, %s52
      %p59 = scmp.eq.s32.totalorder %s21, 1
      %p60 = por %p58, %p59
      %p61 = scmp.ne.s32.totalorder %s52, %s53
      %p62 = scmp.eq.s32.totalorder %s21, 0
      %p63 = por %p61, %p62
      %p64 = scmp.ne.s32.totalorder %s52, %s53
      %p65 = scmp.eq.s32.totalorder %s22, 1
      %p66 = por %p64, %p65
      %p68 = scmp.ne.s32.totalorder %s53, %s67
      %p69 = scmp.eq.s32.totalorder %s22, 0
      %p70 = por %p68, %p69
      %s72 = sadd.s32 %s71, 1
      %p75 = scmp.eq.s32.totalorder %s16, 1
      %p76 = scmp.ne.s32.totalorder %s71, %s73
      %p77 = scmp.eq.s32.totalorder %s16, 0
      %p78 = por %p76, %p77
      %p79 = scmp.ne.s32.totalorder %s71, %s73
      %p80 = scmp.eq.s32.totalorder %s21, 1
      %p81 = por %p79, %p80
      %p82 = scmp.ne.s32.totalorder %s73, %s74
      %p83 = scmp.eq.s32.totalorder %s21, 0
      %p84 = por %p82, %p83
      %p85 = scmp.ne.s32.totalorder %s73, %s74
      %p86 = scmp.eq.s32.totalorder %s22, 1
      %p87 = por %p85, %p86
      %p89 = scmp.ne.s32.totalorder %s74, %s88
      %p90 = scmp.eq.s32.totalorder %s22, 0
      %p91 = por %p89, %p90
      %s92 = ssub.s32 %s16, %s23
      %p93 = scmp.eq.s32.totalorder %s92, 0
      %s95 = sadd.s32 %s94, 1
      %s96 = scalar_select %p93, %s94, %s95
      %p99 = pneg %p93
      %p100 = scmp.eq.s32.totalorder %s16, 1
      %p101 = por %p99, %p100
      %p102 = scmp.ne.s32.totalorder %s94, %s97
      %p103 = scmp.eq.s32.totalorder %s16, 0
      %p104 = por %p102, %p103
      %p105 = scmp.ne.s32.totalorder %s94, %s97
      %p106 = scmp.eq.s32.totalorder %s21, 1
      %p107 = por %p105, %p106
      %p108 = scmp.ne.s32.totalorder %s97, %s98
      %p109 = scmp.eq.s32.totalorder %s21, 0
      %p110 = por %p108, %p109
      %p111 = scmp.ne.s32.totalorder %s97, %s98
      %p112 = scmp.eq.s32.totalorder %s22, 1
      %p113 = por %p111, %p112
      %p115 = scmp.ne.s32.totalorder %s98, %s114
      %p116 = scmp.eq.s32.totalorder %s22, 0
      %p117 = por %p115, %p116
      %p118 = scmp.le.s32.totalorder 1, %s16
      %p119 = scmp.lt.s32.totalorder %s16, 3
      %p120 = pnand %p118, %p119
      %p121 = pneg %p120
      // Predicated region
      $region9: #{tpu_custom_call.1} parent=5 // pred_check
        _
      $region10: #{tpu_custom_call.1} parent=5 // pred_check_branch
        %123 = sbr.rel (%p120) target = $region12
      $region11: #{tpu_custom_call.1} parent=5 // pred_region
        %s124 = ssub.s32 %s16, 1
        // Predicated region
        $region13: #{tpu_custom_call.1} parent=11 // pred_check
          %p125 = pneg %p63
        $region14: #{tpu_custom_call.1} parent=11 // pred_check_branch
          %127 = sbr.rel (%p125) target = $region16
        $region15: #{tpu_custom_call.1} parent=11 // pred_region
          %s129 = ssub.s32 18432, 18432
          %130 = vsyncadd [#allocation7], %s129
          %s131 = sshll.u32 [#allocation6], 4
          %s132 = int_to_ptr.vmem [resolvable:$true] %s131
          %137 = dma.hbm_to_vmem [thread:$0]  %s1, 18432, %s132, [#allocation7], 128, 128, 8
        $region16: #{tpu_custom_call.1} parent=11 // pred_fallthru
          _
        // Predicated region
        $region17: #{tpu_custom_call.1} parent=11 // pred_check
          %p138 = pneg %p84
        $region18: #{tpu_custom_call.1} parent=11 // pred_check_branch
          %140 = sbr.rel (%p138) target = $region20
        $region19: #{tpu_custom_call.1} parent=11 // pred_region
          %s142 = ssub.s32 18432, 18432
          %143 = vsyncadd [#allocation7], %s142
          %s144 = sshll.u32 [#allocation8], 4
          %s145 = int_to_ptr.vmem [resolvable:$true] %s144
          %150 = dma.hbm_to_vmem [thread:$0]  %s2, 18432, %s145, [#allocation7], 128, 128, 8
        $region20: #{tpu_custom_call.1} parent=11 // pred_fallthru
          _
      $region12: #{tpu_custom_call.1} parent=5 // pred_fallthru
        _
      %p151 = scmp.lt.s32.totalorder %s16, 2
      // Predicated region
      $region21: #{tpu_custom_call.1} parent=5 // pred_check
        %p152 = pneg %p151
      $region22: #{tpu_custom_call.1} parent=5 // pred_check_branch
        %154 = sbr.rel (%p152) target = $region24
      $region23: #{tpu_custom_call.1} parent=5 // pred_region
        // Predicated region
        $region25: #{tpu_custom_call.1} parent=23 // pred_check
          %p155 = pneg %p36
        $region26: #{tpu_custom_call.1} parent=23 // pred_check_branch
          %157 = sbr.rel (%p155) target = $region28
        $region27: #{tpu_custom_call.1} parent=23 // pred_region
          %s158 = sand.u32 %s26, 1
          %s159 = scalar_lea.sflag [#allocation4], %s158
          %s160 = sand.u32 %s26, 1
          %s161 = smul.addr %s160, 256
          %s162 = scalar_lea.vmem [#allocation3], %s161
          %s164 = ssub.s32 4096, 4096
          %165 = vsyncadd %s159, %s164
          %s166 = smul.addr %s16, 32
          %s167 = smul.addr %s166, 128
          %s168 = scalar_lea.hbm %s0, %s167
          %s169 = sshll.u32 %s162, 4
          %s170 = int_to_ptr.vmem [resolvable:$true] %s169
          %175 = dma.hbm_to_vmem [thread:$0]  %s168, 4096, %s170, %s159, 128, 128, 8
        $region28: #{tpu_custom_call.1} parent=23 // pred_fallthru
          _
      $region24: #{tpu_custom_call.1} parent=5 // pred_fallthru
        _
      %p176 = scmp.le.s32.totalorder 1, %s16
      %p177 = scmp.lt.s32.totalorder %s16, 3
      %p178 = pnand %p176, %p177
      %p179 = pneg %p178
      // Predicated region
      $region29: #{tpu_custom_call.1} parent=5 // pred_check
        _
      $region30: #{tpu_custom_call.1} parent=5 // pred_check_branch
        %181 = sbr.rel (%p178) target = $region32
      $region31: #{tpu_custom_call.1} parent=5 // pred_region
        %s182 = ssub.s32 %s16, 1
        %s183 = sand.u32 %s29, 1
        %s184 = scalar_lea.sflag [#allocation4], %s183
        %s185 = sand.u32 %s29, 1
        %s186 = smul.addr %s185, 256
        %s187 = scalar_lea.vmem [#allocation3], %s186
        // Predicated region
        $region33: #{tpu_custom_call.1} parent=31 // pred_check
          %p188 = pneg %p42
        $region34: #{tpu_custom_call.1} parent=31 // pred_check_branch
          %190 = sbr.rel (%p188) target = $region36
        $region35: #{tpu_custom_call.1} parent=31 // pred_region
          %191 = dma.done %s184, 4096
        $region36: #{tpu_custom_call.1} parent=31 // pred_fallthru
          _
        // Predicated region
        $region37: #{tpu_custom_call.1} parent=31 // pred_check
          %p192 = pneg %p63
        $region38: #{tpu_custom_call.1} parent=31 // pred_check_branch
          %194 = sbr.rel (%p192) target = $region40
        $region39: #{tpu_custom_call.1} parent=31 // pred_region
          %195 = dma.done [#allocation7], 18432
        $region40: #{tpu_custom_call.1} parent=31 // pred_fallthru
          _
        // Predicated region
        $region41: #{tpu_custom_call.1} parent=31 // pred_check
          %p196 = pneg %p84
        $region42: #{tpu_custom_call.1} parent=31 // pred_check_branch
          %198 = sbr.rel (%p196) target = $region44
        $region43: #{tpu_custom_call.1} parent=31 // pred_region
          %199 = dma.done [#allocation7], 18432
        $region44: #{tpu_custom_call.1} parent=31 // pred_fallthru
          _
        %s200 = sand.u32 %s29, 1
        %s201 = scalar_lea.sflag [#allocation4], %s200
        %s202 = sand.u32 %s29, 1
        %s203 = smul.addr %s202, 256
        %s204 = scalar_lea.vmem [#allocation3], %s203
        %p205 = pneg %p42
        %p206 = pneg %p39
        %p207 = pneg %p63
        %p208 = pneg %p60
        %p209 = pneg %p84
        %p210 = pneg %p81
        %p211 = pneg %p110
        %p212 = pneg %p107
        %s213 = sand.u32 %s97, 1
        %s214 = scalar_lea.sflag [#allocation5], %s213
        %s215 = sand.u32 %s97, 1
        %s216 = smul.addr %s215, 256
        %s217 = scalar_lea.vmem [#allocation9], %s216
        %v218 = vld [vmem:[%s187] sm:$0xff]
        %v219 = vld [vmem:[%s187 + $0x8] sm:$0xff]
        %v220 = vld [vmem:[%s187 + $0x10] sm:$0xff]
        %v221 = vld [vmem:[%s187 + $0x18] sm:$0xff]
        %v222 = vld [vmem:[%s187 + $0x20] sm:$0xff]
        %v223 = vld [vmem:[%s187 + $0x28] sm:$0xff]
        %v224 = vld [vmem:[%s187 + $0x30] sm:$0xff]
        %v225 = vld [vmem:[%s187 + $0x38] sm:$0xff]
        %v226 = vld [vmem:[%s187 + $0x40] sm:$0xff]
        %v227 = vld [vmem:[%s187 + $0x48] sm:$0xff]
        %v228 = vld [vmem:[%s187 + $0x50] sm:$0xff]
        %v229 = vld [vmem:[%s187 + $0x58] sm:$0xff]
        %v230 = vld [vmem:[%s187 + $0x60] sm:$0xff]
        %v231 = vld [vmem:[%s187 + $0x68] sm:$0xff]
        %v232 = vld [vmem:[%s187 + $0x70] sm:$0xff]
        %v233 = vld [vmem:[%s187 + $0x78] sm:$0xff]
        %v234 = vld [vmem:[%s187 + $0x80] sm:$0xff]
        %v235 = vld [vmem:[%s187 + $0x88] sm:$0xff]
        %v236 = vld [vmem:[%s187 + $0x90] sm:$0xff]
        %v237 = vld [vmem:[%s187 + $0x98] sm:$0xff]
        %v238 = vld [vmem:[%s187 + $0xa0] sm:$0xff]
        %v239 = vld [vmem:[%s187 + $0xa8] sm:$0xff]
        %v240 = vld [vmem:[%s187 + $0xb0] sm:$0xff]
        %v241 = vld [vmem:[%s187 + $0xb8] sm:$0xff]
        %v242 = vld [vmem:[%s187 + $0xc0] sm:$0xff]
        %v243 = vld [vmem:[%s187 + $0xc8] sm:$0xff]
        %v244 = vld [vmem:[%s187 + $0xd0] sm:$0xff]
        %v245 = vld [vmem:[%s187 + $0xd8] sm:$0xff]
        %v246 = vld [vmem:[%s187 + $0xe0] sm:$0xff]
        %v247 = vld [vmem:[%s187 + $0xe8] sm:$0xff]
        %v248 = vld [vmem:[%s187 + $0xf0] sm:$0xff]
        %v249 = vld [vmem:[%s187 + $0xf8] sm:$0xff]
        %s250 = scalar_lea.vmem [#allocation2], 24
        %251 = vst [vmem:[%s250 + $0x1] sm:$0xff] %v218
        %252 = vst [vmem:[%s250 + $0x9] sm:$0xff] %v219
        %253 = vst [vmem:[%s250 + $0x19] sm:$0xff] %v220
        %254 = vst [vmem:[%s250 + $0x21] sm:$0xff] %v221
        %255 = vst [vmem:[%s250 + $0x31] sm:$0xff] %v222
        %256 = vst [vmem:[%s250 + $0x39] sm:$0xff] %v223
        %257 = vst [vmem:[%s250 + $0x49] sm:$0xff] %v224
        %258 = vst [vmem:[%s250 + $0x51] sm:$0xff] %v225
        %259 = vst [vmem:[%s250 + $0x61] sm:$0xff] %v226
        %260 = vst [vmem:[%s250 + $0x69] sm:$0xff] %v227
        %261 = vst [vmem:[%s250 + $0x79] sm:$0xff] %v228
        %262 = vst [vmem:[%s250 + $0x81] sm:$0xff] %v229
        %263 = vst [vmem:[%s250 + $0x91] sm:$0xff] %v230
        %264 = vst [vmem:[%s250 + $0x99] sm:$0xff] %v231
        %265 = vst [vmem:[%s250 + $0xa9] sm:$0xff] %v232
        %266 = vst [vmem:[%s250 + $0xb1] sm:$0xff] %v233
        %267 = vst [vmem:[%s250 + $0xc1] sm:$0xff] %v234
        %268 = vst [vmem:[%s250 + $0xc9] sm:$0xff] %v235
        %269 = vst [vmem:[%s250 + $0xd9] sm:$0xff] %v236
        %270 = vst [vmem:[%s250 + $0xe1] sm:$0xff] %v237
        %271 = vst [vmem:[%s250 + $0xf1] sm:$0xff] %v238
        %272 = vst [vmem:[%s250 + $0xf9] sm:$0xff] %v239
        %273 = vst [vmem:[%s250 + $0x109] sm:$0xff] %v240
        %274 = vst [vmem:[%s250 + $0x111] sm:$0xff] %v241
        %275 = vst [vmem:[%s250 + $0x121] sm:$0xff] %v242
        %276 = vst [vmem:[%s250 + $0x129] sm:$0xff] %v243
        %277 = vst [vmem:[%s250 + $0x139] sm:$0xff] %v244
        %278 = vst [vmem:[%s250 + $0x141] sm:$0xff] %v245
        %279 = vst [vmem:[%s250 + $0x151] sm:$0xff] %v246
        %280 = vst [vmem:[%s250 + $0x159] sm:$0xff] %v247
        %281 = vst [vmem:[%s250 + $0x169] sm:$0xff] %v248
        %282 = vst [vmem:[%s250 + $0x171] sm:$0xff] %v249
        %s283 = scalar_lea.vmem [#allocation2], 48
        %v284 = vld [vmem:[%s283 + $0x1] sm:$0xff]
        %v285 = vld [vmem:[%s283 + $0x9] sm:$0xff]
        %286 = vst [vmem:[#allocation2 + $0x1] sm:$0xff] %v284
        %287 = vst [vmem:[#allocation2 + $0x9] sm:$0xff] %v285
        %s288 = scalar_lea.vmem [#allocation2], 360
        %v289 = vld [vmem:[%s288 + $0x1] sm:$0xff]
        %v290 = vld [vmem:[%s288 + $0x9] sm:$0xff]
        %s291 = scalar_lea.vmem [#allocation2], 408
        %292 = vst [vmem:[%s291 + $0x1] sm:$0xff] %v289
        %293 = vst [vmem:[%s291 + $0x9] sm:$0xff] %v290
        %v294 = vld [vmem:[#allocation2 + $0x2] sm:$0x1]
        %v295 = vld [vmem:[#allocation2 + $0x1a] sm:$0x1]
        %v296 = vld [vmem:[#allocation2 + $0x32] sm:$0x1]
        %v297 = vld [vmem:[#allocation2 + $0x4a] sm:$0x1]
        %v298 = vld [vmem:[#allocation2 + $0x62] sm:$0x1]
        %v299 = vld [vmem:[#allocation2 + $0x7a] sm:$0x1]
        %v300 = vld [vmem:[#allocation2 + $0x92] sm:$0x1]
        %v301 = vld [vmem:[#allocation2 + $0xaa] sm:$0x1]
        %v302 = vld [vmem:[#allocation2 + $0xc2] sm:$0x1]
        %v303 = vld [vmem:[#allocation2 + $0xda] sm:$0x1]
        %v304 = vld [vmem:[#allocation2 + $0xf2] sm:$0x1]
        %v305 = vld [vmem:[#allocation2 + $0x10a] sm:$0x1]
        %v306 = vld [vmem:[#allocation2 + $0x122] sm:$0x1]
        %v307 = vld [vmem:[#allocation2 + $0x13a] sm:$0x1]
        %v308 = vld [vmem:[#allocation2 + $0x152] sm:$0x1]
        %v309 = vld [vmem:[#allocation2 + $0x16a] sm:$0x1]
        %v310 = vld [vmem:[#allocation2 + $0x182] sm:$0x1]
        %v311 = vld [vmem:[#allocation2 + $0x19a] sm:$0x1]
        %312 = vst [vmem:[#allocation2] sm:$0x1] %v294
        %313 = vst [vmem:[#allocation2 + $0x18] sm:$0x1] %v295
        %314 = vst [vmem:[#allocation2 + $0x30] sm:$0x1] %v296
        %315 = vst [vmem:[#allocation2 + $0x48] sm:$0x1] %v297
        %316 = vst [vmem:[#allocation2 + $0x60] sm:$0x1] %v298
        %317 = vst [vmem:[#allocation2 + $0x78] sm:$0x1] %v299
        %318 = vst [vmem:[#allocation2 + $0x90] sm:$0x1] %v300
        %319 = vst [vmem:[#allocation2 + $0xa8] sm:$0x1] %v301
        %320 = vst [vmem:[#allocation2 + $0xc0] sm:$0x1] %v302
        %321 = vst [vmem:[#allocation2 + $0xd8] sm:$0x1] %v303
        %322 = vst [vmem:[#allocation2 + $0xf0] sm:$0x1] %v304
        %323 = vst [vmem:[#allocation2 + $0x108] sm:$0x1] %v305
        %324 = vst [vmem:[#allocation2 + $0x120] sm:$0x1] %v306
        %325 = vst [vmem:[#allocation2 + $0x138] sm:$0x1] %v307
        %326 = vst [vmem:[#allocation2 + $0x150] sm:$0x1] %v308
        %327 = vst [vmem:[#allocation2 + $0x168] sm:$0x1] %v309
        %328 = vst [vmem:[#allocation2 + $0x180] sm:$0x1] %v310
        %329 = vst [vmem:[#allocation2 + $0x198] sm:$0x1] %v311
        %v330 = vld [vmem:[#allocation2 + $0xf] sm:$0x1]
        %v331 = vld [vmem:[#allocation2 + $0x27] sm:$0x1]
        %v332 = vld [vmem:[#allocation2 + $0x3f] sm:$0x1]
        %v333 = vld [vmem:[#allocation2 + $0x57] sm:$0x1]
        %v334 = vld [vmem:[#allocation2 + $0x6f] sm:$0x1]
        %v335 = vld [vmem:[#allocation2 + $0x87] sm:$0x1]
        %v336 = vld [vmem:[#allocation2 + $0x9f] sm:$0x1]
        %v337 = vld [vmem:[#allocation2 + $0xb7] sm:$0x1]
        %v338 = vld [vmem:[#allocation2 + $0xcf] sm:$0x1]
        %v339 = vld [vmem:[#allocation2 + $0xe7] sm:$0x1]
        %v340 = vld [vmem:[#allocation2 + $0xff] sm:$0x1]
        %v341 = vld [vmem:[#allocation2 + $0x117] sm:$0x1]
        %v342 = vld [vmem:[#allocation2 + $0x12f] sm:$0x1]
        %v343 = vld [vmem:[#allocation2 + $0x147] sm:$0x1]
        %v344 = vld [vmem:[#allocation2 + $0x15f] sm:$0x1]
        %v345 = vld [vmem:[#allocation2 + $0x177] sm:$0x1]
        %v346 = vld [vmem:[#allocation2 + $0x18f] sm:$0x1]
        %v347 = vld [vmem:[#allocation2 + $0x1a7] sm:$0x1]
        %348 = vst [vmem:[#allocation2 + $0x11] sm:$0x1] %v330
        %349 = vst [vmem:[#allocation2 + $0x29] sm:$0x1] %v331
        %350 = vst [vmem:[#allocation2 + $0x41] sm:$0x1] %v332
        %351 = vst [vmem:[#allocation2 + $0x59] sm:$0x1] %v333
        %352 = vst [vmem:[#allocation2 + $0x71] sm:$0x1] %v334
        %353 = vst [vmem:[#allocation2 + $0x89] sm:$0x1] %v335
        %354 = vst [vmem:[#allocation2 + $0xa1] sm:$0x1] %v336
        %355 = vst [vmem:[#allocation2 + $0xb9] sm:$0x1] %v337
        %356 = vst [vmem:[#allocation2 + $0xd1] sm:$0x1] %v338
        %357 = vst [vmem:[#allocation2 + $0xe9] sm:$0x1] %v339
        %358 = vst [vmem:[#allocation2 + $0x101] sm:$0x1] %v340
        %359 = vst [vmem:[#allocation2 + $0x119] sm:$0x1] %v341
        %360 = vst [vmem:[#allocation2 + $0x131] sm:$0x1] %v342
        %361 = vst [vmem:[#allocation2 + $0x149] sm:$0x1] %v343
        %362 = vst [vmem:[#allocation2 + $0x161] sm:$0x1] %v344
        %363 = vst [vmem:[#allocation2 + $0x179] sm:$0x1] %v345
        %364 = vst [vmem:[#allocation2 + $0x191] sm:$0x1] %v346
        %365 = vst [vmem:[#allocation2 + $0x1a9] sm:$0x1] %v347
        %v366 = vld [vmem:[#allocation2] sm:$0xff]
        %v367 = vld [vmem:[#allocation2 + $0x8] sm:$0xff]
        %v368 = vld [vmem:[#allocation2 + $0x18] sm:$0xff]
        %v369 = vld [vmem:[#allocation2 + $0x20] sm:$0xff]
        %v370 = vld [vmem:[#allocation2 + $0x30] sm:$0xff]
        %v371 = vld [vmem:[#allocation2 + $0x38] sm:$0xff]
        %v372 = vld [vmem:[#allocation2 + $0x48] sm:$0xff]
        %v373 = vld [vmem:[#allocation2 + $0x50] sm:$0xff]
        %v374 = vld [vmem:[#allocation2 + $0x60] sm:$0xff]
        %v375 = vld [vmem:[#allocation2 + $0x68] sm:$0xff]
        %v376 = vld [vmem:[#allocation2 + $0x78] sm:$0xff]
        %v377 = vld [vmem:[#allocation2 + $0x80] sm:$0xff]
        %v378 = vld [vmem:[#allocation2 + $0x90] sm:$0xff]
        %v379 = vld [vmem:[#allocation2 + $0x98] sm:$0xff]
        %v380 = vld [vmem:[#allocation2 + $0xa8] sm:$0xff]
        %v381 = vld [vmem:[#allocation2 + $0xb0] sm:$0xff]
        %v382 = vld [vmem:[#allocation2 + $0xc0] sm:$0xff]
        %v383 = vld [vmem:[#allocation2 + $0xc8] sm:$0xff]
        %v384 = vld [vmem:[#allocation2 + $0xd8] sm:$0xff]
        %v385 = vld [vmem:[#allocation2 + $0xe0] sm:$0xff]
        %v386 = vld [vmem:[#allocation2 + $0xf0] sm:$0xff]
        %v387 = vld [vmem:[#allocation2 + $0xf8] sm:$0xff]
        %v388 = vld [vmem:[#allocation2 + $0x108] sm:$0xff]
        %v389 = vld [vmem:[#allocation2 + $0x110] sm:$0xff]
        %v390 = vld [vmem:[#allocation2 + $0x120] sm:$0xff]
        %v391 = vld [vmem:[#allocation2 + $0x128] sm:$0xff]
        %v392 = vld [vmem:[#allocation2 + $0x138] sm:$0xff]
        %v393 = vld [vmem:[#allocation2 + $0x140] sm:$0xff]
        %v394 = vld [vmem:[#allocation2 + $0x150] sm:$0xff]
        %v395 = vld [vmem:[#allocation2 + $0x158] sm:$0xff]
        %v396 = vld [vmem:[#allocation2 + $0x168] sm:$0xff]
        %v397 = vld [vmem:[#allocation2 + $0x170] sm:$0xff]
        %v398 = vld [vmem:[#allocation2 + $0x180] sm:$0xff]
        %v399 = vld [vmem:[#allocation2 + $0x188] sm:$0xff]
        %v400 = vld [vmem:[#allocation2 + $0x198] sm:$0xff]
        %v401 = vld [vmem:[#allocation2 + $0x1a0] sm:$0xff]
        %v402 = vld [vmem:[#allocation6] sm:$0xff]
        %v403 = vld [vmem:[#allocation6 + $0x8] sm:$0xff]
        %v404 = vld [vmem:[#allocation6 + $0x10] sm:$0xff]
        %v405 = vld [vmem:[#allocation6 + $0x18] sm:$0xff]
        %v406 = vld [vmem:[#allocation6 + $0x20] sm:$0xff]
        %v407 = vld [vmem:[#allocation6 + $0x28] sm:$0xff]
        %v408 = vld [vmem:[#allocation6 + $0x30] sm:$0xff]
        %v409 = vld [vmem:[#allocation6 + $0x38] sm:$0xff]
        %v410 = vld [vmem:[#allocation6 + $0x40] sm:$0xff]
        %v411 = vld [vmem:[#allocation6 + $0x48] sm:$0xff]
        %v412 = vld [vmem:[#allocation6 + $0x50] sm:$0xff]
        %v413 = vld [vmem:[#allocation6 + $0x58] sm:$0xff]
        %v414 = vld [vmem:[#allocation6 + $0x60] sm:$0xff]
        %v415 = vld [vmem:[#allocation6 + $0x68] sm:$0xff]
        %v416 = vld [vmem:[#allocation6 + $0x70] sm:$0xff]
        %v417 = vld [vmem:[#allocation6 + $0x78] sm:$0xff]
        %s418 = scalar_lea.vmem [#allocation6], 384
        %v419 = vld [vmem:[%s418] sm:$0xff]
        %v420 = vld [vmem:[%s418 + $0x8] sm:$0xff]
        %v421 = vld [vmem:[%s418 + $0x10] sm:$0xff]
        %v422 = vld [vmem:[%s418 + $0x18] sm:$0xff]
        %v423 = vld [vmem:[%s418 + $0x20] sm:$0xff]
        %v424 = vld [vmem:[%s418 + $0x28] sm:$0xff]
        %v425 = vld [vmem:[%s418 + $0x30] sm:$0xff]
        %v426 = vld [vmem:[%s418 + $0x38] sm:$0xff]
        %v427 = vld [vmem:[%s418 + $0x40] sm:$0xff]
        %v428 = vld [vmem:[%s418 + $0x48] sm:$0xff]
        %v429 = vld [vmem:[%s418 + $0x50] sm:$0xff]
        %v430 = vld [vmem:[%s418 + $0x58] sm:$0xff]
        %v431 = vld [vmem:[%s418 + $0x60] sm:$0xff]
        %v432 = vld [vmem:[%s418 + $0x68] sm:$0xff]
        %v433 = vld [vmem:[%s418 + $0x70] sm:$0xff]
        %v434 = vld [vmem:[%s418 + $0x78] sm:$0xff]
        %435 = vmatprep.subr.mxu0 0.0
        %436 = vmatpush1.msra.mxu0 %v419
        %437 = vmatprep.subr.mxu0 0.0
        %438 = vmatpush1.msra.mxu0 %v420
        %439 = vmatprep.subr.mxu0 0.0
        %440 = vmatpush1.msra.mxu0 %v421
        %441 = vmatprep.subr.mxu0 0.0
        %442 = vmatpush1.msra.mxu0 %v422
        %443 = vmatprep.subr.mxu0 0.0
        %444 = vmatpush1.msra.mxu0 %v423
        %445 = vmatprep.subr.mxu0 0.0
        %446 = vmatpush1.msra.mxu0 %v424
        %447 = vmatprep.subr.mxu0 0.0
        %448 = vmatpush1.msra.mxu0 %v425
        %449 = vmatprep.subr.mxu0 0.0
        %450 = vmatpush1.msra.mxu0 %v426
        %451 = vmatprep.subr.mxu0 0.0
        %452 = vmatpush1.msra.mxu0 %v427
        %453 = vmatprep.subr.mxu0 0.0
        %454 = vmatpush1.msra.mxu0 %v428
        %455 = vmatprep.subr.mxu0 0.0
        %456 = vmatpush1.msra.mxu0 %v429
        %457 = vmatprep.subr.mxu0 0.0
        %458 = vmatpush1.msra.mxu0 %v430
        %459 = vmatprep.subr.mxu0 0.0
        %460 = vmatpush1.msra.mxu0 %v431
        %461 = vmatprep.subr.mxu0 0.0
        %462 = vmatpush1.msra.mxu0 %v432
        %463 = vmatprep.subr.mxu0 0.0
        %464 = vmatpush1.msra.mxu0 %v433
        %465 = vmatprep.subr.mxu0 0.0
        %466 = vmatpush1.msra.mxu0 %v434
        %467 = vmatprep.subr.mxu0 0.0
        %468 = vmatpush1.msra.mxu0 0.0
        %469 = vmatprep.subr.mxu0 0.0
        %470 = vmatpush1.msra.mxu0 0.0
        %471 = vmatprep.subr.mxu0 0.0
        %472 = vmatpush1.msra.mxu0 0.0
        %473 = vmatprep.subr.mxu0 0.0
        %474 = vmatpush1.msra.mxu0 0.0
        %475 = vmatprep.subr.mxu0 0.0
        %476 = vmatpush1.msra.mxu0 0.0
        %477 = vmatprep.subr.mxu0 0.0
        %478 = vmatpush1.msra.mxu0 0.0
        %479 = vmatprep.subr.mxu0 0.0
        %480 = vmatpush1.msra.mxu0 0.0
        %481 = vmatprep.subr.mxu0 0.0
        %482 = vmatpush1.msra.mxu0 0.0
        %483 = vmatprep.subr.mxu0 0.0
        %484 = vmatpush1.msra.mxu0 0.0
        %485 = vmatprep.subr.mxu0 0.0
        %486 = vmatpush1.msra.mxu0 0.0
        %487 = vmatprep.subr.mxu0 0.0
        %488 = vmatpush1.msra.mxu0 0.0
        %489 = vmatprep.subr.mxu0 0.0
        %490 = vmatpush1.msra.mxu0 0.0
        %491 = vmatprep.subr.mxu0 0.0
        %492 = vmatpush1.msra.mxu0 0.0
        %493 = vmatprep.subr.mxu0 0.0
        %494 = vmatpush1.msra.mxu0 0.0
        %495 = vmatprep.subr.mxu0 0.0
        %496 = vmatpush1.msra.mxu0 0.0
        %497 = vmatprep.subr.mxu0 0.0
        %498 = vmatpush1.msra.mxu0 0.0
        %499 = vmatprep.mubr.f32.mxu0 0.0
        %500 = vmatmul.mubr.f32.gmra.mrb[0].mxu0 %v368
        %v501 = vpop.f32.mrb[0].mxu0
        %v502 = vadd.f32 0.0, %v501
        %v503 = vpop.f32.mrb[0].mxu0
        %504 = vmatprep.mubr.f32.mxu0 0.0
        %505 = vmatmul.mubr.f32.gmra.mrb[0].mxu0 %v369
        %v506 = vpop.f32.mrb[0].mxu0
        %v507 = vadd.f32 0.0, %v506
        %v508 = vpop.f32.mrb[0].mxu0
        %509 = vmatprep.mubr.f32.mxu0 0.0
        %510 = vmatmul.mubr.f32.gmra.mrb[0].mxu0 %v370
        %v511 = vpop.f32.mrb[0].mxu0
        %v512 = vadd.f32 0.0, %v511
        %v513 = vpop.f32.mrb[0].mxu0
        %514 = vmatprep.mubr.f32.mxu0 0.0
        %515 = vmatmul.mubr.f32.gmra.mrb[0].mxu0 %v371
        %v516 = vpop.f32.mrb[0].mxu0
        %v517 = vadd.f32 0.0, %v516
        %v518 = vpop.f32.mrb[0].mxu0
        %519 = vmatprep.mubr.f32.mxu0 0.0
        %520 = vmatmul.mubr.f32.gmra.mrb[0].mxu0 %v372
        %v521 = vpop.f32.mrb[0].mxu0
        %v522 = vadd.f32 0.0, %v521
        %v523 = vpop.f32.mrb[0].mxu0
        %524 = vmatprep.mubr.f32.mxu0 0.0
        %525 = vmatmul.mubr.f32.gmra.mrb[0].mxu0 %v373
        %v526 = vpop.f32.mrb[0].mxu0
        %v527 = vadd.f32 0.0, %v526
        %v528 = vpop.f32.mrb[0].mxu0
        %529 = vmatprep.mubr.f32.mxu0 0.0
        %530 = vmatmul.mubr.f32.gmra.mrb[0].mxu0 %v374
        %v531 = vpop.f32.mrb[0].mxu0
        %v532 = vadd.f32 0.0, %v531
        %v533 = vpop.f32.mrb[0].mxu0
        %534 = vmatprep.mubr.f32.mxu0 0.0
        %535 = vmatmul.mubr.f32.gmra.mrb[0].mxu0 %v375
        %v536 = vpop.f32.mrb[0].mxu0
        %v537 = vadd.f32 0.0, %v536
        %v538 = vpop.f32.mrb[0].mxu0
        %539 = vmatprep.mubr.f32.mxu0 0.0
        %540 = vmatmul.mubr.f32.gmra.mrb[0].mxu0 %v376
        %v541 = vpop.f32.mrb[0].mxu0
        %v542 = vadd.f32 0.0, %v541
        %v543 = vpop.f32.mrb[0].mxu0
        %544 = vmatprep.mubr.f32.mxu0 0.0
        %545 = vmatmul.mubr.f32.gmra.mrb[0].mxu0 %v377
        %v546 = vpop.f32.mrb[0].mxu0
        %v547 = vadd.f32 0.0, %v546
        %v548 = vpop.f32.mrb[0].mxu0
        %549 = vmatprep.mubr.f32.mxu0 0.0
        %550 = vmatmul.mubr.f32.gmra.mrb[0].mxu0 %v378
        %v551 = vpop.f32.mrb[0].mxu0
        %v552 = vadd.f32 0.0, %v551
        %v553 = vpop.f32.mrb[0].mxu0
        %554 = vmatprep.mubr.f32.mxu0 0.0
        %555 = vmatmul.mubr.f32.gmra.mrb[0].mxu0 %v379
        %v556 = vpop.f32.mrb[0].mxu0
        %v557 = vadd.f32 0.0, %v556
        %v558 = vpop.f32.mrb[0].mxu0
        %559 = vmatprep.mubr.f32.mxu0 0.0
        %560 = vmatmul.mubr.f32.gmra.mrb[0].mxu0 %v380
        %v561 = vpop.f32.mrb[0].mxu0
        %v562 = vadd.f32 0.0, %v561
        %v563 = vpop.f32.mrb[0].mxu0
        %564 = vmatprep.mubr.f32.mxu0 0.0
        %565 = vmatmul.mubr.f32.gmra.mrb[0].mxu0 %v381
        %v566 = vpop.f32.mrb[0].mxu0
        %v567 = vadd.f32 0.0, %v566
        %v568 = vpop.f32.mrb[0].mxu0
        %569 = vmatprep.mubr.f32.mxu0 0.0
        %570 = vmatmul.mubr.f32.gmra.mrb[0].mxu0 %v382
        %v571 = vpop.f32.mrb[0].mxu0
        %v572 = vadd.f32 0.0, %v571
        %v573 = vpop.f32.mrb[0].mxu0
        %574 = vmatprep.mubr.f32.mxu0 0.0
        %575 = vmatmul.mubr.f32.gmra.mrb[0].mxu0 %v383
        %v576 = vpop.f32.mrb[0].mxu0
        %v577 = vadd.f32 0.0, %v576
        %v578 = vpop.f32.mrb[0].mxu0
        %579 = vmatprep.mubr.f32.mxu0 0.0
        %580 = vmatmul.mubr.f32.gmra.mrb[0].mxu0 %v384
        %v581 = vpop.f32.mrb[0].mxu0
        %v582 = vadd.f32 0.0, %v581
        %v583 = vpop.f32.mrb[0].mxu0
        %584 = vmatprep.mubr.f32.mxu0 0.0
        %585 = vmatmul.mubr.f32.gmra.mrb[0].mxu0 %v385
        %v586 = vpop.f32.mrb[0].mxu0
        %v587 = vadd.f32 0.0, %v586
        %v588 = vpop.f32.mrb[0].mxu0
        %589 = vmatprep.mubr.f32.mxu0 0.0
        %590 = vmatmul.mubr.f32.gmra.mrb[0].mxu0 %v386
        %v591 = vpop.f32.mrb[0].mxu0
        %v592 = vadd.f32 0.0, %v591
        %v593 = vpop.f32.mrb[0].mxu0
        %594 = vmatprep.mubr.f32.mxu0 0.0
        %595 = vmatmul.mubr.f32.gmra.mrb[0].mxu0 %v387
        %v596 = vpop.f32.mrb[0].mxu0
        %v597 = vadd.f32 0.0, %v596
        %v598 = vpop.f32.mrb[0].mxu0
        %599 = vmatprep.mubr.f32.mxu0 0.0
        %600 = vmatmul.mubr.f32.gmra.mrb[0].mxu0 %v388
        %v601 = vpop.f32.mrb[0].mxu0
        %v602 = vadd.f32 0.0, %v601
        %v603 = vpop.f32.mrb[0].mxu0
        %604 = vmatprep.mubr.f32.mxu0 0.0
        %605 = vmatmul.mubr.f32.gmra.mrb[0].mxu0 %v389
        %v606 = vpop.f32.mrb[0].mxu0
        %v607 = vadd.f32 0.0, %v606
        %v608 = vpop.f32.mrb[0].mxu0
        %609 = vmatprep.mubr.f32.mxu0 0.0
        %610 = vmatmul.mubr.f32.gmra.mrb[0].mxu0 %v390
        %v611 = vpop.f32.mrb[0].mxu0
        %v612 = vadd.f32 0.0, %v611
        %v613 = vpop.f32.mrb[0].mxu0
        %614 = vmatprep.mubr.f32.mxu0 0.0
        %615 = vmatmul.mubr.f32.gmra.mrb[0].mxu0 %v391
        %v616 = vpop.f32.mrb[0].mxu0
        %v617 = vadd.f32 0.0, %v616
        %v618 = vpop.f32.mrb[0].mxu0
        %619 = vmatprep.mubr.f32.mxu0 0.0
        %620 = vmatmul.mubr.f32.gmra.mrb[0].mxu0 %v392
        %v621 = vpop.f32.mrb[0].mxu0
        %v622 = vadd.f32 0.0, %v621
        %v623 = vpop.f32.mrb[0].mxu0
        %624 = vmatprep.mubr.f32.mxu0 0.0
        %625 = vmatmul.mubr.f32.gmra.mrb[0].mxu0 %v393
        %v626 = vpop.f32.mrb[0].mxu0
        %v627 = vadd.f32 0.0, %v626
        %v628 = vpop.f32.mrb[0].mxu0
        %629 = vmatprep.mubr.f32.mxu0 0.0
        %630 = vmatmul.mubr.f32.gmra.mrb[0].mxu0 %v394
        %v631 = vpop.f32.mrb[0].mxu0
        %v632 = vadd.f32 0.0, %v631
        %v633 = vpop.f32.mrb[0].mxu0
        %634 = vmatprep.mubr.f32.mxu0 0.0
        %635 = vmatmul.mubr.f32.gmra.mrb[0].mxu0 %v395
        %v636 = vpop.f32.mrb[0].mxu0
        %v637 = vadd.f32 0.0, %v636
        %v638 = vpop.f32.mrb[0].mxu0
        %639 = vmatprep.mubr.f32.mxu0 0.0
        %640 = vmatmul.mubr.f32.gmra.mrb[0].mxu0 %v396
        %v641 = vpop.f32.mrb[0].mxu0
        %v642 = vadd.f32 0.0, %v641
        %v643 = vpop.f32.mrb[0].mxu0
        %644 = vmatprep.mubr.f32.mxu0 0.0
        %645 = vmatmul.mubr.f32.gmra.mrb[0].mxu0 %v397
        %v646 = vpop.f32.mrb[0].mxu0
        %v647 = vadd.f32 0.0, %v646
        %v648 = vpop.f32.mrb[0].mxu0
        %649 = vmatprep.mubr.f32.mxu0 0.0
        %650 = vmatmul.mubr.f32.gmra.mrb[0].mxu0 %v398
        %v651 = vpop.f32.mrb[0].mxu0
        %v652 = vadd.f32 0.0, %v651
        %v653 = vpop.f32.mrb[0].mxu0
        %654 = vmatprep.mubr.f32.mxu0 0.0
        %655 = vmatmul.mubr.f32.gmra.mrb[0].mxu0 %v399
        %v656 = vpop.f32.mrb[0].mxu0
        %v657 = vadd.f32 0.0, %v656
        %v658 = vpop.f32.mrb[0].mxu0
        %659 = vdwg.mxu0
        %660 = vmatprep.subr.mxu0 0.0
        %661 = vmatpush1.msra.mxu0 %v402
        %662 = vmatprep.subr.mxu0 0.0
        %663 = vmatpush1.msra.mxu0 %v403
        %664 = vmatprep.subr.mxu0 0.0
        %665 = vmatpush1.msra.mxu0 %v404
        %666 = vmatprep.subr.mxu0 0.0
        %667 = vmatpush1.msra.mxu0 %v405
        %668 = vmatprep.subr.mxu0 0.0
        %669 = vmatpush1.msra.mxu0 %v406
        %670 = vmatprep.subr.mxu0 0.0
        %671 = vmatpush1.msra.mxu0 %v407
        %672 = vmatprep.subr.mxu0 0.0
        %673 = vmatpush1.msra.mxu0 %v408
        %674 = vmatprep.subr.mxu0 0.0
        %675 = vmatpush1.msra.mxu0 %v409
        %676 = vmatprep.subr.mxu0 0.0
        %677 = vmatpush1.msra.mxu0 %v410
        %678 = vmatprep.subr.mxu0 0.0
        %679 = vmatpush1.msra.mxu0 %v411
        %680 = vmatprep.subr.mxu0 0.0
        %681 = vmatpush1.msra.mxu0 %v412
        %682 = vmatprep.subr.mxu0 0.0
        %683 = vmatpush1.msra.mxu0 %v413
        %684 = vmatprep.subr.mxu0 0.0
        %685 = vmatpush1.msra.mxu0 %v414
        %686 = vmatprep.subr.mxu0 0.0
        %687 = vmatpush1.msra.mxu0 %v415
        %688 = vmatprep.subr.mxu0 0.0
        %689 = vmatpush1.msra.mxu0 %v416
        %690 = vmatprep.subr.mxu0 0.0
        %691 = vmatpush1.msra.mxu0 %v417
        %692 = vmatprep.subr.mxu0 0.0
        %693 = vmatpush1.msra.mxu0 0.0
        %694 = vmatprep.subr.mxu0 0.0
        %695 = vmatpush1.msra.mxu0 0.0
        %696 = vmatprep.subr.mxu0 0.0
        %697 = vmatpush1.msra.mxu0 0.0
        %698 = vmatprep.subr.mxu0 0.0
        %699 = vmatpush1.msra.mxu0 0.0
        %700 = vmatprep.subr.mxu0 0.0
        %701 = vmatpush1.msra.mxu0 0.0
        %702 = vmatprep.subr.mxu0 0.0
        %703 = vmatpush1.msra.mxu0 0.0
        %704 = vmatprep.subr.mxu0 0.0
        %705 = vmatpush1.msra.mxu0 0.0
        %706 = vmatprep.subr.mxu0 0.0
        %707 = vmatpush1.msra.mxu0 0.0
        %708 = vmatprep.subr.mxu0 0.0
        %709 = vmatpush1.msra.mxu0 0.0
        %710 = vmatprep.subr.mxu0 0.0
        %711 = vmatpush1.msra.mxu0 0.0
        %712 = vmatprep.subr.mxu0 0.0
        %713 = vmatpush1.msra.mxu0 0.0
        %714 = vmatprep.subr.mxu0 0.0
        %715 = vmatpush1.msra.mxu0 0.0
        %716 = vmatprep.subr.mxu0 0.0
        %717 = vmatpush1.msra.mxu0 0.0
        %718 = vmatprep.subr.mxu0 0.0
        %719 = vmatpush1.msra.mxu0 0.0
        %720 = vmatprep.subr.mxu0 0.0
        %721 = vmatpush1.msra.mxu0 0.0
        %722 = vmatprep.subr.mxu0 0.0
        %723 = vmatpush1.msra.mxu0 0.0
        %724 = vmatprep.mubr.f32.mxu0 0.0
        %725 = vmatmul.mubr.f32.gmra.mrb[0].mxu0 %v366
        %v726 = vpop.f32.mrb[0].mxu0
        %v727 = vadd.f32 %v502, %v726
        %v728 = vpop.f32.mrb[0].mxu0
        %729 = vmatprep.mubr.f32.mxu0 0.0
        %730 = vmatmul.mubr.f32.gmra.mrb[0].mxu0 %v367
        %v731 = vpop.f32.mrb[0].mxu0
        %v732 = vadd.f32 %v507, %v731
        %v733 = vpop.f32.mrb[0].mxu0
        %734 = vmatprep.mubr.f32.mxu0 0.0
        %735 = vmatmul.mubr.f32.gmra.mrb[0].mxu0 %v368
        %v736 = vpop.f32.mrb[0].mxu0
        %v737 = vadd.f32 %v512, %v736
        %v738 = vpop.f32.mrb[0].mxu0
        %739 = vmatprep.mubr.f32.mxu0 0.0
        %740 = vmatmul.mubr.f32.gmra.mrb[0].mxu0 %v369
        %v741 = vpop.f32.mrb[0].mxu0
        %v742 = vadd.f32 %v517, %v741
        %v743 = vpop.f32.mrb[0].mxu0
        %744 = vmatprep.mubr.f32.mxu0 0.0
        %745 = vmatmul.mubr.f32.gmra.mrb[0].mxu0 %v370
        %v746 = vpop.f32.mrb[0].mxu0
        %v747 = vadd.f32 %v522, %v746
        %v748 = vpop.f32.mrb[0].mxu0
        %749 = vmatprep.mubr.f32.mxu0 0.0
        %750 = vmatmul.mubr.f32.gmra.mrb[0].mxu0 %v371
        %v751 = vpop.f32.mrb[0].mxu0
        %v752 = vadd.f32 %v527, %v751
        %v753 = vpop.f32.mrb[0].mxu0
        %754 = vmatprep.mubr.f32.mxu0 0.0
        %755 = vmatmul.mubr.f32.gmra.mrb[0].mxu0 %v372
        %v756 = vpop.f32.mrb[0].mxu0
        %v757 = vadd.f32 %v532, %v756
        %v758 = vpop.f32.mrb[0].mxu0
        %759 = vmatprep.mubr.f32.mxu0 0.0
        %760 = vmatmul.mubr.f32.gmra.mrb[0].mxu0 %v373
        %v761 = vpop.f32.mrb[0].mxu0
        %v762 = vadd.f32 %v537, %v761
        %v763 = vpop.f32.mrb[0].mxu0
        %764 = vmatprep.mubr.f32.mxu0 0.0
        %765 = vmatmul.mubr.f32.gmra.mrb[0].mxu0 %v374
        %v766 = vpop.f32.mrb[0].mxu0
        %v767 = vadd.f32 %v542, %v766
        %v768 = vpop.f32.mrb[0].mxu0
        %769 = vmatprep.mubr.f32.mxu0 0.0
        %770 = vmatmul.mubr.f32.gmra.mrb[0].mxu0 %v375
        %v771 = vpop.f32.mrb[0].mxu0
        %v772 = vadd.f32 %v547, %v771
        %v773 = vpop.f32.mrb[0].mxu0
        %774 = vmatprep.mubr.f32.mxu0 0.0
        %775 = vmatmul.mubr.f32.gmra.mrb[0].mxu0 %v376
        %v776 = vpop.f32.mrb[0].mxu0
        %v777 = vadd.f32 %v552, %v776
        %v778 = vpop.f32.mrb[0].mxu0
        %779 = vmatprep.mubr.f32.mxu0 0.0
        %780 = vmatmul.mubr.f32.gmra.mrb[0].mxu0 %v377
        %v781 = vpop.f32.mrb[0].mxu0
        %v782 = vadd.f32 %v557, %v781
        %v783 = vpop.f32.mrb[0].mxu0
        %784 = vmatprep.mubr.f32.mxu0 0.0
        %785 = vmatmul.mubr.f32.gmra.mrb[0].mxu0 %v378
        %v786 = vpop.f32.mrb[0].mxu0
        %v787 = vadd.f32 %v562, %v786
        %v788 = vpop.f32.mrb[0].mxu0
        %789 = vmatprep.mubr.f32.mxu0 0.0
        %790 = vmatmul.mubr.f32.gmra.mrb[0].mxu0 %v379
        %v791 = vpop.f32.mrb[0].mxu0
        %v792 = vadd.f32 %v567, %v791
        %v793 = vpop.f32.mrb[0].mxu0
        %794 = vmatprep.mubr.f32.mxu0 0.0
        %795 = vmatmul.mubr.f32.gmra.mrb[0].mxu0 %v380
        %v796 = vpop.f32.mrb[0].mxu0
        %v797 = vadd.f32 %v572, %v796
        %v798 = vpop.f32.mrb[0].mxu0
        %799 = vmatprep.mubr.f32.mxu0 0.0
        %800 = vmatmul.mubr.f32.gmra.mrb[0].mxu0 %v381
        %v801 = vpop.f32.mrb[0].mxu0
        %v802 = vadd.f32 %v577, %v801
        %v803 = vpop.f32.mrb[0].mxu0
        %804 = vmatprep.mubr.f32.mxu0 0.0
        %805 = vmatmul.mubr.f32.gmra.mrb[0].mxu0 %v382
        %v806 = vpop.f32.mrb[0].mxu0
        %v807 = vadd.f32 %v582, %v806
        %v808 = vpop.f32.mrb[0].mxu0
        %809 = vmatprep.mubr.f32.mxu0 0.0
        %810 = vmatmul.mubr.f32.gmra.mrb[0].mxu0 %v383
        %v811 = vpop.f32.mrb[0].mxu0
        %v812 = vadd.f32 %v587, %v811
        %v813 = vpop.f32.mrb[0].mxu0
        %814 = vmatprep.mubr.f32.mxu0 0.0
        %815 = vmatmul.mubr.f32.gmra.mrb[0].mxu0 %v384
        %v816 = vpop.f32.mrb[0].mxu0
        %v817 = vadd.f32 %v592, %v816
        %v818 = vpop.f32.mrb[0].mxu0
        %819 = vmatprep.mubr.f32.mxu0 0.0
        %820 = vmatmul.mubr.f32.gmra.mrb[0].mxu0 %v385
        %v821 = vpop.f32.mrb[0].mxu0
        %v822 = vadd.f32 %v597, %v821
        %v823 = vpop.f32.mrb[0].mxu0
        %824 = vmatprep.mubr.f32.mxu0 0.0
        %825 = vmatmul.mubr.f32.gmra.mrb[0].mxu0 %v386
        %v826 = vpop.f32.mrb[0].mxu0
        %v827 = vadd.f32 %v602, %v826
        %v828 = vpop.f32.mrb[0].mxu0
        %829 = vmatprep.mubr.f32.mxu0 0.0
        %830 = vmatmul.mubr.f32.gmra.mrb[0].mxu0 %v387
        %v831 = vpop.f32.mrb[0].mxu0
        %v832 = vadd.f32 %v607, %v831
        %v833 = vpop.f32.mrb[0].mxu0
        %834 = vmatprep.mubr.f32.mxu0 0.0
        %835 = vmatmul.mubr.f32.gmra.mrb[0].mxu0 %v388
        %v836 = vpop.f32.mrb[0].mxu0
        %v837 = vadd.f32 %v612, %v836
        %v838 = vpop.f32.mrb[0].mxu0
        %839 = vmatprep.mubr.f32.mxu0 0.0
        %840 = vmatmul.mubr.f32.gmra.mrb[0].mxu0 %v389
        %v841 = vpop.f32.mrb[0].mxu0
        %v842 = vadd.f32 %v617, %v841
        %v843 = vpop.f32.mrb[0].mxu0
        %844 = vmatprep.mubr.f32.mxu0 0.0
        %845 = vmatmul.mubr.f32.gmra.mrb[0].mxu0 %v390
        %v846 = vpop.f32.mrb[0].mxu0
        %v847 = vadd.f32 %v622, %v846
        %v848 = vpop.f32.mrb[0].mxu0
        %849 = vmatprep.mubr.f32.mxu0 0.0
        %850 = vmatmul.mubr.f32.gmra.mrb[0].mxu0 %v391
        %v851 = vpop.f32.mrb[0].mxu0
        %v852 = vadd.f32 %v627, %v851
        %v853 = vpop.f32.mrb[0].mxu0
        %854 = vmatprep.mubr.f32.mxu0 0.0
        %855 = vmatmul.mubr.f32.gmra.mrb[0].mxu0 %v392
        %v856 = vpop.f32.mrb[0].mxu0
        %v857 = vadd.f32 %v632, %v856
        %v858 = vpop.f32.mrb[0].mxu0
        %859 = vmatprep.mubr.f32.mxu0 0.0
        %860 = vmatmul.mubr.f32.gmra.mrb[0].mxu0 %v393
        %v861 = vpop.f32.mrb[0].mxu0
        %v862 = vadd.f32 %v637, %v861
        %v863 = vpop.f32.mrb[0].mxu0
        %864 = vmatprep.mubr.f32.mxu0 0.0
        %865 = vmatmul.mubr.f32.gmra.mrb[0].mxu0 %v394
        %v866 = vpop.f32.mrb[0].mxu0
        %v867 = vadd.f32 %v642, %v866
        %v868 = vpop.f32.mrb[0].mxu0
        %869 = vmatprep.mubr.f32.mxu0 0.0
        %870 = vmatmul.mubr.f32.gmra.mrb[0].mxu0 %v395
        %v871 = vpop.f32.mrb[0].mxu0
        %v872 = vadd.f32 %v647, %v871
        %v873 = vpop.f32.mrb[0].mxu0
        %874 = vmatprep.mubr.f32.mxu0 0.0
        %875 = vmatmul.mubr.f32.gmra.mrb[0].mxu0 %v396
        %v876 = vpop.f32.mrb[0].mxu0
        %v877 = vadd.f32 %v652, %v876
        %v878 = vpop.f32.mrb[0].mxu0
        %879 = vmatprep.mubr.f32.mxu0 0.0
        %880 = vmatmul.mubr.f32.gmra.mrb[0].mxu0 %v397
        %v881 = vpop.f32.mrb[0].mxu0
        %v882 = vadd.f32 %v657, %v881
        %v883 = vpop.f32.mrb[0].mxu0
        %884 = vdwg.mxu0
        %s885 = scalar_lea.vmem [#allocation6], 768
        %v886 = vld [vmem:[%s885] sm:$0xff]
        %v887 = vld [vmem:[%s885 + $0x8] sm:$0xff]
        %v888 = vld [vmem:[%s885 + $0x10] sm:$0xff]
        %v889 = vld [vmem:[%s885 + $0x18] sm:$0xff]
        %v890 = vld [vmem:[%s885 + $0x20] sm:$0xff]
        %v891 = vld [vmem:[%s885 + $0x28] sm:$0xff]
        %v892 = vld [vmem:[%s885 + $0x30] sm:$0xff]
        %v893 = vld [vmem:[%s885 + $0x38] sm:$0xff]
        %v894 = vld [vmem:[%s885 + $0x40] sm:$0xff]
        %v895 = vld [vmem:[%s885 + $0x48] sm:$0xff]
        %v896 = vld [vmem:[%s885 + $0x50] sm:$0xff]
        %v897 = vld [vmem:[%s885 + $0x58] sm:$0xff]
        %v898 = vld [vmem:[%s885 + $0x60] sm:$0xff]
        %v899 = vld [vmem:[%s885 + $0x68] sm:$0xff]
        %v900 = vld [vmem:[%s885 + $0x70] sm:$0xff]
        %v901 = vld [vmem:[%s885 + $0x78] sm:$0xff]
        %902 = vmatprep.subr.mxu0 0.0
        %903 = vmatpush1.msra.mxu0 %v886
        %904 = vmatprep.subr.mxu0 0.0
        %905 = vmatpush1.msra.mxu0 %v887
        %906 = vmatprep.subr.mxu0 0.0
        %907 = vmatpush1.msra.mxu0 %v888
        %908 = vmatprep.subr.mxu0 0.0
        %909 = vmatpush1.msra.mxu0 %v889
        %910 = vmatprep.subr.mxu0 0.0
        %911 = vmatpush1.msra.mxu0 %v890
        %912 = vmatprep.subr.mxu0 0.0
        %913 = vmatpush1.msra.mxu0 %v891
        %914 = vmatprep.subr.mxu0 0.0
        %915 = vmatpush1.msra.mxu0 %v892
        %916 = vmatprep.subr.mxu0 0.0
        %917 = vmatpush1.msra.mxu0 %v893
        %918 = vmatprep.subr.mxu0 0.0
        %919 = vmatpush1.msra.mxu0 %v894
        %920 = vmatprep.subr.mxu0 0.0
        %921 = vmatpush1.msra.mxu0 %v895
        %922 = vmatprep.subr.mxu0 0.0
        %923 = vmatpush1.msra.mxu0 %v896
        %924 = vmatprep.subr.mxu0 0.0
        %925 = vmatpush1.msra.mxu0 %v897
        %926 = vmatprep.subr.mxu0 0.0
        %927 = vmatpush1.msra.mxu0 %v898
        %928 = vmatprep.subr.mxu0 0.0
        %929 = vmatpush1.msra.mxu0 %v899
        %930 = vmatprep.subr.mxu0 0.0
        %931 = vmatpush1.msra.mxu0 %v900
        %932 = vmatprep.subr.mxu0 0.0
        %933 = vmatpush1.msra.mxu0 %v901
        %934 = vmatprep.subr.mxu0 0.0
        %935 = vmatpush1.msra.mxu0 0.0
        %936 = vmatprep.subr.mxu0 0.0
        %937 = vmatpush1.msra.mxu0 0.0
        %938 = vmatprep.subr.mxu0 0.0
        %939 = vmatpush1.msra.mxu0 0.0
        %940 = vmatprep.subr.mxu0 0.0
        %941 = vmatpush1.msra.mxu0 0.0
        %942 = vmatprep.subr.mxu0 0.0
        %943 = vmatpush1.msra.mxu0 0.0
        %944 = vmatprep.subr.mxu0 0.0
        %945 = vmatpush1.msra.mxu0 0.0
        %946 = vmatprep.subr.mxu0 0.0
        %947 = vmatpush1.msra.mxu0 0.0
        %948 = vmatprep.subr.mxu0 0.0
        %949 = vmatpush1.msra.mxu0 0.0
        %950 = vmatprep.subr.mxu0 0.0
        %951 = vmatpush1.msra.mxu0 0.0
        %952 = vmatprep.subr.mxu0 0.0
        %953 = vmatpush1.msra.mxu0 0.0
        %954 = vmatprep.subr.mxu0 0.0
        %955 = vmatpush1.msra.mxu0 0.0
        %956 = vmatprep.subr.mxu0 0.0
        %957 = vmatpush1.msra.mxu0 0.0
        %958 = vmatprep.subr.mxu0 0.0
        %959 = vmatpush1.msra.mxu0 0.0
        %960 = vmatprep.subr.mxu0 0.0
        %961 = vmatpush1.msra.mxu0 0.0
        %962 = vmatprep.subr.mxu0 0.0
        %963 = vmatpush1.msra.mxu0 0.0
        %964 = vmatprep.subr.mxu0 0.0
        %965 = vmatpush1.msra.mxu0 0.0
        %966 = vmatprep.mubr.f32.mxu0 0.0
        %967 = vmatmul.mubr.f32.gmra.mrb[0].mxu0 %v370
        %v968 = vpop.f32.mrb[0].mxu0
        %v969 = vadd.f32 0.0, %v968
        %v970 = vpop.f32.mrb[0].mxu0
        %971 = vmatprep.mubr.f32.mxu0 0.0
        %972 = vmatmul.mubr.f32.gmra.mrb[0].mxu0 %v371
        %v973 = vpop.f32.mrb[0].mxu0
        %v974 = vadd.f32 0.0, %v973
        %v975 = vpop.f32.mrb[0].mxu0
        %976 = vmatprep.mubr.f32.mxu0 0.0
        %977 = vmatmul.mubr.f32.gmra.mrb[0].mxu0 %v372
        %v978 = vpop.f32.mrb[0].mxu0
        %v979 = vadd.f32 0.0, %v978
        %v980 = vpop.f32.mrb[0].mxu0
        %981 = vmatprep.mubr.f32.mxu0 0.0
        %982 = vmatmul.mubr.f32.gmra.mrb[0].mxu0 %v373
        %v983 = vpop.f32.mrb[0].mxu0
        %v984 = vadd.f32 0.0, %v983
        %v985 = vpop.f32.mrb[0].mxu0
        %986 = vmatprep.mubr.f32.mxu0 0.0
        %987 = vmatmul.mubr.f32.gmra.mrb[0].mxu0 %v374
        %v988 = vpop.f32.mrb[0].mxu0
        %v989 = vadd.f32 0.0, %v988
        %v990 = vpop.f32.mrb[0].mxu0
        %991 = vmatprep.mubr.f32.mxu0 0.0
        %992 = vmatmul.mubr.f32.gmra.mrb[0].mxu0 %v375
        %v993 = vpop.f32.mrb[0].mxu0
        %v994 = vadd.f32 0.0, %v993
        %v995 = vpop.f32.mrb[0].mxu0
        %996 = vmatprep.mubr.f32.mxu0 0.0
        %997 = vmatmul.mubr.f32.gmra.mrb[0].mxu0 %v376
        %v998 = vpop.f32.mrb[0].mxu0
        %v999 = vadd.f32 0.0, %v998
        %v1000 = vpop.f32.mrb[0].mxu0
        %1001 = vmatprep.mubr.f32.mxu0 0.0
        %1002 = vmatmul.mubr.f32.gmra.mrb[0].mxu0 %v377
        %v1003 = vpop.f32.mrb[0].mxu0
        %v1004 = vadd.f32 0.0, %v1003
        %v1005 = vpop.f32.mrb[0].mxu0
        %1006 = vmatprep.mubr.f32.mxu0 0.0
        %1007 = vmatmul.mubr.f32.gmra.mrb[0].mxu0 %v378
        %v1008 = vpop.f32.mrb[0].mxu0
        %v1009 = vadd.f32 0.0, %v1008
        %v1010 = vpop.f32.mrb[0].mxu0
        %1011 = vmatprep.mubr.f32.mxu0 0.0
        %1012 = vmatmul.mubr.f32.gmra.mrb[0].mxu0 %v379
        %v1013 = vpop.f32.mrb[0].mxu0
        %v1014 = vadd.f32 0.0, %v1013
        %v1015 = vpop.f32.mrb[0].mxu0
        %1016 = vmatprep.mubr.f32.mxu0 0.0
        %1017 = vmatmul.mubr.f32.gmra.mrb[0].mxu0 %v380
        %v1018 = vpop.f32.mrb[0].mxu0
        %v1019 = vadd.f32 0.0, %v1018
        %v1020 = vpop.f32.mrb[0].mxu0
        %1021 = vmatprep.mubr.f32.mxu0 0.0
        %1022 = vmatmul.mubr.f32.gmra.mrb[0].mxu0 %v381
        %v1023 = vpop.f32.mrb[0].mxu0
        %v1024 = vadd.f32 0.0, %v1023
        %v1025 = vpop.f32.mrb[0].mxu0
        %1026 = vmatprep.mubr.f32.mxu0 0.0
        %1027 = vmatmul.mubr.f32.gmra.mrb[0].mxu0 %v382
        %v1028 = vpop.f32.mrb[0].mxu0
        %v1029 = vadd.f32 0.0, %v1028
        %v1030 = vpop.f32.mrb[0].mxu0
        %1031 = vmatprep.mubr.f32.mxu0 0.0
        %1032 = vmatmul.mubr.f32.gmra.mrb[0].mxu0 %v383
        %v1033 = vpop.f32.mrb[0].mxu0
        %v1034 = vadd.f32 0.0, %v1033
        %v1035 = vpop.f32.mrb[0].mxu0
        %1036 = vmatprep.mubr.f32.mxu0 0.0
        %1037 = vmatmul.mubr.f32.gmra.mrb[0].mxu0 %v384
        %v1038 = vpop.f32.mrb[0].mxu0
        %v1039 = vadd.f32 0.0, %v1038
        %v1040 = vpop.f32.mrb[0].mxu0
        %1041 = vmatprep.mubr.f32.mxu0 0.0
        %1042 = vmatmul.mubr.f32.gmra.mrb[0].mxu0 %v385
        %v1043 = vpop.f32.mrb[0].mxu0
        %v1044 = vadd.f32 0.0, %v1043
        %v1045 = vpop.f32.mrb[0].mxu0
        %1046 = vmatprep.mubr.f32.mxu0 0.0
        %1047 = vmatmul.mubr.f32.gmra.mrb[0].mxu0 %v386
        %v1048 = vpop.f32.mrb[0].mxu0
        %v1049 = vadd.f32 0.0, %v1048
        %v1050 = vpop.f32.mrb[0].mxu0
        %1051 = vmatprep.mubr.f32.mxu0 0.0
        %1052 = vmatmul.mubr.f32.gmra.mrb[0].mxu0 %v387
        %v1053 = vpop.f32.mrb[0].mxu0
        %v1054 = vadd.f32 0.0, %v1053
        %v1055 = vpop.f32.mrb[0].mxu0
        %1056 = vmatprep.mubr.f32.mxu0 0.0
        %1057 = vmatmul.mubr.f32.gmra.mrb[0].mxu0 %v388
        %v1058 = vpop.f32.mrb[0].mxu0
        %v1059 = vadd.f32 0.0, %v1058
        %v1060 = vpop.f32.mrb[0].mxu0
        %1061 = vmatprep.mubr.f32.mxu0 0.0
        %1062 = vmatmul.mubr.f32.gmra.mrb[0].mxu0 %v389
        %v1063 = vpop.f32.mrb[0].mxu0
        %v1064 = vadd.f32 0.0, %v1063
        %v1065 = vpop.f32.mrb[0].mxu0
        %1066 = vmatprep.mubr.f32.mxu0 0.0
        %1067 = vmatmul.mubr.f32.gmra.mrb[0].mxu0 %v390
        %v1068 = vpop.f32.mrb[0].mxu0
        %v1069 = vadd.f32 0.0, %v1068
        %v1070 = vpop.f32.mrb[0].mxu0
        %1071 = vmatprep.mubr.f32.mxu0 0.0
        %1072 = vmatmul.mubr.f32.gmra.mrb[0].mxu0 %v391
        %v1073 = vpop.f32.mrb[0].mxu0
        %v1074 = vadd.f32 0.0, %v1073
        %v1075 = vpop.f32.mrb[0].mxu0
        %1076 = vmatprep.mubr.f32.mxu0 0.0
        %1077 = vmatmul.mubr.f32.gmra.mrb[0].mxu0 %v392
        %v1078 = vpop.f32.mrb[0].mxu0
        %v1079 = vadd.f32 0.0, %v1078
        %v1080 = vpop.f32.mrb[0].mxu0
        %1081 = vmatprep.mubr.f32.mxu0 0.0
        %1082 = vmatmul.mubr.f32.gmra.mrb[0].mxu0 %v393
        %v1083 = vpop.f32.mrb[0].mxu0
        %v1084 = vadd.f32 0.0, %v1083
        %v1085 = vpop.f32.mrb[0].mxu0
        %1086 = vmatprep.mubr.f32.mxu0 0.0
        %1087 = vmatmul.mubr.f32.gmra.mrb[0].mxu0 %v394
        %v1088 = vpop.f32.mrb[0].mxu0
        %v1089 = vadd.f32 0.0, %v1088
        %v1090 = vpop.f32.mrb[0].mxu0
        %1091 = vmatprep.mubr.f32.mxu0 0.0
        %1092 = vmatmul.mubr.f32.gmra.mrb[0].mxu0 %v395
        %v1093 = vpop.f32.mrb[0].mxu0
        %v1094 = vadd.f32 0.0, %v1093
        %v1095 = vpop.f32.mrb[0].mxu0
        %1096 = vmatprep.mubr.f32.mxu0 0.0
        %1097 = vmatmul.mubr.f32.gmra.mrb[0].mxu0 %v396
        %v1098 = vpop.f32.mrb[0].mxu0
        %v1099 = vadd.f32 0.0, %v1098
        %v1100 = vpop.f32.mrb[0].mxu0
        %1101 = vmatprep.mubr.f32.mxu0 0.0
        %1102 = vmatmul.mubr.f32.gmra.mrb[0].mxu0 %v397
        %v1103 = vpop.f32.mrb[0].mxu0
        %v1104 = vadd.f32 0.0, %v1103
        %v1105 = vpop.f32.mrb[0].mxu0
        %1106 = vmatprep.mubr.f32.mxu0 0.0
        %1107 = vmatmul.mubr.f32.gmra.mrb[0].mxu0 %v398
        %v1108 = vpop.f32.mrb[0].mxu0
        %v1109 = vadd.f32 0.0, %v1108
        %v1110 = vpop.f32.mrb[0].mxu0
        %1111 = vmatprep.mubr.f32.mxu0 0.0
        %1112 = vmatmul.mubr.f32.gmra.mrb[0].mxu0 %v399
        %v1113 = vpop.f32.mrb[0].mxu0
        %v1114 = vadd.f32 0.0, %v1113
        %v1115 = vpop.f32.mrb[0].mxu0
        %1116 = vmatprep.mubr.f32.mxu0 0.0
        %1117 = vmatmul.mubr.f32.gmra.mrb[0].mxu0 %v400
        %v1118 = vpop.f32.mrb[0].mxu0
        %v1119 = vadd.f32 0.0, %v1118
        %v1120 = vpop.f32.mrb[0].mxu0
        %1121 = vmatprep.mubr.f32.mxu0 0.0
        %1122 = vmatmul.mubr.f32.gmra.mrb[0].mxu0 %v401
        %v1123 = vpop.f32.mrb[0].mxu0
        %v1124 = vadd.f32 0.0, %v1123
        %v1125 = vpop.f32.mrb[0].mxu0
        %1126 = vdwg.mxu0
        %v1127 = vadd.f32 %v727, %v969
        %v1128 = vadd.f32 %v732, %v974
        %v1129 = vadd.f32 %v737, %v979
        %v1130 = vadd.f32 %v742, %v984
        %v1131 = vadd.f32 %v747, %v989
        %v1132 = vadd.f32 %v752, %v994
        %v1133 = vadd.f32 %v757, %v999
        %v1134 = vadd.f32 %v762, %v1004
        %v1135 = vadd.f32 %v767, %v1009
        %v1136 = vadd.f32 %v772, %v1014
        %v1137 = vadd.f32 %v777, %v1019
        %v1138 = vadd.f32 %v782, %v1024
        %v1139 = vadd.f32 %v787, %v1029
        %v1140 = vadd.f32 %v792, %v1034
        %v1141 = vadd.f32 %v797, %v1039
        %v1142 = vadd.f32 %v802, %v1044
        %v1143 = vadd.f32 %v807, %v1049
        %v1144 = vadd.f32 %v812, %v1054
        %v1145 = vadd.f32 %v817, %v1059
        %v1146 = vadd.f32 %v822, %v1064
        %v1147 = vadd.f32 %v827, %v1069
        %v1148 = vadd.f32 %v832, %v1074
        %v1149 = vadd.f32 %v837, %v1079
        %v1150 = vadd.f32 %v842, %v1084
        %v1151 = vadd.f32 %v847, %v1089
        %v1152 = vadd.f32 %v852, %v1094
        %v1153 = vadd.f32 %v857, %v1099
        %v1154 = vadd.f32 %v862, %v1104
        %v1155 = vadd.f32 %v867, %v1109
        %v1156 = vadd.f32 %v872, %v1114
        %v1157 = vadd.f32 %v877, %v1119
        %v1158 = vadd.f32 %v882, %v1124
        %v1159 = vld [vmem:[#allocation2 + $0x1] sm:$0xff]
        %v1160 = vld [vmem:[#allocation2 + $0x9] sm:$0xff]
        %v1161 = vld [vmem:[#allocation2 + $0x19] sm:$0xff]
        %v1162 = vld [vmem:[#allocation2 + $0x21] sm:$0xff]
        %v1163 = vld [vmem:[#allocation2 + $0x31] sm:$0xff]
        %v1164 = vld [vmem:[#allocation2 + $0x39] sm:$0xff]
        %v1165 = vld [vmem:[#allocation2 + $0x49] sm:$0xff]
        %v1166 = vld [vmem:[#allocation2 + $0x51] sm:$0xff]
        %v1167 = vld [vmem:[#allocation2 + $0x61] sm:$0xff]
        %v1168 = vld [vmem:[#allocation2 + $0x69] sm:$0xff]
        %v1169 = vld [vmem:[#allocation2 + $0x79] sm:$0xff]
        %v1170 = vld [vmem:[#allocation2 + $0x81] sm:$0xff]
        %v1171 = vld [vmem:[#allocation2 + $0x91] sm:$0xff]
        %v1172 = vld [vmem:[#allocation2 + $0x99] sm:$0xff]
        %v1173 = vld [vmem:[#allocation2 + $0xa9] sm:$0xff]
        %v1174 = vld [vmem:[#allocation2 + $0xb1] sm:$0xff]
        %v1175 = vld [vmem:[#allocation2 + $0xc1] sm:$0xff]
        %v1176 = vld [vmem:[#allocation2 + $0xc9] sm:$0xff]
        %v1177 = vld [vmem:[#allocation2 + $0xd9] sm:$0xff]
        %v1178 = vld [vmem:[#allocation2 + $0xe1] sm:$0xff]
        %v1179 = vld [vmem:[#allocation2 + $0xf1] sm:$0xff]
        %v1180 = vld [vmem:[#allocation2 + $0xf9] sm:$0xff]
        %v1181 = vld [vmem:[#allocation2 + $0x109] sm:$0xff]
        %v1182 = vld [vmem:[#allocation2 + $0x111] sm:$0xff]
        %v1183 = vld [vmem:[#allocation2 + $0x121] sm:$0xff]
        %v1184 = vld [vmem:[#allocation2 + $0x129] sm:$0xff]
        %v1185 = vld [vmem:[#allocation2 + $0x139] sm:$0xff]
        %v1186 = vld [vmem:[#allocation2 + $0x141] sm:$0xff]
        %v1187 = vld [vmem:[#allocation2 + $0x151] sm:$0xff]
        %v1188 = vld [vmem:[#allocation2 + $0x159] sm:$0xff]
        %v1189 = vld [vmem:[#allocation2 + $0x169] sm:$0xff]
        %v1190 = vld [vmem:[#allocation2 + $0x171] sm:$0xff]
        %v1191 = vld [vmem:[#allocation2 + $0x181] sm:$0xff]
        %v1192 = vld [vmem:[#allocation2 + $0x189] sm:$0xff]
        %v1193 = vld [vmem:[#allocation2 + $0x199] sm:$0xff]
        %v1194 = vld [vmem:[#allocation2 + $0x1a1] sm:$0xff]
        %s1195 = scalar_lea.vmem [#allocation6], 128
        %v1196 = vld [vmem:[%s1195] sm:$0xff]
        %v1197 = vld [vmem:[%s1195 + $0x8] sm:$0xff]
        %v1198 = vld [vmem:[%s1195 + $0x10] sm:$0xff]
        %v1199 = vld [vmem:[%s1195 + $0x18] sm:$0xff]
        %v1200 = vld [vmem:[%s1195 + $0x20] sm:$0xff]
        %v1201 = vld [vmem:[%s1195 + $0x28] sm:$0xff]
        %v1202 = vld [vmem:[%s1195 + $0x30] sm:$0xff]
        %v1203 = vld [vmem:[%s1195 + $0x38] sm:$0xff]
        %v1204 = vld [vmem:[%s1195 + $0x40] sm:$0xff]
        %v1205 = vld [vmem:[%s1195 + $0x48] sm:$0xff]
        %v1206 = vld [vmem:[%s1195 + $0x50] sm:$0xff]
        %v1207 = vld [vmem:[%s1195 + $0x58] sm:$0xff]
        %v1208 = vld [vmem:[%s1195 + $0x60] sm:$0xff]
        %v1209 = vld [vmem:[%s1195 + $0x68] sm:$0xff]
        %v1210 = vld [vmem:[%s1195 + $0x70] sm:$0xff]
        %v1211 = vld [vmem:[%s1195 + $0x78] sm:$0xff]
        %1212 = vmatprep.subr.mxu0 0.0
        %1213 = vmatpush1.msra.mxu0 %v1196
        %1214 = vmatprep.subr.mxu0 0.0
        %1215 = vmatpush1.msra.mxu0 %v1197
        %1216 = vmatprep.subr.mxu0 0.0
        %1217 = vmatpush1.msra.mxu0 %v1198
        %1218 = vmatprep.subr.mxu0 0.0
        %1219 = vmatpush1.msra.mxu0 %v1199
        %1220 = vmatprep.subr.mxu0 0.0
        %1221 = vmatpush1.msra.mxu0 %v1200
        %1222 = vmatprep.subr.mxu0 0.0
        %1223 = vmatpush1.msra.mxu0 %v1201
        %1224 = vmatprep.subr.mxu0 0.0
        %1225 = vmatpush1.msra.mxu0 %v1202
        %1226 = vmatprep.subr.mxu0 0.0
        %1227 = vmatpush1.msra.mxu0 %v1203
        %1228 = vmatprep.subr.mxu0 0.0
        %1229 = vmatpush1.msra.mxu0 %v1204
        %1230 = vmatprep.subr.mxu0 0.0
        %1231 = vmatpush1.msra.mxu0 %v1205
        %1232 = vmatprep.subr.mxu0 0.0
        %1233 = vmatpush1.msra.mxu0 %v1206
        %1234 = vmatprep.subr.mxu0 0.0
        %1235 = vmatpush1.msra.mxu0 %v1207
        %1236 = vmatprep.subr.mxu0 0.0
        %1237 = vmatpush1.msra.mxu0 %v1208
        %1238 = vmatprep.subr.mxu0 0.0
        %1239 = vmatpush1.msra.mxu0 %v1209
        %1240 = vmatprep.subr.mxu0 0.0
        %1241 = vmatpush1.msra.mxu0 %v1210
        %1242 = vmatprep.subr.mxu0 0.0
        %1243 = vmatpush1.msra.mxu0 %v1211
        %1244 = vmatprep.subr.mxu0 0.0
        %1245 = vmatpush1.msra.mxu0 0.0
        %1246 = vmatprep.subr.mxu0 0.0
        %1247 = vmatpush1.msra.mxu0 0.0
        %1248 = vmatprep.subr.mxu0 0.0
        %1249 = vmatpush1.msra.mxu0 0.0
        %1250 = vmatprep.subr.mxu0 0.0
        %1251 = vmatpush1.msra.mxu0 0.0
        %1252 = vmatprep.subr.mxu0 0.0
        %1253 = vmatpush1.msra.mxu0 0.0
        %1254 = vmatprep.subr.mxu0 0.0
        %1255 = vmatpush1.msra.mxu0 0.0
        %1256 = vmatprep.subr.mxu0 0.0
        %1257 = vmatpush1.msra.mxu0 0.0
        %1258 = vmatprep.subr.mxu0 0.0
        %1259 = vmatpush1.msra.mxu0 0.0
        %1260 = vmatprep.subr.mxu0 0.0
        %1261 = vmatpush1.msra.mxu0 0.0
        %1262 = vmatprep.subr.mxu0 0.0
        %1263 = vmatpush1.msra.mxu0 0.0
        %1264 = vmatprep.subr.mxu0 0.0
        %1265 = vmatpush1.msra.mxu0 0.0
        %1266 = vmatprep.subr.mxu0 0.0
        %1267 = vmatpush1.msra.mxu0 0.0
        %1268 = vmatprep.subr.mxu0 0.0
        %1269 = vmatpush1.msra.mxu0 0.0
        %1270 = vmatprep.subr.mxu0 0.0
        %1271 = vmatpush1.msra.mxu0 0.0
        %1272 = vmatprep.subr.mxu0 0.0
        %1273 = vmatpush1.msra.mxu0 0.0
        %1274 = vmatprep.subr.mxu0 0.0
        %1275 = vmatpush1.msra.mxu0 0.0
        %1276 = vmatprep.mubr.f32.mxu0 0.0
        %1277 = vmatmul.mubr.f32.gmra.mrb[0].mxu0 %v1159
        %v1278 = vpop.f32.mrb[0].mxu0
        %v1279 = vadd.f32 0.0, %v1278
        %v1280 = vpop.f32.mrb[0].mxu0
        %1281 = vmatprep.mubr.f32.mxu0 0.0
        %1282 = vmatmul.mubr.f32.gmra.mrb[0].mxu0 %v1160
        %v1283 = vpop.f32.mrb[0].mxu0
        %v1284 = vadd.f32 0.0, %v1283
        %v1285 = vpop.f32.mrb[0].mxu0
        %1286 = vmatprep.mubr.f32.mxu0 0.0
        %1287 = vmatmul.mubr.f32.gmra.mrb[0].mxu0 %v1161
        %v1288 = vpop.f32.mrb[0].mxu0
        %v1289 = vadd.f32 0.0, %v1288
        %v1290 = vpop.f32.mrb[0].mxu0
        %1291 = vmatprep.mubr.f32.mxu0 0.0
        %1292 = vmatmul.mubr.f32.gmra.mrb[0].mxu0 %v1162
        %v1293 = vpop.f32.mrb[0].mxu0
        %v1294 = vadd.f32 0.0, %v1293
        %v1295 = vpop.f32.mrb[0].mxu0
        %1296 = vmatprep.mubr.f32.mxu0 0.0
        %1297 = vmatmul.mubr.f32.gmra.mrb[0].mxu0 %v1163
        %v1298 = vpop.f32.mrb[0].mxu0
        %v1299 = vadd.f32 0.0, %v1298
        %v1300 = vpop.f32.mrb[0].mxu0
        %1301 = vmatprep.mubr.f32.mxu0 0.0
        %1302 = vmatmul.mubr.f32.gmra.mrb[0].mxu0 %v1164
        %v1303 = vpop.f32.mrb[0].mxu0
        %v1304 = vadd.f32 0.0, %v1303
        %v1305 = vpop.f32.mrb[0].mxu0
        %1306 = vmatprep.mubr.f32.mxu0 0.0
        %1307 = vmatmul.mubr.f32.gmra.mrb[0].mxu0 %v1165
        %v1308 = vpop.f32.mrb[0].mxu0
        %v1309 = vadd.f32 0.0, %v1308
        %v1310 = vpop.f32.mrb[0].mxu0
        %1311 = vmatprep.mubr.f32.mxu0 0.0
        %1312 = vmatmul.mubr.f32.gmra.mrb[0].mxu0 %v1166
        %v1313 = vpop.f32.mrb[0].mxu0
        %v1314 = vadd.f32 0.0, %v1313
        %v1315 = vpop.f32.mrb[0].mxu0
        %1316 = vmatprep.mubr.f32.mxu0 0.0
        %1317 = vmatmul.mubr.f32.gmra.mrb[0].mxu0 %v1167
        %v1318 = vpop.f32.mrb[0].mxu0
        %v1319 = vadd.f32 0.0, %v1318
        %v1320 = vpop.f32.mrb[0].mxu0
        %1321 = vmatprep.mubr.f32.mxu0 0.0
        %1322 = vmatmul.mubr.f32.gmra.mrb[0].mxu0 %v1168
        %v1323 = vpop.f32.mrb[0].mxu0
        %v1324 = vadd.f32 0.0, %v1323
        %v1325 = vpop.f32.mrb[0].mxu0
        %1326 = vmatprep.mubr.f32.mxu0 0.0
        %1327 = vmatmul.mubr.f32.gmra.mrb[0].mxu0 %v1169
        %v1328 = vpop.f32.mrb[0].mxu0
        %v1329 = vadd.f32 0.0, %v1328
        %v1330 = vpop.f32.mrb[0].mxu0
        %1331 = vmatprep.mubr.f32.mxu0 0.0
        %1332 = vmatmul.mubr.f32.gmra.mrb[0].mxu0 %v1170
        %v1333 = vpop.f32.mrb[0].mxu0
        %v1334 = vadd.f32 0.0, %v1333
        %v1335 = vpop.f32.mrb[0].mxu0
        %1336 = vmatprep.mubr.f32.mxu0 0.0
        %1337 = vmatmul.mubr.f32.gmra.mrb[0].mxu0 %v1171
        %v1338 = vpop.f32.mrb[0].mxu0
        %v1339 = vadd.f32 0.0, %v1338
        %v1340 = vpop.f32.mrb[0].mxu0
        %1341 = vmatprep.mubr.f32.mxu0 0.0
        %1342 = vmatmul.mubr.f32.gmra.mrb[0].mxu0 %v1172
        %v1343 = vpop.f32.mrb[0].mxu0
        %v1344 = vadd.f32 0.0, %v1343
        %v1345 = vpop.f32.mrb[0].mxu0
        %1346 = vmatprep.mubr.f32.mxu0 0.0
        %1347 = vmatmul.mubr.f32.gmra.mrb[0].mxu0 %v1173
        %v1348 = vpop.f32.mrb[0].mxu0
        %v1349 = vadd.f32 0.0, %v1348
        %v1350 = vpop.f32.mrb[0].mxu0
        %1351 = vmatprep.mubr.f32.mxu0 0.0
        %1352 = vmatmul.mubr.f32.gmra.mrb[0].mxu0 %v1174
        %v1353 = vpop.f32.mrb[0].mxu0
        %v1354 = vadd.f32 0.0, %v1353
        %v1355 = vpop.f32.mrb[0].mxu0
        %1356 = vmatprep.mubr.f32.mxu0 0.0
        %1357 = vmatmul.mubr.f32.gmra.mrb[0].mxu0 %v1175
        %v1358 = vpop.f32.mrb[0].mxu0
        %v1359 = vadd.f32 0.0, %v1358
        %v1360 = vpop.f32.mrb[0].mxu0
        %1361 = vmatprep.mubr.f32.mxu0 0.0
        %1362 = vmatmul.mubr.f32.gmra.mrb[0].mxu0 %v1176
        %v1363 = vpop.f32.mrb[0].mxu0
        %v1364 = vadd.f32 0.0, %v1363
        %v1365 = vpop.f32.mrb[0].mxu0
        %1366 = vmatprep.mubr.f32.mxu0 0.0
        %1367 = vmatmul.mubr.f32.gmra.mrb[0].mxu0 %v1177
        %v1368 = vpop.f32.mrb[0].mxu0
        %v1369 = vadd.f32 0.0, %v1368
        %v1370 = vpop.f32.mrb[0].mxu0
        %1371 = vmatprep.mubr.f32.mxu0 0.0
        %1372 = vmatmul.mubr.f32.gmra.mrb[0].mxu0 %v1178
        %v1373 = vpop.f32.mrb[0].mxu0
        %v1374 = vadd.f32 0.0, %v1373
        %v1375 = vpop.f32.mrb[0].mxu0
        %1376 = vmatprep.mubr.f32.mxu0 0.0
        %1377 = vmatmul.mubr.f32.gmra.mrb[0].mxu0 %v1179
        %v1378 = vpop.f32.mrb[0].mxu0
        %v1379 = vadd.f32 0.0, %v1378
        %v1380 = vpop.f32.mrb[0].mxu0
        %1381 = vmatprep.mubr.f32.mxu0 0.0
        %1382 = vmatmul.mubr.f32.gmra.mrb[0].mxu0 %v1180
        %v1383 = vpop.f32.mrb[0].mxu0
        %v1384 = vadd.f32 0.0, %v1383
        %v1385 = vpop.f32.mrb[0].mxu0
        %1386 = vmatprep.mubr.f32.mxu0 0.0
        %1387 = vmatmul.mubr.f32.gmra.mrb[0].mxu0 %v1181
        %v1388 = vpop.f32.mrb[0].mxu0
        %v1389 = vadd.f32 0.0, %v1388
        %v1390 = vpop.f32.mrb[0].mxu0
        %1391 = vmatprep.mubr.f32.mxu0 0.0
        %1392 = vmatmul.mubr.f32.gmra.mrb[0].mxu0 %v1182
        %v1393 = vpop.f32.mrb[0].mxu0
        %v1394 = vadd.f32 0.0, %v1393
        %v1395 = vpop.f32.mrb[0].mxu0
        %1396 = vmatprep.mubr.f32.mxu0 0.0
        %1397 = vmatmul.mubr.f32.gmra.mrb[0].mxu0 %v1183
        %v1398 = vpop.f32.mrb[0].mxu0
        %v1399 = vadd.f32 0.0, %v1398
        %v1400 = vpop.f32.mrb[0].mxu0
        %1401 = vmatprep.mubr.f32.mxu0 0.0
        %1402 = vmatmul.mubr.f32.gmra.mrb[0].mxu0 %v1184
        %v1403 = vpop.f32.mrb[0].mxu0
        %v1404 = vadd.f32 0.0, %v1403
        %v1405 = vpop.f32.mrb[0].mxu0
        %1406 = vmatprep.mubr.f32.mxu0 0.0
        %1407 = vmatmul.mubr.f32.gmra.mrb[0].mxu0 %v1185
        %v1408 = vpop.f32.mrb[0].mxu0
        %v1409 = vadd.f32 0.0, %v1408
        %v1410 = vpop.f32.mrb[0].mxu0
        %1411 = vmatprep.mubr.f32.mxu0 0.0
        %1412 = vmatmul.mubr.f32.gmra.mrb[0].mxu0 %v1186
        %v1413 = vpop.f32.mrb[0].mxu0
        %v1414 = vadd.f32 0.0, %v1413
        %v1415 = vpop.f32.mrb[0].mxu0
        %1416 = vmatprep.mubr.f32.mxu0 0.0
        %1417 = vmatmul.mubr.f32.gmra.mrb[0].mxu0 %v1187
        %v1418 = vpop.f32.mrb[0].mxu0
        %v1419 = vadd.f32 0.0, %v1418
        %v1420 = vpop.f32.mrb[0].mxu0
        %1421 = vmatprep.mubr.f32.mxu0 0.0
        %1422 = vmatmul.mubr.f32.gmra.mrb[0].mxu0 %v1188
        %v1423 = vpop.f32.mrb[0].mxu0
        %v1424 = vadd.f32 0.0, %v1423
        %v1425 = vpop.f32.mrb[0].mxu0
        %1426 = vmatprep.mubr.f32.mxu0 0.0
        %1427 = vmatmul.mubr.f32.gmra.mrb[0].mxu0 %v1189
        %v1428 = vpop.f32.mrb[0].mxu0
        %v1429 = vadd.f32 0.0, %v1428
        %v1430 = vpop.f32.mrb[0].mxu0
        %1431 = vmatprep.mubr.f32.mxu0 0.0
        %1432 = vmatmul.mubr.f32.gmra.mrb[0].mxu0 %v1190
        %v1433 = vpop.f32.mrb[0].mxu0
        %v1434 = vadd.f32 0.0, %v1433
        %v1435 = vpop.f32.mrb[0].mxu0
        %1436 = vdwg.mxu0
        %v1437 = vadd.f32 %v1127, %v1279
        %v1438 = vadd.f32 %v1128, %v1284
        %v1439 = vadd.f32 %v1129, %v1289
        %v1440 = vadd.f32 %v1130, %v1294
        %v1441 = vadd.f32 %v1131, %v1299
        %v1442 = vadd.f32 %v1132, %v1304
        %v1443 = vadd.f32 %v1133, %v1309
        %v1444 = vadd.f32 %v1134, %v1314
        %v1445 = vadd.f32 %v1135, %v1319
        %v1446 = vadd.f32 %v1136, %v1324
        %v1447 = vadd.f32 %v1137, %v1329
        %v1448 = vadd.f32 %v1138, %v1334
        %v1449 = vadd.f32 %v1139, %v1339
        %v1450 = vadd.f32 %v1140, %v1344
        %v1451 = vadd.f32 %v1141, %v1349
        %v1452 = vadd.f32 %v1142, %v1354
        %v1453 = vadd.f32 %v1143, %v1359
        %v1454 = vadd.f32 %v1144, %v1364
        %v1455 = vadd.f32 %v1145, %v1369
        %v1456 = vadd.f32 %v1146, %v1374
        %v1457 = vadd.f32 %v1147, %v1379
        %v1458 = vadd.f32 %v1148, %v1384
        %v1459 = vadd.f32 %v1149, %v1389
        %v1460 = vadd.f32 %v1150, %v1394
        %v1461 = vadd.f32 %v1151, %v1399
        %v1462 = vadd.f32 %v1152, %v1404
        %v1463 = vadd.f32 %v1153, %v1409
        %v1464 = vadd.f32 %v1154, %v1414
        %v1465 = vadd.f32 %v1155, %v1419
        %v1466 = vadd.f32 %v1156, %v1424
        %v1467 = vadd.f32 %v1157, %v1429
        %v1468 = vadd.f32 %v1158, %v1434
        %s1469 = scalar_lea.vmem [#allocation6], 512
        %v1470 = vld [vmem:[%s1469] sm:$0xff]
        %v1471 = vld [vmem:[%s1469 + $0x8] sm:$0xff]
        %v1472 = vld [vmem:[%s1469 + $0x10] sm:$0xff]
        %v1473 = vld [vmem:[%s1469 + $0x18] sm:$0xff]
        %v1474 = vld [vmem:[%s1469 + $0x20] sm:$0xff]
        %v1475 = vld [vmem:[%s1469 + $0x28] sm:$0xff]
        %v1476 = vld [vmem:[%s1469 + $0x30] sm:$0xff]
        %v1477 = vld [vmem:[%s1469 + $0x38] sm:$0xff]
        %v1478 = vld [vmem:[%s1469 + $0x40] sm:$0xff]
        %v1479 = vld [vmem:[%s1469 + $0x48] sm:$0xff]
        %v1480 = vld [vmem:[%s1469 + $0x50] sm:$0xff]
        %v1481 = vld [vmem:[%s1469 + $0x58] sm:$0xff]
        %v1482 = vld [vmem:[%s1469 + $0x60] sm:$0xff]
        %v1483 = vld [vmem:[%s1469 + $0x68] sm:$0xff]
        %v1484 = vld [vmem:[%s1469 + $0x70] sm:$0xff]
        %v1485 = vld [vmem:[%s1469 + $0x78] sm:$0xff]
        %1486 = vmatprep.subr.mxu0 0.0
        %1487 = vmatpush1.msra.mxu0 %v1470
        %1488 = vmatprep.subr.mxu0 0.0
        %1489 = vmatpush1.msra.mxu0 %v1471
        %1490 = vmatprep.subr.mxu0 0.0
        %1491 = vmatpush1.msra.mxu0 %v1472
        %1492 = vmatprep.subr.mxu0 0.0
        %1493 = vmatpush1.msra.mxu0 %v1473
        %1494 = vmatprep.subr.mxu0 0.0
        %1495 = vmatpush1.msra.mxu0 %v1474
        %1496 = vmatprep.subr.mxu0 0.0
        %1497 = vmatpush1.msra.mxu0 %v1475
        %1498 = vmatprep.subr.mxu0 0.0
        %1499 = vmatpush1.msra.mxu0 %v1476
        %1500 = vmatprep.subr.mxu0 0.0
        %1501 = vmatpush1.msra.mxu0 %v1477
        %1502 = vmatprep.subr.mxu0 0.0
        %1503 = vmatpush1.msra.mxu0 %v1478
        %1504 = vmatprep.subr.mxu0 0.0
        %1505 = vmatpush1.msra.mxu0 %v1479
        %1506 = vmatprep.subr.mxu0 0.0
        %1507 = vmatpush1.msra.mxu0 %v1480
        %1508 = vmatprep.subr.mxu0 0.0
        %1509 = vmatpush1.msra.mxu0 %v1481
        %1510 = vmatprep.subr.mxu0 0.0
        %1511 = vmatpush1.msra.mxu0 %v1482
        %1512 = vmatprep.subr.mxu0 0.0
        %1513 = vmatpush1.msra.mxu0 %v1483
        %1514 = vmatprep.subr.mxu0 0.0
        %1515 = vmatpush1.msra.mxu0 %v1484
        %1516 = vmatprep.subr.mxu0 0.0
        %1517 = vmatpush1.msra.mxu0 %v1485
        %1518 = vmatprep.subr.mxu0 0.0
        %1519 = vmatpush1.msra.mxu0 0.0
        %1520 = vmatprep.subr.mxu0 0.0
        %1521 = vmatpush1.msra.mxu0 0.0
        %1522 = vmatprep.subr.mxu0 0.0
        %1523 = vmatpush1.msra.mxu0 0.0
        %1524 = vmatprep.subr.mxu0 0.0
        %1525 = vmatpush1.msra.mxu0 0.0
        %1526 = vmatprep.subr.mxu0 0.0
        %1527 = vmatpush1.msra.mxu0 0.0
        %1528 = vmatprep.subr.mxu0 0.0
        %1529 = vmatpush1.msra.mxu0 0.0
        %1530 = vmatprep.subr.mxu0 0.0
        %1531 = vmatpush1.msra.mxu0 0.0
        %1532 = vmatprep.subr.mxu0 0.0
        %1533 = vmatpush1.msra.mxu0 0.0
        %1534 = vmatprep.subr.mxu0 0.0
        %1535 = vmatpush1.msra.mxu0 0.0
        %1536 = vmatprep.subr.mxu0 0.0
        %1537 = vmatpush1.msra.mxu0 0.0
        %1538 = vmatprep.subr.mxu0 0.0
        %1539 = vmatpush1.msra.mxu0 0.0
        %1540 = vmatprep.subr.mxu0 0.0
        %1541 = vmatpush1.msra.mxu0 0.0
        %1542 = vmatprep.subr.mxu0 0.0
        %1543 = vmatpush1.msra.mxu0 0.0
        %1544 = vmatprep.subr.mxu0 0.0
        %1545 = vmatpush1.msra.mxu0 0.0
        %1546 = vmatprep.subr.mxu0 0.0
        %1547 = vmatpush1.msra.mxu0 0.0
        %1548 = vmatprep.subr.mxu0 0.0
        %1549 = vmatpush1.msra.mxu0 0.0
        %1550 = vmatprep.mubr.f32.mxu0 0.0
        %1551 = vmatmul.mubr.f32.gmra.mrb[0].mxu0 %v1161
        %v1552 = vpop.f32.mrb[0].mxu0
        %v1553 = vadd.f32 0.0, %v1552
        %v1554 = vpop.f32.mrb[0].mxu0
        %1555 = vmatprep.mubr.f32.mxu0 0.0
        %1556 = vmatmul.mubr.f32.gmra.mrb[0].mxu0 %v1162
        %v1557 = vpop.f32.mrb[0].mxu0
        %v1558 = vadd.f32 0.0, %v1557
        %v1559 = vpop.f32.mrb[0].mxu0
        %1560 = vmatprep.mubr.f32.mxu0 0.0
        %1561 = vmatmul.mubr.f32.gmra.mrb[0].mxu0 %v1163
        %v1562 = vpop.f32.mrb[0].mxu0
        %v1563 = vadd.f32 0.0, %v1562
        %v1564 = vpop.f32.mrb[0].mxu0
        %1565 = vmatprep.mubr.f32.mxu0 0.0
        %1566 = vmatmul.mubr.f32.gmra.mrb[0].mxu0 %v1164
        %v1567 = vpop.f32.mrb[0].mxu0
        %v1568 = vadd.f32 0.0, %v1567
        %v1569 = vpop.f32.mrb[0].mxu0
        %1570 = vmatprep.mubr.f32.mxu0 0.0
        %1571 = vmatmul.mubr.f32.gmra.mrb[0].mxu0 %v1165
        %v1572 = vpop.f32.mrb[0].mxu0
        %v1573 = vadd.f32 0.0, %v1572
        %v1574 = vpop.f32.mrb[0].mxu0
        %1575 = vmatprep.mubr.f32.mxu0 0.0
        %1576 = vmatmul.mubr.f32.gmra.mrb[0].mxu0 %v1166
        %v1577 = vpop.f32.mrb[0].mxu0
        %v1578 = vadd.f32 0.0, %v1577
        %v1579 = vpop.f32.mrb[0].mxu0
        %1580 = vmatprep.mubr.f32.mxu0 0.0
        %1581 = vmatmul.mubr.f32.gmra.mrb[0].mxu0 %v1167
        %v1582 = vpop.f32.mrb[0].mxu0
        %v1583 = vadd.f32 0.0, %v1582
        %v1584 = vpop.f32.mrb[0].mxu0
        %1585 = vmatprep.mubr.f32.mxu0 0.0
        %1586 = vmatmul.mubr.f32.gmra.mrb[0].mxu0 %v1168
        %v1587 = vpop.f32.mrb[0].mxu0
        %v1588 = vadd.f32 0.0, %v1587
        %v1589 = vpop.f32.mrb[0].mxu0
        %1590 = vmatprep.mubr.f32.mxu0 0.0
        %1591 = vmatmul.mubr.f32.gmra.mrb[0].mxu0 %v1169
        %v1592 = vpop.f32.mrb[0].mxu0
        %v1593 = vadd.f32 0.0, %v1592
        %v1594 = vpop.f32.mrb[0].mxu0
        %1595 = vmatprep.mubr.f32.mxu0 0.0
        %1596 = vmatmul.mubr.f32.gmra.mrb[0].mxu0 %v1170
        %v1597 = vpop.f32.mrb[0].mxu0
        %v1598 = vadd.f32 0.0, %v1597
        %v1599 = vpop.f32.mrb[0].mxu0
        %1600 = vmatprep.mubr.f32.mxu0 0.0
        %1601 = vmatmul.mubr.f32.gmra.mrb[0].mxu0 %v1171
        %v1602 = vpop.f32.mrb[0].mxu0
        %v1603 = vadd.f32 0.0, %v1602
        %v1604 = vpop.f32.mrb[0].mxu0
        %1605 = vmatprep.mubr.f32.mxu0 0.0
        %1606 = vmatmul.mubr.f32.gmra.mrb[0].mxu0 %v1172
        %v1607 = vpop.f32.mrb[0].mxu0
        %v1608 = vadd.f32 0.0, %v1607
        %v1609 = vpop.f32.mrb[0].mxu0
        %1610 = vmatprep.mubr.f32.mxu0 0.0
        %1611 = vmatmul.mubr.f32.gmra.mrb[0].mxu0 %v1173
        %v1612 = vpop.f32.mrb[0].mxu0
        %v1613 = vadd.f32 0.0, %v1612
        %v1614 = vpop.f32.mrb[0].mxu0
        %1615 = vmatprep.mubr.f32.mxu0 0.0
        %1616 = vmatmul.mubr.f32.gmra.mrb[0].mxu0 %v1174
        %v1617 = vpop.f32.mrb[0].mxu0
        %v1618 = vadd.f32 0.0, %v1617
        %v1619 = vpop.f32.mrb[0].mxu0
        %1620 = vmatprep.mubr.f32.mxu0 0.0
        %1621 = vmatmul.mubr.f32.gmra.mrb[0].mxu0 %v1175
        %v1622 = vpop.f32.mrb[0].mxu0
        %v1623 = vadd.f32 0.0, %v1622
        %v1624 = vpop.f32.mrb[0].mxu0
        %1625 = vmatprep.mubr.f32.mxu0 0.0
        %1626 = vmatmul.mubr.f32.gmra.mrb[0].mxu0 %v1176
        %v1627 = vpop.f32.mrb[0].mxu0
        %v1628 = vadd.f32 0.0, %v1627
        %v1629 = vpop.f32.mrb[0].mxu0
        %1630 = vmatprep.mubr.f32.mxu0 0.0
        %1631 = vmatmul.mubr.f32.gmra.mrb[0].mxu0 %v1177
        %v1632 = vpop.f32.mrb[0].mxu0
        %v1633 = vadd.f32 0.0, %v1632
        %v1634 = vpop.f32.mrb[0].mxu0
        %1635 = vmatprep.mubr.f32.mxu0 0.0
        %1636 = vmatmul.mubr.f32.gmra.mrb[0].mxu0 %v1178
        %v1637 = vpop.f32.mrb[0].mxu0
        %v1638 = vadd.f32 0.0, %v1637
        %v1639 = vpop.f32.mrb[0].mxu0
        %1640 = vmatprep.mubr.f32.mxu0 0.0
        %1641 = vmatmul.mubr.f32.gmra.mrb[0].mxu0 %v1179
        %v1642 = vpop.f32.mrb[0].mxu0
        %v1643 = vadd.f32 0.0, %v1642
        %v1644 = vpop.f32.mrb[0].mxu0
        %1645 = vmatprep.mubr.f32.mxu0 0.0
        %1646 = vmatmul.mubr.f32.gmra.mrb[0].mxu0 %v1180
        %v1647 = vpop.f32.mrb[0].mxu0
        %v1648 = vadd.f32 0.0, %v1647
        %v1649 = vpop.f32.mrb[0].mxu0
        %1650 = vmatprep.mubr.f32.mxu0 0.0
        %1651 = vmatmul.mubr.f32.gmra.mrb[0].mxu0 %v1181
        %v1652 = vpop.f32.mrb[0].mxu0
        %v1653 = vadd.f32 0.0, %v1652
        %v1654 = vpop.f32.mrb[0].mxu0
        %1655 = vmatprep.mubr.f32.mxu0 0.0
        %1656 = vmatmul.mubr.f32.gmra.mrb[0].mxu0 %v1182
        %v1657 = vpop.f32.mrb[0].mxu0
        %v1658 = vadd.f32 0.0, %v1657
        %v1659 = vpop.f32.mrb[0].mxu0
        %1660 = vmatprep.mubr.f32.mxu0 0.0
        %1661 = vmatmul.mubr.f32.gmra.mrb[0].mxu0 %v1183
        %v1662 = vpop.f32.mrb[0].mxu0
        %v1663 = vadd.f32 0.0, %v1662
        %v1664 = vpop.f32.mrb[0].mxu0
        %1665 = vmatprep.mubr.f32.mxu0 0.0
        %1666 = vmatmul.mubr.f32.gmra.mrb[0].mxu0 %v1184
        %v1667 = vpop.f32.mrb[0].mxu0
        %v1668 = vadd.f32 0.0, %v1667
        %v1669 = vpop.f32.mrb[0].mxu0
        %1670 = vmatprep.mubr.f32.mxu0 0.0
        %1671 = vmatmul.mubr.f32.gmra.mrb[0].mxu0 %v1185
        %v1672 = vpop.f32.mrb[0].mxu0
        %v1673 = vadd.f32 0.0, %v1672
        %v1674 = vpop.f32.mrb[0].mxu0
        %1675 = vmatprep.mubr.f32.mxu0 0.0
        %1676 = vmatmul.mubr.f32.gmra.mrb[0].mxu0 %v1186
        %v1677 = vpop.f32.mrb[0].mxu0
        %v1678 = vadd.f32 0.0, %v1677
        %v1679 = vpop.f32.mrb[0].mxu0
        %1680 = vmatprep.mubr.f32.mxu0 0.0
        %1681 = vmatmul.mubr.f32.gmra.mrb[0].mxu0 %v1187
        %v1682 = vpop.f32.mrb[0].mxu0
        %v1683 = vadd.f32 0.0, %v1682
        %v1684 = vpop.f32.mrb[0].mxu0
        %1685 = vmatprep.mubr.f32.mxu0 0.0
        %1686 = vmatmul.mubr.f32.gmra.mrb[0].mxu0 %v1188
        %v1687 = vpop.f32.mrb[0].mxu0
        %v1688 = vadd.f32 0.0, %v1687
        %v1689 = vpop.f32.mrb[0].mxu0
        %1690 = vmatprep.mubr.f32.mxu0 0.0
        %1691 = vmatmul.mubr.f32.gmra.mrb[0].mxu0 %v1189
        %v1692 = vpop.f32.mrb[0].mxu0
        %v1693 = vadd.f32 0.0, %v1692
        %v1694 = vpop.f32.mrb[0].mxu0
        %1695 = vmatprep.mubr.f32.mxu0 0.0
        %1696 = vmatmul.mubr.f32.gmra.mrb[0].mxu0 %v1190
        %v1697 = vpop.f32.mrb[0].mxu0
        %v1698 = vadd.f32 0.0, %v1697
        %v1699 = vpop.f32.mrb[0].mxu0
        %1700 = vmatprep.mubr.f32.mxu0 0.0
        %1701 = vmatmul.mubr.f32.gmra.mrb[0].mxu0 %v1191
        %v1702 = vpop.f32.mrb[0].mxu0
        %v1703 = vadd.f32 0.0, %v1702
        %v1704 = vpop.f32.mrb[0].mxu0
        %1705 = vmatprep.mubr.f32.mxu0 0.0
        %1706 = vmatmul.mubr.f32.gmra.mrb[0].mxu0 %v1192
        %v1707 = vpop.f32.mrb[0].mxu0
        %v1708 = vadd.f32 0.0, %v1707
        %v1709 = vpop.f32.mrb[0].mxu0
        %1710 = vdwg.mxu0
        %v1711 = vadd.f32 %v1437, %v1553
        %v1712 = vadd.f32 %v1438, %v1558
        %v1713 = vadd.f32 %v1439, %v1563
        %v1714 = vadd.f32 %v1440, %v1568
        %v1715 = vadd.f32 %v1441, %v1573
        %v1716 = vadd.f32 %v1442, %v1578
        %v1717 = vadd.f32 %v1443, %v1583
        %v1718 = vadd.f32 %v1444, %v1588
        %v1719 = vadd.f32 %v1445, %v1593
        %v1720 = vadd.f32 %v1446, %v1598
        %v1721 = vadd.f32 %v1447, %v1603
        %v1722 = vadd.f32 %v1448, %v1608
        %v1723 = vadd.f32 %v1449, %v1613
        %v1724 = vadd.f32 %v1450, %v1618
        %v1725 = vadd.f32 %v1451, %v1623
        %v1726 = vadd.f32 %v1452, %v1628
        %v1727 = vadd.f32 %v1453, %v1633
        %v1728 = vadd.f32 %v1454, %v1638
        %v1729 = vadd.f32 %v1455, %v1643
        %v1730 = vadd.f32 %v1456, %v1648
        %v1731 = vadd.f32 %v1457, %v1653
        %v1732 = vadd.f32 %v1458, %v1658
        %v1733 = vadd.f32 %v1459, %v1663
        %v1734 = vadd.f32 %v1460, %v1668
        %v1735 = vadd.f32 %v1461, %v1673
        %v1736 = vadd.f32 %v1462, %v1678
        %v1737 = vadd.f32 %v1463, %v1683
        %v1738 = vadd.f32 %v1464, %v1688
        %v1739 = vadd.f32 %v1465, %v1693
        %v1740 = vadd.f32 %v1466, %v1698
        %v1741 = vadd.f32 %v1467, %v1703
        %v1742 = vadd.f32 %v1468, %v1708
        %s1743 = scalar_lea.vmem [#allocation6], 896
        %v1744 = vld [vmem:[%s1743] sm:$0xff]
        %v1745 = vld [vmem:[%s1743 + $0x8] sm:$0xff]
        %v1746 = vld [vmem:[%s1743 + $0x10] sm:$0xff]
        %v1747 = vld [vmem:[%s1743 + $0x18] sm:$0xff]
        %v1748 = vld [vmem:[%s1743 + $0x20] sm:$0xff]
        %v1749 = vld [vmem:[%s1743 + $0x28] sm:$0xff]
        %v1750 = vld [vmem:[%s1743 + $0x30] sm:$0xff]
        %v1751 = vld [vmem:[%s1743 + $0x38] sm:$0xff]
        %v1752 = vld [vmem:[%s1743 + $0x40] sm:$0xff]
        %v1753 = vld [vmem:[%s1743 + $0x48] sm:$0xff]
        %v1754 = vld [vmem:[%s1743 + $0x50] sm:$0xff]
        %v1755 = vld [vmem:[%s1743 + $0x58] sm:$0xff]
        %v1756 = vld [vmem:[%s1743 + $0x60] sm:$0xff]
        %v1757 = vld [vmem:[%s1743 + $0x68] sm:$0xff]
        %v1758 = vld [vmem:[%s1743 + $0x70] sm:$0xff]
        %v1759 = vld [vmem:[%s1743 + $0x78] sm:$0xff]
        %1760 = vmatprep.subr.mxu0 0.0
        %1761 = vmatpush1.msra.mxu0 %v1744
        %1762 = vmatprep.subr.mxu0 0.0
        %1763 = vmatpush1.msra.mxu0 %v1745
        %1764 = vmatprep.subr.mxu0 0.0
        %1765 = vmatpush1.msra.mxu0 %v1746
        %1766 = vmatprep.subr.mxu0 0.0
        %1767 = vmatpush1.msra.mxu0 %v1747
        %1768 = vmatprep.subr.mxu0 0.0
        %1769 = vmatpush1.msra.mxu0 %v1748
        %1770 = vmatprep.subr.mxu0 0.0
        %1771 = vmatpush1.msra.mxu0 %v1749
        %1772 = vmatprep.subr.mxu0 0.0
        %1773 = vmatpush1.msra.mxu0 %v1750
        %1774 = vmatprep.subr.mxu0 0.0
        %1775 = vmatpush1.msra.mxu0 %v1751
        %1776 = vmatprep.subr.mxu0 0.0
        %1777 = vmatpush1.msra.mxu0 %v1752
        %1778 = vmatprep.subr.mxu0 0.0
        %1779 = vmatpush1.msra.mxu0 %v1753
        %1780 = vmatprep.subr.mxu0 0.0
        %1781 = vmatpush1.msra.mxu0 %v1754
        %1782 = vmatprep.subr.mxu0 0.0
        %1783 = vmatpush1.msra.mxu0 %v1755
        %1784 = vmatprep.subr.mxu0 0.0
        %1785 = vmatpush1.msra.mxu0 %v1756
        %1786 = vmatprep.subr.mxu0 0.0
        %1787 = vmatpush1.msra.mxu0 %v1757
        %1788 = vmatprep.subr.mxu0 0.0
        %1789 = vmatpush1.msra.mxu0 %v1758
        %1790 = vmatprep.subr.mxu0 0.0
        %1791 = vmatpush1.msra.mxu0 %v1759
        %1792 = vmatprep.subr.mxu0 0.0
        %1793 = vmatpush1.msra.mxu0 0.0
        %1794 = vmatprep.subr.mxu0 0.0
        %1795 = vmatpush1.msra.mxu0 0.0
        %1796 = vmatprep.subr.mxu0 0.0
        %1797 = vmatpush1.msra.mxu0 0.0
        %1798 = vmatprep.subr.mxu0 0.0
        %1799 = vmatpush1.msra.mxu0 0.0
        %1800 = vmatprep.subr.mxu0 0.0
        %1801 = vmatpush1.msra.mxu0 0.0
        %1802 = vmatprep.subr.mxu0 0.0
        %1803 = vmatpush1.msra.mxu0 0.0
        %1804 = vmatprep.subr.mxu0 0.0
        %1805 = vmatpush1.msra.mxu0 0.0
        %1806 = vmatprep.subr.mxu0 0.0
        %1807 = vmatpush1.msra.mxu0 0.0
        %1808 = vmatprep.subr.mxu0 0.0
        %1809 = vmatpush1.msra.mxu0 0.0
        %1810 = vmatprep.subr.mxu0 0.0
        %1811 = vmatpush1.msra.mxu0 0.0
        %1812 = vmatprep.subr.mxu0 0.0
        %1813 = vmatpush1.msra.mxu0 0.0
        %1814 = vmatprep.subr.mxu0 0.0
        %1815 = vmatpush1.msra.mxu0 0.0
        %1816 = vmatprep.subr.mxu0 0.0
        %1817 = vmatpush1.msra.mxu0 0.0
        %1818 = vmatprep.subr.mxu0 0.0
        %1819 = vmatpush1.msra.mxu0 0.0
        %1820 = vmatprep.subr.mxu0 0.0
        %1821 = vmatpush1.msra.mxu0 0.0
        %1822 = vmatprep.subr.mxu0 0.0
        %1823 = vmatpush1.msra.mxu0 0.0
        %1824 = vmatprep.mubr.f32.mxu0 0.0
        %1825 = vmatmul.mubr.f32.gmra.mrb[0].mxu0 %v1163
        %v1826 = vpop.f32.mrb[0].mxu0
        %v1827 = vadd.f32 0.0, %v1826
        %v1828 = vpop.f32.mrb[0].mxu0
        %1829 = vmatprep.mubr.f32.mxu0 0.0
        %1830 = vmatmul.mubr.f32.gmra.mrb[0].mxu0 %v1164
        %v1831 = vpop.f32.mrb[0].mxu0
        %v1832 = vadd.f32 0.0, %v1831
        %v1833 = vpop.f32.mrb[0].mxu0
        %1834 = vmatprep.mubr.f32.mxu0 0.0
        %1835 = vmatmul.mubr.f32.gmra.mrb[0].mxu0 %v1165
        %v1836 = vpop.f32.mrb[0].mxu0
        %v1837 = vadd.f32 0.0, %v1836
        %v1838 = vpop.f32.mrb[0].mxu0
        %1839 = vmatprep.mubr.f32.mxu0 0.0
        %1840 = vmatmul.mubr.f32.gmra.mrb[0].mxu0 %v1166
        %v1841 = vpop.f32.mrb[0].mxu0
        %v1842 = vadd.f32 0.0, %v1841
        %v1843 = vpop.f32.mrb[0].mxu0
        %1844 = vmatprep.mubr.f32.mxu0 0.0
        %1845 = vmatmul.mubr.f32.gmra.mrb[0].mxu0 %v1167
        %v1846 = vpop.f32.mrb[0].mxu0
        %v1847 = vadd.f32 0.0, %v1846
        %v1848 = vpop.f32.mrb[0].mxu0
        %1849 = vmatprep.mubr.f32.mxu0 0.0
        %1850 = vmatmul.mubr.f32.gmra.mrb[0].mxu0 %v1168
        %v1851 = vpop.f32.mrb[0].mxu0
        %v1852 = vadd.f32 0.0, %v1851
        %v1853 = vpop.f32.mrb[0].mxu0
        %1854 = vmatprep.mubr.f32.mxu0 0.0
        %1855 = vmatmul.mubr.f32.gmra.mrb[0].mxu0 %v1169
        %v1856 = vpop.f32.mrb[0].mxu0
        %v1857 = vadd.f32 0.0, %v1856
        %v1858 = vpop.f32.mrb[0].mxu0
        %1859 = vmatprep.mubr.f32.mxu0 0.0
        %1860 = vmatmul.mubr.f32.gmra.mrb[0].mxu0 %v1170
        %v1861 = vpop.f32.mrb[0].mxu0
        %v1862 = vadd.f32 0.0, %v1861
        %v1863 = vpop.f32.mrb[0].mxu0
        %1864 = vmatprep.mubr.f32.mxu0 0.0
        %1865 = vmatmul.mubr.f32.gmra.mrb[0].mxu0 %v1171
        %v1866 = vpop.f32.mrb[0].mxu0
        %v1867 = vadd.f32 0.0, %v1866
        %v1868 = vpop.f32.mrb[0].mxu0
        %1869 = vmatprep.mubr.f32.mxu0 0.0
        %1870 = vmatmul.mubr.f32.gmra.mrb[0].mxu0 %v1172
        %v1871 = vpop.f32.mrb[0].mxu0
        %v1872 = vadd.f32 0.0, %v1871
        %v1873 = vpop.f32.mrb[0].mxu0
        %1874 = vmatprep.mubr.f32.mxu0 0.0
        %1875 = vmatmul.mubr.f32.gmra.mrb[0].mxu0 %v1173
        %v1876 = vpop.f32.mrb[0].mxu0
        %v1877 = vadd.f32 0.0, %v1876
        %v1878 = vpop.f32.mrb[0].mxu0
        %1879 = vmatprep.mubr.f32.mxu0 0.0
        %1880 = vmatmul.mubr.f32.gmra.mrb[0].mxu0 %v1174
        %v1881 = vpop.f32.mrb[0].mxu0
        %v1882 = vadd.f32 0.0, %v1881
        %v1883 = vpop.f32.mrb[0].mxu0
        %1884 = vmatprep.mubr.f32.mxu0 0.0
        %1885 = vmatmul.mubr.f32.gmra.mrb[0].mxu0 %v1175
        %v1886 = vpop.f32.mrb[0].mxu0
        %v1887 = vadd.f32 0.0, %v1886
        %v1888 = vpop.f32.mrb[0].mxu0
        %1889 = vmatprep.mubr.f32.mxu0 0.0
        %1890 = vmatmul.mubr.f32.gmra.mrb[0].mxu0 %v1176
        %v1891 = vpop.f32.mrb[0].mxu0
        %v1892 = vadd.f32 0.0, %v1891
        %v1893 = vpop.f32.mrb[0].mxu0
        %1894 = vmatprep.mubr.f32.mxu0 0.0
        %1895 = vmatmul.mubr.f32.gmra.mrb[0].mxu0 %v1177
        %v1896 = vpop.f32.mrb[0].mxu0
        %v1897 = vadd.f32 0.0, %v1896
        %v1898 = vpop.f32.mrb[0].mxu0
        %1899 = vmatprep.mubr.f32.mxu0 0.0
        %1900 = vmatmul.mubr.f32.gmra.mrb[0].mxu0 %v1178
        %v1901 = vpop.f32.mrb[0].mxu0
        %v1902 = vadd.f32 0.0, %v1901
        %v1903 = vpop.f32.mrb[0].mxu0
        %1904 = vmatprep.mubr.f32.mxu0 0.0
        %1905 = vmatmul.mubr.f32.gmra.mrb[0].mxu0 %v1179
        %v1906 = vpop.f32.mrb[0].mxu0
        %v1907 = vadd.f32 0.0, %v1906
        %v1908 = vpop.f32.mrb[0].mxu0
        %1909 = vmatprep.mubr.f32.mxu0 0.0
        %1910 = vmatmul.mubr.f32.gmra.mrb[0].mxu0 %v1180
        %v1911 = vpop.f32.mrb[0].mxu0
        %v1912 = vadd.f32 0.0, %v1911
        %v1913 = vpop.f32.mrb[0].mxu0
        %1914 = vmatprep.mubr.f32.mxu0 0.0
        %1915 = vmatmul.mubr.f32.gmra.mrb[0].mxu0 %v1181
        %v1916 = vpop.f32.mrb[0].mxu0
        %v1917 = vadd.f32 0.0, %v1916
        %v1918 = vpop.f32.mrb[0].mxu0
        %1919 = vmatprep.mubr.f32.mxu0 0.0
        %1920 = vmatmul.mubr.f32.gmra.mrb[0].mxu0 %v1182
        %v1921 = vpop.f32.mrb[0].mxu0
        %v1922 = vadd.f32 0.0, %v1921
        %v1923 = vpop.f32.mrb[0].mxu0
        %1924 = vmatprep.mubr.f32.mxu0 0.0
        %1925 = vmatmul.mubr.f32.gmra.mrb[0].mxu0 %v1183
        %v1926 = vpop.f32.mrb[0].mxu0
        %v1927 = vadd.f32 0.0, %v1926
        %v1928 = vpop.f32.mrb[0].mxu0
        %1929 = vmatprep.mubr.f32.mxu0 0.0
        %1930 = vmatmul.mubr.f32.gmra.mrb[0].mxu0 %v1184
        %v1931 = vpop.f32.mrb[0].mxu0
        %v1932 = vadd.f32 0.0, %v1931
        %v1933 = vpop.f32.mrb[0].mxu0
        %1934 = vmatprep.mubr.f32.mxu0 0.0
        %1935 = vmatmul.mubr.f32.gmra.mrb[0].mxu0 %v1185
        %v1936 = vpop.f32.mrb[0].mxu0
        %v1937 = vadd.f32 0.0, %v1936
        %v1938 = vpop.f32.mrb[0].mxu0
        %1939 = vmatprep.mubr.f32.mxu0 0.0
        %1940 = vmatmul.mubr.f32.gmra.mrb[0].mxu0 %v1186
        %v1941 = vpop.f32.mrb[0].mxu0
        %v1942 = vadd.f32 0.0, %v1941
        %v1943 = vpop.f32.mrb[0].mxu0
        %1944 = vmatprep.mubr.f32.mxu0 0.0
        %1945 = vmatmul.mubr.f32.gmra.mrb[0].mxu0 %v1187
        %v1946 = vpop.f32.mrb[0].mxu0
        %v1947 = vadd.f32 0.0, %v1946
        %v1948 = vpop.f32.mrb[0].mxu0
        %1949 = vmatprep.mubr.f32.mxu0 0.0
        %1950 = vmatmul.mubr.f32.gmra.mrb[0].mxu0 %v1188
        %v1951 = vpop.f32.mrb[0].mxu0
        %v1952 = vadd.f32 0.0, %v1951
        %v1953 = vpop.f32.mrb[0].mxu0
        %1954 = vmatprep.mubr.f32.mxu0 0.0
        %1955 = vmatmul.mubr.f32.gmra.mrb[0].mxu0 %v1189
        %v1956 = vpop.f32.mrb[0].mxu0
        %v1957 = vadd.f32 0.0, %v1956
        %v1958 = vpop.f32.mrb[0].mxu0
        %1959 = vmatprep.mubr.f32.mxu0 0.0
        %1960 = vmatmul.mubr.f32.gmra.mrb[0].mxu0 %v1190
        %v1961 = vpop.f32.mrb[0].mxu0
        %v1962 = vadd.f32 0.0, %v1961
        %v1963 = vpop.f32.mrb[0].mxu0
        %1964 = vmatprep.mubr.f32.mxu0 0.0
        %1965 = vmatmul.mubr.f32.gmra.mrb[0].mxu0 %v1191
        %v1966 = vpop.f32.mrb[0].mxu0
        %v1967 = vadd.f32 0.0, %v1966
        %v1968 = vpop.f32.mrb[0].mxu0
        %1969 = vmatprep.mubr.f32.mxu0 0.0
        %1970 = vmatmul.mubr.f32.gmra.mrb[0].mxu0 %v1192
        %v1971 = vpop.f32.mrb[0].mxu0
        %v1972 = vadd.f32 0.0, %v1971
        %v1973 = vpop.f32.mrb[0].mxu0
        %1974 = vmatprep.mubr.f32.mxu0 0.0
        %1975 = vmatmul.mubr.f32.gmra.mrb[0].mxu0 %v1193
        %v1976 = vpop.f32.mrb[0].mxu0
        %v1977 = vadd.f32 0.0, %v1976
        %v1978 = vpop.f32.mrb[0].mxu0
        %1979 = vmatprep.mubr.f32.mxu0 0.0
        %1980 = vmatmul.mubr.f32.gmra.mrb[0].mxu0 %v1194
        %v1981 = vpop.f32.mrb[0].mxu0
        %v1982 = vadd.f32 0.0, %v1981
        %v1983 = vpop.f32.mrb[0].mxu0
        %1984 = vdwg.mxu0
        %v1985 = vadd.f32 %v1711, %v1827
        %v1986 = vadd.f32 %v1712, %v1832
        %v1987 = vadd.f32 %v1713, %v1837
        %v1988 = vadd.f32 %v1714, %v1842
        %v1989 = vadd.f32 %v1715, %v1847
        %v1990 = vadd.f32 %v1716, %v1852
        %v1991 = vadd.f32 %v1717, %v1857
        %v1992 = vadd.f32 %v1718, %v1862
        %v1993 = vadd.f32 %v1719, %v1867
        %v1994 = vadd.f32 %v1720, %v1872
        %v1995 = vadd.f32 %v1721, %v1877
        %v1996 = vadd.f32 %v1722, %v1882
        %v1997 = vadd.f32 %v1723, %v1887
        %v1998 = vadd.f32 %v1724, %v1892
        %v1999 = vadd.f32 %v1725, %v1897
        %v2000 = vadd.f32 %v1726, %v1902
        %v2001 = vadd.f32 %v1727, %v1907
        %v2002 = vadd.f32 %v1728, %v1912
        %v2003 = vadd.f32 %v1729, %v1917
        %v2004 = vadd.f32 %v1730, %v1922
        %v2005 = vadd.f32 %v1731, %v1927
        %v2006 = vadd.f32 %v1732, %v1932
        %v2007 = vadd.f32 %v1733, %v1937
        %v2008 = vadd.f32 %v1734, %v1942
        %v2009 = vadd.f32 %v1735, %v1947
        %v2010 = vadd.f32 %v1736, %v1952
        %v2011 = vadd.f32 %v1737, %v1957
        %v2012 = vadd.f32 %v1738, %v1962
        %v2013 = vadd.f32 %v1739, %v1967
        %v2014 = vadd.f32 %v1740, %v1972
        %v2015 = vadd.f32 %v1741, %v1977
        %v2016 = vadd.f32 %v1742, %v1982
        %v2017 = vld [vmem:[#allocation2 + $0x2] sm:$0xff]
        %v2018 = vld [vmem:[#allocation2 + $0xa] sm:$0xff]
        %v2019 = vld [vmem:[#allocation2 + $0x1a] sm:$0xff]
        %v2020 = vld [vmem:[#allocation2 + $0x22] sm:$0xff]
        %v2021 = vld [vmem:[#allocation2 + $0x32] sm:$0xff]
        %v2022 = vld [vmem:[#allocation2 + $0x3a] sm:$0xff]
        %v2023 = vld [vmem:[#allocation2 + $0x4a] sm:$0xff]
        %v2024 = vld [vmem:[#allocation2 + $0x52] sm:$0xff]
        %v2025 = vld [vmem:[#allocation2 + $0x62] sm:$0xff]
        %v2026 = vld [vmem:[#allocation2 + $0x6a] sm:$0xff]
        %v2027 = vld [vmem:[#allocation2 + $0x7a] sm:$0xff]
        %v2028 = vld [vmem:[#allocation2 + $0x82] sm:$0xff]
        %v2029 = vld [vmem:[#allocation2 + $0x92] sm:$0xff]
        %v2030 = vld [vmem:[#allocation2 + $0x9a] sm:$0xff]
        %v2031 = vld [vmem:[#allocation2 + $0xaa] sm:$0xff]
        %v2032 = vld [vmem:[#allocation2 + $0xb2] sm:$0xff]
        %v2033 = vld [vmem:[#allocation2 + $0xc2] sm:$0xff]
        %v2034 = vld [vmem:[#allocation2 + $0xca] sm:$0xff]
        %v2035 = vld [vmem:[#allocation2 + $0xda] sm:$0xff]
        %v2036 = vld [vmem:[#allocation2 + $0xe2] sm:$0xff]
        %v2037 = vld [vmem:[#allocation2 + $0xf2] sm:$0xff]
        %v2038 = vld [vmem:[#allocation2 + $0xfa] sm:$0xff]
        %v2039 = vld [vmem:[#allocation2 + $0x10a] sm:$0xff]
        %v2040 = vld [vmem:[#allocation2 + $0x112] sm:$0xff]
        %v2041 = vld [vmem:[#allocation2 + $0x122] sm:$0xff]
        %v2042 = vld [vmem:[#allocation2 + $0x12a] sm:$0xff]
        %v2043 = vld [vmem:[#allocation2 + $0x13a] sm:$0xff]
        %v2044 = vld [vmem:[#allocation2 + $0x142] sm:$0xff]
        %v2045 = vld [vmem:[#allocation2 + $0x152] sm:$0xff]
        %v2046 = vld [vmem:[#allocation2 + $0x15a] sm:$0xff]
        %v2047 = vld [vmem:[#allocation2 + $0x16a] sm:$0xff]
        %v2048 = vld [vmem:[#allocation2 + $0x172] sm:$0xff]
        %v2049 = vld [vmem:[#allocation2 + $0x182] sm:$0xff]
        %v2050 = vld [vmem:[#allocation2 + $0x18a] sm:$0xff]
        %v2051 = vld [vmem:[#allocation2 + $0x19a] sm:$0xff]
        %v2052 = vld [vmem:[#allocation2 + $0x1a2] sm:$0xff]
        %s2053 = scalar_lea.vmem [#allocation6], 256
        %v2054 = vld [vmem:[%s2053] sm:$0xff]
        %v2055 = vld [vmem:[%s2053 + $0x8] sm:$0xff]
        %v2056 = vld [vmem:[%s2053 + $0x10] sm:$0xff]
        %v2057 = vld [vmem:[%s2053 + $0x18] sm:$0xff]
        %v2058 = vld [vmem:[%s2053 + $0x20] sm:$0xff]
        %v2059 = vld [vmem:[%s2053 + $0x28] sm:$0xff]
        %v2060 = vld [vmem:[%s2053 + $0x30] sm:$0xff]
        %v2061 = vld [vmem:[%s2053 + $0x38] sm:$0xff]
        %v2062 = vld [vmem:[%s2053 + $0x40] sm:$0xff]
        %v2063 = vld [vmem:[%s2053 + $0x48] sm:$0xff]
        %v2064 = vld [vmem:[%s2053 + $0x50] sm:$0xff]
        %v2065 = vld [vmem:[%s2053 + $0x58] sm:$0xff]
        %v2066 = vld [vmem:[%s2053 + $0x60] sm:$0xff]
        %v2067 = vld [vmem:[%s2053 + $0x68] sm:$0xff]
        %v2068 = vld [vmem:[%s2053 + $0x70] sm:$0xff]
        %v2069 = vld [vmem:[%s2053 + $0x78] sm:$0xff]
        %2070 = vmatprep.subr.mxu0 0.0
        %2071 = vmatpush1.msra.mxu0 %v2054
        %2072 = vmatprep.subr.mxu0 0.0
        %2073 = vmatpush1.msra.mxu0 %v2055
        %2074 = vmatprep.subr.mxu0 0.0
        %2075 = vmatpush1.msra.mxu0 %v2056
        %2076 = vmatprep.subr.mxu0 0.0
        %2077 = vmatpush1.msra.mxu0 %v2057
        %2078 = vmatprep.subr.mxu0 0.0
        %2079 = vmatpush1.msra.mxu0 %v2058
        %2080 = vmatprep.subr.mxu0 0.0
        %2081 = vmatpush1.msra.mxu0 %v2059
        %2082 = vmatprep.subr.mxu0 0.0
        %2083 = vmatpush1.msra.mxu0 %v2060
        %2084 = vmatprep.subr.mxu0 0.0
        %2085 = vmatpush1.msra.mxu0 %v2061
        %2086 = vmatprep.subr.mxu0 0.0
        %2087 = vmatpush1.msra.mxu0 %v2062
        %2088 = vmatprep.subr.mxu0 0.0
        %2089 = vmatpush1.msra.mxu0 %v2063
        %2090 = vmatprep.subr.mxu0 0.0
        %2091 = vmatpush1.msra.mxu0 %v2064
        %2092 = vmatprep.subr.mxu0 0.0
        %2093 = vmatpush1.msra.mxu0 %v2065
        %2094 = vmatprep.subr.mxu0 0.0
        %2095 = vmatpush1.msra.mxu0 %v2066
        %2096 = vmatprep.subr.mxu0 0.0
        %2097 = vmatpush1.msra.mxu0 %v2067
        %2098 = vmatprep.subr.mxu0 0.0
        %2099 = vmatpush1.msra.mxu0 %v2068
        %2100 = vmatprep.subr.mxu0 0.0
        %2101 = vmatpush1.msra.mxu0 %v2069
        %2102 = vmatprep.subr.mxu0 0.0
        %2103 = vmatpush1.msra.mxu0 0.0
        %2104 = vmatprep.subr.mxu0 0.0
        %2105 = vmatpush1.msra.mxu0 0.0
        %2106 = vmatprep.subr.mxu0 0.0
        %2107 = vmatpush1.msra.mxu0 0.0
        %2108 = vmatprep.subr.mxu0 0.0
        %2109 = vmatpush1.msra.mxu0 0.0
        %2110 = vmatprep.subr.mxu0 0.0
        %2111 = vmatpush1.msra.mxu0 0.0
        %2112 = vmatprep.subr.mxu0 0.0
        %2113 = vmatpush1.msra.mxu0 0.0
        %2114 = vmatprep.subr.mxu0 0.0
        %2115 = vmatpush1.msra.mxu0 0.0
        %2116 = vmatprep.subr.mxu0 0.0
        %2117 = vmatpush1.msra.mxu0 0.0
        %2118 = vmatprep.subr.mxu0 0.0
        %2119 = vmatpush1.msra.mxu0 0.0
        %2120 = vmatprep.subr.mxu0 0.0
        %2121 = vmatpush1.msra.mxu0 0.0
        %2122 = vmatprep.subr.mxu0 0.0
        %2123 = vmatpush1.msra.mxu0 0.0
        %2124 = vmatprep.subr.mxu0 0.0
        %2125 = vmatpush1.msra.mxu0 0.0
        %2126 = vmatprep.subr.mxu0 0.0
        %2127 = vmatpush1.msra.mxu0 0.0
        %2128 = vmatprep.subr.mxu0 0.0
        %2129 = vmatpush1.msra.mxu0 0.0
        %2130 = vmatprep.subr.mxu0 0.0
        %2131 = vmatpush1.msra.mxu0 0.0
        %2132 = vmatprep.subr.mxu0 0.0
        %2133 = vmatpush1.msra.mxu0 0.0
        %2134 = vmatprep.mubr.f32.mxu0 0.0
        %2135 = vmatmul.mubr.f32.gmra.mrb[0].mxu0 %v2017
        %v2136 = vpop.f32.mrb[0].mxu0
        %v2137 = vadd.f32 0.0, %v2136
        %v2138 = vpop.f32.mrb[0].mxu0
        %2139 = vmatprep.mubr.f32.mxu0 0.0
        %2140 = vmatmul.mubr.f32.gmra.mrb[0].mxu0 %v2018
        %v2141 = vpop.f32.mrb[0].mxu0
        %v2142 = vadd.f32 0.0, %v2141
        %v2143 = vpop.f32.mrb[0].mxu0
        %2144 = vmatprep.mubr.f32.mxu0 0.0
        %2145 = vmatmul.mubr.f32.gmra.mrb[0].mxu0 %v2019
        %v2146 = vpop.f32.mrb[0].mxu0
        %v2147 = vadd.f32 0.0, %v2146
        %v2148 = vpop.f32.mrb[0].mxu0
        %2149 = vmatprep.mubr.f32.mxu0 0.0
        %2150 = vmatmul.mubr.f32.gmra.mrb[0].mxu0 %v2020
        %v2151 = vpop.f32.mrb[0].mxu0
        %v2152 = vadd.f32 0.0, %v2151
        %v2153 = vpop.f32.mrb[0].mxu0
        %2154 = vmatprep.mubr.f32.mxu0 0.0
        %2155 = vmatmul.mubr.f32.gmra.mrb[0].mxu0 %v2021
        %v2156 = vpop.f32.mrb[0].mxu0
        %v2157 = vadd.f32 0.0, %v2156
        %v2158 = vpop.f32.mrb[0].mxu0
        %2159 = vmatprep.mubr.f32.mxu0 0.0
        %2160 = vmatmul.mubr.f32.gmra.mrb[0].mxu0 %v2022
        %v2161 = vpop.f32.mrb[0].mxu0
        %v2162 = vadd.f32 0.0, %v2161
        %v2163 = vpop.f32.mrb[0].mxu0
        %2164 = vmatprep.mubr.f32.mxu0 0.0
        %2165 = vmatmul.mubr.f32.gmra.mrb[0].mxu0 %v2023
        %v2166 = vpop.f32.mrb[0].mxu0
        %v2167 = vadd.f32 0.0, %v2166
        %v2168 = vpop.f32.mrb[0].mxu0
        %2169 = vmatprep.mubr.f32.mxu0 0.0
        %2170 = vmatmul.mubr.f32.gmra.mrb[0].mxu0 %v2024
        %v2171 = vpop.f32.mrb[0].mxu0
        %v2172 = vadd.f32 0.0, %v2171
        %v2173 = vpop.f32.mrb[0].mxu0
        %2174 = vmatprep.mubr.f32.mxu0 0.0
        %2175 = vmatmul.mubr.f32.gmra.mrb[0].mxu0 %v2025
        %v2176 = vpop.f32.mrb[0].mxu0
        %v2177 = vadd.f32 0.0, %v2176
        %v2178 = vpop.f32.mrb[0].mxu0
        %2179 = vmatprep.mubr.f32.mxu0 0.0
        %2180 = vmatmul.mubr.f32.gmra.mrb[0].mxu0 %v2026
        %v2181 = vpop.f32.mrb[0].mxu0
        %v2182 = vadd.f32 0.0, %v2181
        %v2183 = vpop.f32.mrb[0].mxu0
        %2184 = vmatprep.mubr.f32.mxu0 0.0
        %2185 = vmatmul.mubr.f32.gmra.mrb[0].mxu0 %v2027
        %v2186 = vpop.f32.mrb[0].mxu0
        %v2187 = vadd.f32 0.0, %v2186
        %v2188 = vpop.f32.mrb[0].mxu0
        %2189 = vmatprep.mubr.f32.mxu0 0.0
        %2190 = vmatmul.mubr.f32.gmra.mrb[0].mxu0 %v2028
        %v2191 = vpop.f32.mrb[0].mxu0
        %v2192 = vadd.f32 0.0, %v2191
        %v2193 = vpop.f32.mrb[0].mxu0
        %2194 = vmatprep.mubr.f32.mxu0 0.0
        %2195 = vmatmul.mubr.f32.gmra.mrb[0].mxu0 %v2029
        %v2196 = vpop.f32.mrb[0].mxu0
        %v2197 = vadd.f32 0.0, %v2196
        %v2198 = vpop.f32.mrb[0].mxu0
        %2199 = vmatprep.mubr.f32.mxu0 0.0
        %2200 = vmatmul.mubr.f32.gmra.mrb[0].mxu0 %v2030
        %v2201 = vpop.f32.mrb[0].mxu0
        %v2202 = vadd.f32 0.0, %v2201
        %v2203 = vpop.f32.mrb[0].mxu0
        %2204 = vmatprep.mubr.f32.mxu0 0.0
        %2205 = vmatmul.mubr.f32.gmra.mrb[0].mxu0 %v2031
        %v2206 = vpop.f32.mrb[0].mxu0
        %v2207 = vadd.f32 0.0, %v2206
        %v2208 = vpop.f32.mrb[0].mxu0
        %2209 = vmatprep.mubr.f32.mxu0 0.0
        %2210 = vmatmul.mubr.f32.gmra.mrb[0].mxu0 %v2032
        %v2211 = vpop.f32.mrb[0].mxu0
        %v2212 = vadd.f32 0.0, %v2211
        %v2213 = vpop.f32.mrb[0].mxu0
        %2214 = vmatprep.mubr.f32.mxu0 0.0
        %2215 = vmatmul.mubr.f32.gmra.mrb[0].mxu0 %v2033
        %v2216 = vpop.f32.mrb[0].mxu0
        %v2217 = vadd.f32 0.0, %v2216
        %v2218 = vpop.f32.mrb[0].mxu0
        %2219 = vmatprep.mubr.f32.mxu0 0.0
        %2220 = vmatmul.mubr.f32.gmra.mrb[0].mxu0 %v2034
        %v2221 = vpop.f32.mrb[0].mxu0
        %v2222 = vadd.f32 0.0, %v2221
        %v2223 = vpop.f32.mrb[0].mxu0
        %2224 = vmatprep.mubr.f32.mxu0 0.0
        %2225 = vmatmul.mubr.f32.gmra.mrb[0].mxu0 %v2035
        %v2226 = vpop.f32.mrb[0].mxu0
        %v2227 = vadd.f32 0.0, %v2226
        %v2228 = vpop.f32.mrb[0].mxu0
        %2229 = vmatprep.mubr.f32.mxu0 0.0
        %2230 = vmatmul.mubr.f32.gmra.mrb[0].mxu0 %v2036
        %v2231 = vpop.f32.mrb[0].mxu0
        %v2232 = vadd.f32 0.0, %v2231
        %v2233 = vpop.f32.mrb[0].mxu0
        %2234 = vmatprep.mubr.f32.mxu0 0.0
        %2235 = vmatmul.mubr.f32.gmra.mrb[0].mxu0 %v2037
        %v2236 = vpop.f32.mrb[0].mxu0
        %v2237 = vadd.f32 0.0, %v2236
        %v2238 = vpop.f32.mrb[0].mxu0
        %2239 = vmatprep.mubr.f32.mxu0 0.0
        %2240 = vmatmul.mubr.f32.gmra.mrb[0].mxu0 %v2038
        %v2241 = vpop.f32.mrb[0].mxu0
        %v2242 = vadd.f32 0.0, %v2241
        %v2243 = vpop.f32.mrb[0].mxu0
        %2244 = vmatprep.mubr.f32.mxu0 0.0
        %2245 = vmatmul.mubr.f32.gmra.mrb[0].mxu0 %v2039
        %v2246 = vpop.f32.mrb[0].mxu0
        %v2247 = vadd.f32 0.0, %v2246
        %v2248 = vpop.f32.mrb[0].mxu0
        %2249 = vmatprep.mubr.f32.mxu0 0.0
        %2250 = vmatmul.mubr.f32.gmra.mrb[0].mxu0 %v2040
        %v2251 = vpop.f32.mrb[0].mxu0
        %v2252 = vadd.f32 0.0, %v2251
        %v2253 = vpop.f32.mrb[0].mxu0
        %2254 = vmatprep.mubr.f32.mxu0 0.0
        %2255 = vmatmul.mubr.f32.gmra.mrb[0].mxu0 %v2041
        %v2256 = vpop.f32.mrb[0].mxu0
        %v2257 = vadd.f32 0.0, %v2256
        %v2258 = vpop.f32.mrb[0].mxu0
        %2259 = vmatprep.mubr.f32.mxu0 0.0
        %2260 = vmatmul.mubr.f32.gmra.mrb[0].mxu0 %v2042
        %v2261 = vpop.f32.mrb[0].mxu0
        %v2262 = vadd.f32 0.0, %v2261
        %v2263 = vpop.f32.mrb[0].mxu0
        %2264 = vmatprep.mubr.f32.mxu0 0.0
        %2265 = vmatmul.mubr.f32.gmra.mrb[0].mxu0 %v2043
        %v2266 = vpop.f32.mrb[0].mxu0
        %v2267 = vadd.f32 0.0, %v2266
        %v2268 = vpop.f32.mrb[0].mxu0
        %2269 = vmatprep.mubr.f32.mxu0 0.0
        %2270 = vmatmul.mubr.f32.gmra.mrb[0].mxu0 %v2044
        %v2271 = vpop.f32.mrb[0].mxu0
        %v2272 = vadd.f32 0.0, %v2271
        %v2273 = vpop.f32.mrb[0].mxu0
        %2274 = vmatprep.mubr.f32.mxu0 0.0
        %2275 = vmatmul.mubr.f32.gmra.mrb[0].mxu0 %v2045
        %v2276 = vpop.f32.mrb[0].mxu0
        %v2277 = vadd.f32 0.0, %v2276
        %v2278 = vpop.f32.mrb[0].mxu0
        %2279 = vmatprep.mubr.f32.mxu0 0.0
        %2280 = vmatmul.mubr.f32.gmra.mrb[0].mxu0 %v2046
        %v2281 = vpop.f32.mrb[0].mxu0
        %v2282 = vadd.f32 0.0, %v2281
        %v2283 = vpop.f32.mrb[0].mxu0
        %2284 = vmatprep.mubr.f32.mxu0 0.0
        %2285 = vmatmul.mubr.f32.gmra.mrb[0].mxu0 %v2047
        %v2286 = vpop.f32.mrb[0].mxu0
        %v2287 = vadd.f32 0.0, %v2286
        %v2288 = vpop.f32.mrb[0].mxu0
        %2289 = vmatprep.mubr.f32.mxu0 0.0
        %2290 = vmatmul.mubr.f32.gmra.mrb[0].mxu0 %v2048
        %v2291 = vpop.f32.mrb[0].mxu0
        %v2292 = vadd.f32 0.0, %v2291
        %v2293 = vpop.f32.mrb[0].mxu0
        %2294 = vdwg.mxu0
        %v2295 = vadd.f32 %v1985, %v2137
        %v2296 = vadd.f32 %v1986, %v2142
        %v2297 = vadd.f32 %v1987, %v2147
        %v2298 = vadd.f32 %v1988, %v2152
        %v2299 = vadd.f32 %v1989, %v2157
        %v2300 = vadd.f32 %v1990, %v2162
        %v2301 = vadd.f32 %v1991, %v2167
        %v2302 = vadd.f32 %v1992, %v2172
        %v2303 = vadd.f32 %v1993, %v2177
        %v2304 = vadd.f32 %v1994, %v2182
        %v2305 = vadd.f32 %v1995, %v2187
        %v2306 = vadd.f32 %v1996, %v2192
        %v2307 = vadd.f32 %v1997, %v2197
        %v2308 = vadd.f32 %v1998, %v2202
        %v2309 = vadd.f32 %v1999, %v2207
        %v2310 = vadd.f32 %v2000, %v2212
        %v2311 = vadd.f32 %v2001, %v2217
        %v2312 = vadd.f32 %v2002, %v2222
        %v2313 = vadd.f32 %v2003, %v2227
        %v2314 = vadd.f32 %v2004, %v2232
        %v2315 = vadd.f32 %v2005, %v2237
        %v2316 = vadd.f32 %v2006, %v2242
        %v2317 = vadd.f32 %v2007, %v2247
        %v2318 = vadd.f32 %v2008, %v2252
        %v2319 = vadd.f32 %v2009, %v2257
        %v2320 = vadd.f32 %v2010, %v2262
        %v2321 = vadd.f32 %v2011, %v2267
        %v2322 = vadd.f32 %v2012, %v2272
        %v2323 = vadd.f32 %v2013, %v2277
        %v2324 = vadd.f32 %v2014, %v2282
        %v2325 = vadd.f32 %v2015, %v2287
        %v2326 = vadd.f32 %v2016, %v2292
        %s2327 = scalar_lea.vmem [#allocation6], 640
        %v2328 = vld [vmem:[%s2327] sm:$0xff]
        %v2329 = vld [vmem:[%s2327 + $0x8] sm:$0xff]
        %v2330 = vld [vmem:[%s2327 + $0x10] sm:$0xff]
        %v2331 = vld [vmem:[%s2327 + $0x18] sm:$0xff]
        %v2332 = vld [vmem:[%s2327 + $0x20] sm:$0xff]
        %v2333 = vld [vmem:[%s2327 + $0x28] sm:$0xff]
        %v2334 = vld [vmem:[%s2327 + $0x30] sm:$0xff]
        %v2335 = vld [vmem:[%s2327 + $0x38] sm:$0xff]
        %v2336 = vld [vmem:[%s2327 + $0x40] sm:$0xff]
        %v2337 = vld [vmem:[%s2327 + $0x48] sm:$0xff]
        %v2338 = vld [vmem:[%s2327 + $0x50] sm:$0xff]
        %v2339 = vld [vmem:[%s2327 + $0x58] sm:$0xff]
        %v2340 = vld [vmem:[%s2327 + $0x60] sm:$0xff]
        %v2341 = vld [vmem:[%s2327 + $0x68] sm:$0xff]
        %v2342 = vld [vmem:[%s2327 + $0x70] sm:$0xff]
        %v2343 = vld [vmem:[%s2327 + $0x78] sm:$0xff]
        %2344 = vmatprep.subr.mxu0 0.0
        %2345 = vmatpush1.msra.mxu0 %v2328
        %2346 = vmatprep.subr.mxu0 0.0
        %2347 = vmatpush1.msra.mxu0 %v2329
        %2348 = vmatprep.subr.mxu0 0.0
        %2349 = vmatpush1.msra.mxu0 %v2330
        %2350 = vmatprep.subr.mxu0 0.0
        %2351 = vmatpush1.msra.mxu0 %v2331
        %2352 = vmatprep.subr.mxu0 0.0
        %2353 = vmatpush1.msra.mxu0 %v2332
        %2354 = vmatprep.subr.mxu0 0.0
        %2355 = vmatpush1.msra.mxu0 %v2333
        %2356 = vmatprep.subr.mxu0 0.0
        %2357 = vmatpush1.msra.mxu0 %v2334
        %2358 = vmatprep.subr.mxu0 0.0
        %2359 = vmatpush1.msra.mxu0 %v2335
        %2360 = vmatprep.subr.mxu0 0.0
        %2361 = vmatpush1.msra.mxu0 %v2336
        %2362 = vmatprep.subr.mxu0 0.0
        %2363 = vmatpush1.msra.mxu0 %v2337
        %2364 = vmatprep.subr.mxu0 0.0
        %2365 = vmatpush1.msra.mxu0 %v2338
        %2366 = vmatprep.subr.mxu0 0.0
        %2367 = vmatpush1.msra.mxu0 %v2339
        %2368 = vmatprep.subr.mxu0 0.0
        %2369 = vmatpush1.msra.mxu0 %v2340
        %2370 = vmatprep.subr.mxu0 0.0
        %2371 = vmatpush1.msra.mxu0 %v2341
        %2372 = vmatprep.subr.mxu0 0.0
        %2373 = vmatpush1.msra.mxu0 %v2342
        %2374 = vmatprep.subr.mxu0 0.0
        %2375 = vmatpush1.msra.mxu0 %v2343
        %2376 = vmatprep.subr.mxu0 0.0
        %2377 = vmatpush1.msra.mxu0 0.0
        %2378 = vmatprep.subr.mxu0 0.0
        %2379 = vmatpush1.msra.mxu0 0.0
        %2380 = vmatprep.subr.mxu0 0.0
        %2381 = vmatpush1.msra.mxu0 0.0
        %2382 = vmatprep.subr.mxu0 0.0
        %2383 = vmatpush1.msra.mxu0 0.0
        %2384 = vmatprep.subr.mxu0 0.0
        %2385 = vmatpush1.msra.mxu0 0.0
        %2386 = vmatprep.subr.mxu0 0.0
        %2387 = vmatpush1.msra.mxu0 0.0
        %2388 = vmatprep.subr.mxu0 0.0
        %2389 = vmatpush1.msra.mxu0 0.0
        %2390 = vmatprep.subr.mxu0 0.0
        %2391 = vmatpush1.msra.mxu0 0.0
        %2392 = vmatprep.subr.mxu0 0.0
        %2393 = vmatpush1.msra.mxu0 0.0
        %2394 = vmatprep.subr.mxu0 0.0
        %2395 = vmatpush1.msra.mxu0 0.0
        %2396 = vmatprep.subr.mxu0 0.0
        %2397 = vmatpush1.msra.mxu0 0.0
        %2398 = vmatprep.subr.mxu0 0.0
        %2399 = vmatpush1.msra.mxu0 0.0
        %2400 = vmatprep.subr.mxu0 0.0
        %2401 = vmatpush1.msra.mxu0 0.0
        %2402 = vmatprep.subr.mxu0 0.0
        %2403 = vmatpush1.msra.mxu0 0.0
        %2404 = vmatprep.subr.mxu0 0.0
        %2405 = vmatpush1.msra.mxu0 0.0
        %2406 = vmatprep.subr.mxu0 0.0
        %2407 = vmatpush1.msra.mxu0 0.0
        %2408 = vmatprep.mubr.f32.mxu0 0.0
        %2409 = vmatmul.mubr.f32.gmra.mrb[0].mxu0 %v2019
        %v2410 = vpop.f32.mrb[0].mxu0
        %v2411 = vadd.f32 0.0, %v2410
        %v2412 = vpop.f32.mrb[0].mxu0
        %2413 = vmatprep.mubr.f32.mxu0 0.0
        %2414 = vmatmul.mubr.f32.gmra.mrb[0].mxu0 %v2020
        %v2415 = vpop.f32.mrb[0].mxu0
        %v2416 = vadd.f32 0.0, %v2415
        %v2417 = vpop.f32.mrb[0].mxu0
        %2418 = vmatprep.mubr.f32.mxu0 0.0
        %2419 = vmatmul.mubr.f32.gmra.mrb[0].mxu0 %v2021
        %v2420 = vpop.f32.mrb[0].mxu0
        %v2421 = vadd.f32 0.0, %v2420
        %v2422 = vpop.f32.mrb[0].mxu0
        %2423 = vmatprep.mubr.f32.mxu0 0.0
        %2424 = vmatmul.mubr.f32.gmra.mrb[0].mxu0 %v2022
        %v2425 = vpop.f32.mrb[0].mxu0
        %v2426 = vadd.f32 0.0, %v2425
        %v2427 = vpop.f32.mrb[0].mxu0
        %2428 = vmatprep.mubr.f32.mxu0 0.0
        %2429 = vmatmul.mubr.f32.gmra.mrb[0].mxu0 %v2023
        %v2430 = vpop.f32.mrb[0].mxu0
        %v2431 = vadd.f32 0.0, %v2430
        %v2432 = vpop.f32.mrb[0].mxu0
        %2433 = vmatprep.mubr.f32.mxu0 0.0
        %2434 = vmatmul.mubr.f32.gmra.mrb[0].mxu0 %v2024
        %v2435 = vpop.f32.mrb[0].mxu0
        %v2436 = vadd.f32 0.0, %v2435
        %v2437 = vpop.f32.mrb[0].mxu0
        %2438 = vmatprep.mubr.f32.mxu0 0.0
        %2439 = vmatmul.mubr.f32.gmra.mrb[0].mxu0 %v2025
        %v2440 = vpop.f32.mrb[0].mxu0
        %v2441 = vadd.f32 0.0, %v2440
        %v2442 = vpop.f32.mrb[0].mxu0
        %2443 = vmatprep.mubr.f32.mxu0 0.0
        %2444 = vmatmul.mubr.f32.gmra.mrb[0].mxu0 %v2026
        %v2445 = vpop.f32.mrb[0].mxu0
        %v2446 = vadd.f32 0.0, %v2445
        %v2447 = vpop.f32.mrb[0].mxu0
        %2448 = vmatprep.mubr.f32.mxu0 0.0
        %2449 = vmatmul.mubr.f32.gmra.mrb[0].mxu0 %v2027
        %v2450 = vpop.f32.mrb[0].mxu0
        %v2451 = vadd.f32 0.0, %v2450
        %v2452 = vpop.f32.mrb[0].mxu0
        %2453 = vmatprep.mubr.f32.mxu0 0.0
        %2454 = vmatmul.mubr.f32.gmra.mrb[0].mxu0 %v2028
        %v2455 = vpop.f32.mrb[0].mxu0
        %v2456 = vadd.f32 0.0, %v2455
        %v2457 = vpop.f32.mrb[0].mxu0
        %2458 = vmatprep.mubr.f32.mxu0 0.0
        %2459 = vmatmul.mubr.f32.gmra.mrb[0].mxu0 %v2029
        %v2460 = vpop.f32.mrb[0].mxu0
        %v2461 = vadd.f32 0.0, %v2460
        %v2462 = vpop.f32.mrb[0].mxu0
        %2463 = vmatprep.mubr.f32.mxu0 0.0
        %2464 = vmatmul.mubr.f32.gmra.mrb[0].mxu0 %v2030
        %v2465 = vpop.f32.mrb[0].mxu0
        %v2466 = vadd.f32 0.0, %v2465
        %v2467 = vpop.f32.mrb[0].mxu0
        %2468 = vmatprep.mubr.f32.mxu0 0.0
        %2469 = vmatmul.mubr.f32.gmra.mrb[0].mxu0 %v2031
        %v2470 = vpop.f32.mrb[0].mxu0
        %v2471 = vadd.f32 0.0, %v2470
        %v2472 = vpop.f32.mrb[0].mxu0
        %2473 = vmatprep.mubr.f32.mxu0 0.0
        %2474 = vmatmul.mubr.f32.gmra.mrb[0].mxu0 %v2032
        %v2475 = vpop.f32.mrb[0].mxu0
        %v2476 = vadd.f32 0.0, %v2475
        %v2477 = vpop.f32.mrb[0].mxu0
        %2478 = vmatprep.mubr.f32.mxu0 0.0
        %2479 = vmatmul.mubr.f32.gmra.mrb[0].mxu0 %v2033
        %v2480 = vpop.f32.mrb[0].mxu0
        %v2481 = vadd.f32 0.0, %v2480
        %v2482 = vpop.f32.mrb[0].mxu0
        %2483 = vmatprep.mubr.f32.mxu0 0.0
        %2484 = vmatmul.mubr.f32.gmra.mrb[0].mxu0 %v2034
        %v2485 = vpop.f32.mrb[0].mxu0
        %v2486 = vadd.f32 0.0, %v2485
        %v2487 = vpop.f32.mrb[0].mxu0
        %2488 = vmatprep.mubr.f32.mxu0 0.0
        %2489 = vmatmul.mubr.f32.gmra.mrb[0].mxu0 %v2035
        %v2490 = vpop.f32.mrb[0].mxu0
        %v2491 = vadd.f32 0.0, %v2490
        %v2492 = vpop.f32.mrb[0].mxu0
        %2493 = vmatprep.mubr.f32.mxu0 0.0
        %2494 = vmatmul.mubr.f32.gmra.mrb[0].mxu0 %v2036
        %v2495 = vpop.f32.mrb[0].mxu0
        %v2496 = vadd.f32 0.0, %v2495
        %v2497 = vpop.f32.mrb[0].mxu0
        %2498 = vmatprep.mubr.f32.mxu0 0.0
        %2499 = vmatmul.mubr.f32.gmra.mrb[0].mxu0 %v2037
        %v2500 = vpop.f32.mrb[0].mxu0
        %v2501 = vadd.f32 0.0, %v2500
        %v2502 = vpop.f32.mrb[0].mxu0
        %2503 = vmatprep.mubr.f32.mxu0 0.0
        %2504 = vmatmul.mubr.f32.gmra.mrb[0].mxu0 %v2038
        %v2505 = vpop.f32.mrb[0].mxu0
        %v2506 = vadd.f32 0.0, %v2505
        %v2507 = vpop.f32.mrb[0].mxu0
        %2508 = vmatprep.mubr.f32.mxu0 0.0
        %2509 = vmatmul.mubr.f32.gmra.mrb[0].mxu0 %v2039
        %v2510 = vpop.f32.mrb[0].mxu0
        %v2511 = vadd.f32 0.0, %v2510
        %v2512 = vpop.f32.mrb[0].mxu0
        %2513 = vmatprep.mubr.f32.mxu0 0.0
        %2514 = vmatmul.mubr.f32.gmra.mrb[0].mxu0 %v2040
        %v2515 = vpop.f32.mrb[0].mxu0
        %v2516 = vadd.f32 0.0, %v2515
        %v2517 = vpop.f32.mrb[0].mxu0
        %2518 = vmatprep.mubr.f32.mxu0 0.0
        %2519 = vmatmul.mubr.f32.gmra.mrb[0].mxu0 %v2041
        %v2520 = vpop.f32.mrb[0].mxu0
        %v2521 = vadd.f32 0.0, %v2520
        %v2522 = vpop.f32.mrb[0].mxu0
        %2523 = vmatprep.mubr.f32.mxu0 0.0
        %2524 = vmatmul.mubr.f32.gmra.mrb[0].mxu0 %v2042
        %v2525 = vpop.f32.mrb[0].mxu0
        %v2526 = vadd.f32 0.0, %v2525
        %v2527 = vpop.f32.mrb[0].mxu0
        %2528 = vmatprep.mubr.f32.mxu0 0.0
        %2529 = vmatmul.mubr.f32.gmra.mrb[0].mxu0 %v2043
        %v2530 = vpop.f32.mrb[0].mxu0
        %v2531 = vadd.f32 0.0, %v2530
        %v2532 = vpop.f32.mrb[0].mxu0
        %2533 = vmatprep.mubr.f32.mxu0 0.0
        %2534 = vmatmul.mubr.f32.gmra.mrb[0].mxu0 %v2044
        %v2535 = vpop.f32.mrb[0].mxu0
        %v2536 = vadd.f32 0.0, %v2535
        %v2537 = vpop.f32.mrb[0].mxu0
        %2538 = vmatprep.mubr.f32.mxu0 0.0
        %2539 = vmatmul.mubr.f32.gmra.mrb[0].mxu0 %v2045
        %v2540 = vpop.f32.mrb[0].mxu0
        %v2541 = vadd.f32 0.0, %v2540
        %v2542 = vpop.f32.mrb[0].mxu0
        %2543 = vmatprep.mubr.f32.mxu0 0.0
        %2544 = vmatmul.mubr.f32.gmra.mrb[0].mxu0 %v2046
        %v2545 = vpop.f32.mrb[0].mxu0
        %v2546 = vadd.f32 0.0, %v2545
        %v2547 = vpop.f32.mrb[0].mxu0
        %2548 = vmatprep.mubr.f32.mxu0 0.0
        %2549 = vmatmul.mubr.f32.gmra.mrb[0].mxu0 %v2047
        %v2550 = vpop.f32.mrb[0].mxu0
        %v2551 = vadd.f32 0.0, %v2550
        %v2552 = vpop.f32.mrb[0].mxu0
        %2553 = vmatprep.mubr.f32.mxu0 0.0
        %2554 = vmatmul.mubr.f32.gmra.mrb[0].mxu0 %v2048
        %v2555 = vpop.f32.mrb[0].mxu0
        %v2556 = vadd.f32 0.0, %v2555
        %v2557 = vpop.f32.mrb[0].mxu0
        %2558 = vmatprep.mubr.f32.mxu0 0.0
        %2559 = vmatmul.mubr.f32.gmra.mrb[0].mxu0 %v2049
        %v2560 = vpop.f32.mrb[0].mxu0
        %v2561 = vadd.f32 0.0, %v2560
        %v2562 = vpop.f32.mrb[0].mxu0
        %2563 = vmatprep.mubr.f32.mxu0 0.0
        %2564 = vmatmul.mubr.f32.gmra.mrb[0].mxu0 %v2050
        %v2565 = vpop.f32.mrb[0].mxu0
        %v2566 = vadd.f32 0.0, %v2565
        %v2567 = vpop.f32.mrb[0].mxu0
        %2568 = vdwg.mxu0
        %v2569 = vadd.f32 %v2295, %v2411
        %v2570 = vadd.f32 %v2296, %v2416
        %v2571 = vadd.f32 %v2297, %v2421
        %v2572 = vadd.f32 %v2298, %v2426
        %v2573 = vadd.f32 %v2299, %v2431
        %v2574 = vadd.f32 %v2300, %v2436
        %v2575 = vadd.f32 %v2301, %v2441
        %v2576 = vadd.f32 %v2302, %v2446
        %v2577 = vadd.f32 %v2303, %v2451
        %v2578 = vadd.f32 %v2304, %v2456
        %v2579 = vadd.f32 %v2305, %v2461
        %v2580 = vadd.f32 %v2306, %v2466
        %v2581 = vadd.f32 %v2307, %v2471
        %v2582 = vadd.f32 %v2308, %v2476
        %v2583 = vadd.f32 %v2309, %v2481
        %v2584 = vadd.f32 %v2310, %v2486
        %v2585 = vadd.f32 %v2311, %v2491
        %v2586 = vadd.f32 %v2312, %v2496
        %v2587 = vadd.f32 %v2313, %v2501
        %v2588 = vadd.f32 %v2314, %v2506
        %v2589 = vadd.f32 %v2315, %v2511
        %v2590 = vadd.f32 %v2316, %v2516
        %v2591 = vadd.f32 %v2317, %v2521
        %v2592 = vadd.f32 %v2318, %v2526
        %v2593 = vadd.f32 %v2319, %v2531
        %v2594 = vadd.f32 %v2320, %v2536
        %v2595 = vadd.f32 %v2321, %v2541
        %v2596 = vadd.f32 %v2322, %v2546
        %v2597 = vadd.f32 %v2323, %v2551
        %v2598 = vadd.f32 %v2324, %v2556
        %v2599 = vadd.f32 %v2325, %v2561
        %v2600 = vadd.f32 %v2326, %v2566
        %s2601 = scalar_lea.vmem [#allocation6], 1024
        %v2602 = vld [vmem:[%s2601] sm:$0xff]
        %v2603 = vld [vmem:[%s2601 + $0x8] sm:$0xff]
        %v2604 = vld [vmem:[%s2601 + $0x10] sm:$0xff]
        %v2605 = vld [vmem:[%s2601 + $0x18] sm:$0xff]
        %v2606 = vld [vmem:[%s2601 + $0x20] sm:$0xff]
        %v2607 = vld [vmem:[%s2601 + $0x28] sm:$0xff]
        %v2608 = vld [vmem:[%s2601 + $0x30] sm:$0xff]
        %v2609 = vld [vmem:[%s2601 + $0x38] sm:$0xff]
        %v2610 = vld [vmem:[%s2601 + $0x40] sm:$0xff]
        %v2611 = vld [vmem:[%s2601 + $0x48] sm:$0xff]
        %v2612 = vld [vmem:[%s2601 + $0x50] sm:$0xff]
        %v2613 = vld [vmem:[%s2601 + $0x58] sm:$0xff]
        %v2614 = vld [vmem:[%s2601 + $0x60] sm:$0xff]
        %v2615 = vld [vmem:[%s2601 + $0x68] sm:$0xff]
        %v2616 = vld [vmem:[%s2601 + $0x70] sm:$0xff]
        %v2617 = vld [vmem:[%s2601 + $0x78] sm:$0xff]
        %2618 = vmatprep.subr.mxu0 0.0
        %2619 = vmatpush1.msra.mxu0 %v2602
        %2620 = vmatprep.subr.mxu0 0.0
        %2621 = vmatpush1.msra.mxu0 %v2603
        %2622 = vmatprep.subr.mxu0 0.0
        %2623 = vmatpush1.msra.mxu0 %v2604
        %2624 = vmatprep.subr.mxu0 0.0
        %2625 = vmatpush1.msra.mxu0 %v2605
        %2626 = vmatprep.subr.mxu0 0.0
        %2627 = vmatpush1.msra.mxu0 %v2606
        %2628 = vmatprep.subr.mxu0 0.0
        %2629 = vmatpush1.msra.mxu0 %v2607
        %2630 = vmatprep.subr.mxu0 0.0
        %2631 = vmatpush1.msra.mxu0 %v2608
        %2632 = vmatprep.subr.mxu0 0.0
        %2633 = vmatpush1.msra.mxu0 %v2609
        %2634 = vmatprep.subr.mxu0 0.0
        %2635 = vmatpush1.msra.mxu0 %v2610
        %2636 = vmatprep.subr.mxu0 0.0
        %2637 = vmatpush1.msra.mxu0 %v2611
        %2638 = vmatprep.subr.mxu0 0.0
        %2639 = vmatpush1.msra.mxu0 %v2612
        %2640 = vmatprep.subr.mxu0 0.0
        %2641 = vmatpush1.msra.mxu0 %v2613
        %2642 = vmatprep.subr.mxu0 0.0
        %2643 = vmatpush1.msra.mxu0 %v2614
        %2644 = vmatprep.subr.mxu0 0.0
        %2645 = vmatpush1.msra.mxu0 %v2615
        %2646 = vmatprep.subr.mxu0 0.0
        %2647 = vmatpush1.msra.mxu0 %v2616
        %2648 = vmatprep.subr.mxu0 0.0
        %2649 = vmatpush1.msra.mxu0 %v2617
        %2650 = vmatprep.subr.mxu0 0.0
        %2651 = vmatpush1.msra.mxu0 0.0
        %2652 = vmatprep.subr.mxu0 0.0
        %2653 = vmatpush1.msra.mxu0 0.0
        %2654 = vmatprep.subr.mxu0 0.0
        %2655 = vmatpush1.msra.mxu0 0.0
        %2656 = vmatprep.subr.mxu0 0.0
        %2657 = vmatpush1.msra.mxu0 0.0
        %2658 = vmatprep.subr.mxu0 0.0
        %2659 = vmatpush1.msra.mxu0 0.0
        %2660 = vmatprep.subr.mxu0 0.0
        %2661 = vmatpush1.msra.mxu0 0.0
        %2662 = vmatprep.subr.mxu0 0.0
        %2663 = vmatpush1.msra.mxu0 0.0
        %2664 = vmatprep.subr.mxu0 0.0
        %2665 = vmatpush1.msra.mxu0 0.0
        %2666 = vmatprep.subr.mxu0 0.0
        %2667 = vmatpush1.msra.mxu0 0.0
        %2668 = vmatprep.subr.mxu0 0.0
        %2669 = vmatpush1.msra.mxu0 0.0
        %2670 = vmatprep.subr.mxu0 0.0
        %2671 = vmatpush1.msra.mxu0 0.0
        %2672 = vmatprep.subr.mxu0 0.0
        %2673 = vmatpush1.msra.mxu0 0.0
        %2674 = vmatprep.subr.mxu0 0.0
        %2675 = vmatpush1.msra.mxu0 0.0
        %2676 = vmatprep.subr.mxu0 0.0
        %2677 = vmatpush1.msra.mxu0 0.0
        %2678 = vmatprep.subr.mxu0 0.0
        %2679 = vmatpush1.msra.mxu0 0.0
        %2680 = vmatprep.subr.mxu0 0.0
        %2681 = vmatpush1.msra.mxu0 0.0
        %2682 = vmatprep.mubr.f32.mxu0 0.0
        %2683 = vmatmul.mubr.f32.gmra.mrb[0].mxu0 %v2021
        %v2684 = vpop.f32.mrb[0].mxu0
        %v2685 = vadd.f32 0.0, %v2684
        %v2686 = vpop.f32.mrb[0].mxu0
        %2687 = vmatprep.mubr.f32.mxu0 0.0
        %2688 = vmatmul.mubr.f32.gmra.mrb[0].mxu0 %v2022
        %v2689 = vpop.f32.mrb[0].mxu0
        %v2690 = vadd.f32 0.0, %v2689
        %v2691 = vpop.f32.mrb[0].mxu0
        %2692 = vmatprep.mubr.f32.mxu0 0.0
        %2693 = vmatmul.mubr.f32.gmra.mrb[0].mxu0 %v2023
        %v2694 = vpop.f32.mrb[0].mxu0
        %v2695 = vadd.f32 0.0, %v2694
        %v2696 = vpop.f32.mrb[0].mxu0
        %2697 = vmatprep.mubr.f32.mxu0 0.0
        %2698 = vmatmul.mubr.f32.gmra.mrb[0].mxu0 %v2024
        %v2699 = vpop.f32.mrb[0].mxu0
        %v2700 = vadd.f32 0.0, %v2699
        %v2701 = vpop.f32.mrb[0].mxu0
        %2702 = vmatprep.mubr.f32.mxu0 0.0
        %2703 = vmatmul.mubr.f32.gmra.mrb[0].mxu0 %v2025
        %v2704 = vpop.f32.mrb[0].mxu0
        %v2705 = vadd.f32 0.0, %v2704
        %v2706 = vpop.f32.mrb[0].mxu0
        %2707 = vmatprep.mubr.f32.mxu0 0.0
        %2708 = vmatmul.mubr.f32.gmra.mrb[0].mxu0 %v2026
        %v2709 = vpop.f32.mrb[0].mxu0
        %v2710 = vadd.f32 0.0, %v2709
        %v2711 = vpop.f32.mrb[0].mxu0
        %2712 = vmatprep.mubr.f32.mxu0 0.0
        %2713 = vmatmul.mubr.f32.gmra.mrb[0].mxu0 %v2027
        %v2714 = vpop.f32.mrb[0].mxu0
        %v2715 = vadd.f32 0.0, %v2714
        %v2716 = vpop.f32.mrb[0].mxu0
        %2717 = vmatprep.mubr.f32.mxu0 0.0
        %2718 = vmatmul.mubr.f32.gmra.mrb[0].mxu0 %v2028
        %v2719 = vpop.f32.mrb[0].mxu0
        %v2720 = vadd.f32 0.0, %v2719
        %v2721 = vpop.f32.mrb[0].mxu0
        %2722 = vmatprep.mubr.f32.mxu0 0.0
        %2723 = vmatmul.mubr.f32.gmra.mrb[0].mxu0 %v2029
        %v2724 = vpop.f32.mrb[0].mxu0
        %v2725 = vadd.f32 0.0, %v2724
        %v2726 = vpop.f32.mrb[0].mxu0
        %2727 = vmatprep.mubr.f32.mxu0 0.0
        %2728 = vmatmul.mubr.f32.gmra.mrb[0].mxu0 %v2030
        %v2729 = vpop.f32.mrb[0].mxu0
        %v2730 = vadd.f32 0.0, %v2729
        %v2731 = vpop.f32.mrb[0].mxu0
        %2732 = vmatprep.mubr.f32.mxu0 0.0
        %2733 = vmatmul.mubr.f32.gmra.mrb[0].mxu0 %v2031
        %v2734 = vpop.f32.mrb[0].mxu0
        %v2735 = vadd.f32 0.0, %v2734
        %v2736 = vpop.f32.mrb[0].mxu0
        %2737 = vmatprep.mubr.f32.mxu0 0.0
        %2738 = vmatmul.mubr.f32.gmra.mrb[0].mxu0 %v2032
        %v2739 = vpop.f32.mrb[0].mxu0
        %v2740 = vadd.f32 0.0, %v2739
        %v2741 = vpop.f32.mrb[0].mxu0
        %2742 = vmatprep.mubr.f32.mxu0 0.0
        %2743 = vmatmul.mubr.f32.gmra.mrb[0].mxu0 %v2033
        %v2744 = vpop.f32.mrb[0].mxu0
        %v2745 = vadd.f32 0.0, %v2744
        %v2746 = vpop.f32.mrb[0].mxu0
        %2747 = vmatprep.mubr.f32.mxu0 0.0
        %2748 = vmatmul.mubr.f32.gmra.mrb[0].mxu0 %v2034
        %v2749 = vpop.f32.mrb[0].mxu0
        %v2750 = vadd.f32 0.0, %v2749
        %v2751 = vpop.f32.mrb[0].mxu0
        %2752 = vmatprep.mubr.f32.mxu0 0.0
        %2753 = vmatmul.mubr.f32.gmra.mrb[0].mxu0 %v2035
        %v2754 = vpop.f32.mrb[0].mxu0
        %v2755 = vadd.f32 0.0, %v2754
        %v2756 = vpop.f32.mrb[0].mxu0
        %2757 = vmatprep.mubr.f32.mxu0 0.0
        %2758 = vmatmul.mubr.f32.gmra.mrb[0].mxu0 %v2036
        %v2759 = vpop.f32.mrb[0].mxu0
        %v2760 = vadd.f32 0.0, %v2759
        %v2761 = vpop.f32.mrb[0].mxu0
        %2762 = vmatprep.mubr.f32.mxu0 0.0
        %2763 = vmatmul.mubr.f32.gmra.mrb[0].mxu0 %v2037
        %v2764 = vpop.f32.mrb[0].mxu0
        %v2765 = vadd.f32 0.0, %v2764
        %v2766 = vpop.f32.mrb[0].mxu0
        %2767 = vmatprep.mubr.f32.mxu0 0.0
        %2768 = vmatmul.mubr.f32.gmra.mrb[0].mxu0 %v2038
        %v2769 = vpop.f32.mrb[0].mxu0
        %v2770 = vadd.f32 0.0, %v2769
        %v2771 = vpop.f32.mrb[0].mxu0
        %2772 = vmatprep.mubr.f32.mxu0 0.0
        %2773 = vmatmul.mubr.f32.gmra.mrb[0].mxu0 %v2039
        %v2774 = vpop.f32.mrb[0].mxu0
        %v2775 = vadd.f32 0.0, %v2774
        %v2776 = vpop.f32.mrb[0].mxu0
        %2777 = vmatprep.mubr.f32.mxu0 0.0
        %2778 = vmatmul.mubr.f32.gmra.mrb[0].mxu0 %v2040
        %v2779 = vpop.f32.mrb[0].mxu0
        %v2780 = vadd.f32 0.0, %v2779
        %v2781 = vpop.f32.mrb[0].mxu0
        %2782 = vmatprep.mubr.f32.mxu0 0.0
        %2783 = vmatmul.mubr.f32.gmra.mrb[0].mxu0 %v2041
        %v2784 = vpop.f32.mrb[0].mxu0
        %v2785 = vadd.f32 0.0, %v2784
        %v2786 = vpop.f32.mrb[0].mxu0
        %2787 = vmatprep.mubr.f32.mxu0 0.0
        %2788 = vmatmul.mubr.f32.gmra.mrb[0].mxu0 %v2042
        %v2789 = vpop.f32.mrb[0].mxu0
        %v2790 = vadd.f32 0.0, %v2789
        %v2791 = vpop.f32.mrb[0].mxu0
        %2792 = vmatprep.mubr.f32.mxu0 0.0
        %2793 = vmatmul.mubr.f32.gmra.mrb[0].mxu0 %v2043
        %v2794 = vpop.f32.mrb[0].mxu0
        %v2795 = vadd.f32 0.0, %v2794
        %v2796 = vpop.f32.mrb[0].mxu0
        %2797 = vmatprep.mubr.f32.mxu0 0.0
        %2798 = vmatmul.mubr.f32.gmra.mrb[0].mxu0 %v2044
        %v2799 = vpop.f32.mrb[0].mxu0
        %v2800 = vadd.f32 0.0, %v2799
        %v2801 = vpop.f32.mrb[0].mxu0
        %2802 = vmatprep.mubr.f32.mxu0 0.0
        %2803 = vmatmul.mubr.f32.gmra.mrb[0].mxu0 %v2045
        %v2804 = vpop.f32.mrb[0].mxu0
        %v2805 = vadd.f32 0.0, %v2804
        %v2806 = vpop.f32.mrb[0].mxu0
        %2807 = vmatprep.mubr.f32.mxu0 0.0
        %2808 = vmatmul.mubr.f32.gmra.mrb[0].mxu0 %v2046
        %v2809 = vpop.f32.mrb[0].mxu0
        %v2810 = vadd.f32 0.0, %v2809
        %v2811 = vpop.f32.mrb[0].mxu0
        %2812 = vmatprep.mubr.f32.mxu0 0.0
        %2813 = vmatmul.mubr.f32.gmra.mrb[0].mxu0 %v2047
        %v2814 = vpop.f32.mrb[0].mxu0
        %v2815 = vadd.f32 0.0, %v2814
        %v2816 = vpop.f32.mrb[0].mxu0
        %2817 = vmatprep.mubr.f32.mxu0 0.0
        %2818 = vmatmul.mubr.f32.gmra.mrb[0].mxu0 %v2048
        %v2819 = vpop.f32.mrb[0].mxu0
        %v2820 = vadd.f32 0.0, %v2819
        %v2821 = vpop.f32.mrb[0].mxu0
        %2822 = vmatprep.mubr.f32.mxu0 0.0
        %2823 = vmatmul.mubr.f32.gmra.mrb[0].mxu0 %v2049
        %v2824 = vpop.f32.mrb[0].mxu0
        %v2825 = vadd.f32 0.0, %v2824
        %v2826 = vpop.f32.mrb[0].mxu0
        %2827 = vmatprep.mubr.f32.mxu0 0.0
        %2828 = vmatmul.mubr.f32.gmra.mrb[0].mxu0 %v2050
        %v2829 = vpop.f32.mrb[0].mxu0
        %v2830 = vadd.f32 0.0, %v2829
        %v2831 = vpop.f32.mrb[0].mxu0
        %2832 = vmatprep.mubr.f32.mxu0 0.0
        %2833 = vmatmul.mubr.f32.gmra.mrb[0].mxu0 %v2051
        %v2834 = vpop.f32.mrb[0].mxu0
        %v2835 = vadd.f32 0.0, %v2834
        %v2836 = vpop.f32.mrb[0].mxu0
        %2837 = vmatprep.mubr.f32.mxu0 0.0
        %2838 = vmatmul.mubr.f32.gmra.mrb[0].mxu0 %v2052
        %v2839 = vpop.f32.mrb[0].mxu0
        %v2840 = vadd.f32 0.0, %v2839
        %v2841 = vpop.f32.mrb[0].mxu0
        %2842 = vdwg.mxu0
        %v2843 = vadd.f32 %v2569, %v2685
        %v2844 = vadd.f32 %v2570, %v2690
        %v2845 = vadd.f32 %v2571, %v2695
        %v2846 = vadd.f32 %v2572, %v2700
        %v2847 = vadd.f32 %v2573, %v2705
        %v2848 = vadd.f32 %v2574, %v2710
        %v2849 = vadd.f32 %v2575, %v2715
        %v2850 = vadd.f32 %v2576, %v2720
        %v2851 = vadd.f32 %v2577, %v2725
        %v2852 = vadd.f32 %v2578, %v2730
        %v2853 = vadd.f32 %v2579, %v2735
        %v2854 = vadd.f32 %v2580, %v2740
        %v2855 = vadd.f32 %v2581, %v2745
        %v2856 = vadd.f32 %v2582, %v2750
        %v2857 = vadd.f32 %v2583, %v2755
        %v2858 = vadd.f32 %v2584, %v2760
        %v2859 = vadd.f32 %v2585, %v2765
        %v2860 = vadd.f32 %v2586, %v2770
        %v2861 = vadd.f32 %v2587, %v2775
        %v2862 = vadd.f32 %v2588, %v2780
        %v2863 = vadd.f32 %v2589, %v2785
        %v2864 = vadd.f32 %v2590, %v2790
        %v2865 = vadd.f32 %v2591, %v2795
        %v2866 = vadd.f32 %v2592, %v2800
        %v2867 = vadd.f32 %v2593, %v2805
        %v2868 = vadd.f32 %v2594, %v2810
        %v2869 = vadd.f32 %v2595, %v2815
        %v2870 = vadd.f32 %v2596, %v2820
        %v2871 = vadd.f32 %v2597, %v2825
        %v2872 = vadd.f32 %v2598, %v2830
        %v2873 = vadd.f32 %v2599, %v2835
        %v2874 = vadd.f32 %v2600, %v2840
        %v2875 = vadd.f32 %v2843, %v2844
        %v2876 = vadd.f32 %v2875, %v2845
        %v2877 = vadd.f32 %v2876, %v2846
        %v2878 = vadd.f32 %v2877, %v2847
        %v2879 = vadd.f32 %v2878, %v2848
        %v2880 = vadd.f32 %v2879, %v2849
        %v2881 = vadd.f32 %v2880, %v2850
        %v2882 = vadd.f32 %v2881, %v2851
        %v2883 = vadd.f32 %v2882, %v2852
        %v2884 = vadd.f32 %v2883, %v2853
        %v2885 = vadd.f32 %v2884, %v2854
        %v2886 = vadd.f32 %v2885, %v2855
        %v2887 = vadd.f32 %v2886, %v2856
        %v2888 = vadd.f32 %v2887, %v2857
        %v2889 = vadd.f32 %v2888, %v2858
        %v2890 = vadd.f32 %v2889, %v2859
        %v2891 = vadd.f32 %v2890, %v2860
        %v2892 = vadd.f32 %v2891, %v2861
        %v2893 = vadd.f32 %v2892, %v2862
        %v2894 = vadd.f32 %v2893, %v2863
        %v2895 = vadd.f32 %v2894, %v2864
        %v2896 = vadd.f32 %v2895, %v2865
        %v2897 = vadd.f32 %v2896, %v2866
        %v2898 = vadd.f32 %v2897, %v2867
        %v2899 = vadd.f32 %v2898, %v2868
        %v2900 = vadd.f32 %v2899, %v2869
        %v2901 = vadd.f32 %v2900, %v2870
        %v2902 = vadd.f32 %v2901, %v2871
        %v2903 = vadd.f32 %v2902, %v2872
        %v2904 = vadd.f32 %v2903, %v2873
        %v2905 = vadd.f32 %v2904, %v2874
        %v2906 = vrot.slane %v2905, 4
        %v2907 = vadd.f32 %v2905, %v2906
        %v2908 = vrot.slane %v2907, 2
        %v2909 = vadd.f32 %v2907, %v2908
        %v2910 = vrot.slane %v2909, 1
        %v2911 = vadd.f32 %v2909, %v2910
        %v2912 = vmul.f32 %v2843, %v2843
        %v2913 = vmul.f32 %v2844, %v2844
        %v2914 = vmul.f32 %v2845, %v2845
        %v2915 = vmul.f32 %v2846, %v2846
        %v2916 = vmul.f32 %v2847, %v2847
        %v2917 = vmul.f32 %v2848, %v2848
        %v2918 = vmul.f32 %v2849, %v2849
        %v2919 = vmul.f32 %v2850, %v2850
        %v2920 = vmul.f32 %v2851, %v2851
        %v2921 = vmul.f32 %v2852, %v2852
        %v2922 = vmul.f32 %v2853, %v2853
        %v2923 = vmul.f32 %v2854, %v2854
        %v2924 = vmul.f32 %v2855, %v2855
        %v2925 = vmul.f32 %v2856, %v2856
        %v2926 = vmul.f32 %v2857, %v2857
        %v2927 = vmul.f32 %v2858, %v2858
        %v2928 = vmul.f32 %v2859, %v2859
        %v2929 = vmul.f32 %v2860, %v2860
        %v2930 = vmul.f32 %v2861, %v2861
        %v2931 = vmul.f32 %v2862, %v2862
        %v2932 = vmul.f32 %v2863, %v2863
        %v2933 = vmul.f32 %v2864, %v2864
        %v2934 = vmul.f32 %v2865, %v2865
        %v2935 = vmul.f32 %v2866, %v2866
        %v2936 = vmul.f32 %v2867, %v2867
        %v2937 = vmul.f32 %v2868, %v2868
        %v2938 = vmul.f32 %v2869, %v2869
        %v2939 = vmul.f32 %v2870, %v2870
        %v2940 = vmul.f32 %v2871, %v2871
        %v2941 = vmul.f32 %v2872, %v2872
        %v2942 = vmul.f32 %v2873, %v2873
        %v2943 = vmul.f32 %v2874, %v2874
        %v2944 = vadd.f32 %v2912, %v2913
        %v2945 = vadd.f32 %v2944, %v2914
        %v2946 = vadd.f32 %v2945, %v2915
        %v2947 = vadd.f32 %v2946, %v2916
        %v2948 = vadd.f32 %v2947, %v2917
        %v2949 = vadd.f32 %v2948, %v2918
        %v2950 = vadd.f32 %v2949, %v2919
        %v2951 = vadd.f32 %v2950, %v2920
        %v2952 = vadd.f32 %v2951, %v2921
        %v2953 = vadd.f32 %v2952, %v2922
        %v2954 = vadd.f32 %v2953, %v2923
        %v2955 = vadd.f32 %v2954, %v2924
        %v2956 = vadd.f32 %v2955, %v2925
        %v2957 = vadd.f32 %v2956, %v2926
        %v2958 = vadd.f32 %v2957, %v2927
        %v2959 = vadd.f32 %v2958, %v2928
        %v2960 = vadd.f32 %v2959, %v2929
        %v2961 = vadd.f32 %v2960, %v2930
        %v2962 = vadd.f32 %v2961, %v2931
        %v2963 = vadd.f32 %v2962, %v2932
        %v2964 = vadd.f32 %v2963, %v2933
        %v2965 = vadd.f32 %v2964, %v2934
        %v2966 = vadd.f32 %v2965, %v2935
        %v2967 = vadd.f32 %v2966, %v2936
        %v2968 = vadd.f32 %v2967, %v2937
        %v2969 = vadd.f32 %v2968, %v2938
        %v2970 = vadd.f32 %v2969, %v2939
        %v2971 = vadd.f32 %v2970, %v2940
        %v2972 = vadd.f32 %v2971, %v2941
        %v2973 = vadd.f32 %v2972, %v2942
        %v2974 = vadd.f32 %v2973, %v2943
        %v2975 = vrot.slane %v2974, 4
        %v2976 = vadd.f32 %v2974, %v2975
        %v2977 = vrot.slane %v2976, 2
        %v2978 = vadd.f32 %v2976, %v2977
        %v2979 = vrot.slane %v2978, 1
        %v2980 = vadd.f32 %v2978, %v2979
        %v2981 = vmul.f32 %v2911, 0.00390625
        %v2982 = vmul.f32 %v2980, 0.00390625
        %v2983 = vmul.f32 %v2981, %v2981
        %v2984 = vsub.f32 %v2982, %v2983
        %v2985 = vmax.f32 %v2984, 0.0
        %v2986 = vadd.f32 %v2985, 1e-05
        %v2987 = vrsqrt.pop %v2986
        %v2988 = vsub.f32 0.0, %v2981
        %v2989 = vmul.f32 %v2988, %v2987
        %v2990 = vmul.f32 %v2843, %v2987
        %v2991 = vmul.f32 %v2844, %v2987
        %v2992 = vmul.f32 %v2845, %v2987
        %v2993 = vmul.f32 %v2846, %v2987
        %v2994 = vmul.f32 %v2847, %v2987
        %v2995 = vmul.f32 %v2848, %v2987
        %v2996 = vmul.f32 %v2849, %v2987
        %v2997 = vmul.f32 %v2850, %v2987
        %v2998 = vmul.f32 %v2851, %v2987
        %v2999 = vmul.f32 %v2852, %v2987
        %v3000 = vmul.f32 %v2853, %v2987
        %v3001 = vmul.f32 %v2854, %v2987
        %v3002 = vmul.f32 %v2855, %v2987
        %v3003 = vmul.f32 %v2856, %v2987
        %v3004 = vmul.f32 %v2857, %v2987
        %v3005 = vmul.f32 %v2858, %v2987
        %v3006 = vmul.f32 %v2859, %v2987
        %v3007 = vmul.f32 %v2860, %v2987
        %v3008 = vmul.f32 %v2861, %v2987
        %v3009 = vmul.f32 %v2862, %v2987
        %v3010 = vmul.f32 %v2863, %v2987
        %v3011 = vmul.f32 %v2864, %v2987
        %v3012 = vmul.f32 %v2865, %v2987
        %v3013 = vmul.f32 %v2866, %v2987
        %v3014 = vmul.f32 %v2867, %v2987
        %v3015 = vmul.f32 %v2868, %v2987
        %v3016 = vmul.f32 %v2869, %v2987
        %v3017 = vmul.f32 %v2870, %v2987
        %v3018 = vmul.f32 %v2871, %v2987
        %v3019 = vmul.f32 %v2872, %v2987
        %v3020 = vmul.f32 %v2873, %v2987
        %v3021 = vmul.f32 %v2874, %v2987
        %v3022 = vadd.f32 %v2990, %v2989
        %v3023 = vadd.f32 %v2991, %v2989
        %v3024 = vadd.f32 %v2992, %v2989
        %v3025 = vadd.f32 %v2993, %v2989
        %v3026 = vadd.f32 %v2994, %v2989
        %v3027 = vadd.f32 %v2995, %v2989
        %v3028 = vadd.f32 %v2996, %v2989
        %v3029 = vadd.f32 %v2997, %v2989
        %v3030 = vadd.f32 %v2998, %v2989
        %v3031 = vadd.f32 %v2999, %v2989
        %v3032 = vadd.f32 %v3000, %v2989
        %v3033 = vadd.f32 %v3001, %v2989
        %v3034 = vadd.f32 %v3002, %v2989
        %v3035 = vadd.f32 %v3003, %v2989
        %v3036 = vadd.f32 %v3004, %v2989
        %v3037 = vadd.f32 %v3005, %v2989
        %v3038 = vadd.f32 %v3006, %v2989
        %v3039 = vadd.f32 %v3007, %v2989
        %v3040 = vadd.f32 %v3008, %v2989
        %v3041 = vadd.f32 %v3009, %v2989
        %v3042 = vadd.f32 %v3010, %v2989
        %v3043 = vadd.f32 %v3011, %v2989
        %v3044 = vadd.f32 %v3012, %v2989
        %v3045 = vadd.f32 %v3013, %v2989
        %v3046 = vadd.f32 %v3014, %v2989
        %v3047 = vadd.f32 %v3015, %v2989
        %v3048 = vadd.f32 %v3016, %v2989
        %v3049 = vadd.f32 %v3017, %v2989
        %v3050 = vadd.f32 %v3018, %v2989
        %v3051 = vadd.f32 %v3019, %v2989
        %v3052 = vadd.f32 %v3020, %v2989
        %v3053 = vadd.f32 %v3021, %v2989
        %v3054 = vmax.f32 %v3022, 0.0
        %v3055 = vmax.f32 %v3023, 0.0
        %v3056 = vmax.f32 %v3024, 0.0
        %v3057 = vmax.f32 %v3025, 0.0
        %v3058 = vmax.f32 %v3026, 0.0
        %v3059 = vmax.f32 %v3027, 0.0
        %v3060 = vmax.f32 %v3028, 0.0
        %v3061 = vmax.f32 %v3029, 0.0
        %v3062 = vmax.f32 %v3030, 0.0
        %v3063 = vmax.f32 %v3031, 0.0
        %v3064 = vmax.f32 %v3032, 0.0
        %v3065 = vmax.f32 %v3033, 0.0
        %v3066 = vmax.f32 %v3034, 0.0
        %v3067 = vmax.f32 %v3035, 0.0
        %v3068 = vmax.f32 %v3036, 0.0
        %v3069 = vmax.f32 %v3037, 0.0
        %v3070 = vmax.f32 %v3038, 0.0
        %v3071 = vmax.f32 %v3039, 0.0
        %v3072 = vmax.f32 %v3040, 0.0
        %v3073 = vmax.f32 %v3041, 0.0
        %v3074 = vmax.f32 %v3042, 0.0
        %v3075 = vmax.f32 %v3043, 0.0
        %v3076 = vmax.f32 %v3044, 0.0
        %v3077 = vmax.f32 %v3045, 0.0
        %v3078 = vmax.f32 %v3046, 0.0
        %v3079 = vmax.f32 %v3047, 0.0
        %v3080 = vmax.f32 %v3048, 0.0
        %v3081 = vmax.f32 %v3049, 0.0
        %v3082 = vmax.f32 %v3050, 0.0
        %v3083 = vmax.f32 %v3051, 0.0
        %v3084 = vmax.f32 %v3052, 0.0
        %v3085 = vmax.f32 %v3053, 0.0
        %3086 = vst [vmem:[%s250 + $0x1] sm:$0xff] %v3054
        %3087 = vst [vmem:[%s250 + $0x9] sm:$0xff] %v3055
        %3088 = vst [vmem:[%s250 + $0x19] sm:$0xff] %v3056
        %3089 = vst [vmem:[%s250 + $0x21] sm:$0xff] %v3057
        %3090 = vst [vmem:[%s250 + $0x31] sm:$0xff] %v3058
        %3091 = vst [vmem:[%s250 + $0x39] sm:$0xff] %v3059
        %3092 = vst [vmem:[%s250 + $0x49] sm:$0xff] %v3060
        %3093 = vst [vmem:[%s250 + $0x51] sm:$0xff] %v3061
        %3094 = vst [vmem:[%s250 + $0x61] sm:$0xff] %v3062
        %3095 = vst [vmem:[%s250 + $0x69] sm:$0xff] %v3063
        %3096 = vst [vmem:[%s250 + $0x79] sm:$0xff] %v3064
        %3097 = vst [vmem:[%s250 + $0x81] sm:$0xff] %v3065
        %3098 = vst [vmem:[%s250 + $0x91] sm:$0xff] %v3066
        %3099 = vst [vmem:[%s250 + $0x99] sm:$0xff] %v3067
        %3100 = vst [vmem:[%s250 + $0xa9] sm:$0xff] %v3068
        %3101 = vst [vmem:[%s250 + $0xb1] sm:$0xff] %v3069
        %3102 = vst [vmem:[%s250 + $0xc1] sm:$0xff] %v3070
        %3103 = vst [vmem:[%s250 + $0xc9] sm:$0xff] %v3071
        %3104 = vst [vmem:[%s250 + $0xd9] sm:$0xff] %v3072
        %3105 = vst [vmem:[%s250 + $0xe1] sm:$0xff] %v3073
        %3106 = vst [vmem:[%s250 + $0xf1] sm:$0xff] %v3074
        %3107 = vst [vmem:[%s250 + $0xf9] sm:$0xff] %v3075
        %3108 = vst [vmem:[%s250 + $0x109] sm:$0xff] %v3076
        %3109 = vst [vmem:[%s250 + $0x111] sm:$0xff] %v3077
        %3110 = vst [vmem:[%s250 + $0x121] sm:$0xff] %v3078
        %3111 = vst [vmem:[%s250 + $0x129] sm:$0xff] %v3079
        %3112 = vst [vmem:[%s250 + $0x139] sm:$0xff] %v3080
        %3113 = vst [vmem:[%s250 + $0x141] sm:$0xff] %v3081
        %3114 = vst [vmem:[%s250 + $0x151] sm:$0xff] %v3082
        %3115 = vst [vmem:[%s250 + $0x159] sm:$0xff] %v3083
        %3116 = vst [vmem:[%s250 + $0x169] sm:$0xff] %v3084
        %3117 = vst [vmem:[%s250 + $0x171] sm:$0xff] %v3085
        %v3118 = vld [vmem:[%s283 + $0x1] sm:$0xff]
        %v3119 = vld [vmem:[%s283 + $0x9] sm:$0xff]
        %3120 = vst [vmem:[#allocation2 + $0x1] sm:$0xff] %v3118
        %3121 = vst [vmem:[#allocation2 + $0x9] sm:$0xff] %v3119
        %v3122 = vld [vmem:[%s288 + $0x1] sm:$0xff]
        %v3123 = vld [vmem:[%s288 + $0x9] sm:$0xff]
        %3124 = vst [vmem:[%s291 + $0x1] sm:$0xff] %v3122
        %3125 = vst [vmem:[%s291 + $0x9] sm:$0xff] %v3123
        %v3126 = vld [vmem:[#allocation2 + $0x2] sm:$0x1]
        %v3127 = vld [vmem:[#allocation2 + $0x1a] sm:$0x1]
        %v3128 = vld [vmem:[#allocation2 + $0x32] sm:$0x1]
        %v3129 = vld [vmem:[#allocation2 + $0x4a] sm:$0x1]
        %v3130 = vld [vmem:[#allocation2 + $0x62] sm:$0x1]
        %v3131 = vld [vmem:[#allocation2 + $0x7a] sm:$0x1]
        %v3132 = vld [vmem:[#allocation2 + $0x92] sm:$0x1]
        %v3133 = vld [vmem:[#allocation2 + $0xaa] sm:$0x1]
        %v3134 = vld [vmem:[#allocation2 + $0xc2] sm:$0x1]
        %v3135 = vld [vmem:[#allocation2 + $0xda] sm:$0x1]
        %v3136 = vld [vmem:[#allocation2 + $0xf2] sm:$0x1]
        %v3137 = vld [vmem:[#allocation2 + $0x10a] sm:$0x1]
        %v3138 = vld [vmem:[#allocation2 + $0x122] sm:$0x1]
        %v3139 = vld [vmem:[#allocation2 + $0x13a] sm:$0x1]
        %v3140 = vld [vmem:[#allocation2 + $0x152] sm:$0x1]
        %v3141 = vld [vmem:[#allocation2 + $0x16a] sm:$0x1]
        %v3142 = vld [vmem:[#allocation2 + $0x182] sm:$0x1]
        %v3143 = vld [vmem:[#allocation2 + $0x19a] sm:$0x1]
        %3144 = vst [vmem:[#allocation2] sm:$0x1] %v3126
        %3145 = vst [vmem:[#allocation2 + $0x18] sm:$0x1] %v3127
        %3146 = vst [vmem:[#allocation2 + $0x30] sm:$0x1] %v3128
        %3147 = vst [vmem:[#allocation2 + $0x48] sm:$0x1] %v3129
        %3148 = vst [vmem:[#allocation2 + $0x60] sm:$0x1] %v3130
        %3149 = vst [vmem:[#allocation2 + $0x78] sm:$0x1] %v3131
        %3150 = vst [vmem:[#allocation2 + $0x90] sm:$0x1] %v3132
        %3151 = vst [vmem:[#allocation2 + $0xa8] sm:$0x1] %v3133
        %3152 = vst [vmem:[#allocation2 + $0xc0] sm:$0x1] %v3134
        %3153 = vst [vmem:[#allocation2 + $0xd8] sm:$0x1] %v3135
        %3154 = vst [vmem:[#allocation2 + $0xf0] sm:$0x1] %v3136
        %3155 = vst [vmem:[#allocation2 + $0x108] sm:$0x1] %v3137
        %3156 = vst [vmem:[#allocation2 + $0x120] sm:$0x1] %v3138
        %3157 = vst [vmem:[#allocation2 + $0x138] sm:$0x1] %v3139
        %3158 = vst [vmem:[#allocation2 + $0x150] sm:$0x1] %v3140
        %3159 = vst [vmem:[#allocation2 + $0x168] sm:$0x1] %v3141
        %3160 = vst [vmem:[#allocation2 + $0x180] sm:$0x1] %v3142
        %3161 = vst [vmem:[#allocation2 + $0x198] sm:$0x1] %v3143
        %v3162 = vld [vmem:[#allocation2 + $0xf] sm:$0x1]
        %v3163 = vld [vmem:[#allocation2 + $0x27] sm:$0x1]
        %v3164 = vld [vmem:[#allocation2 + $0x3f] sm:$0x1]
        %v3165 = vld [vmem:[#allocation2 + $0x57] sm:$0x1]
        %v3166 = vld [vmem:[#allocation2 + $0x6f] sm:$0x1]
        %v3167 = vld [vmem:[#allocation2 + $0x87] sm:$0x1]
        %v3168 = vld [vmem:[#allocation2 + $0x9f] sm:$0x1]
        %v3169 = vld [vmem:[#allocation2 + $0xb7] sm:$0x1]
        %v3170 = vld [vmem:[#allocation2 + $0xcf] sm:$0x1]
        %v3171 = vld [vmem:[#allocation2 + $0xe7] sm:$0x1]
        %v3172 = vld [vmem:[#allocation2 + $0xff] sm:$0x1]
        %v3173 = vld [vmem:[#allocation2 + $0x117] sm:$0x1]
        %v3174 = vld [vmem:[#allocation2 + $0x12f] sm:$0x1]
        %v3175 = vld [vmem:[#allocation2 + $0x147] sm:$0x1]
        %v3176 = vld [vmem:[#allocation2 + $0x15f] sm:$0x1]
        %v3177 = vld [vmem:[#allocation2 + $0x177] sm:$0x1]
        %v3178 = vld [vmem:[#allocation2 + $0x18f] sm:$0x1]
        %v3179 = vld [vmem:[#allocation2 + $0x1a7] sm:$0x1]
        %3180 = vst [vmem:[#allocation2 + $0x11] sm:$0x1] %v3162
        %3181 = vst [vmem:[#allocation2 + $0x29] sm:$0x1] %v3163
        %3182 = vst [vmem:[#allocation2 + $0x41] sm:$0x1] %v3164
        %3183 = vst [vmem:[#allocation2 + $0x59] sm:$0x1] %v3165
        %3184 = vst [vmem:[#allocation2 + $0x71] sm:$0x1] %v3166
        %3185 = vst [vmem:[#allocation2 + $0x89] sm:$0x1] %v3167
        %3186 = vst [vmem:[#allocation2 + $0xa1] sm:$0x1] %v3168
        %3187 = vst [vmem:[#allocation2 + $0xb9] sm:$0x1] %v3169
        %3188 = vst [vmem:[#allocation2 + $0xd1] sm:$0x1] %v3170
        %3189 = vst [vmem:[#allocation2 + $0xe9] sm:$0x1] %v3171
        %3190 = vst [vmem:[#allocation2 + $0x101] sm:$0x1] %v3172
        %3191 = vst [vmem:[#allocation2 + $0x119] sm:$0x1] %v3173
        %3192 = vst [vmem:[#allocation2 + $0x131] sm:$0x1] %v3174
        %3193 = vst [vmem:[#allocation2 + $0x149] sm:$0x1] %v3175
        %3194 = vst [vmem:[#allocation2 + $0x161] sm:$0x1] %v3176
        %3195 = vst [vmem:[#allocation2 + $0x179] sm:$0x1] %v3177
        %3196 = vst [vmem:[#allocation2 + $0x191] sm:$0x1] %v3178
        %3197 = vst [vmem:[#allocation2 + $0x1a9] sm:$0x1] %v3179
        %v3198 = vld [vmem:[#allocation2] sm:$0xff]
        %v3199 = vld [vmem:[#allocation2 + $0x8] sm:$0xff]
        %v3200 = vld [vmem:[#allocation2 + $0x18] sm:$0xff]
        %v3201 = vld [vmem:[#allocation2 + $0x20] sm:$0xff]
        %v3202 = vld [vmem:[#allocation2 + $0x30] sm:$0xff]
        %v3203 = vld [vmem:[#allocation2 + $0x38] sm:$0xff]
        %v3204 = vld [vmem:[#allocation2 + $0x48] sm:$0xff]
        %v3205 = vld [vmem:[#allocation2 + $0x50] sm:$0xff]
        %v3206 = vld [vmem:[#allocation2 + $0x60] sm:$0xff]
        %v3207 = vld [vmem:[#allocation2 + $0x68] sm:$0xff]
        %v3208 = vld [vmem:[#allocation2 + $0x78] sm:$0xff]
        %v3209 = vld [vmem:[#allocation2 + $0x80] sm:$0xff]
        %v3210 = vld [vmem:[#allocation2 + $0x90] sm:$0xff]
        %v3211 = vld [vmem:[#allocation2 + $0x98] sm:$0xff]
        %v3212 = vld [vmem:[#allocation2 + $0xa8] sm:$0xff]
        %v3213 = vld [vmem:[#allocation2 + $0xb0] sm:$0xff]
        %v3214 = vld [vmem:[#allocation2 + $0xc0] sm:$0xff]
        %v3215 = vld [vmem:[#allocation2 + $0xc8] sm:$0xff]
        %v3216 = vld [vmem:[#allocation2 + $0xd8] sm:$0xff]
        %v3217 = vld [vmem:[#allocation2 + $0xe0] sm:$0xff]
        %v3218 = vld [vmem:[#allocation2 + $0xf0] sm:$0xff]
        %v3219 = vld [vmem:[#allocation2 + $0xf8] sm:$0xff]
        %v3220 = vld [vmem:[#allocation2 + $0x108] sm:$0xff]
        %v3221 = vld [vmem:[#allocation2 + $0x110] sm:$0xff]
        %v3222 = vld [vmem:[#allocation2 + $0x120] sm:$0xff]
        %v3223 = vld [vmem:[#allocation2 + $0x128] sm:$0xff]
        %v3224 = vld [vmem:[#allocation2 + $0x138] sm:$0xff]
        %v3225 = vld [vmem:[#allocation2 + $0x140] sm:$0xff]
        %v3226 = vld [vmem:[#allocation2 + $0x150] sm:$0xff]
        %v3227 = vld [vmem:[#allocation2 + $0x158] sm:$0xff]
        %v3228 = vld [vmem:[#allocation2 + $0x168] sm:$0xff]
        %v3229 = vld [vmem:[#allocation2 + $0x170] sm:$0xff]
        %v3230 = vld [vmem:[#allocation2 + $0x180] sm:$0xff]
        %v3231 = vld [vmem:[#allocation2 + $0x188] sm:$0xff]
        %v3232 = vld [vmem:[#allocation2 + $0x198] sm:$0xff]
        %v3233 = vld [vmem:[#allocation2 + $0x1a0] sm:$0xff]
        %v3234 = vld [vmem:[#allocation8] sm:$0xff]
        %v3235 = vld [vmem:[#allocation8 + $0x8] sm:$0xff]
        %v3236 = vld [vmem:[#allocation8 + $0x10] sm:$0xff]
        %v3237 = vld [vmem:[#allocation8 + $0x18] sm:$0xff]
        %v3238 = vld [vmem:[#allocation8 + $0x20] sm:$0xff]
        %v3239 = vld [vmem:[#allocation8 + $0x28] sm:$0xff]
        %v3240 = vld [vmem:[#allocation8 + $0x30] sm:$0xff]
        %v3241 = vld [vmem:[#allocation8 + $0x38] sm:$0xff]
        %v3242 = vld [vmem:[#allocation8 + $0x40] sm:$0xff]
        %v3243 = vld [vmem:[#allocation8 + $0x48] sm:$0xff]
        %v3244 = vld [vmem:[#allocation8 + $0x50] sm:$0xff]
        %v3245 = vld [vmem:[#allocation8 + $0x58] sm:$0xff]
        %v3246 = vld [vmem:[#allocation8 + $0x60] sm:$0xff]
        %v3247 = vld [vmem:[#allocation8 + $0x68] sm:$0xff]
        %v3248 = vld [vmem:[#allocation8 + $0x70] sm:$0xff]
        %v3249 = vld [vmem:[#allocation8 + $0x78] sm:$0xff]
        %s3250 = scalar_lea.vmem [#allocation8], 384
        %v3251 = vld [vmem:[%s3250] sm:$0xff]
        %v3252 = vld [vmem:[%s3250 + $0x8] sm:$0xff]
        %v3253 = vld [vmem:[%s3250 + $0x10] sm:$0xff]
        %v3254 = vld [vmem:[%s3250 + $0x18] sm:$0xff]
        %v3255 = vld [vmem:[%s3250 + $0x20] sm:$0xff]
        %v3256 = vld [vmem:[%s3250 + $0x28] sm:$0xff]
        %v3257 = vld [vmem:[%s3250 + $0x30] sm:$0xff]
        %v3258 = vld [vmem:[%s3250 + $0x38] sm:$0xff]
        %v3259 = vld [vmem:[%s3250 + $0x40] sm:$0xff]
        %v3260 = vld [vmem:[%s3250 + $0x48] sm:$0xff]
        %v3261 = vld [vmem:[%s3250 + $0x50] sm:$0xff]
        %v3262 = vld [vmem:[%s3250 + $0x58] sm:$0xff]
        %v3263 = vld [vmem:[%s3250 + $0x60] sm:$0xff]
        %v3264 = vld [vmem:[%s3250 + $0x68] sm:$0xff]
        %v3265 = vld [vmem:[%s3250 + $0x70] sm:$0xff]
        %v3266 = vld [vmem:[%s3250 + $0x78] sm:$0xff]
        %3267 = vmatprep.subr.mxu0 0.0
        %3268 = vmatpush1.msra.mxu0 %v3251
        %3269 = vmatprep.subr.mxu0 0.0
        %3270 = vmatpush1.msra.mxu0 %v3252
        %3271 = vmatprep.subr.mxu0 0.0
        %3272 = vmatpush1.msra.mxu0 %v3253
        %3273 = vmatprep.subr.mxu0 0.0
        %3274 = vmatpush1.msra.mxu0 %v3254
        %3275 = vmatprep.subr.mxu0 0.0
        %3276 = vmatpush1.msra.mxu0 %v3255
        %3277 = vmatprep.subr.mxu0 0.0
        %3278 = vmatpush1.msra.mxu0 %v3256
        %3279 = vmatprep.subr.mxu0 0.0
        %3280 = vmatpush1.msra.mxu0 %v3257
        %3281 = vmatprep.subr.mxu0 0.0
        %3282 = vmatpush1.msra.mxu0 %v3258
        %3283 = vmatprep.subr.mxu0 0.0
        %3284 = vmatpush1.msra.mxu0 %v3259
        %3285 = vmatprep.subr.mxu0 0.0
        %3286 = vmatpush1.msra.mxu0 %v3260
        %3287 = vmatprep.subr.mxu0 0.0
        %3288 = vmatpush1.msra.mxu0 %v3261
        %3289 = vmatprep.subr.mxu0 0.0
        %3290 = vmatpush1.msra.mxu0 %v3262
        %3291 = vmatprep.subr.mxu0 0.0
        %3292 = vmatpush1.msra.mxu0 %v3263
        %3293 = vmatprep.subr.mxu0 0.0
        %3294 = vmatpush1.msra.mxu0 %v3264
        %3295 = vmatprep.subr.mxu0 0.0
        %3296 = vmatpush1.msra.mxu0 %v3265
        %3297 = vmatprep.subr.mxu0 0.0
        %3298 = vmatpush1.msra.mxu0 %v3266
        %3299 = vmatprep.subr.mxu0 0.0
        %3300 = vmatpush1.msra.mxu0 0.0
        %3301 = vmatprep.subr.mxu0 0.0
        %3302 = vmatpush1.msra.mxu0 0.0
        %3303 = vmatprep.subr.mxu0 0.0
        %3304 = vmatpush1.msra.mxu0 0.0
        %3305 = vmatprep.subr.mxu0 0.0
        %3306 = vmatpush1.msra.mxu0 0.0
        %3307 = vmatprep.subr.mxu0 0.0
        %3308 = vmatpush1.msra.mxu0 0.0
        %3309 = vmatprep.subr.mxu0 0.0
        %3310 = vmatpush1.msra.mxu0 0.0
        %3311 = vmatprep.subr.mxu0 0.0
        %3312 = vmatpush1.msra.mxu0 0.0
        %3313 = vmatprep.subr.mxu0 0.0
        %3314 = vmatpush1.msra.mxu0 0.0
        %3315 = vmatprep.subr.mxu0 0.0
        %3316 = vmatpush1.msra.mxu0 0.0
        %3317 = vmatprep.subr.mxu0 0.0
        %3318 = vmatpush1.msra.mxu0 0.0
        %3319 = vmatprep.subr.mxu0 0.0
        %3320 = vmatpush1.msra.mxu0 0.0
        %3321 = vmatprep.subr.mxu0 0.0
        %3322 = vmatpush1.msra.mxu0 0.0
        %3323 = vmatprep.subr.mxu0 0.0
        %3324 = vmatpush1.msra.mxu0 0.0
        %3325 = vmatprep.subr.mxu0 0.0
        %3326 = vmatpush1.msra.mxu0 0.0
        %3327 = vmatprep.subr.mxu0 0.0
        %3328 = vmatpush1.msra.mxu0 0.0
        %3329 = vmatprep.subr.mxu0 0.0
        %3330 = vmatpush1.msra.mxu0 0.0
        %3331 = vmatprep.mubr.f32.mxu0 0.0
        %3332 = vmatmul.mubr.f32.gmra.mrb[0].mxu0 %v3200
        %v3333 = vpop.f32.mrb[0].mxu0
        %v3334 = vadd.f32 0.0, %v3333
        %v3335 = vpop.f32.mrb[0].mxu0
        %3336 = vmatprep.mubr.f32.mxu0 0.0
        %3337 = vmatmul.mubr.f32.gmra.mrb[0].mxu0 %v3201
        %v3338 = vpop.f32.mrb[0].mxu0
        %v3339 = vadd.f32 0.0, %v3338
        %v3340 = vpop.f32.mrb[0].mxu0
        %3341 = vmatprep.mubr.f32.mxu0 0.0
        %3342 = vmatmul.mubr.f32.gmra.mrb[0].mxu0 %v3202
        %v3343 = vpop.f32.mrb[0].mxu0
        %v3344 = vadd.f32 0.0, %v3343
        %v3345 = vpop.f32.mrb[0].mxu0
        %3346 = vmatprep.mubr.f32.mxu0 0.0
        %3347 = vmatmul.mubr.f32.gmra.mrb[0].mxu0 %v3203
        %v3348 = vpop.f32.mrb[0].mxu0
        %v3349 = vadd.f32 0.0, %v3348
        %v3350 = vpop.f32.mrb[0].mxu0
        %3351 = vmatprep.mubr.f32.mxu0 0.0
        %3352 = vmatmul.mubr.f32.gmra.mrb[0].mxu0 %v3204
        %v3353 = vpop.f32.mrb[0].mxu0
        %v3354 = vadd.f32 0.0, %v3353
        %v3355 = vpop.f32.mrb[0].mxu0
        %3356 = vmatprep.mubr.f32.mxu0 0.0
        %3357 = vmatmul.mubr.f32.gmra.mrb[0].mxu0 %v3205
        %v3358 = vpop.f32.mrb[0].mxu0
        %v3359 = vadd.f32 0.0, %v3358
        %v3360 = vpop.f32.mrb[0].mxu0
        %3361 = vmatprep.mubr.f32.mxu0 0.0
        %3362 = vmatmul.mubr.f32.gmra.mrb[0].mxu0 %v3206
        %v3363 = vpop.f32.mrb[0].mxu0
        %v3364 = vadd.f32 0.0, %v3363
        %v3365 = vpop.f32.mrb[0].mxu0
        %3366 = vmatprep.mubr.f32.mxu0 0.0
        %3367 = vmatmul.mubr.f32.gmra.mrb[0].mxu0 %v3207
        %v3368 = vpop.f32.mrb[0].mxu0
        %v3369 = vadd.f32 0.0, %v3368
        %v3370 = vpop.f32.mrb[0].mxu0
        %3371 = vmatprep.mubr.f32.mxu0 0.0
        %3372 = vmatmul.mubr.f32.gmra.mrb[0].mxu0 %v3208
        %v3373 = vpop.f32.mrb[0].mxu0
        %v3374 = vadd.f32 0.0, %v3373
        %v3375 = vpop.f32.mrb[0].mxu0
        %3376 = vmatprep.mubr.f32.mxu0 0.0
        %3377 = vmatmul.mubr.f32.gmra.mrb[0].mxu0 %v3209
        %v3378 = vpop.f32.mrb[0].mxu0
        %v3379 = vadd.f32 0.0, %v3378
        %v3380 = vpop.f32.mrb[0].mxu0
        %3381 = vmatprep.mubr.f32.mxu0 0.0
        %3382 = vmatmul.mubr.f32.gmra.mrb[0].mxu0 %v3210
        %v3383 = vpop.f32.mrb[0].mxu0
        %v3384 = vadd.f32 0.0, %v3383
        %v3385 = vpop.f32.mrb[0].mxu0
        %3386 = vmatprep.mubr.f32.mxu0 0.0
        %3387 = vmatmul.mubr.f32.gmra.mrb[0].mxu0 %v3211
        %v3388 = vpop.f32.mrb[0].mxu0
        %v3389 = vadd.f32 0.0, %v3388
        %v3390 = vpop.f32.mrb[0].mxu0
        %3391 = vmatprep.mubr.f32.mxu0 0.0
        %3392 = vmatmul.mubr.f32.gmra.mrb[0].mxu0 %v3212
        %v3393 = vpop.f32.mrb[0].mxu0
        %v3394 = vadd.f32 0.0, %v3393
        %v3395 = vpop.f32.mrb[0].mxu0
        %3396 = vmatprep.mubr.f32.mxu0 0.0
        %3397 = vmatmul.mubr.f32.gmra.mrb[0].mxu0 %v3213
        %v3398 = vpop.f32.mrb[0].mxu0
        %v3399 = vadd.f32 0.0, %v3398
        %v3400 = vpop.f32.mrb[0].mxu0
        %3401 = vmatprep.mubr.f32.mxu0 0.0
        %3402 = vmatmul.mubr.f32.gmra.mrb[0].mxu0 %v3214
        %v3403 = vpop.f32.mrb[0].mxu0
        %v3404 = vadd.f32 0.0, %v3403
        %v3405 = vpop.f32.mrb[0].mxu0
        %3406 = vmatprep.mubr.f32.mxu0 0.0
        %3407 = vmatmul.mubr.f32.gmra.mrb[0].mxu0 %v3215
        %v3408 = vpop.f32.mrb[0].mxu0
        %v3409 = vadd.f32 0.0, %v3408
        %v3410 = vpop.f32.mrb[0].mxu0
        %3411 = vmatprep.mubr.f32.mxu0 0.0
        %3412 = vmatmul.mubr.f32.gmra.mrb[0].mxu0 %v3216
        %v3413 = vpop.f32.mrb[0].mxu0
        %v3414 = vadd.f32 0.0, %v3413
        %v3415 = vpop.f32.mrb[0].mxu0
        %3416 = vmatprep.mubr.f32.mxu0 0.0
        %3417 = vmatmul.mubr.f32.gmra.mrb[0].mxu0 %v3217
        %v3418 = vpop.f32.mrb[0].mxu0
        %v3419 = vadd.f32 0.0, %v3418
        %v3420 = vpop.f32.mrb[0].mxu0
        %3421 = vmatprep.mubr.f32.mxu0 0.0
        %3422 = vmatmul.mubr.f32.gmra.mrb[0].mxu0 %v3218
        %v3423 = vpop.f32.mrb[0].mxu0
        %v3424 = vadd.f32 0.0, %v3423
        %v3425 = vpop.f32.mrb[0].mxu0
        %3426 = vmatprep.mubr.f32.mxu0 0.0
        %3427 = vmatmul.mubr.f32.gmra.mrb[0].mxu0 %v3219
        %v3428 = vpop.f32.mrb[0].mxu0
        %v3429 = vadd.f32 0.0, %v3428
        %v3430 = vpop.f32.mrb[0].mxu0
        %3431 = vmatprep.mubr.f32.mxu0 0.0
        %3432 = vmatmul.mubr.f32.gmra.mrb[0].mxu0 %v3220
        %v3433 = vpop.f32.mrb[0].mxu0
        %v3434 = vadd.f32 0.0, %v3433
        %v3435 = vpop.f32.mrb[0].mxu0
        %3436 = vmatprep.mubr.f32.mxu0 0.0
        %3437 = vmatmul.mubr.f32.gmra.mrb[0].mxu0 %v3221
        %v3438 = vpop.f32.mrb[0].mxu0
        %v3439 = vadd.f32 0.0, %v3438
        %v3440 = vpop.f32.mrb[0].mxu0
        %3441 = vmatprep.mubr.f32.mxu0 0.0
        %3442 = vmatmul.mubr.f32.gmra.mrb[0].mxu0 %v3222
        %v3443 = vpop.f32.mrb[0].mxu0
        %v3444 = vadd.f32 0.0, %v3443
        %v3445 = vpop.f32.mrb[0].mxu0
        %3446 = vmatprep.mubr.f32.mxu0 0.0
        %3447 = vmatmul.mubr.f32.gmra.mrb[0].mxu0 %v3223
        %v3448 = vpop.f32.mrb[0].mxu0
        %v3449 = vadd.f32 0.0, %v3448
        %v3450 = vpop.f32.mrb[0].mxu0
        %3451 = vmatprep.mubr.f32.mxu0 0.0
        %3452 = vmatmul.mubr.f32.gmra.mrb[0].mxu0 %v3224
        %v3453 = vpop.f32.mrb[0].mxu0
        %v3454 = vadd.f32 0.0, %v3453
        %v3455 = vpop.f32.mrb[0].mxu0
        %3456 = vmatprep.mubr.f32.mxu0 0.0
        %3457 = vmatmul.mubr.f32.gmra.mrb[0].mxu0 %v3225
        %v3458 = vpop.f32.mrb[0].mxu0
        %v3459 = vadd.f32 0.0, %v3458
        %v3460 = vpop.f32.mrb[0].mxu0
        %3461 = vmatprep.mubr.f32.mxu0 0.0
        %3462 = vmatmul.mubr.f32.gmra.mrb[0].mxu0 %v3226
        %v3463 = vpop.f32.mrb[0].mxu0
        %v3464 = vadd.f32 0.0, %v3463
        %v3465 = vpop.f32.mrb[0].mxu0
        %3466 = vmatprep.mubr.f32.mxu0 0.0
        %3467 = vmatmul.mubr.f32.gmra.mrb[0].mxu0 %v3227
        %v3468 = vpop.f32.mrb[0].mxu0
        %v3469 = vadd.f32 0.0, %v3468
        %v3470 = vpop.f32.mrb[0].mxu0
        %3471 = vmatprep.mubr.f32.mxu0 0.0
        %3472 = vmatmul.mubr.f32.gmra.mrb[0].mxu0 %v3228
        %v3473 = vpop.f32.mrb[0].mxu0
        %v3474 = vadd.f32 0.0, %v3473
        %v3475 = vpop.f32.mrb[0].mxu0
        %3476 = vmatprep.mubr.f32.mxu0 0.0
        %3477 = vmatmul.mubr.f32.gmra.mrb[0].mxu0 %v3229
        %v3478 = vpop.f32.mrb[0].mxu0
        %v3479 = vadd.f32 0.0, %v3478
        %v3480 = vpop.f32.mrb[0].mxu0
        %3481 = vmatprep.mubr.f32.mxu0 0.0
        %3482 = vmatmul.mubr.f32.gmra.mrb[0].mxu0 %v3230
        %v3483 = vpop.f32.mrb[0].mxu0
        %v3484 = vadd.f32 0.0, %v3483
        %v3485 = vpop.f32.mrb[0].mxu0
        %3486 = vmatprep.mubr.f32.mxu0 0.0
        %3487 = vmatmul.mubr.f32.gmra.mrb[0].mxu0 %v3231
        %v3488 = vpop.f32.mrb[0].mxu0
        %v3489 = vadd.f32 0.0, %v3488
        %v3490 = vpop.f32.mrb[0].mxu0
        %3491 = vdwg.mxu0
        %3492 = vmatprep.subr.mxu0 0.0
        %3493 = vmatpush1.msra.mxu0 %v3234
        %3494 = vmatprep.subr.mxu0 0.0
        %3495 = vmatpush1.msra.mxu0 %v3235
        %3496 = vmatprep.subr.mxu0 0.0
        %3497 = vmatpush1.msra.mxu0 %v3236
        %3498 = vmatprep.subr.mxu0 0.0
        %3499 = vmatpush1.msra.mxu0 %v3237
        %3500 = vmatprep.subr.mxu0 0.0
        %3501 = vmatpush1.msra.mxu0 %v3238
        %3502 = vmatprep.subr.mxu0 0.0
        %3503 = vmatpush1.msra.mxu0 %v3239
        %3504 = vmatprep.subr.mxu0 0.0
        %3505 = vmatpush1.msra.mxu0 %v3240
        %3506 = vmatprep.subr.mxu0 0.0
        %3507 = vmatpush1.msra.mxu0 %v3241
        %3508 = vmatprep.subr.mxu0 0.0
        %3509 = vmatpush1.msra.mxu0 %v3242
        %3510 = vmatprep.subr.mxu0 0.0
        %3511 = vmatpush1.msra.mxu0 %v3243
        %3512 = vmatprep.subr.mxu0 0.0
        %3513 = vmatpush1.msra.mxu0 %v3244
        %3514 = vmatprep.subr.mxu0 0.0
        %3515 = vmatpush1.msra.mxu0 %v3245
        %3516 = vmatprep.subr.mxu0 0.0
        %3517 = vmatpush1.msra.mxu0 %v3246
        %3518 = vmatprep.subr.mxu0 0.0
        %3519 = vmatpush1.msra.mxu0 %v3247
        %3520 = vmatprep.subr.mxu0 0.0
        %3521 = vmatpush1.msra.mxu0 %v3248
        %3522 = vmatprep.subr.mxu0 0.0
        %3523 = vmatpush1.msra.mxu0 %v3249
        %3524 = vmatprep.subr.mxu0 0.0
        %3525 = vmatpush1.msra.mxu0 0.0
        %3526 = vmatprep.subr.mxu0 0.0
        %3527 = vmatpush1.msra.mxu0 0.0
        %3528 = vmatprep.subr.mxu0 0.0
        %3529 = vmatpush1.msra.mxu0 0.0
        %3530 = vmatprep.subr.mxu0 0.0
        %3531 = vmatpush1.msra.mxu0 0.0
        %3532 = vmatprep.subr.mxu0 0.0
        %3533 = vmatpush1.msra.mxu0 0.0
        %3534 = vmatprep.subr.mxu0 0.0
        %3535 = vmatpush1.msra.mxu0 0.0
        %3536 = vmatprep.subr.mxu0 0.0
        %3537 = vmatpush1.msra.mxu0 0.0
        %3538 = vmatprep.subr.mxu0 0.0
        %3539 = vmatpush1.msra.mxu0 0.0
        %3540 = vmatprep.subr.mxu0 0.0
        %3541 = vmatpush1.msra.mxu0 0.0
        %3542 = vmatprep.subr.mxu0 0.0
        %3543 = vmatpush1.msra.mxu0 0.0
        %3544 = vmatprep.subr.mxu0 0.0
        %3545 = vmatpush1.msra.mxu0 0.0
        %3546 = vmatprep.subr.mxu0 0.0
        %3547 = vmatpush1.msra.mxu0 0.0
        %3548 = vmatprep.subr.mxu0 0.0
        %3549 = vmatpush1.msra.mxu0 0.0
        %3550 = vmatprep.subr.mxu0 0.0
        %3551 = vmatpush1.msra.mxu0 0.0
        %3552 = vmatprep.subr.mxu0 0.0
        %3553 = vmatpush1.msra.mxu0 0.0
        %3554 = vmatprep.subr.mxu0 0.0
        %3555 = vmatpush1.msra.mxu0 0.0
        %3556 = vmatprep.mubr.f32.mxu0 0.0
        %3557 = vmatmul.mubr.f32.gmra.mrb[0].mxu0 %v3198
        %v3558 = vpop.f32.mrb[0].mxu0
        %v3559 = vadd.f32 %v3334, %v3558
        %v3560 = vpop.f32.mrb[0].mxu0
        %3561 = vmatprep.mubr.f32.mxu0 0.0
        %3562 = vmatmul.mubr.f32.gmra.mrb[0].mxu0 %v3199
        %v3563 = vpop.f32.mrb[0].mxu0
        %v3564 = vadd.f32 %v3339, %v3563
        %v3565 = vpop.f32.mrb[0].mxu0
        %3566 = vmatprep.mubr.f32.mxu0 0.0
        %3567 = vmatmul.mubr.f32.gmra.mrb[0].mxu0 %v3200
        %v3568 = vpop.f32.mrb[0].mxu0
        %v3569 = vadd.f32 %v3344, %v3568
        %v3570 = vpop.f32.mrb[0].mxu0
        %3571 = vmatprep.mubr.f32.mxu0 0.0
        %3572 = vmatmul.mubr.f32.gmra.mrb[0].mxu0 %v3201
        %v3573 = vpop.f32.mrb[0].mxu0
        %v3574 = vadd.f32 %v3349, %v3573
        %v3575 = vpop.f32.mrb[0].mxu0
        %3576 = vmatprep.mubr.f32.mxu0 0.0
        %3577 = vmatmul.mubr.f32.gmra.mrb[0].mxu0 %v3202
        %v3578 = vpop.f32.mrb[0].mxu0
        %v3579 = vadd.f32 %v3354, %v3578
        %v3580 = vpop.f32.mrb[0].mxu0
        %3581 = vmatprep.mubr.f32.mxu0 0.0
        %3582 = vmatmul.mubr.f32.gmra.mrb[0].mxu0 %v3203
        %v3583 = vpop.f32.mrb[0].mxu0
        %v3584 = vadd.f32 %v3359, %v3583
        %v3585 = vpop.f32.mrb[0].mxu0
        %3586 = vmatprep.mubr.f32.mxu0 0.0
        %3587 = vmatmul.mubr.f32.gmra.mrb[0].mxu0 %v3204
        %v3588 = vpop.f32.mrb[0].mxu0
        %v3589 = vadd.f32 %v3364, %v3588
        %v3590 = vpop.f32.mrb[0].mxu0
        %3591 = vmatprep.mubr.f32.mxu0 0.0
        %3592 = vmatmul.mubr.f32.gmra.mrb[0].mxu0 %v3205
        %v3593 = vpop.f32.mrb[0].mxu0
        %v3594 = vadd.f32 %v3369, %v3593
        %v3595 = vpop.f32.mrb[0].mxu0
        %3596 = vmatprep.mubr.f32.mxu0 0.0
        %3597 = vmatmul.mubr.f32.gmra.mrb[0].mxu0 %v3206
        %v3598 = vpop.f32.mrb[0].mxu0
        %v3599 = vadd.f32 %v3374, %v3598
        %v3600 = vpop.f32.mrb[0].mxu0
        %3601 = vmatprep.mubr.f32.mxu0 0.0
        %3602 = vmatmul.mubr.f32.gmra.mrb[0].mxu0 %v3207
        %v3603 = vpop.f32.mrb[0].mxu0
        %v3604 = vadd.f32 %v3379, %v3603
        %v3605 = vpop.f32.mrb[0].mxu0
        %3606 = vmatprep.mubr.f32.mxu0 0.0
        %3607 = vmatmul.mubr.f32.gmra.mrb[0].mxu0 %v3208
        %v3608 = vpop.f32.mrb[0].mxu0
        %v3609 = vadd.f32 %v3384, %v3608
        %v3610 = vpop.f32.mrb[0].mxu0
        %3611 = vmatprep.mubr.f32.mxu0 0.0
        %3612 = vmatmul.mubr.f32.gmra.mrb[0].mxu0 %v3209
        %v3613 = vpop.f32.mrb[0].mxu0
        %v3614 = vadd.f32 %v3389, %v3613
        %v3615 = vpop.f32.mrb[0].mxu0
        %3616 = vmatprep.mubr.f32.mxu0 0.0
        %3617 = vmatmul.mubr.f32.gmra.mrb[0].mxu0 %v3210
        %v3618 = vpop.f32.mrb[0].mxu0
        %v3619 = vadd.f32 %v3394, %v3618
        %v3620 = vpop.f32.mrb[0].mxu0
        %3621 = vmatprep.mubr.f32.mxu0 0.0
        %3622 = vmatmul.mubr.f32.gmra.mrb[0].mxu0 %v3211
        %v3623 = vpop.f32.mrb[0].mxu0
        %v3624 = vadd.f32 %v3399, %v3623
        %v3625 = vpop.f32.mrb[0].mxu0
        %3626 = vmatprep.mubr.f32.mxu0 0.0
        %3627 = vmatmul.mubr.f32.gmra.mrb[0].mxu0 %v3212
        %v3628 = vpop.f32.mrb[0].mxu0
        %v3629 = vadd.f32 %v3404, %v3628
        %v3630 = vpop.f32.mrb[0].mxu0
        %3631 = vmatprep.mubr.f32.mxu0 0.0
        %3632 = vmatmul.mubr.f32.gmra.mrb[0].mxu0 %v3213
        %v3633 = vpop.f32.mrb[0].mxu0
        %v3634 = vadd.f32 %v3409, %v3633
        %v3635 = vpop.f32.mrb[0].mxu0
        %3636 = vmatprep.mubr.f32.mxu0 0.0
        %3637 = vmatmul.mubr.f32.gmra.mrb[0].mxu0 %v3214
        %v3638 = vpop.f32.mrb[0].mxu0
        %v3639 = vadd.f32 %v3414, %v3638
        %v3640 = vpop.f32.mrb[0].mxu0
        %3641 = vmatprep.mubr.f32.mxu0 0.0
        %3642 = vmatmul.mubr.f32.gmra.mrb[0].mxu0 %v3215
        %v3643 = vpop.f32.mrb[0].mxu0
        %v3644 = vadd.f32 %v3419, %v3643
        %v3645 = vpop.f32.mrb[0].mxu0
        %3646 = vmatprep.mubr.f32.mxu0 0.0
        %3647 = vmatmul.mubr.f32.gmra.mrb[0].mxu0 %v3216
        %v3648 = vpop.f32.mrb[0].mxu0
        %v3649 = vadd.f32 %v3424, %v3648
        %v3650 = vpop.f32.mrb[0].mxu0
        %3651 = vmatprep.mubr.f32.mxu0 0.0
        %3652 = vmatmul.mubr.f32.gmra.mrb[0].mxu0 %v3217
        %v3653 = vpop.f32.mrb[0].mxu0
        %v3654 = vadd.f32 %v3429, %v3653
        %v3655 = vpop.f32.mrb[0].mxu0
        %3656 = vmatprep.mubr.f32.mxu0 0.0
        %3657 = vmatmul.mubr.f32.gmra.mrb[0].mxu0 %v3218
        %v3658 = vpop.f32.mrb[0].mxu0
        %v3659 = vadd.f32 %v3434, %v3658
        %v3660 = vpop.f32.mrb[0].mxu0
        %3661 = vmatprep.mubr.f32.mxu0 0.0
        %3662 = vmatmul.mubr.f32.gmra.mrb[0].mxu0 %v3219
        %v3663 = vpop.f32.mrb[0].mxu0
        %v3664 = vadd.f32 %v3439, %v3663
        %v3665 = vpop.f32.mrb[0].mxu0
        %3666 = vmatprep.mubr.f32.mxu0 0.0
        %3667 = vmatmul.mubr.f32.gmra.mrb[0].mxu0 %v3220
        %v3668 = vpop.f32.mrb[0].mxu0
        %v3669 = vadd.f32 %v3444, %v3668
        %v3670 = vpop.f32.mrb[0].mxu0
        %3671 = vmatprep.mubr.f32.mxu0 0.0
        %3672 = vmatmul.mubr.f32.gmra.mrb[0].mxu0 %v3221
        %v3673 = vpop.f32.mrb[0].mxu0
        %v3674 = vadd.f32 %v3449, %v3673
        %v3675 = vpop.f32.mrb[0].mxu0
        %3676 = vmatprep.mubr.f32.mxu0 0.0
        %3677 = vmatmul.mubr.f32.gmra.mrb[0].mxu0 %v3222
        %v3678 = vpop.f32.mrb[0].mxu0
        %v3679 = vadd.f32 %v3454, %v3678
        %v3680 = vpop.f32.mrb[0].mxu0
        %3681 = vmatprep.mubr.f32.mxu0 0.0
        %3682 = vmatmul.mubr.f32.gmra.mrb[0].mxu0 %v3223
        %v3683 = vpop.f32.mrb[0].mxu0
        %v3684 = vadd.f32 %v3459, %v3683
        %v3685 = vpop.f32.mrb[0].mxu0
        %3686 = vmatprep.mubr.f32.mxu0 0.0
        %3687 = vmatmul.mubr.f32.gmra.mrb[0].mxu0 %v3224
        %v3688 = vpop.f32.mrb[0].mxu0
        %v3689 = vadd.f32 %v3464, %v3688
        %v3690 = vpop.f32.mrb[0].mxu0
        %3691 = vmatprep.mubr.f32.mxu0 0.0
        %3692 = vmatmul.mubr.f32.gmra.mrb[0].mxu0 %v3225
        %v3693 = vpop.f32.mrb[0].mxu0
        %v3694 = vadd.f32 %v3469, %v3693
        %v3695 = vpop.f32.mrb[0].mxu0
        %3696 = vmatprep.mubr.f32.mxu0 0.0
        %3697 = vmatmul.mubr.f32.gmra.mrb[0].mxu0 %v3226
        %v3698 = vpop.f32.mrb[0].mxu0
        %v3699 = vadd.f32 %v3474, %v3698
        %v3700 = vpop.f32.mrb[0].mxu0
        %3701 = vmatprep.mubr.f32.mxu0 0.0
        %3702 = vmatmul.mubr.f32.gmra.mrb[0].mxu0 %v3227
        %v3703 = vpop.f32.mrb[0].mxu0
        %v3704 = vadd.f32 %v3479, %v3703
        %v3705 = vpop.f32.mrb[0].mxu0
        %3706 = vmatprep.mubr.f32.mxu0 0.0
        %3707 = vmatmul.mubr.f32.gmra.mrb[0].mxu0 %v3228
        %v3708 = vpop.f32.mrb[0].mxu0
        %v3709 = vadd.f32 %v3484, %v3708
        %v3710 = vpop.f32.mrb[0].mxu0
        %3711 = vmatprep.mubr.f32.mxu0 0.0
        %3712 = vmatmul.mubr.f32.gmra.mrb[0].mxu0 %v3229
        %v3713 = vpop.f32.mrb[0].mxu0
        %v3714 = vadd.f32 %v3489, %v3713
        %v3715 = vpop.f32.mrb[0].mxu0
        %3716 = vdwg.mxu0
        %s3717 = scalar_lea.vmem [#allocation8], 768
        %v3718 = vld [vmem:[%s3717] sm:$0xff]
        %v3719 = vld [vmem:[%s3717 + $0x8] sm:$0xff]
        %v3720 = vld [vmem:[%s3717 + $0x10] sm:$0xff]
        %v3721 = vld [vmem:[%s3717 + $0x18] sm:$0xff]
        %v3722 = vld [vmem:[%s3717 + $0x20] sm:$0xff]
        %v3723 = vld [vmem:[%s3717 + $0x28] sm:$0xff]
        %v3724 = vld [vmem:[%s3717 + $0x30] sm:$0xff]
        %v3725 = vld [vmem:[%s3717 + $0x38] sm:$0xff]
        %v3726 = vld [vmem:[%s3717 + $0x40] sm:$0xff]
        %v3727 = vld [vmem:[%s3717 + $0x48] sm:$0xff]
        %v3728 = vld [vmem:[%s3717 + $0x50] sm:$0xff]
        %v3729 = vld [vmem:[%s3717 + $0x58] sm:$0xff]
        %v3730 = vld [vmem:[%s3717 + $0x60] sm:$0xff]
        %v3731 = vld [vmem:[%s3717 + $0x68] sm:$0xff]
        %v3732 = vld [vmem:[%s3717 + $0x70] sm:$0xff]
        %v3733 = vld [vmem:[%s3717 + $0x78] sm:$0xff]
        %3734 = vmatprep.subr.mxu0 0.0
        %3735 = vmatpush1.msra.mxu0 %v3718
        %3736 = vmatprep.subr.mxu0 0.0
        %3737 = vmatpush1.msra.mxu0 %v3719
        %3738 = vmatprep.subr.mxu0 0.0
        %3739 = vmatpush1.msra.mxu0 %v3720
        %3740 = vmatprep.subr.mxu0 0.0
        %3741 = vmatpush1.msra.mxu0 %v3721
        %3742 = vmatprep.subr.mxu0 0.0
        %3743 = vmatpush1.msra.mxu0 %v3722
        %3744 = vmatprep.subr.mxu0 0.0
        %3745 = vmatpush1.msra.mxu0 %v3723
        %3746 = vmatprep.subr.mxu0 0.0
        %3747 = vmatpush1.msra.mxu0 %v3724
        %3748 = vmatprep.subr.mxu0 0.0
        %3749 = vmatpush1.msra.mxu0 %v3725
        %3750 = vmatprep.subr.mxu0 0.0
        %3751 = vmatpush1.msra.mxu0 %v3726
        %3752 = vmatprep.subr.mxu0 0.0
        %3753 = vmatpush1.msra.mxu0 %v3727
        %3754 = vmatprep.subr.mxu0 0.0
        %3755 = vmatpush1.msra.mxu0 %v3728
        %3756 = vmatprep.subr.mxu0 0.0
        %3757 = vmatpush1.msra.mxu0 %v3729
        %3758 = vmatprep.subr.mxu0 0.0
        %3759 = vmatpush1.msra.mxu0 %v3730
        %3760 = vmatprep.subr.mxu0 0.0
        %3761 = vmatpush1.msra.mxu0 %v3731
        %3762 = vmatprep.subr.mxu0 0.0
        %3763 = vmatpush1.msra.mxu0 %v3732
        %3764 = vmatprep.subr.mxu0 0.0
        %3765 = vmatpush1.msra.mxu0 %v3733
        %3766 = vmatprep.subr.mxu0 0.0
        %3767 = vmatpush1.msra.mxu0 0.0
        %3768 = vmatprep.subr.mxu0 0.0
        %3769 = vmatpush1.msra.mxu0 0.0
        %3770 = vmatprep.subr.mxu0 0.0
        %3771 = vmatpush1.msra.mxu0 0.0
        %3772 = vmatprep.subr.mxu0 0.0
        %3773 = vmatpush1.msra.mxu0 0.0
        %3774 = vmatprep.subr.mxu0 0.0
        %3775 = vmatpush1.msra.mxu0 0.0
        %3776 = vmatprep.subr.mxu0 0.0
        %3777 = vmatpush1.msra.mxu0 0.0
        %3778 = vmatprep.subr.mxu0 0.0
        %3779 = vmatpush1.msra.mxu0 0.0
        %3780 = vmatprep.subr.mxu0 0.0
        %3781 = vmatpush1.msra.mxu0 0.0
        %3782 = vmatprep.subr.mxu0 0.0
        %3783 = vmatpush1.msra.mxu0 0.0
        %3784 = vmatprep.subr.mxu0 0.0
        %3785 = vmatpush1.msra.mxu0 0.0
        %3786 = vmatprep.subr.mxu0 0.0
        %3787 = vmatpush1.msra.mxu0 0.0
        %3788 = vmatprep.subr.mxu0 0.0
        %3789 = vmatpush1.msra.mxu0 0.0
        %3790 = vmatprep.subr.mxu0 0.0
        %3791 = vmatpush1.msra.mxu0 0.0
        %3792 = vmatprep.subr.mxu0 0.0
        %3793 = vmatpush1.msra.mxu0 0.0
        %3794 = vmatprep.subr.mxu0 0.0
        %3795 = vmatpush1.msra.mxu0 0.0
        %3796 = vmatprep.subr.mxu0 0.0
        %3797 = vmatpush1.msra.mxu0 0.0
        %3798 = vmatprep.mubr.f32.mxu0 0.0
        %3799 = vmatmul.mubr.f32.gmra.mrb[0].mxu0 %v3202
        %v3800 = vpop.f32.mrb[0].mxu0
        %v3801 = vadd.f32 0.0, %v3800
        %v3802 = vpop.f32.mrb[0].mxu0
        %3803 = vmatprep.mubr.f32.mxu0 0.0
        %3804 = vmatmul.mubr.f32.gmra.mrb[0].mxu0 %v3203
        %v3805 = vpop.f32.mrb[0].mxu0
        %v3806 = vadd.f32 0.0, %v3805
        %v3807 = vpop.f32.mrb[0].mxu0
        %3808 = vmatprep.mubr.f32.mxu0 0.0
        %3809 = vmatmul.mubr.f32.gmra.mrb[0].mxu0 %v3204
        %v3810 = vpop.f32.mrb[0].mxu0
        %v3811 = vadd.f32 0.0, %v3810
        %v3812 = vpop.f32.mrb[0].mxu0
        %3813 = vmatprep.mubr.f32.mxu0 0.0
        %3814 = vmatmul.mubr.f32.gmra.mrb[0].mxu0 %v3205
        %v3815 = vpop.f32.mrb[0].mxu0
        %v3816 = vadd.f32 0.0, %v3815
        %v3817 = vpop.f32.mrb[0].mxu0
        %3818 = vmatprep.mubr.f32.mxu0 0.0
        %3819 = vmatmul.mubr.f32.gmra.mrb[0].mxu0 %v3206
        %v3820 = vpop.f32.mrb[0].mxu0
        %v3821 = vadd.f32 0.0, %v3820
        %v3822 = vpop.f32.mrb[0].mxu0
        %3823 = vmatprep.mubr.f32.mxu0 0.0
        %3824 = vmatmul.mubr.f32.gmra.mrb[0].mxu0 %v3207
        %v3825 = vpop.f32.mrb[0].mxu0
        %v3826 = vadd.f32 0.0, %v3825
        %v3827 = vpop.f32.mrb[0].mxu0
        %3828 = vmatprep.mubr.f32.mxu0 0.0
        %3829 = vmatmul.mubr.f32.gmra.mrb[0].mxu0 %v3208
        %v3830 = vpop.f32.mrb[0].mxu0
        %v3831 = vadd.f32 0.0, %v3830
        %v3832 = vpop.f32.mrb[0].mxu0
        %3833 = vmatprep.mubr.f32.mxu0 0.0
        %3834 = vmatmul.mubr.f32.gmra.mrb[0].mxu0 %v3209
        %v3835 = vpop.f32.mrb[0].mxu0
        %v3836 = vadd.f32 0.0, %v3835
        %v3837 = vpop.f32.mrb[0].mxu0
        %3838 = vmatprep.mubr.f32.mxu0 0.0
        %3839 = vmatmul.mubr.f32.gmra.mrb[0].mxu0 %v3210
        %v3840 = vpop.f32.mrb[0].mxu0
        %v3841 = vadd.f32 0.0, %v3840
        %v3842 = vpop.f32.mrb[0].mxu0
        %3843 = vmatprep.mubr.f32.mxu0 0.0
        %3844 = vmatmul.mubr.f32.gmra.mrb[0].mxu0 %v3211
        %v3845 = vpop.f32.mrb[0].mxu0
        %v3846 = vadd.f32 0.0, %v3845
        %v3847 = vpop.f32.mrb[0].mxu0
        %3848 = vmatprep.mubr.f32.mxu0 0.0
        %3849 = vmatmul.mubr.f32.gmra.mrb[0].mxu0 %v3212
        %v3850 = vpop.f32.mrb[0].mxu0
        %v3851 = vadd.f32 0.0, %v3850
        %v3852 = vpop.f32.mrb[0].mxu0
        %3853 = vmatprep.mubr.f32.mxu0 0.0
        %3854 = vmatmul.mubr.f32.gmra.mrb[0].mxu0 %v3213
        %v3855 = vpop.f32.mrb[0].mxu0
        %v3856 = vadd.f32 0.0, %v3855
        %v3857 = vpop.f32.mrb[0].mxu0
        %3858 = vmatprep.mubr.f32.mxu0 0.0
        %3859 = vmatmul.mubr.f32.gmra.mrb[0].mxu0 %v3214
        %v3860 = vpop.f32.mrb[0].mxu0
        %v3861 = vadd.f32 0.0, %v3860
        %v3862 = vpop.f32.mrb[0].mxu0
        %3863 = vmatprep.mubr.f32.mxu0 0.0
        %3864 = vmatmul.mubr.f32.gmra.mrb[0].mxu0 %v3215
        %v3865 = vpop.f32.mrb[0].mxu0
        %v3866 = vadd.f32 0.0, %v3865
        %v3867 = vpop.f32.mrb[0].mxu0
        %3868 = vmatprep.mubr.f32.mxu0 0.0
        %3869 = vmatmul.mubr.f32.gmra.mrb[0].mxu0 %v3216
        %v3870 = vpop.f32.mrb[0].mxu0
        %v3871 = vadd.f32 0.0, %v3870
        %v3872 = vpop.f32.mrb[0].mxu0
        %3873 = vmatprep.mubr.f32.mxu0 0.0
        %3874 = vmatmul.mubr.f32.gmra.mrb[0].mxu0 %v3217
        %v3875 = vpop.f32.mrb[0].mxu0
        %v3876 = vadd.f32 0.0, %v3875
        %v3877 = vpop.f32.mrb[0].mxu0
        %3878 = vmatprep.mubr.f32.mxu0 0.0
        %3879 = vmatmul.mubr.f32.gmra.mrb[0].mxu0 %v3218
        %v3880 = vpop.f32.mrb[0].mxu0
        %v3881 = vadd.f32 0.0, %v3880
        %v3882 = vpop.f32.mrb[0].mxu0
        %3883 = vmatprep.mubr.f32.mxu0 0.0
        %3884 = vmatmul.mubr.f32.gmra.mrb[0].mxu0 %v3219
        %v3885 = vpop.f32.mrb[0].mxu0
        %v3886 = vadd.f32 0.0, %v3885
        %v3887 = vpop.f32.mrb[0].mxu0
        %3888 = vmatprep.mubr.f32.mxu0 0.0
        %3889 = vmatmul.mubr.f32.gmra.mrb[0].mxu0 %v3220
        %v3890 = vpop.f32.mrb[0].mxu0
        %v3891 = vadd.f32 0.0, %v3890
        %v3892 = vpop.f32.mrb[0].mxu0
        %3893 = vmatprep.mubr.f32.mxu0 0.0
        %3894 = vmatmul.mubr.f32.gmra.mrb[0].mxu0 %v3221
        %v3895 = vpop.f32.mrb[0].mxu0
        %v3896 = vadd.f32 0.0, %v3895
        %v3897 = vpop.f32.mrb[0].mxu0
        %3898 = vmatprep.mubr.f32.mxu0 0.0
        %3899 = vmatmul.mubr.f32.gmra.mrb[0].mxu0 %v3222
        %v3900 = vpop.f32.mrb[0].mxu0
        %v3901 = vadd.f32 0.0, %v3900
        %v3902 = vpop.f32.mrb[0].mxu0
        %3903 = vmatprep.mubr.f32.mxu0 0.0
        %3904 = vmatmul.mubr.f32.gmra.mrb[0].mxu0 %v3223
        %v3905 = vpop.f32.mrb[0].mxu0
        %v3906 = vadd.f32 0.0, %v3905
        %v3907 = vpop.f32.mrb[0].mxu0
        %3908 = vmatprep.mubr.f32.mxu0 0.0
        %3909 = vmatmul.mubr.f32.gmra.mrb[0].mxu0 %v3224
        %v3910 = vpop.f32.mrb[0].mxu0
        %v3911 = vadd.f32 0.0, %v3910
        %v3912 = vpop.f32.mrb[0].mxu0
        %3913 = vmatprep.mubr.f32.mxu0 0.0
        %3914 = vmatmul.mubr.f32.gmra.mrb[0].mxu0 %v3225
        %v3915 = vpop.f32.mrb[0].mxu0
        %v3916 = vadd.f32 0.0, %v3915
        %v3917 = vpop.f32.mrb[0].mxu0
        %3918 = vmatprep.mubr.f32.mxu0 0.0
        %3919 = vmatmul.mubr.f32.gmra.mrb[0].mxu0 %v3226
        %v3920 = vpop.f32.mrb[0].mxu0
        %v3921 = vadd.f32 0.0, %v3920
        %v3922 = vpop.f32.mrb[0].mxu0
        %3923 = vmatprep.mubr.f32.mxu0 0.0
        %3924 = vmatmul.mubr.f32.gmra.mrb[0].mxu0 %v3227
        %v3925 = vpop.f32.mrb[0].mxu0
        %v3926 = vadd.f32 0.0, %v3925
        %v3927 = vpop.f32.mrb[0].mxu0
        %3928 = vmatprep.mubr.f32.mxu0 0.0
        %3929 = vmatmul.mubr.f32.gmra.mrb[0].mxu0 %v3228
        %v3930 = vpop.f32.mrb[0].mxu0
        %v3931 = vadd.f32 0.0, %v3930
        %v3932 = vpop.f32.mrb[0].mxu0
        %3933 = vmatprep.mubr.f32.mxu0 0.0
        %3934 = vmatmul.mubr.f32.gmra.mrb[0].mxu0 %v3229
        %v3935 = vpop.f32.mrb[0].mxu0
        %v3936 = vadd.f32 0.0, %v3935
        %v3937 = vpop.f32.mrb[0].mxu0
        %3938 = vmatprep.mubr.f32.mxu0 0.0
        %3939 = vmatmul.mubr.f32.gmra.mrb[0].mxu0 %v3230
        %v3940 = vpop.f32.mrb[0].mxu0
        %v3941 = vadd.f32 0.0, %v3940
        %v3942 = vpop.f32.mrb[0].mxu0
        %3943 = vmatprep.mubr.f32.mxu0 0.0
        %3944 = vmatmul.mubr.f32.gmra.mrb[0].mxu0 %v3231
        %v3945 = vpop.f32.mrb[0].mxu0
        %v3946 = vadd.f32 0.0, %v3945
        %v3947 = vpop.f32.mrb[0].mxu0
        %3948 = vmatprep.mubr.f32.mxu0 0.0
        %3949 = vmatmul.mubr.f32.gmra.mrb[0].mxu0 %v3232
        %v3950 = vpop.f32.mrb[0].mxu0
        %v3951 = vadd.f32 0.0, %v3950
        %v3952 = vpop.f32.mrb[0].mxu0
        %3953 = vmatprep.mubr.f32.mxu0 0.0
        %3954 = vmatmul.mubr.f32.gmra.mrb[0].mxu0 %v3233
        %v3955 = vpop.f32.mrb[0].mxu0
        %v3956 = vadd.f32 0.0, %v3955
        %v3957 = vpop.f32.mrb[0].mxu0
        %3958 = vdwg.mxu0
        %v3959 = vadd.f32 %v3559, %v3801
        %v3960 = vadd.f32 %v3564, %v3806
        %v3961 = vadd.f32 %v3569, %v3811
        %v3962 = vadd.f32 %v3574, %v3816
        %v3963 = vadd.f32 %v3579, %v3821
        %v3964 = vadd.f32 %v3584, %v3826
        %v3965 = vadd.f32 %v3589, %v3831
        %v3966 = vadd.f32 %v3594, %v3836
        %v3967 = vadd.f32 %v3599, %v3841
        %v3968 = vadd.f32 %v3604, %v3846
        %v3969 = vadd.f32 %v3609, %v3851
        %v3970 = vadd.f32 %v3614, %v3856
        %v3971 = vadd.f32 %v3619, %v3861
        %v3972 = vadd.f32 %v3624, %v3866
        %v3973 = vadd.f32 %v3629, %v3871
        %v3974 = vadd.f32 %v3634, %v3876
        %v3975 = vadd.f32 %v3639, %v3881
        %v3976 = vadd.f32 %v3644, %v3886
        %v3977 = vadd.f32 %v3649, %v3891
        %v3978 = vadd.f32 %v3654, %v3896
        %v3979 = vadd.f32 %v3659, %v3901
        %v3980 = vadd.f32 %v3664, %v3906
        %v3981 = vadd.f32 %v3669, %v3911
        %v3982 = vadd.f32 %v3674, %v3916
        %v3983 = vadd.f32 %v3679, %v3921
        %v3984 = vadd.f32 %v3684, %v3926
        %v3985 = vadd.f32 %v3689, %v3931
        %v3986 = vadd.f32 %v3694, %v3936
        %v3987 = vadd.f32 %v3699, %v3941
        %v3988 = vadd.f32 %v3704, %v3946
        %v3989 = vadd.f32 %v3709, %v3951
        %v3990 = vadd.f32 %v3714, %v3956
        %v3991 = vld [vmem:[#allocation2 + $0x1] sm:$0xff]
        %v3992 = vld [vmem:[#allocation2 + $0x9] sm:$0xff]
        %v3993 = vld [vmem:[#allocation2 + $0x19] sm:$0xff]
        %v3994 = vld [vmem:[#allocation2 + $0x21] sm:$0xff]
        %v3995 = vld [vmem:[#allocation2 + $0x31] sm:$0xff]
        %v3996 = vld [vmem:[#allocation2 + $0x39] sm:$0xff]
        %v3997 = vld [vmem:[#allocation2 + $0x49] sm:$0xff]
        %v3998 = vld [vmem:[#allocation2 + $0x51] sm:$0xff]
        %v3999 = vld [vmem:[#allocation2 + $0x61] sm:$0xff]
        %v4000 = vld [vmem:[#allocation2 + $0x69] sm:$0xff]
        %v4001 = vld [vmem:[#allocation2 + $0x79] sm:$0xff]
        %v4002 = vld [vmem:[#allocation2 + $0x81] sm:$0xff]
        %v4003 = vld [vmem:[#allocation2 + $0x91] sm:$0xff]
        %v4004 = vld [vmem:[#allocation2 + $0x99] sm:$0xff]
        %v4005 = vld [vmem:[#allocation2 + $0xa9] sm:$0xff]
        %v4006 = vld [vmem:[#allocation2 + $0xb1] sm:$0xff]
        %v4007 = vld [vmem:[#allocation2 + $0xc1] sm:$0xff]
        %v4008 = vld [vmem:[#allocation2 + $0xc9] sm:$0xff]
        %v4009 = vld [vmem:[#allocation2 + $0xd9] sm:$0xff]
        %v4010 = vld [vmem:[#allocation2 + $0xe1] sm:$0xff]
        %v4011 = vld [vmem:[#allocation2 + $0xf1] sm:$0xff]
        %v4012 = vld [vmem:[#allocation2 + $0xf9] sm:$0xff]
        %v4013 = vld [vmem:[#allocation2 + $0x109] sm:$0xff]
        %v4014 = vld [vmem:[#allocation2 + $0x111] sm:$0xff]
        %v4015 = vld [vmem:[#allocation2 + $0x121] sm:$0xff]
        %v4016 = vld [vmem:[#allocation2 + $0x129] sm:$0xff]
        %v4017 = vld [vmem:[#allocation2 + $0x139] sm:$0xff]
        %v4018 = vld [vmem:[#allocation2 + $0x141] sm:$0xff]
        %v4019 = vld [vmem:[#allocation2 + $0x151] sm:$0xff]
        %v4020 = vld [vmem:[#allocation2 + $0x159] sm:$0xff]
        %v4021 = vld [vmem:[#allocation2 + $0x169] sm:$0xff]
        %v4022 = vld [vmem:[#allocation2 + $0x171] sm:$0xff]
        %v4023 = vld [vmem:[#allocation2 + $0x181] sm:$0xff]
        %v4024 = vld [vmem:[#allocation2 + $0x189] sm:$0xff]
        %v4025 = vld [vmem:[#allocation2 + $0x199] sm:$0xff]
        %v4026 = vld [vmem:[#allocation2 + $0x1a1] sm:$0xff]
        %s4027 = scalar_lea.vmem [#allocation8], 128
        %v4028 = vld [vmem:[%s4027] sm:$0xff]
        %v4029 = vld [vmem:[%s4027 + $0x8] sm:$0xff]
        %v4030 = vld [vmem:[%s4027 + $0x10] sm:$0xff]
        %v4031 = vld [vmem:[%s4027 + $0x18] sm:$0xff]
        %v4032 = vld [vmem:[%s4027 + $0x20] sm:$0xff]
        %v4033 = vld [vmem:[%s4027 + $0x28] sm:$0xff]
        %v4034 = vld [vmem:[%s4027 + $0x30] sm:$0xff]
        %v4035 = vld [vmem:[%s4027 + $0x38] sm:$0xff]
        %v4036 = vld [vmem:[%s4027 + $0x40] sm:$0xff]
        %v4037 = vld [vmem:[%s4027 + $0x48] sm:$0xff]
        %v4038 = vld [vmem:[%s4027 + $0x50] sm:$0xff]
        %v4039 = vld [vmem:[%s4027 + $0x58] sm:$0xff]
        %v4040 = vld [vmem:[%s4027 + $0x60] sm:$0xff]
        %v4041 = vld [vmem:[%s4027 + $0x68] sm:$0xff]
        %v4042 = vld [vmem:[%s4027 + $0x70] sm:$0xff]
        %v4043 = vld [vmem:[%s4027 + $0x78] sm:$0xff]
        %4044 = vmatprep.subr.mxu0 0.0
        %4045 = vmatpush1.msra.mxu0 %v4028
        %4046 = vmatprep.subr.mxu0 0.0
        %4047 = vmatpush1.msra.mxu0 %v4029
        %4048 = vmatprep.subr.mxu0 0.0
        %4049 = vmatpush1.msra.mxu0 %v4030
        %4050 = vmatprep.subr.mxu0 0.0
        %4051 = vmatpush1.msra.mxu0 %v4031
        %4052 = vmatprep.subr.mxu0 0.0
        %4053 = vmatpush1.msra.mxu0 %v4032
        %4054 = vmatprep.subr.mxu0 0.0
        %4055 = vmatpush1.msra.mxu0 %v4033
        %4056 = vmatprep.subr.mxu0 0.0
        %4057 = vmatpush1.msra.mxu0 %v4034
        %4058 = vmatprep.subr.mxu0 0.0
        %4059 = vmatpush1.msra.mxu0 %v4035
        %4060 = vmatprep.subr.mxu0 0.0
        %4061 = vmatpush1.msra.mxu0 %v4036
        %4062 = vmatprep.subr.mxu0 0.0
        %4063 = vmatpush1.msra.mxu0 %v4037
        %4064 = vmatprep.subr.mxu0 0.0
        %4065 = vmatpush1.msra.mxu0 %v4038
        %4066 = vmatprep.subr.mxu0 0.0
        %4067 = vmatpush1.msra.mxu0 %v4039
        %4068 = vmatprep.subr.mxu0 0.0
        %4069 = vmatpush1.msra.mxu0 %v4040
        %4070 = vmatprep.subr.mxu0 0.0
        %4071 = vmatpush1.msra.mxu0 %v4041
        %4072 = vmatprep.subr.mxu0 0.0
        %4073 = vmatpush1.msra.mxu0 %v4042
        %4074 = vmatprep.subr.mxu0 0.0
        %4075 = vmatpush1.msra.mxu0 %v4043
        %4076 = vmatprep.subr.mxu0 0.0
        %4077 = vmatpush1.msra.mxu0 0.0
        %4078 = vmatprep.subr.mxu0 0.0
        %4079 = vmatpush1.msra.mxu0 0.0
        %4080 = vmatprep.subr.mxu0 0.0
        %4081 = vmatpush1.msra.mxu0 0.0
        %4082 = vmatprep.subr.mxu0 0.0
        %4083 = vmatpush1.msra.mxu0 0.0
        %4084 = vmatprep.subr.mxu0 0.0
        %4085 = vmatpush1.msra.mxu0 0.0
        %4086 = vmatprep.subr.mxu0 0.0
        %4087 = vmatpush1.msra.mxu0 0.0
        %4088 = vmatprep.subr.mxu0 0.0
        %4089 = vmatpush1.msra.mxu0 0.0
        %4090 = vmatprep.subr.mxu0 0.0
        %4091 = vmatpush1.msra.mxu0 0.0
        %4092 = vmatprep.subr.mxu0 0.0
        %4093 = vmatpush1.msra.mxu0 0.0
        %4094 = vmatprep.subr.mxu0 0.0
        %4095 = vmatpush1.msra.mxu0 0.0
        %4096 = vmatprep.subr.mxu0 0.0
        %4097 = vmatpush1.msra.mxu0 0.0
        %4098 = vmatprep.subr.mxu0 0.0
        %4099 = vmatpush1.msra.mxu0 0.0
        %4100 = vmatprep.subr.mxu0 0.0
        %4101 = vmatpush1.msra.mxu0 0.0
        %4102 = vmatprep.subr.mxu0 0.0
        %4103 = vmatpush1.msra.mxu0 0.0
        %4104 = vmatprep.subr.mxu0 0.0
        %4105 = vmatpush1.msra.mxu0 0.0
        %4106 = vmatprep.subr.mxu0 0.0
        %4107 = vmatpush1.msra.mxu0 0.0
        %4108 = vmatprep.mubr.f32.mxu0 0.0
        %4109 = vmatmul.mubr.f32.gmra.mrb[0].mxu0 %v3991
        %v4110 = vpop.f32.mrb[0].mxu0
        %v4111 = vadd.f32 0.0, %v4110
        %v4112 = vpop.f32.mrb[0].mxu0
        %4113 = vmatprep.mubr.f32.mxu0 0.0
        %4114 = vmatmul.mubr.f32.gmra.mrb[0].mxu0 %v3992
        %v4115 = vpop.f32.mrb[0].mxu0
        %v4116 = vadd.f32 0.0, %v4115
        %v4117 = vpop.f32.mrb[0].mxu0
        %4118 = vmatprep.mubr.f32.mxu0 0.0
        %4119 = vmatmul.mubr.f32.gmra.mrb[0].mxu0 %v3993
        %v4120 = vpop.f32.mrb[0].mxu0
        %v4121 = vadd.f32 0.0, %v4120
        %v4122 = vpop.f32.mrb[0].mxu0
        %4123 = vmatprep.mubr.f32.mxu0 0.0
        %4124 = vmatmul.mubr.f32.gmra.mrb[0].mxu0 %v3994
        %v4125 = vpop.f32.mrb[0].mxu0
        %v4126 = vadd.f32 0.0, %v4125
        %v4127 = vpop.f32.mrb[0].mxu0
        %4128 = vmatprep.mubr.f32.mxu0 0.0
        %4129 = vmatmul.mubr.f32.gmra.mrb[0].mxu0 %v3995
        %v4130 = vpop.f32.mrb[0].mxu0
        %v4131 = vadd.f32 0.0, %v4130
        %v4132 = vpop.f32.mrb[0].mxu0
        %4133 = vmatprep.mubr.f32.mxu0 0.0
        %4134 = vmatmul.mubr.f32.gmra.mrb[0].mxu0 %v3996
        %v4135 = vpop.f32.mrb[0].mxu0
        %v4136 = vadd.f32 0.0, %v4135
        %v4137 = vpop.f32.mrb[0].mxu0
        %4138 = vmatprep.mubr.f32.mxu0 0.0
        %4139 = vmatmul.mubr.f32.gmra.mrb[0].mxu0 %v3997
        %v4140 = vpop.f32.mrb[0].mxu0
        %v4141 = vadd.f32 0.0, %v4140
        %v4142 = vpop.f32.mrb[0].mxu0
        %4143 = vmatprep.mubr.f32.mxu0 0.0
        %4144 = vmatmul.mubr.f32.gmra.mrb[0].mxu0 %v3998
        %v4145 = vpop.f32.mrb[0].mxu0
        %v4146 = vadd.f32 0.0, %v4145
        %v4147 = vpop.f32.mrb[0].mxu0
        %4148 = vmatprep.mubr.f32.mxu0 0.0
        %4149 = vmatmul.mubr.f32.gmra.mrb[0].mxu0 %v3999
        %v4150 = vpop.f32.mrb[0].mxu0
        %v4151 = vadd.f32 0.0, %v4150
        %v4152 = vpop.f32.mrb[0].mxu0
        %4153 = vmatprep.mubr.f32.mxu0 0.0
        %4154 = vmatmul.mubr.f32.gmra.mrb[0].mxu0 %v4000
        %v4155 = vpop.f32.mrb[0].mxu0
        %v4156 = vadd.f32 0.0, %v4155
        %v4157 = vpop.f32.mrb[0].mxu0
        %4158 = vmatprep.mubr.f32.mxu0 0.0
        %4159 = vmatmul.mubr.f32.gmra.mrb[0].mxu0 %v4001
        %v4160 = vpop.f32.mrb[0].mxu0
        %v4161 = vadd.f32 0.0, %v4160
        %v4162 = vpop.f32.mrb[0].mxu0
        %4163 = vmatprep.mubr.f32.mxu0 0.0
        %4164 = vmatmul.mubr.f32.gmra.mrb[0].mxu0 %v4002
        %v4165 = vpop.f32.mrb[0].mxu0
        %v4166 = vadd.f32 0.0, %v4165
        %v4167 = vpop.f32.mrb[0].mxu0
        %4168 = vmatprep.mubr.f32.mxu0 0.0
        %4169 = vmatmul.mubr.f32.gmra.mrb[0].mxu0 %v4003
        %v4170 = vpop.f32.mrb[0].mxu0
        %v4171 = vadd.f32 0.0, %v4170
        %v4172 = vpop.f32.mrb[0].mxu0
        %4173 = vmatprep.mubr.f32.mxu0 0.0
        %4174 = vmatmul.mubr.f32.gmra.mrb[0].mxu0 %v4004
        %v4175 = vpop.f32.mrb[0].mxu0
        %v4176 = vadd.f32 0.0, %v4175
        %v4177 = vpop.f32.mrb[0].mxu0
        %4178 = vmatprep.mubr.f32.mxu0 0.0
        %4179 = vmatmul.mubr.f32.gmra.mrb[0].mxu0 %v4005
        %v4180 = vpop.f32.mrb[0].mxu0
        %v4181 = vadd.f32 0.0, %v4180
        %v4182 = vpop.f32.mrb[0].mxu0
        %4183 = vmatprep.mubr.f32.mxu0 0.0
        %4184 = vmatmul.mubr.f32.gmra.mrb[0].mxu0 %v4006
        %v4185 = vpop.f32.mrb[0].mxu0
        %v4186 = vadd.f32 0.0, %v4185
        %v4187 = vpop.f32.mrb[0].mxu0
        %4188 = vmatprep.mubr.f32.mxu0 0.0
        %4189 = vmatmul.mubr.f32.gmra.mrb[0].mxu0 %v4007
        %v4190 = vpop.f32.mrb[0].mxu0
        %v4191 = vadd.f32 0.0, %v4190
        %v4192 = vpop.f32.mrb[0].mxu0
        %4193 = vmatprep.mubr.f32.mxu0 0.0
        %4194 = vmatmul.mubr.f32.gmra.mrb[0].mxu0 %v4008
        %v4195 = vpop.f32.mrb[0].mxu0
        %v4196 = vadd.f32 0.0, %v4195
        %v4197 = vpop.f32.mrb[0].mxu0
        %4198 = vmatprep.mubr.f32.mxu0 0.0
        %4199 = vmatmul.mubr.f32.gmra.mrb[0].mxu0 %v4009
        %v4200 = vpop.f32.mrb[0].mxu0
        %v4201 = vadd.f32 0.0, %v4200
        %v4202 = vpop.f32.mrb[0].mxu0
        %4203 = vmatprep.mubr.f32.mxu0 0.0
        %4204 = vmatmul.mubr.f32.gmra.mrb[0].mxu0 %v4010
        %v4205 = vpop.f32.mrb[0].mxu0
        %v4206 = vadd.f32 0.0, %v4205
        %v4207 = vpop.f32.mrb[0].mxu0
        %4208 = vmatprep.mubr.f32.mxu0 0.0
        %4209 = vmatmul.mubr.f32.gmra.mrb[0].mxu0 %v4011
        %v4210 = vpop.f32.mrb[0].mxu0
        %v4211 = vadd.f32 0.0, %v4210
        %v4212 = vpop.f32.mrb[0].mxu0
        %4213 = vmatprep.mubr.f32.mxu0 0.0
        %4214 = vmatmul.mubr.f32.gmra.mrb[0].mxu0 %v4012
        %v4215 = vpop.f32.mrb[0].mxu0
        %v4216 = vadd.f32 0.0, %v4215
        %v4217 = vpop.f32.mrb[0].mxu0
        %4218 = vmatprep.mubr.f32.mxu0 0.0
        %4219 = vmatmul.mubr.f32.gmra.mrb[0].mxu0 %v4013
        %v4220 = vpop.f32.mrb[0].mxu0
        %v4221 = vadd.f32 0.0, %v4220
        %v4222 = vpop.f32.mrb[0].mxu0
        %4223 = vmatprep.mubr.f32.mxu0 0.0
        %4224 = vmatmul.mubr.f32.gmra.mrb[0].mxu0 %v4014
        %v4225 = vpop.f32.mrb[0].mxu0
        %v4226 = vadd.f32 0.0, %v4225
        %v4227 = vpop.f32.mrb[0].mxu0
        %4228 = vmatprep.mubr.f32.mxu0 0.0
        %4229 = vmatmul.mubr.f32.gmra.mrb[0].mxu0 %v4015
        %v4230 = vpop.f32.mrb[0].mxu0
        %v4231 = vadd.f32 0.0, %v4230
        %v4232 = vpop.f32.mrb[0].mxu0
        %4233 = vmatprep.mubr.f32.mxu0 0.0
        %4234 = vmatmul.mubr.f32.gmra.mrb[0].mxu0 %v4016
        %v4235 = vpop.f32.mrb[0].mxu0
        %v4236 = vadd.f32 0.0, %v4235
        %v4237 = vpop.f32.mrb[0].mxu0
        %4238 = vmatprep.mubr.f32.mxu0 0.0
        %4239 = vmatmul.mubr.f32.gmra.mrb[0].mxu0 %v4017
        %v4240 = vpop.f32.mrb[0].mxu0
        %v4241 = vadd.f32 0.0, %v4240
        %v4242 = vpop.f32.mrb[0].mxu0
        %4243 = vmatprep.mubr.f32.mxu0 0.0
        %4244 = vmatmul.mubr.f32.gmra.mrb[0].mxu0 %v4018
        %v4245 = vpop.f32.mrb[0].mxu0
        %v4246 = vadd.f32 0.0, %v4245
        %v4247 = vpop.f32.mrb[0].mxu0
        %4248 = vmatprep.mubr.f32.mxu0 0.0
        %4249 = vmatmul.mubr.f32.gmra.mrb[0].mxu0 %v4019
        %v4250 = vpop.f32.mrb[0].mxu0
        %v4251 = vadd.f32 0.0, %v4250
        %v4252 = vpop.f32.mrb[0].mxu0
        %4253 = vmatprep.mubr.f32.mxu0 0.0
        %4254 = vmatmul.mubr.f32.gmra.mrb[0].mxu0 %v4020
        %v4255 = vpop.f32.mrb[0].mxu0
        %v4256 = vadd.f32 0.0, %v4255
        %v4257 = vpop.f32.mrb[0].mxu0
        %4258 = vmatprep.mubr.f32.mxu0 0.0
        %4259 = vmatmul.mubr.f32.gmra.mrb[0].mxu0 %v4021
        %v4260 = vpop.f32.mrb[0].mxu0
        %v4261 = vadd.f32 0.0, %v4260
        %v4262 = vpop.f32.mrb[0].mxu0
        %4263 = vmatprep.mubr.f32.mxu0 0.0
        %4264 = vmatmul.mubr.f32.gmra.mrb[0].mxu0 %v4022
        %v4265 = vpop.f32.mrb[0].mxu0
        %v4266 = vadd.f32 0.0, %v4265
        %v4267 = vpop.f32.mrb[0].mxu0
        %4268 = vdwg.mxu0
        %v4269 = vadd.f32 %v3959, %v4111
        %v4270 = vadd.f32 %v3960, %v4116
        %v4271 = vadd.f32 %v3961, %v4121
        %v4272 = vadd.f32 %v3962, %v4126
        %v4273 = vadd.f32 %v3963, %v4131
        %v4274 = vadd.f32 %v3964, %v4136
        %v4275 = vadd.f32 %v3965, %v4141
        %v4276 = vadd.f32 %v3966, %v4146
        %v4277 = vadd.f32 %v3967, %v4151
        %v4278 = vadd.f32 %v3968, %v4156
        %v4279 = vadd.f32 %v3969, %v4161
        %v4280 = vadd.f32 %v3970, %v4166
        %v4281 = vadd.f32 %v3971, %v4171
        %v4282 = vadd.f32 %v3972, %v4176
        %v4283 = vadd.f32 %v3973, %v4181
        %v4284 = vadd.f32 %v3974, %v4186
        %v4285 = vadd.f32 %v3975, %v4191
        %v4286 = vadd.f32 %v3976, %v4196
        %v4287 = vadd.f32 %v3977, %v4201
        %v4288 = vadd.f32 %v3978, %v4206
        %v4289 = vadd.f32 %v3979, %v4211
        %v4290 = vadd.f32 %v3980, %v4216
        %v4291 = vadd.f32 %v3981, %v4221
        %v4292 = vadd.f32 %v3982, %v4226
        %v4293 = vadd.f32 %v3983, %v4231
        %v4294 = vadd.f32 %v3984, %v4236
        %v4295 = vadd.f32 %v3985, %v4241
        %v4296 = vadd.f32 %v3986, %v4246
        %v4297 = vadd.f32 %v3987, %v4251
        %v4298 = vadd.f32 %v3988, %v4256
        %v4299 = vadd.f32 %v3989, %v4261
        %v4300 = vadd.f32 %v3990, %v4266
        %s4301 = scalar_lea.vmem [#allocation8], 512
        %v4302 = vld [vmem:[%s4301] sm:$0xff]
        %v4303 = vld [vmem:[%s4301 + $0x8] sm:$0xff]
        %v4304 = vld [vmem:[%s4301 + $0x10] sm:$0xff]
        %v4305 = vld [vmem:[%s4301 + $0x18] sm:$0xff]
        %v4306 = vld [vmem:[%s4301 + $0x20] sm:$0xff]
        %v4307 = vld [vmem:[%s4301 + $0x28] sm:$0xff]
        %v4308 = vld [vmem:[%s4301 + $0x30] sm:$0xff]
        %v4309 = vld [vmem:[%s4301 + $0x38] sm:$0xff]
        %v4310 = vld [vmem:[%s4301 + $0x40] sm:$0xff]
        %v4311 = vld [vmem:[%s4301 + $0x48] sm:$0xff]
        %v4312 = vld [vmem:[%s4301 + $0x50] sm:$0xff]
        %v4313 = vld [vmem:[%s4301 + $0x58] sm:$0xff]
        %v4314 = vld [vmem:[%s4301 + $0x60] sm:$0xff]
        %v4315 = vld [vmem:[%s4301 + $0x68] sm:$0xff]
        %v4316 = vld [vmem:[%s4301 + $0x70] sm:$0xff]
        %v4317 = vld [vmem:[%s4301 + $0x78] sm:$0xff]
        %4318 = vmatprep.subr.mxu0 0.0
        %4319 = vmatpush1.msra.mxu0 %v4302
        %4320 = vmatprep.subr.mxu0 0.0
        %4321 = vmatpush1.msra.mxu0 %v4303
        %4322 = vmatprep.subr.mxu0 0.0
        %4323 = vmatpush1.msra.mxu0 %v4304
        %4324 = vmatprep.subr.mxu0 0.0
        %4325 = vmatpush1.msra.mxu0 %v4305
        %4326 = vmatprep.subr.mxu0 0.0
        %4327 = vmatpush1.msra.mxu0 %v4306
        %4328 = vmatprep.subr.mxu0 0.0
        %4329 = vmatpush1.msra.mxu0 %v4307
        %4330 = vmatprep.subr.mxu0 0.0
        %4331 = vmatpush1.msra.mxu0 %v4308
        %4332 = vmatprep.subr.mxu0 0.0
        %4333 = vmatpush1.msra.mxu0 %v4309
        %4334 = vmatprep.subr.mxu0 0.0
        %4335 = vmatpush1.msra.mxu0 %v4310
        %4336 = vmatprep.subr.mxu0 0.0
        %4337 = vmatpush1.msra.mxu0 %v4311
        %4338 = vmatprep.subr.mxu0 0.0
        %4339 = vmatpush1.msra.mxu0 %v4312
        %4340 = vmatprep.subr.mxu0 0.0
        %4341 = vmatpush1.msra.mxu0 %v4313
        %4342 = vmatprep.subr.mxu0 0.0
        %4343 = vmatpush1.msra.mxu0 %v4314
        %4344 = vmatprep.subr.mxu0 0.0
        %4345 = vmatpush1.msra.mxu0 %v4315
        %4346 = vmatprep.subr.mxu0 0.0
        %4347 = vmatpush1.msra.mxu0 %v4316
        %4348 = vmatprep.subr.mxu0 0.0
        %4349 = vmatpush1.msra.mxu0 %v4317
        %4350 = vmatprep.subr.mxu0 0.0
        %4351 = vmatpush1.msra.mxu0 0.0
        %4352 = vmatprep.subr.mxu0 0.0
        %4353 = vmatpush1.msra.mxu0 0.0
        %4354 = vmatprep.subr.mxu0 0.0
        %4355 = vmatpush1.msra.mxu0 0.0
        %4356 = vmatprep.subr.mxu0 0.0
        %4357 = vmatpush1.msra.mxu0 0.0
        %4358 = vmatprep.subr.mxu0 0.0
        %4359 = vmatpush1.msra.mxu0 0.0
        %4360 = vmatprep.subr.mxu0 0.0
        %4361 = vmatpush1.msra.mxu0 0.0
        %4362 = vmatprep.subr.mxu0 0.0
        %4363 = vmatpush1.msra.mxu0 0.0
        %4364 = vmatprep.subr.mxu0 0.0
        %4365 = vmatpush1.msra.mxu0 0.0
        %4366 = vmatprep.subr.mxu0 0.0
        %4367 = vmatpush1.msra.mxu0 0.0
        %4368 = vmatprep.subr.mxu0 0.0
        %4369 = vmatpush1.msra.mxu0 0.0
        %4370 = vmatprep.subr.mxu0 0.0
        %4371 = vmatpush1.msra.mxu0 0.0
        %4372 = vmatprep.subr.mxu0 0.0
        %4373 = vmatpush1.msra.mxu0 0.0
        %4374 = vmatprep.subr.mxu0 0.0
        %4375 = vmatpush1.msra.mxu0 0.0
        %4376 = vmatprep.subr.mxu0 0.0
        %4377 = vmatpush1.msra.mxu0 0.0
        %4378 = vmatprep.subr.mxu0 0.0
        %4379 = vmatpush1.msra.mxu0 0.0
        %4380 = vmatprep.subr.mxu0 0.0
        %4381 = vmatpush1.msra.mxu0 0.0
        %4382 = vmatprep.mubr.f32.mxu0 0.0
        %4383 = vmatmul.mubr.f32.gmra.mrb[0].mxu0 %v3993
        %v4384 = vpop.f32.mrb[0].mxu0
        %v4385 = vadd.f32 0.0, %v4384
        %v4386 = vpop.f32.mrb[0].mxu0
        %4387 = vmatprep.mubr.f32.mxu0 0.0
        %4388 = vmatmul.mubr.f32.gmra.mrb[0].mxu0 %v3994
        %v4389 = vpop.f32.mrb[0].mxu0
        %v4390 = vadd.f32 0.0, %v4389
        %v4391 = vpop.f32.mrb[0].mxu0
        %4392 = vmatprep.mubr.f32.mxu0 0.0
        %4393 = vmatmul.mubr.f32.gmra.mrb[0].mxu0 %v3995
        %v4394 = vpop.f32.mrb[0].mxu0
        %v4395 = vadd.f32 0.0, %v4394
        %v4396 = vpop.f32.mrb[0].mxu0
        %4397 = vmatprep.mubr.f32.mxu0 0.0
        %4398 = vmatmul.mubr.f32.gmra.mrb[0].mxu0 %v3996
        %v4399 = vpop.f32.mrb[0].mxu0
        %v4400 = vadd.f32 0.0, %v4399
        %v4401 = vpop.f32.mrb[0].mxu0
        %4402 = vmatprep.mubr.f32.mxu0 0.0
        %4403 = vmatmul.mubr.f32.gmra.mrb[0].mxu0 %v3997
        %v4404 = vpop.f32.mrb[0].mxu0
        %v4405 = vadd.f32 0.0, %v4404
        %v4406 = vpop.f32.mrb[0].mxu0
        %4407 = vmatprep.mubr.f32.mxu0 0.0
        %4408 = vmatmul.mubr.f32.gmra.mrb[0].mxu0 %v3998
        %v4409 = vpop.f32.mrb[0].mxu0
        %v4410 = vadd.f32 0.0, %v4409
        %v4411 = vpop.f32.mrb[0].mxu0
        %4412 = vmatprep.mubr.f32.mxu0 0.0
        %4413 = vmatmul.mubr.f32.gmra.mrb[0].mxu0 %v3999
        %v4414 = vpop.f32.mrb[0].mxu0
        %v4415 = vadd.f32 0.0, %v4414
        %v4416 = vpop.f32.mrb[0].mxu0
        %4417 = vmatprep.mubr.f32.mxu0 0.0
        %4418 = vmatmul.mubr.f32.gmra.mrb[0].mxu0 %v4000
        %v4419 = vpop.f32.mrb[0].mxu0
        %v4420 = vadd.f32 0.0, %v4419
        %v4421 = vpop.f32.mrb[0].mxu0
        %4422 = vmatprep.mubr.f32.mxu0 0.0
        %4423 = vmatmul.mubr.f32.gmra.mrb[0].mxu0 %v4001
        %v4424 = vpop.f32.mrb[0].mxu0
        %v4425 = vadd.f32 0.0, %v4424
        %v4426 = vpop.f32.mrb[0].mxu0
        %4427 = vmatprep.mubr.f32.mxu0 0.0
        %4428 = vmatmul.mubr.f32.gmra.mrb[0].mxu0 %v4002
        %v4429 = vpop.f32.mrb[0].mxu0
        %v4430 = vadd.f32 0.0, %v4429
        %v4431 = vpop.f32.mrb[0].mxu0
        %4432 = vmatprep.mubr.f32.mxu0 0.0
        %4433 = vmatmul.mubr.f32.gmra.mrb[0].mxu0 %v4003
        %v4434 = vpop.f32.mrb[0].mxu0
        %v4435 = vadd.f32 0.0, %v4434
        %v4436 = vpop.f32.mrb[0].mxu0
        %4437 = vmatprep.mubr.f32.mxu0 0.0
        %4438 = vmatmul.mubr.f32.gmra.mrb[0].mxu0 %v4004
        %v4439 = vpop.f32.mrb[0].mxu0
        %v4440 = vadd.f32 0.0, %v4439
        %v4441 = vpop.f32.mrb[0].mxu0
        %4442 = vmatprep.mubr.f32.mxu0 0.0
        %4443 = vmatmul.mubr.f32.gmra.mrb[0].mxu0 %v4005
        %v4444 = vpop.f32.mrb[0].mxu0
        %v4445 = vadd.f32 0.0, %v4444
        %v4446 = vpop.f32.mrb[0].mxu0
        %4447 = vmatprep.mubr.f32.mxu0 0.0
        %4448 = vmatmul.mubr.f32.gmra.mrb[0].mxu0 %v4006
        %v4449 = vpop.f32.mrb[0].mxu0
        %v4450 = vadd.f32 0.0, %v4449
        %v4451 = vpop.f32.mrb[0].mxu0
        %4452 = vmatprep.mubr.f32.mxu0 0.0
        %4453 = vmatmul.mubr.f32.gmra.mrb[0].mxu0 %v4007
        %v4454 = vpop.f32.mrb[0].mxu0
        %v4455 = vadd.f32 0.0, %v4454
        %v4456 = vpop.f32.mrb[0].mxu0
        %4457 = vmatprep.mubr.f32.mxu0 0.0
        %4458 = vmatmul.mubr.f32.gmra.mrb[0].mxu0 %v4008
        %v4459 = vpop.f32.mrb[0].mxu0
        %v4460 = vadd.f32 0.0, %v4459
        %v4461 = vpop.f32.mrb[0].mxu0
        %4462 = vmatprep.mubr.f32.mxu0 0.0
        %4463 = vmatmul.mubr.f32.gmra.mrb[0].mxu0 %v4009
        %v4464 = vpop.f32.mrb[0].mxu0
        %v4465 = vadd.f32 0.0, %v4464
        %v4466 = vpop.f32.mrb[0].mxu0
        %4467 = vmatprep.mubr.f32.mxu0 0.0
        %4468 = vmatmul.mubr.f32.gmra.mrb[0].mxu0 %v4010
        %v4469 = vpop.f32.mrb[0].mxu0
        %v4470 = vadd.f32 0.0, %v4469
        %v4471 = vpop.f32.mrb[0].mxu0
        %4472 = vmatprep.mubr.f32.mxu0 0.0
        %4473 = vmatmul.mubr.f32.gmra.mrb[0].mxu0 %v4011
        %v4474 = vpop.f32.mrb[0].mxu0
        %v4475 = vadd.f32 0.0, %v4474
        %v4476 = vpop.f32.mrb[0].mxu0
        %4477 = vmatprep.mubr.f32.mxu0 0.0
        %4478 = vmatmul.mubr.f32.gmra.mrb[0].mxu0 %v4012
        %v4479 = vpop.f32.mrb[0].mxu0
        %v4480 = vadd.f32 0.0, %v4479
        %v4481 = vpop.f32.mrb[0].mxu0
        %4482 = vmatprep.mubr.f32.mxu0 0.0
        %4483 = vmatmul.mubr.f32.gmra.mrb[0].mxu0 %v4013
        %v4484 = vpop.f32.mrb[0].mxu0
        %v4485 = vadd.f32 0.0, %v4484
        %v4486 = vpop.f32.mrb[0].mxu0
        %4487 = vmatprep.mubr.f32.mxu0 0.0
        %4488 = vmatmul.mubr.f32.gmra.mrb[0].mxu0 %v4014
        %v4489 = vpop.f32.mrb[0].mxu0
        %v4490 = vadd.f32 0.0, %v4489
        %v4491 = vpop.f32.mrb[0].mxu0
        %4492 = vmatprep.mubr.f32.mxu0 0.0
        %4493 = vmatmul.mubr.f32.gmra.mrb[0].mxu0 %v4015
        %v4494 = vpop.f32.mrb[0].mxu0
        %v4495 = vadd.f32 0.0, %v4494
        %v4496 = vpop.f32.mrb[0].mxu0
        %4497 = vmatprep.mubr.f32.mxu0 0.0
        %4498 = vmatmul.mubr.f32.gmra.mrb[0].mxu0 %v4016
        %v4499 = vpop.f32.mrb[0].mxu0
        %v4500 = vadd.f32 0.0, %v4499
        %v4501 = vpop.f32.mrb[0].mxu0
        %4502 = vmatprep.mubr.f32.mxu0 0.0
        %4503 = vmatmul.mubr.f32.gmra.mrb[0].mxu0 %v4017
        %v4504 = vpop.f32.mrb[0].mxu0
        %v4505 = vadd.f32 0.0, %v4504
        %v4506 = vpop.f32.mrb[0].mxu0
        %4507 = vmatprep.mubr.f32.mxu0 0.0
        %4508 = vmatmul.mubr.f32.gmra.mrb[0].mxu0 %v4018
        %v4509 = vpop.f32.mrb[0].mxu0
        %v4510 = vadd.f32 0.0, %v4509
        %v4511 = vpop.f32.mrb[0].mxu0
        %4512 = vmatprep.mubr.f32.mxu0 0.0
        %4513 = vmatmul.mubr.f32.gmra.mrb[0].mxu0 %v4019
        %v4514 = vpop.f32.mrb[0].mxu0
        %v4515 = vadd.f32 0.0, %v4514
        %v4516 = vpop.f32.mrb[0].mxu0
        %4517 = vmatprep.mubr.f32.mxu0 0.0
        %4518 = vmatmul.mubr.f32.gmra.mrb[0].mxu0 %v4020
        %v4519 = vpop.f32.mrb[0].mxu0
        %v4520 = vadd.f32 0.0, %v4519
        %v4521 = vpop.f32.mrb[0].mxu0
        %4522 = vmatprep.mubr.f32.mxu0 0.0
        %4523 = vmatmul.mubr.f32.gmra.mrb[0].mxu0 %v4021
        %v4524 = vpop.f32.mrb[0].mxu0
        %v4525 = vadd.f32 0.0, %v4524
        %v4526 = vpop.f32.mrb[0].mxu0
        %4527 = vmatprep.mubr.f32.mxu0 0.0
        %4528 = vmatmul.mubr.f32.gmra.mrb[0].mxu0 %v4022
        %v4529 = vpop.f32.mrb[0].mxu0
        %v4530 = vadd.f32 0.0, %v4529
        %v4531 = vpop.f32.mrb[0].mxu0
        %4532 = vmatprep.mubr.f32.mxu0 0.0
        %4533 = vmatmul.mubr.f32.gmra.mrb[0].mxu0 %v4023
        %v4534 = vpop.f32.mrb[0].mxu0
        %v4535 = vadd.f32 0.0, %v4534
        %v4536 = vpop.f32.mrb[0].mxu0
        %4537 = vmatprep.mubr.f32.mxu0 0.0
        %4538 = vmatmul.mubr.f32.gmra.mrb[0].mxu0 %v4024
        %v4539 = vpop.f32.mrb[0].mxu0
        %v4540 = vadd.f32 0.0, %v4539
        %v4541 = vpop.f32.mrb[0].mxu0
        %4542 = vdwg.mxu0
        %v4543 = vadd.f32 %v4269, %v4385
        %v4544 = vadd.f32 %v4270, %v4390
        %v4545 = vadd.f32 %v4271, %v4395
        %v4546 = vadd.f32 %v4272, %v4400
        %v4547 = vadd.f32 %v4273, %v4405
        %v4548 = vadd.f32 %v4274, %v4410
        %v4549 = vadd.f32 %v4275, %v4415
        %v4550 = vadd.f32 %v4276, %v4420
        %v4551 = vadd.f32 %v4277, %v4425
        %v4552 = vadd.f32 %v4278, %v4430
        %v4553 = vadd.f32 %v4279, %v4435
        %v4554 = vadd.f32 %v4280, %v4440
        %v4555 = vadd.f32 %v4281, %v4445
        %v4556 = vadd.f32 %v4282, %v4450
        %v4557 = vadd.f32 %v4283, %v4455
        %v4558 = vadd.f32 %v4284, %v4460
        %v4559 = vadd.f32 %v4285, %v4465
        %v4560 = vadd.f32 %v4286, %v4470
        %v4561 = vadd.f32 %v4287, %v4475
        %v4562 = vadd.f32 %v4288, %v4480
        %v4563 = vadd.f32 %v4289, %v4485
        %v4564 = vadd.f32 %v4290, %v4490
        %v4565 = vadd.f32 %v4291, %v4495
        %v4566 = vadd.f32 %v4292, %v4500
        %v4567 = vadd.f32 %v4293, %v4505
        %v4568 = vadd.f32 %v4294, %v4510
        %v4569 = vadd.f32 %v4295, %v4515
        %v4570 = vadd.f32 %v4296, %v4520
        %v4571 = vadd.f32 %v4297, %v4525
        %v4572 = vadd.f32 %v4298, %v4530
        %v4573 = vadd.f32 %v4299, %v4535
        %v4574 = vadd.f32 %v4300, %v4540
        %s4575 = scalar_lea.vmem [#allocation8], 896
        %v4576 = vld [vmem:[%s4575] sm:$0xff]
        %v4577 = vld [vmem:[%s4575 + $0x8] sm:$0xff]
        %v4578 = vld [vmem:[%s4575 + $0x10] sm:$0xff]
        %v4579 = vld [vmem:[%s4575 + $0x18] sm:$0xff]
        %v4580 = vld [vmem:[%s4575 + $0x20] sm:$0xff]
        %v4581 = vld [vmem:[%s4575 + $0x28] sm:$0xff]
        %v4582 = vld [vmem:[%s4575 + $0x30] sm:$0xff]
        %v4583 = vld [vmem:[%s4575 + $0x38] sm:$0xff]
        %v4584 = vld [vmem:[%s4575 + $0x40] sm:$0xff]
        %v4585 = vld [vmem:[%s4575 + $0x48] sm:$0xff]
        %v4586 = vld [vmem:[%s4575 + $0x50] sm:$0xff]
        %v4587 = vld [vmem:[%s4575 + $0x58] sm:$0xff]
        %v4588 = vld [vmem:[%s4575 + $0x60] sm:$0xff]
        %v4589 = vld [vmem:[%s4575 + $0x68] sm:$0xff]
        %v4590 = vld [vmem:[%s4575 + $0x70] sm:$0xff]
        %v4591 = vld [vmem:[%s4575 + $0x78] sm:$0xff]
        %4592 = vmatprep.subr.mxu0 0.0
        %4593 = vmatpush1.msra.mxu0 %v4576
        %4594 = vmatprep.subr.mxu0 0.0
        %4595 = vmatpush1.msra.mxu0 %v4577
        %4596 = vmatprep.subr.mxu0 0.0
        %4597 = vmatpush1.msra.mxu0 %v4578
        %4598 = vmatprep.subr.mxu0 0.0
        %4599 = vmatpush1.msra.mxu0 %v4579
        %4600 = vmatprep.subr.mxu0 0.0
        %4601 = vmatpush1.msra.mxu0 %v4580
        %4602 = vmatprep.subr.mxu0 0.0
        %4603 = vmatpush1.msra.mxu0 %v4581
        %4604 = vmatprep.subr.mxu0 0.0
        %4605 = vmatpush1.msra.mxu0 %v4582
        %4606 = vmatprep.subr.mxu0 0.0
        %4607 = vmatpush1.msra.mxu0 %v4583
        %4608 = vmatprep.subr.mxu0 0.0
        %4609 = vmatpush1.msra.mxu0 %v4584
        %4610 = vmatprep.subr.mxu0 0.0
        %4611 = vmatpush1.msra.mxu0 %v4585
        %4612 = vmatprep.subr.mxu0 0.0
        %4613 = vmatpush1.msra.mxu0 %v4586
        %4614 = vmatprep.subr.mxu0 0.0
        %4615 = vmatpush1.msra.mxu0 %v4587
        %4616 = vmatprep.subr.mxu0 0.0
        %4617 = vmatpush1.msra.mxu0 %v4588
        %4618 = vmatprep.subr.mxu0 0.0
        %4619 = vmatpush1.msra.mxu0 %v4589
        %4620 = vmatprep.subr.mxu0 0.0
        %4621 = vmatpush1.msra.mxu0 %v4590
        %4622 = vmatprep.subr.mxu0 0.0
        %4623 = vmatpush1.msra.mxu0 %v4591
        %4624 = vmatprep.subr.mxu0 0.0
        %4625 = vmatpush1.msra.mxu0 0.0
        %4626 = vmatprep.subr.mxu0 0.0
        %4627 = vmatpush1.msra.mxu0 0.0
        %4628 = vmatprep.subr.mxu0 0.0
        %4629 = vmatpush1.msra.mxu0 0.0
        %4630 = vmatprep.subr.mxu0 0.0
        %4631 = vmatpush1.msra.mxu0 0.0
        %4632 = vmatprep.subr.mxu0 0.0
        %4633 = vmatpush1.msra.mxu0 0.0
        %4634 = vmatprep.subr.mxu0 0.0
        %4635 = vmatpush1.msra.mxu0 0.0
        %4636 = vmatprep.subr.mxu0 0.0
        %4637 = vmatpush1.msra.mxu0 0.0
        %4638 = vmatprep.subr.mxu0 0.0
        %4639 = vmatpush1.msra.mxu0 0.0
        %4640 = vmatprep.subr.mxu0 0.0
        %4641 = vmatpush1.msra.mxu0 0.0
        %4642 = vmatprep.subr.mxu0 0.0
        %4643 = vmatpush1.msra.mxu0 0.0
        %4644 = vmatprep.subr.mxu0 0.0
        %4645 = vmatpush1.msra.mxu0 0.0
        %4646 = vmatprep.subr.mxu0 0.0
        %4647 = vmatpush1.msra.mxu0 0.0
        %4648 = vmatprep.subr.mxu0 0.0
        %4649 = vmatpush1.msra.mxu0 0.0
        %4650 = vmatprep.subr.mxu0 0.0
        %4651 = vmatpush1.msra.mxu0 0.0
        %4652 = vmatprep.subr.mxu0 0.0
        %4653 = vmatpush1.msra.mxu0 0.0
        %4654 = vmatprep.subr.mxu0 0.0
        %4655 = vmatpush1.msra.mxu0 0.0
        %4656 = vmatprep.mubr.f32.mxu0 0.0
        %4657 = vmatmul.mubr.f32.gmra.mrb[0].mxu0 %v3995
        %v4658 = vpop.f32.mrb[0].mxu0
        %v4659 = vadd.f32 0.0, %v4658
        %v4660 = vpop.f32.mrb[0].mxu0
        %4661 = vmatprep.mubr.f32.mxu0 0.0
        %4662 = vmatmul.mubr.f32.gmra.mrb[0].mxu0 %v3996
        %v4663 = vpop.f32.mrb[0].mxu0
        %v4664 = vadd.f32 0.0, %v4663
        %v4665 = vpop.f32.mrb[0].mxu0
        %4666 = vmatprep.mubr.f32.mxu0 0.0
        %4667 = vmatmul.mubr.f32.gmra.mrb[0].mxu0 %v3997
        %v4668 = vpop.f32.mrb[0].mxu0
        %v4669 = vadd.f32 0.0, %v4668
        %v4670 = vpop.f32.mrb[0].mxu0
        %4671 = vmatprep.mubr.f32.mxu0 0.0
        %4672 = vmatmul.mubr.f32.gmra.mrb[0].mxu0 %v3998
        %v4673 = vpop.f32.mrb[0].mxu0
        %v4674 = vadd.f32 0.0, %v4673
        %v4675 = vpop.f32.mrb[0].mxu0
        %4676 = vmatprep.mubr.f32.mxu0 0.0
        %4677 = vmatmul.mubr.f32.gmra.mrb[0].mxu0 %v3999
        %v4678 = vpop.f32.mrb[0].mxu0
        %v4679 = vadd.f32 0.0, %v4678
        %v4680 = vpop.f32.mrb[0].mxu0
        %4681 = vmatprep.mubr.f32.mxu0 0.0
        %4682 = vmatmul.mubr.f32.gmra.mrb[0].mxu0 %v4000
        %v4683 = vpop.f32.mrb[0].mxu0
        %v4684 = vadd.f32 0.0, %v4683
        %v4685 = vpop.f32.mrb[0].mxu0
        %4686 = vmatprep.mubr.f32.mxu0 0.0
        %4687 = vmatmul.mubr.f32.gmra.mrb[0].mxu0 %v4001
        %v4688 = vpop.f32.mrb[0].mxu0
        %v4689 = vadd.f32 0.0, %v4688
        %v4690 = vpop.f32.mrb[0].mxu0
        %4691 = vmatprep.mubr.f32.mxu0 0.0
        %4692 = vmatmul.mubr.f32.gmra.mrb[0].mxu0 %v4002
        %v4693 = vpop.f32.mrb[0].mxu0
        %v4694 = vadd.f32 0.0, %v4693
        %v4695 = vpop.f32.mrb[0].mxu0
        %4696 = vmatprep.mubr.f32.mxu0 0.0
        %4697 = vmatmul.mubr.f32.gmra.mrb[0].mxu0 %v4003
        %v4698 = vpop.f32.mrb[0].mxu0
        %v4699 = vadd.f32 0.0, %v4698
        %v4700 = vpop.f32.mrb[0].mxu0
        %4701 = vmatprep.mubr.f32.mxu0 0.0
        %4702 = vmatmul.mubr.f32.gmra.mrb[0].mxu0 %v4004
        %v4703 = vpop.f32.mrb[0].mxu0
        %v4704 = vadd.f32 0.0, %v4703
        %v4705 = vpop.f32.mrb[0].mxu0
        %4706 = vmatprep.mubr.f32.mxu0 0.0
        %4707 = vmatmul.mubr.f32.gmra.mrb[0].mxu0 %v4005
        %v4708 = vpop.f32.mrb[0].mxu0
        %v4709 = vadd.f32 0.0, %v4708
        %v4710 = vpop.f32.mrb[0].mxu0
        %4711 = vmatprep.mubr.f32.mxu0 0.0
        %4712 = vmatmul.mubr.f32.gmra.mrb[0].mxu0 %v4006
        %v4713 = vpop.f32.mrb[0].mxu0
        %v4714 = vadd.f32 0.0, %v4713
        %v4715 = vpop.f32.mrb[0].mxu0
        %4716 = vmatprep.mubr.f32.mxu0 0.0
        %4717 = vmatmul.mubr.f32.gmra.mrb[0].mxu0 %v4007
        %v4718 = vpop.f32.mrb[0].mxu0
        %v4719 = vadd.f32 0.0, %v4718
        %v4720 = vpop.f32.mrb[0].mxu0
        %4721 = vmatprep.mubr.f32.mxu0 0.0
        %4722 = vmatmul.mubr.f32.gmra.mrb[0].mxu0 %v4008
        %v4723 = vpop.f32.mrb[0].mxu0
        %v4724 = vadd.f32 0.0, %v4723
        %v4725 = vpop.f32.mrb[0].mxu0
        %4726 = vmatprep.mubr.f32.mxu0 0.0
        %4727 = vmatmul.mubr.f32.gmra.mrb[0].mxu0 %v4009
        %v4728 = vpop.f32.mrb[0].mxu0
        %v4729 = vadd.f32 0.0, %v4728
        %v4730 = vpop.f32.mrb[0].mxu0
        %4731 = vmatprep.mubr.f32.mxu0 0.0
        %4732 = vmatmul.mubr.f32.gmra.mrb[0].mxu0 %v4010
        %v4733 = vpop.f32.mrb[0].mxu0
        %v4734 = vadd.f32 0.0, %v4733
        %v4735 = vpop.f32.mrb[0].mxu0
        %4736 = vmatprep.mubr.f32.mxu0 0.0
        %4737 = vmatmul.mubr.f32.gmra.mrb[0].mxu0 %v4011
        %v4738 = vpop.f32.mrb[0].mxu0
        %v4739 = vadd.f32 0.0, %v4738
        %v4740 = vpop.f32.mrb[0].mxu0
        %4741 = vmatprep.mubr.f32.mxu0 0.0
        %4742 = vmatmul.mubr.f32.gmra.mrb[0].mxu0 %v4012
        %v4743 = vpop.f32.mrb[0].mxu0
        %v4744 = vadd.f32 0.0, %v4743
        %v4745 = vpop.f32.mrb[0].mxu0
        %4746 = vmatprep.mubr.f32.mxu0 0.0
        %4747 = vmatmul.mubr.f32.gmra.mrb[0].mxu0 %v4013
        %v4748 = vpop.f32.mrb[0].mxu0
        %v4749 = vadd.f32 0.0, %v4748
        %v4750 = vpop.f32.mrb[0].mxu0
        %4751 = vmatprep.mubr.f32.mxu0 0.0
        %4752 = vmatmul.mubr.f32.gmra.mrb[0].mxu0 %v4014
        %v4753 = vpop.f32.mrb[0].mxu0
        %v4754 = vadd.f32 0.0, %v4753
        %v4755 = vpop.f32.mrb[0].mxu0
        %4756 = vmatprep.mubr.f32.mxu0 0.0
        %4757 = vmatmul.mubr.f32.gmra.mrb[0].mxu0 %v4015
        %v4758 = vpop.f32.mrb[0].mxu0
        %v4759 = vadd.f32 0.0, %v4758
        %v4760 = vpop.f32.mrb[0].mxu0
        %4761 = vmatprep.mubr.f32.mxu0 0.0
        %4762 = vmatmul.mubr.f32.gmra.mrb[0].mxu0 %v4016
        %v4763 = vpop.f32.mrb[0].mxu0
        %v4764 = vadd.f32 0.0, %v4763
        %v4765 = vpop.f32.mrb[0].mxu0
        %4766 = vmatprep.mubr.f32.mxu0 0.0
        %4767 = vmatmul.mubr.f32.gmra.mrb[0].mxu0 %v4017
        %v4768 = vpop.f32.mrb[0].mxu0
        %v4769 = vadd.f32 0.0, %v4768
        %v4770 = vpop.f32.mrb[0].mxu0
        %4771 = vmatprep.mubr.f32.mxu0 0.0
        %4772 = vmatmul.mubr.f32.gmra.mrb[0].mxu0 %v4018
        %v4773 = vpop.f32.mrb[0].mxu0
        %v4774 = vadd.f32 0.0, %v4773
        %v4775 = vpop.f32.mrb[0].mxu0
        %4776 = vmatprep.mubr.f32.mxu0 0.0
        %4777 = vmatmul.mubr.f32.gmra.mrb[0].mxu0 %v4019
        %v4778 = vpop.f32.mrb[0].mxu0
        %v4779 = vadd.f32 0.0, %v4778
        %v4780 = vpop.f32.mrb[0].mxu0
        %4781 = vmatprep.mubr.f32.mxu0 0.0
        %4782 = vmatmul.mubr.f32.gmra.mrb[0].mxu0 %v4020
        %v4783 = vpop.f32.mrb[0].mxu0
        %v4784 = vadd.f32 0.0, %v4783
        %v4785 = vpop.f32.mrb[0].mxu0
        %4786 = vmatprep.mubr.f32.mxu0 0.0
        %4787 = vmatmul.mubr.f32.gmra.mrb[0].mxu0 %v4021
        %v4788 = vpop.f32.mrb[0].mxu0
        %v4789 = vadd.f32 0.0, %v4788
        %v4790 = vpop.f32.mrb[0].mxu0
        %4791 = vmatprep.mubr.f32.mxu0 0.0
        %4792 = vmatmul.mubr.f32.gmra.mrb[0].mxu0 %v4022
        %v4793 = vpop.f32.mrb[0].mxu0
        %v4794 = vadd.f32 0.0, %v4793
        %v4795 = vpop.f32.mrb[0].mxu0
        %4796 = vmatprep.mubr.f32.mxu0 0.0
        %4797 = vmatmul.mubr.f32.gmra.mrb[0].mxu0 %v4023
        %v4798 = vpop.f32.mrb[0].mxu0
        %v4799 = vadd.f32 0.0, %v4798
        %v4800 = vpop.f32.mrb[0].mxu0
        %4801 = vmatprep.mubr.f32.mxu0 0.0
        %4802 = vmatmul.mubr.f32.gmra.mrb[0].mxu0 %v4024
        %v4803 = vpop.f32.mrb[0].mxu0
        %v4804 = vadd.f32 0.0, %v4803
        %v4805 = vpop.f32.mrb[0].mxu0
        %4806 = vmatprep.mubr.f32.mxu0 0.0
        %4807 = vmatmul.mubr.f32.gmra.mrb[0].mxu0 %v4025
        %v4808 = vpop.f32.mrb[0].mxu0
        %v4809 = vadd.f32 0.0, %v4808
        %v4810 = vpop.f32.mrb[0].mxu0
        %4811 = vmatprep.mubr.f32.mxu0 0.0
        %4812 = vmatmul.mubr.f32.gmra.mrb[0].mxu0 %v4026
        %v4813 = vpop.f32.mrb[0].mxu0
        %v4814 = vadd.f32 0.0, %v4813
        %v4815 = vpop.f32.mrb[0].mxu0
        %4816 = vdwg.mxu0
        %v4817 = vadd.f32 %v4543, %v4659
        %v4818 = vadd.f32 %v4544, %v4664
        %v4819 = vadd.f32 %v4545, %v4669
        %v4820 = vadd.f32 %v4546, %v4674
        %v4821 = vadd.f32 %v4547, %v4679
        %v4822 = vadd.f32 %v4548, %v4684
        %v4823 = vadd.f32 %v4549, %v4689
        %v4824 = vadd.f32 %v4550, %v4694
        %v4825 = vadd.f32 %v4551, %v4699
        %v4826 = vadd.f32 %v4552, %v4704
        %v4827 = vadd.f32 %v4553, %v4709
        %v4828 = vadd.f32 %v4554, %v4714
        %v4829 = vadd.f32 %v4555, %v4719
        %v4830 = vadd.f32 %v4556, %v4724
        %v4831 = vadd.f32 %v4557, %v4729
        %v4832 = vadd.f32 %v4558, %v4734
        %v4833 = vadd.f32 %v4559, %v4739
        %v4834 = vadd.f32 %v4560, %v4744
        %v4835 = vadd.f32 %v4561, %v4749
        %v4836 = vadd.f32 %v4562, %v4754
        %v4837 = vadd.f32 %v4563, %v4759
        %v4838 = vadd.f32 %v4564, %v4764
        %v4839 = vadd.f32 %v4565, %v4769
        %v4840 = vadd.f32 %v4566, %v4774
        %v4841 = vadd.f32 %v4567, %v4779
        %v4842 = vadd.f32 %v4568, %v4784
        %v4843 = vadd.f32 %v4569, %v4789
        %v4844 = vadd.f32 %v4570, %v4794
        %v4845 = vadd.f32 %v4571, %v4799
        %v4846 = vadd.f32 %v4572, %v4804
        %v4847 = vadd.f32 %v4573, %v4809
        %v4848 = vadd.f32 %v4574, %v4814
        %v4849 = vld [vmem:[#allocation2 + $0x2] sm:$0xff]
        %v4850 = vld [vmem:[#allocation2 + $0xa] sm:$0xff]
        %v4851 = vld [vmem:[#allocation2 + $0x1a] sm:$0xff]
        %v4852 = vld [vmem:[#allocation2 + $0x22] sm:$0xff]
        %v4853 = vld [vmem:[#allocation2 + $0x32] sm:$0xff]
        %v4854 = vld [vmem:[#allocation2 + $0x3a] sm:$0xff]
        %v4855 = vld [vmem:[#allocation2 + $0x4a] sm:$0xff]
        %v4856 = vld [vmem:[#allocation2 + $0x52] sm:$0xff]
        %v4857 = vld [vmem:[#allocation2 + $0x62] sm:$0xff]
        %v4858 = vld [vmem:[#allocation2 + $0x6a] sm:$0xff]
        %v4859 = vld [vmem:[#allocation2 + $0x7a] sm:$0xff]
        %v4860 = vld [vmem:[#allocation2 + $0x82] sm:$0xff]
        %v4861 = vld [vmem:[#allocation2 + $0x92] sm:$0xff]
        %v4862 = vld [vmem:[#allocation2 + $0x9a] sm:$0xff]
        %v4863 = vld [vmem:[#allocation2 + $0xaa] sm:$0xff]
        %v4864 = vld [vmem:[#allocation2 + $0xb2] sm:$0xff]
        %v4865 = vld [vmem:[#allocation2 + $0xc2] sm:$0xff]
        %v4866 = vld [vmem:[#allocation2 + $0xca] sm:$0xff]
        %v4867 = vld [vmem:[#allocation2 + $0xda] sm:$0xff]
        %v4868 = vld [vmem:[#allocation2 + $0xe2] sm:$0xff]
        %v4869 = vld [vmem:[#allocation2 + $0xf2] sm:$0xff]
        %v4870 = vld [vmem:[#allocation2 + $0xfa] sm:$0xff]
        %v4871 = vld [vmem:[#allocation2 + $0x10a] sm:$0xff]
        %v4872 = vld [vmem:[#allocation2 + $0x112] sm:$0xff]
        %v4873 = vld [vmem:[#allocation2 + $0x122] sm:$0xff]
        %v4874 = vld [vmem:[#allocation2 + $0x12a] sm:$0xff]
        %v4875 = vld [vmem:[#allocation2 + $0x13a] sm:$0xff]
        %v4876 = vld [vmem:[#allocation2 + $0x142] sm:$0xff]
        %v4877 = vld [vmem:[#allocation2 + $0x152] sm:$0xff]
        %v4878 = vld [vmem:[#allocation2 + $0x15a] sm:$0xff]
        %v4879 = vld [vmem:[#allocation2 + $0x16a] sm:$0xff]
        %v4880 = vld [vmem:[#allocation2 + $0x172] sm:$0xff]
        %v4881 = vld [vmem:[#allocation2 + $0x182] sm:$0xff]
        %v4882 = vld [vmem:[#allocation2 + $0x18a] sm:$0xff]
        %v4883 = vld [vmem:[#allocation2 + $0x19a] sm:$0xff]
        %v4884 = vld [vmem:[#allocation2 + $0x1a2] sm:$0xff]
        %s4885 = scalar_lea.vmem [#allocation8], 256
        %v4886 = vld [vmem:[%s4885] sm:$0xff]
        %v4887 = vld [vmem:[%s4885 + $0x8] sm:$0xff]
        %v4888 = vld [vmem:[%s4885 + $0x10] sm:$0xff]
        %v4889 = vld [vmem:[%s4885 + $0x18] sm:$0xff]
        %v4890 = vld [vmem:[%s4885 + $0x20] sm:$0xff]
        %v4891 = vld [vmem:[%s4885 + $0x28] sm:$0xff]
        %v4892 = vld [vmem:[%s4885 + $0x30] sm:$0xff]
        %v4893 = vld [vmem:[%s4885 + $0x38] sm:$0xff]
        %v4894 = vld [vmem:[%s4885 + $0x40] sm:$0xff]
        %v4895 = vld [vmem:[%s4885 + $0x48] sm:$0xff]
        %v4896 = vld [vmem:[%s4885 + $0x50] sm:$0xff]
        %v4897 = vld [vmem:[%s4885 + $0x58] sm:$0xff]
        %v4898 = vld [vmem:[%s4885 + $0x60] sm:$0xff]
        %v4899 = vld [vmem:[%s4885 + $0x68] sm:$0xff]
        %v4900 = vld [vmem:[%s4885 + $0x70] sm:$0xff]
        %v4901 = vld [vmem:[%s4885 + $0x78] sm:$0xff]
        %4902 = vmatprep.subr.mxu0 0.0
        %4903 = vmatpush1.msra.mxu0 %v4886
        %4904 = vmatprep.subr.mxu0 0.0
        %4905 = vmatpush1.msra.mxu0 %v4887
        %4906 = vmatprep.subr.mxu0 0.0
        %4907 = vmatpush1.msra.mxu0 %v4888
        %4908 = vmatprep.subr.mxu0 0.0
        %4909 = vmatpush1.msra.mxu0 %v4889
        %4910 = vmatprep.subr.mxu0 0.0
        %4911 = vmatpush1.msra.mxu0 %v4890
        %4912 = vmatprep.subr.mxu0 0.0
        %4913 = vmatpush1.msra.mxu0 %v4891
        %4914 = vmatprep.subr.mxu0 0.0
        %4915 = vmatpush1.msra.mxu0 %v4892
        %4916 = vmatprep.subr.mxu0 0.0
        %4917 = vmatpush1.msra.mxu0 %v4893
        %4918 = vmatprep.subr.mxu0 0.0
        %4919 = vmatpush1.msra.mxu0 %v4894
        %4920 = vmatprep.subr.mxu0 0.0
        %4921 = vmatpush1.msra.mxu0 %v4895
        %4922 = vmatprep.subr.mxu0 0.0
        %4923 = vmatpush1.msra.mxu0 %v4896
        %4924 = vmatprep.subr.mxu0 0.0
        %4925 = vmatpush1.msra.mxu0 %v4897
        %4926 = vmatprep.subr.mxu0 0.0
        %4927 = vmatpush1.msra.mxu0 %v4898
        %4928 = vmatprep.subr.mxu0 0.0
        %4929 = vmatpush1.msra.mxu0 %v4899
        %4930 = vmatprep.subr.mxu0 0.0
        %4931 = vmatpush1.msra.mxu0 %v4900
        %4932 = vmatprep.subr.mxu0 0.0
        %4933 = vmatpush1.msra.mxu0 %v4901
        %4934 = vmatprep.subr.mxu0 0.0
        %4935 = vmatpush1.msra.mxu0 0.0
        %4936 = vmatprep.subr.mxu0 0.0
        %4937 = vmatpush1.msra.mxu0 0.0
        %4938 = vmatprep.subr.mxu0 0.0
        %4939 = vmatpush1.msra.mxu0 0.0
        %4940 = vmatprep.subr.mxu0 0.0
        %4941 = vmatpush1.msra.mxu0 0.0
        %4942 = vmatprep.subr.mxu0 0.0
        %4943 = vmatpush1.msra.mxu0 0.0
        %4944 = vmatprep.subr.mxu0 0.0
        %4945 = vmatpush1.msra.mxu0 0.0
        %4946 = vmatprep.subr.mxu0 0.0
        %4947 = vmatpush1.msra.mxu0 0.0
        %4948 = vmatprep.subr.mxu0 0.0
        %4949 = vmatpush1.msra.mxu0 0.0
        %4950 = vmatprep.subr.mxu0 0.0
        %4951 = vmatpush1.msra.mxu0 0.0
        %4952 = vmatprep.subr.mxu0 0.0
        %4953 = vmatpush1.msra.mxu0 0.0
        %4954 = vmatprep.subr.mxu0 0.0
        %4955 = vmatpush1.msra.mxu0 0.0
        %4956 = vmatprep.subr.mxu0 0.0
        %4957 = vmatpush1.msra.mxu0 0.0
        %4958 = vmatprep.subr.mxu0 0.0
        %4959 = vmatpush1.msra.mxu0 0.0
        %4960 = vmatprep.subr.mxu0 0.0
        %4961 = vmatpush1.msra.mxu0 0.0
        %4962 = vmatprep.subr.mxu0 0.0
        %4963 = vmatpush1.msra.mxu0 0.0
        %4964 = vmatprep.subr.mxu0 0.0
        %4965 = vmatpush1.msra.mxu0 0.0
        %4966 = vmatprep.mubr.f32.mxu0 0.0
        %4967 = vmatmul.mubr.f32.gmra.mrb[0].mxu0 %v4849
        %v4968 = vpop.f32.mrb[0].mxu0
        %v4969 = vadd.f32 0.0, %v4968
        %v4970 = vpop.f32.mrb[0].mxu0
        %4971 = vmatprep.mubr.f32.mxu0 0.0
        %4972 = vmatmul.mubr.f32.gmra.mrb[0].mxu0 %v4850
        %v4973 = vpop.f32.mrb[0].mxu0
        %v4974 = vadd.f32 0.0, %v4973
        %v4975 = vpop.f32.mrb[0].mxu0
        %4976 = vmatprep.mubr.f32.mxu0 0.0
        %4977 = vmatmul.mubr.f32.gmra.mrb[0].mxu0 %v4851
        %v4978 = vpop.f32.mrb[0].mxu0
        %v4979 = vadd.f32 0.0, %v4978
        %v4980 = vpop.f32.mrb[0].mxu0
        %4981 = vmatprep.mubr.f32.mxu0 0.0
        %4982 = vmatmul.mubr.f32.gmra.mrb[0].mxu0 %v4852
        %v4983 = vpop.f32.mrb[0].mxu0
        %v4984 = vadd.f32 0.0, %v4983
        %v4985 = vpop.f32.mrb[0].mxu0
        %4986 = vmatprep.mubr.f32.mxu0 0.0
        %4987 = vmatmul.mubr.f32.gmra.mrb[0].mxu0 %v4853
        %v4988 = vpop.f32.mrb[0].mxu0
        %v4989 = vadd.f32 0.0, %v4988
        %v4990 = vpop.f32.mrb[0].mxu0
        %4991 = vmatprep.mubr.f32.mxu0 0.0
        %4992 = vmatmul.mubr.f32.gmra.mrb[0].mxu0 %v4854
        %v4993 = vpop.f32.mrb[0].mxu0
        %v4994 = vadd.f32 0.0, %v4993
        %v4995 = vpop.f32.mrb[0].mxu0
        %4996 = vmatprep.mubr.f32.mxu0 0.0
        %4997 = vmatmul.mubr.f32.gmra.mrb[0].mxu0 %v4855
        %v4998 = vpop.f32.mrb[0].mxu0
        %v4999 = vadd.f32 0.0, %v4998
        %v5000 = vpop.f32.mrb[0].mxu0
        %5001 = vmatprep.mubr.f32.mxu0 0.0
        %5002 = vmatmul.mubr.f32.gmra.mrb[0].mxu0 %v4856
        %v5003 = vpop.f32.mrb[0].mxu0
        %v5004 = vadd.f32 0.0, %v5003
        %v5005 = vpop.f32.mrb[0].mxu0
        %5006 = vmatprep.mubr.f32.mxu0 0.0
        %5007 = vmatmul.mubr.f32.gmra.mrb[0].mxu0 %v4857
        %v5008 = vpop.f32.mrb[0].mxu0
        %v5009 = vadd.f32 0.0, %v5008
        %v5010 = vpop.f32.mrb[0].mxu0
        %5011 = vmatprep.mubr.f32.mxu0 0.0
        %5012 = vmatmul.mubr.f32.gmra.mrb[0].mxu0 %v4858
        %v5013 = vpop.f32.mrb[0].mxu0
        %v5014 = vadd.f32 0.0, %v5013
        %v5015 = vpop.f32.mrb[0].mxu0
        %5016 = vmatprep.mubr.f32.mxu0 0.0
        %5017 = vmatmul.mubr.f32.gmra.mrb[0].mxu0 %v4859
        %v5018 = vpop.f32.mrb[0].mxu0
        %v5019 = vadd.f32 0.0, %v5018
        %v5020 = vpop.f32.mrb[0].mxu0
        %5021 = vmatprep.mubr.f32.mxu0 0.0
        %5022 = vmatmul.mubr.f32.gmra.mrb[0].mxu0 %v4860
        %v5023 = vpop.f32.mrb[0].mxu0
        %v5024 = vadd.f32 0.0, %v5023
        %v5025 = vpop.f32.mrb[0].mxu0
        %5026 = vmatprep.mubr.f32.mxu0 0.0
        %5027 = vmatmul.mubr.f32.gmra.mrb[0].mxu0 %v4861
        %v5028 = vpop.f32.mrb[0].mxu0
        %v5029 = vadd.f32 0.0, %v5028
        %v5030 = vpop.f32.mrb[0].mxu0
        %5031 = vmatprep.mubr.f32.mxu0 0.0
        %5032 = vmatmul.mubr.f32.gmra.mrb[0].mxu0 %v4862
        %v5033 = vpop.f32.mrb[0].mxu0
        %v5034 = vadd.f32 0.0, %v5033
        %v5035 = vpop.f32.mrb[0].mxu0
        %5036 = vmatprep.mubr.f32.mxu0 0.0
        %5037 = vmatmul.mubr.f32.gmra.mrb[0].mxu0 %v4863
        %v5038 = vpop.f32.mrb[0].mxu0
        %v5039 = vadd.f32 0.0, %v5038
        %v5040 = vpop.f32.mrb[0].mxu0
        %5041 = vmatprep.mubr.f32.mxu0 0.0
        %5042 = vmatmul.mubr.f32.gmra.mrb[0].mxu0 %v4864
        %v5043 = vpop.f32.mrb[0].mxu0
        %v5044 = vadd.f32 0.0, %v5043
        %v5045 = vpop.f32.mrb[0].mxu0
        %5046 = vmatprep.mubr.f32.mxu0 0.0
        %5047 = vmatmul.mubr.f32.gmra.mrb[0].mxu0 %v4865
        %v5048 = vpop.f32.mrb[0].mxu0
        %v5049 = vadd.f32 0.0, %v5048
        %v5050 = vpop.f32.mrb[0].mxu0
        %5051 = vmatprep.mubr.f32.mxu0 0.0
        %5052 = vmatmul.mubr.f32.gmra.mrb[0].mxu0 %v4866
        %v5053 = vpop.f32.mrb[0].mxu0
        %v5054 = vadd.f32 0.0, %v5053
        %v5055 = vpop.f32.mrb[0].mxu0
        %5056 = vmatprep.mubr.f32.mxu0 0.0
        %5057 = vmatmul.mubr.f32.gmra.mrb[0].mxu0 %v4867
        %v5058 = vpop.f32.mrb[0].mxu0
        %v5059 = vadd.f32 0.0, %v5058
        %v5060 = vpop.f32.mrb[0].mxu0
        %5061 = vmatprep.mubr.f32.mxu0 0.0
        %5062 = vmatmul.mubr.f32.gmra.mrb[0].mxu0 %v4868
        %v5063 = vpop.f32.mrb[0].mxu0
        %v5064 = vadd.f32 0.0, %v5063
        %v5065 = vpop.f32.mrb[0].mxu0
        %5066 = vmatprep.mubr.f32.mxu0 0.0
        %5067 = vmatmul.mubr.f32.gmra.mrb[0].mxu0 %v4869
        %v5068 = vpop.f32.mrb[0].mxu0
        %v5069 = vadd.f32 0.0, %v5068
        %v5070 = vpop.f32.mrb[0].mxu0
        %5071 = vmatprep.mubr.f32.mxu0 0.0
        %5072 = vmatmul.mubr.f32.gmra.mrb[0].mxu0 %v4870
        %v5073 = vpop.f32.mrb[0].mxu0
        %v5074 = vadd.f32 0.0, %v5073
        %v5075 = vpop.f32.mrb[0].mxu0
        %5076 = vmatprep.mubr.f32.mxu0 0.0
        %5077 = vmatmul.mubr.f32.gmra.mrb[0].mxu0 %v4871
        %v5078 = vpop.f32.mrb[0].mxu0
        %v5079 = vadd.f32 0.0, %v5078
        %v5080 = vpop.f32.mrb[0].mxu0
        %5081 = vmatprep.mubr.f32.mxu0 0.0
        %5082 = vmatmul.mubr.f32.gmra.mrb[0].mxu0 %v4872
        %v5083 = vpop.f32.mrb[0].mxu0
        %v5084 = vadd.f32 0.0, %v5083
        %v5085 = vpop.f32.mrb[0].mxu0
        %5086 = vmatprep.mubr.f32.mxu0 0.0
        %5087 = vmatmul.mubr.f32.gmra.mrb[0].mxu0 %v4873
        %v5088 = vpop.f32.mrb[0].mxu0
        %v5089 = vadd.f32 0.0, %v5088
        %v5090 = vpop.f32.mrb[0].mxu0
        %5091 = vmatprep.mubr.f32.mxu0 0.0
        %5092 = vmatmul.mubr.f32.gmra.mrb[0].mxu0 %v4874
        %v5093 = vpop.f32.mrb[0].mxu0
        %v5094 = vadd.f32 0.0, %v5093
        %v5095 = vpop.f32.mrb[0].mxu0
        %5096 = vmatprep.mubr.f32.mxu0 0.0
        %5097 = vmatmul.mubr.f32.gmra.mrb[0].mxu0 %v4875
        %v5098 = vpop.f32.mrb[0].mxu0
        %v5099 = vadd.f32 0.0, %v5098
        %v5100 = vpop.f32.mrb[0].mxu0
        %5101 = vmatprep.mubr.f32.mxu0 0.0
        %5102 = vmatmul.mubr.f32.gmra.mrb[0].mxu0 %v4876
        %v5103 = vpop.f32.mrb[0].mxu0
        %v5104 = vadd.f32 0.0, %v5103
        %v5105 = vpop.f32.mrb[0].mxu0
        %5106 = vmatprep.mubr.f32.mxu0 0.0
        %5107 = vmatmul.mubr.f32.gmra.mrb[0].mxu0 %v4877
        %v5108 = vpop.f32.mrb[0].mxu0
        %v5109 = vadd.f32 0.0, %v5108
        %v5110 = vpop.f32.mrb[0].mxu0
        %5111 = vmatprep.mubr.f32.mxu0 0.0
        %5112 = vmatmul.mubr.f32.gmra.mrb[0].mxu0 %v4878
        %v5113 = vpop.f32.mrb[0].mxu0
        %v5114 = vadd.f32 0.0, %v5113
        %v5115 = vpop.f32.mrb[0].mxu0
        %5116 = vmatprep.mubr.f32.mxu0 0.0
        %5117 = vmatmul.mubr.f32.gmra.mrb[0].mxu0 %v4879
        %v5118 = vpop.f32.mrb[0].mxu0
        %v5119 = vadd.f32 0.0, %v5118
        %v5120 = vpop.f32.mrb[0].mxu0
        %5121 = vmatprep.mubr.f32.mxu0 0.0
        %5122 = vmatmul.mubr.f32.gmra.mrb[0].mxu0 %v4880
        %v5123 = vpop.f32.mrb[0].mxu0
        %v5124 = vadd.f32 0.0, %v5123
        %v5125 = vpop.f32.mrb[0].mxu0
        %5126 = vdwg.mxu0
        %v5127 = vadd.f32 %v4817, %v4969
        %v5128 = vadd.f32 %v4818, %v4974
        %v5129 = vadd.f32 %v4819, %v4979
        %v5130 = vadd.f32 %v4820, %v4984
        %v5131 = vadd.f32 %v4821, %v4989
        %v5132 = vadd.f32 %v4822, %v4994
        %v5133 = vadd.f32 %v4823, %v4999
        %v5134 = vadd.f32 %v4824, %v5004
        %v5135 = vadd.f32 %v4825, %v5009
        %v5136 = vadd.f32 %v4826, %v5014
        %v5137 = vadd.f32 %v4827, %v5019
        %v5138 = vadd.f32 %v4828, %v5024
        %v5139 = vadd.f32 %v4829, %v5029
        %v5140 = vadd.f32 %v4830, %v5034
        %v5141 = vadd.f32 %v4831, %v5039
        %v5142 = vadd.f32 %v4832, %v5044
        %v5143 = vadd.f32 %v4833, %v5049
        %v5144 = vadd.f32 %v4834, %v5054
        %v5145 = vadd.f32 %v4835, %v5059
        %v5146 = vadd.f32 %v4836, %v5064
        %v5147 = vadd.f32 %v4837, %v5069
        %v5148 = vadd.f32 %v4838, %v5074
        %v5149 = vadd.f32 %v4839, %v5079
        %v5150 = vadd.f32 %v4840, %v5084
        %v5151 = vadd.f32 %v4841, %v5089
        %v5152 = vadd.f32 %v4842, %v5094
        %v5153 = vadd.f32 %v4843, %v5099
        %v5154 = vadd.f32 %v4844, %v5104
        %v5155 = vadd.f32 %v4845, %v5109
        %v5156 = vadd.f32 %v4846, %v5114
        %v5157 = vadd.f32 %v4847, %v5119
        %v5158 = vadd.f32 %v4848, %v5124
        %s5159 = scalar_lea.vmem [#allocation8], 640
        %v5160 = vld [vmem:[%s5159] sm:$0xff]
        %v5161 = vld [vmem:[%s5159 + $0x8] sm:$0xff]
        %v5162 = vld [vmem:[%s5159 + $0x10] sm:$0xff]
        %v5163 = vld [vmem:[%s5159 + $0x18] sm:$0xff]
        %v5164 = vld [vmem:[%s5159 + $0x20] sm:$0xff]
        %v5165 = vld [vmem:[%s5159 + $0x28] sm:$0xff]
        %v5166 = vld [vmem:[%s5159 + $0x30] sm:$0xff]
        %v5167 = vld [vmem:[%s5159 + $0x38] sm:$0xff]
        %v5168 = vld [vmem:[%s5159 + $0x40] sm:$0xff]
        %v5169 = vld [vmem:[%s5159 + $0x48] sm:$0xff]
        %v5170 = vld [vmem:[%s5159 + $0x50] sm:$0xff]
        %v5171 = vld [vmem:[%s5159 + $0x58] sm:$0xff]
        %v5172 = vld [vmem:[%s5159 + $0x60] sm:$0xff]
        %v5173 = vld [vmem:[%s5159 + $0x68] sm:$0xff]
        %v5174 = vld [vmem:[%s5159 + $0x70] sm:$0xff]
        %v5175 = vld [vmem:[%s5159 + $0x78] sm:$0xff]
        %5176 = vmatprep.subr.mxu0 0.0
        %5177 = vmatpush1.msra.mxu0 %v5160
        %5178 = vmatprep.subr.mxu0 0.0
        %5179 = vmatpush1.msra.mxu0 %v5161
        %5180 = vmatprep.subr.mxu0 0.0
        %5181 = vmatpush1.msra.mxu0 %v5162
        %5182 = vmatprep.subr.mxu0 0.0
        %5183 = vmatpush1.msra.mxu0 %v5163
        %5184 = vmatprep.subr.mxu0 0.0
        %5185 = vmatpush1.msra.mxu0 %v5164
        %5186 = vmatprep.subr.mxu0 0.0
        %5187 = vmatpush1.msra.mxu0 %v5165
        %5188 = vmatprep.subr.mxu0 0.0
        %5189 = vmatpush1.msra.mxu0 %v5166
        %5190 = vmatprep.subr.mxu0 0.0
        %5191 = vmatpush1.msra.mxu0 %v5167
        %5192 = vmatprep.subr.mxu0 0.0
        %5193 = vmatpush1.msra.mxu0 %v5168
        %5194 = vmatprep.subr.mxu0 0.0
        %5195 = vmatpush1.msra.mxu0 %v5169
        %5196 = vmatprep.subr.mxu0 0.0
        %5197 = vmatpush1.msra.mxu0 %v5170
        %5198 = vmatprep.subr.mxu0 0.0
        %5199 = vmatpush1.msra.mxu0 %v5171
        %5200 = vmatprep.subr.mxu0 0.0
        %5201 = vmatpush1.msra.mxu0 %v5172
        %5202 = vmatprep.subr.mxu0 0.0
        %5203 = vmatpush1.msra.mxu0 %v5173
        %5204 = vmatprep.subr.mxu0 0.0
        %5205 = vmatpush1.msra.mxu0 %v5174
        %5206 = vmatprep.subr.mxu0 0.0
        %5207 = vmatpush1.msra.mxu0 %v5175
        %5208 = vmatprep.subr.mxu0 0.0
        %5209 = vmatpush1.msra.mxu0 0.0
        %5210 = vmatprep.subr.mxu0 0.0
        %5211 = vmatpush1.msra.mxu0 0.0
        %5212 = vmatprep.subr.mxu0 0.0
        %5213 = vmatpush1.msra.mxu0 0.0
        %5214 = vmatprep.subr.mxu0 0.0
        %5215 = vmatpush1.msra.mxu0 0.0
        %5216 = vmatprep.subr.mxu0 0.0
        %5217 = vmatpush1.msra.mxu0 0.0
        %5218 = vmatprep.subr.mxu0 0.0
        %5219 = vmatpush1.msra.mxu0 0.0
        %5220 = vmatprep.subr.mxu0 0.0
        %5221 = vmatpush1.msra.mxu0 0.0
        %5222 = vmatprep.subr.mxu0 0.0
        %5223 = vmatpush1.msra.mxu0 0.0
        %5224 = vmatprep.subr.mxu0 0.0
        %5225 = vmatpush1.msra.mxu0 0.0
        %5226 = vmatprep.subr.mxu0 0.0
        %5227 = vmatpush1.msra.mxu0 0.0
        %5228 = vmatprep.subr.mxu0 0.0
        %5229 = vmatpush1.msra.mxu0 0.0
        %5230 = vmatprep.subr.mxu0 0.0
        %5231 = vmatpush1.msra.mxu0 0.0
        %5232 = vmatprep.subr.mxu0 0.0
        %5233 = vmatpush1.msra.mxu0 0.0
        %5234 = vmatprep.subr.mxu0 0.0
        %5235 = vmatpush1.msra.mxu0 0.0
        %5236 = vmatprep.subr.mxu0 0.0
        %5237 = vmatpush1.msra.mxu0 0.0
        %5238 = vmatprep.subr.mxu0 0.0
        %5239 = vmatpush1.msra.mxu0 0.0
        %5240 = vmatprep.mubr.f32.mxu0 0.0
        %5241 = vmatmul.mubr.f32.gmra.mrb[0].mxu0 %v4851
        %v5242 = vpop.f32.mrb[0].mxu0
        %v5243 = vadd.f32 0.0, %v5242
        %v5244 = vpop.f32.mrb[0].mxu0
        %5245 = vmatprep.mubr.f32.mxu0 0.0
        %5246 = vmatmul.mubr.f32.gmra.mrb[0].mxu0 %v4852
        %v5247 = vpop.f32.mrb[0].mxu0
        %v5248 = vadd.f32 0.0, %v5247
        %v5249 = vpop.f32.mrb[0].mxu0
        %5250 = vmatprep.mubr.f32.mxu0 0.0
        %5251 = vmatmul.mubr.f32.gmra.mrb[0].mxu0 %v4853
        %v5252 = vpop.f32.mrb[0].mxu0
        %v5253 = vadd.f32 0.0, %v5252
        %v5254 = vpop.f32.mrb[0].mxu0
        %5255 = vmatprep.mubr.f32.mxu0 0.0
        %5256 = vmatmul.mubr.f32.gmra.mrb[0].mxu0 %v4854
        %v5257 = vpop.f32.mrb[0].mxu0
        %v5258 = vadd.f32 0.0, %v5257
        %v5259 = vpop.f32.mrb[0].mxu0
        %5260 = vmatprep.mubr.f32.mxu0 0.0
        %5261 = vmatmul.mubr.f32.gmra.mrb[0].mxu0 %v4855
        %v5262 = vpop.f32.mrb[0].mxu0
        %v5263 = vadd.f32 0.0, %v5262
        %v5264 = vpop.f32.mrb[0].mxu0
        %5265 = vmatprep.mubr.f32.mxu0 0.0
        %5266 = vmatmul.mubr.f32.gmra.mrb[0].mxu0 %v4856
        %v5267 = vpop.f32.mrb[0].mxu0
        %v5268 = vadd.f32 0.0, %v5267
        %v5269 = vpop.f32.mrb[0].mxu0
        %5270 = vmatprep.mubr.f32.mxu0 0.0
        %5271 = vmatmul.mubr.f32.gmra.mrb[0].mxu0 %v4857
        %v5272 = vpop.f32.mrb[0].mxu0
        %v5273 = vadd.f32 0.0, %v5272
        %v5274 = vpop.f32.mrb[0].mxu0
        %5275 = vmatprep.mubr.f32.mxu0 0.0
        %5276 = vmatmul.mubr.f32.gmra.mrb[0].mxu0 %v4858
        %v5277 = vpop.f32.mrb[0].mxu0
        %v5278 = vadd.f32 0.0, %v5277
        %v5279 = vpop.f32.mrb[0].mxu0
        %5280 = vmatprep.mubr.f32.mxu0 0.0
        %5281 = vmatmul.mubr.f32.gmra.mrb[0].mxu0 %v4859
        %v5282 = vpop.f32.mrb[0].mxu0
        %v5283 = vadd.f32 0.0, %v5282
        %v5284 = vpop.f32.mrb[0].mxu0
        %5285 = vmatprep.mubr.f32.mxu0 0.0
        %5286 = vmatmul.mubr.f32.gmra.mrb[0].mxu0 %v4860
        %v5287 = vpop.f32.mrb[0].mxu0
        %v5288 = vadd.f32 0.0, %v5287
        %v5289 = vpop.f32.mrb[0].mxu0
        %5290 = vmatprep.mubr.f32.mxu0 0.0
        %5291 = vmatmul.mubr.f32.gmra.mrb[0].mxu0 %v4861
        %v5292 = vpop.f32.mrb[0].mxu0
        %v5293 = vadd.f32 0.0, %v5292
        %v5294 = vpop.f32.mrb[0].mxu0
        %5295 = vmatprep.mubr.f32.mxu0 0.0
        %5296 = vmatmul.mubr.f32.gmra.mrb[0].mxu0 %v4862
        %v5297 = vpop.f32.mrb[0].mxu0
        %v5298 = vadd.f32 0.0, %v5297
        %v5299 = vpop.f32.mrb[0].mxu0
        %5300 = vmatprep.mubr.f32.mxu0 0.0
        %5301 = vmatmul.mubr.f32.gmra.mrb[0].mxu0 %v4863
        %v5302 = vpop.f32.mrb[0].mxu0
        %v5303 = vadd.f32 0.0, %v5302
        %v5304 = vpop.f32.mrb[0].mxu0
        %5305 = vmatprep.mubr.f32.mxu0 0.0
        %5306 = vmatmul.mubr.f32.gmra.mrb[0].mxu0 %v4864
        %v5307 = vpop.f32.mrb[0].mxu0
        %v5308 = vadd.f32 0.0, %v5307
        %v5309 = vpop.f32.mrb[0].mxu0
        %5310 = vmatprep.mubr.f32.mxu0 0.0
        %5311 = vmatmul.mubr.f32.gmra.mrb[0].mxu0 %v4865
        %v5312 = vpop.f32.mrb[0].mxu0
        %v5313 = vadd.f32 0.0, %v5312
        %v5314 = vpop.f32.mrb[0].mxu0
        %5315 = vmatprep.mubr.f32.mxu0 0.0
        %5316 = vmatmul.mubr.f32.gmra.mrb[0].mxu0 %v4866
        %v5317 = vpop.f32.mrb[0].mxu0
        %v5318 = vadd.f32 0.0, %v5317
        %v5319 = vpop.f32.mrb[0].mxu0
        %5320 = vmatprep.mubr.f32.mxu0 0.0
        %5321 = vmatmul.mubr.f32.gmra.mrb[0].mxu0 %v4867
        %v5322 = vpop.f32.mrb[0].mxu0
        %v5323 = vadd.f32 0.0, %v5322
        %v5324 = vpop.f32.mrb[0].mxu0
        %5325 = vmatprep.mubr.f32.mxu0 0.0
        %5326 = vmatmul.mubr.f32.gmra.mrb[0].mxu0 %v4868
        %v5327 = vpop.f32.mrb[0].mxu0
        %v5328 = vadd.f32 0.0, %v5327
        %v5329 = vpop.f32.mrb[0].mxu0
        %5330 = vmatprep.mubr.f32.mxu0 0.0
        %5331 = vmatmul.mubr.f32.gmra.mrb[0].mxu0 %v4869
        %v5332 = vpop.f32.mrb[0].mxu0
        %v5333 = vadd.f32 0.0, %v5332
        %v5334 = vpop.f32.mrb[0].mxu0
        %5335 = vmatprep.mubr.f32.mxu0 0.0
        %5336 = vmatmul.mubr.f32.gmra.mrb[0].mxu0 %v4870
        %v5337 = vpop.f32.mrb[0].mxu0
        %v5338 = vadd.f32 0.0, %v5337
        %v5339 = vpop.f32.mrb[0].mxu0
        %5340 = vmatprep.mubr.f32.mxu0 0.0
        %5341 = vmatmul.mubr.f32.gmra.mrb[0].mxu0 %v4871
        %v5342 = vpop.f32.mrb[0].mxu0
        %v5343 = vadd.f32 0.0, %v5342
        %v5344 = vpop.f32.mrb[0].mxu0
        %5345 = vmatprep.mubr.f32.mxu0 0.0
        %5346 = vmatmul.mubr.f32.gmra.mrb[0].mxu0 %v4872
        %v5347 = vpop.f32.mrb[0].mxu0
        %v5348 = vadd.f32 0.0, %v5347
        %v5349 = vpop.f32.mrb[0].mxu0
        %5350 = vmatprep.mubr.f32.mxu0 0.0
        %5351 = vmatmul.mubr.f32.gmra.mrb[0].mxu0 %v4873
        %v5352 = vpop.f32.mrb[0].mxu0
        %v5353 = vadd.f32 0.0, %v5352
        %v5354 = vpop.f32.mrb[0].mxu0
        %5355 = vmatprep.mubr.f32.mxu0 0.0
        %5356 = vmatmul.mubr.f32.gmra.mrb[0].mxu0 %v4874
        %v5357 = vpop.f32.mrb[0].mxu0
        %v5358 = vadd.f32 0.0, %v5357
        %v5359 = vpop.f32.mrb[0].mxu0
        %5360 = vmatprep.mubr.f32.mxu0 0.0
        %5361 = vmatmul.mubr.f32.gmra.mrb[0].mxu0 %v4875
        %v5362 = vpop.f32.mrb[0].mxu0
        %v5363 = vadd.f32 0.0, %v5362
        %v5364 = vpop.f32.mrb[0].mxu0
        %5365 = vmatprep.mubr.f32.mxu0 0.0
        %5366 = vmatmul.mubr.f32.gmra.mrb[0].mxu0 %v4876
        %v5367 = vpop.f32.mrb[0].mxu0
        %v5368 = vadd.f32 0.0, %v5367
        %v5369 = vpop.f32.mrb[0].mxu0
        %5370 = vmatprep.mubr.f32.mxu0 0.0
        %5371 = vmatmul.mubr.f32.gmra.mrb[0].mxu0 %v4877
        %v5372 = vpop.f32.mrb[0].mxu0
        %v5373 = vadd.f32 0.0, %v5372
        %v5374 = vpop.f32.mrb[0].mxu0
        %5375 = vmatprep.mubr.f32.mxu0 0.0
        %5376 = vmatmul.mubr.f32.gmra.mrb[0].mxu0 %v4878
        %v5377 = vpop.f32.mrb[0].mxu0
        %v5378 = vadd.f32 0.0, %v5377
        %v5379 = vpop.f32.mrb[0].mxu0
        %5380 = vmatprep.mubr.f32.mxu0 0.0
        %5381 = vmatmul.mubr.f32.gmra.mrb[0].mxu0 %v4879
        %v5382 = vpop.f32.mrb[0].mxu0
        %v5383 = vadd.f32 0.0, %v5382
        %v5384 = vpop.f32.mrb[0].mxu0
        %5385 = vmatprep.mubr.f32.mxu0 0.0
        %5386 = vmatmul.mubr.f32.gmra.mrb[0].mxu0 %v4880
        %v5387 = vpop.f32.mrb[0].mxu0
        %v5388 = vadd.f32 0.0, %v5387
        %v5389 = vpop.f32.mrb[0].mxu0
        %5390 = vmatprep.mubr.f32.mxu0 0.0
        %5391 = vmatmul.mubr.f32.gmra.mrb[0].mxu0 %v4881
        %v5392 = vpop.f32.mrb[0].mxu0
        %v5393 = vadd.f32 0.0, %v5392
        %v5394 = vpop.f32.mrb[0].mxu0
        %5395 = vmatprep.mubr.f32.mxu0 0.0
        %5396 = vmatmul.mubr.f32.gmra.mrb[0].mxu0 %v4882
        %v5397 = vpop.f32.mrb[0].mxu0
        %v5398 = vadd.f32 0.0, %v5397
        %v5399 = vpop.f32.mrb[0].mxu0
        %5400 = vdwg.mxu0
        %v5401 = vadd.f32 %v5127, %v5243
        %v5402 = vadd.f32 %v5128, %v5248
        %v5403 = vadd.f32 %v5129, %v5253
        %v5404 = vadd.f32 %v5130, %v5258
        %v5405 = vadd.f32 %v5131, %v5263
        %v5406 = vadd.f32 %v5132, %v5268
        %v5407 = vadd.f32 %v5133, %v5273
        %v5408 = vadd.f32 %v5134, %v5278
        %v5409 = vadd.f32 %v5135, %v5283
        %v5410 = vadd.f32 %v5136, %v5288
        %v5411 = vadd.f32 %v5137, %v5293
        %v5412 = vadd.f32 %v5138, %v5298
        %v5413 = vadd.f32 %v5139, %v5303
        %v5414 = vadd.f32 %v5140, %v5308
        %v5415 = vadd.f32 %v5141, %v5313
        %v5416 = vadd.f32 %v5142, %v5318
        %v5417 = vadd.f32 %v5143, %v5323
        %v5418 = vadd.f32 %v5144, %v5328
        %v5419 = vadd.f32 %v5145, %v5333
        %v5420 = vadd.f32 %v5146, %v5338
        %v5421 = vadd.f32 %v5147, %v5343
        %v5422 = vadd.f32 %v5148, %v5348
        %v5423 = vadd.f32 %v5149, %v5353
        %v5424 = vadd.f32 %v5150, %v5358
        %v5425 = vadd.f32 %v5151, %v5363
        %v5426 = vadd.f32 %v5152, %v5368
        %v5427 = vadd.f32 %v5153, %v5373
        %v5428 = vadd.f32 %v5154, %v5378
        %v5429 = vadd.f32 %v5155, %v5383
        %v5430 = vadd.f32 %v5156, %v5388
        %v5431 = vadd.f32 %v5157, %v5393
        %v5432 = vadd.f32 %v5158, %v5398
        %s5433 = scalar_lea.vmem [#allocation8], 1024
        %v5434 = vld [vmem:[%s5433] sm:$0xff]
        %v5435 = vld [vmem:[%s5433 + $0x8] sm:$0xff]
        %v5436 = vld [vmem:[%s5433 + $0x10] sm:$0xff]
        %v5437 = vld [vmem:[%s5433 + $0x18] sm:$0xff]
        %v5438 = vld [vmem:[%s5433 + $0x20] sm:$0xff]
        %v5439 = vld [vmem:[%s5433 + $0x28] sm:$0xff]
        %v5440 = vld [vmem:[%s5433 + $0x30] sm:$0xff]
        %v5441 = vld [vmem:[%s5433 + $0x38] sm:$0xff]
        %v5442 = vld [vmem:[%s5433 + $0x40] sm:$0xff]
        %v5443 = vld [vmem:[%s5433 + $0x48] sm:$0xff]
        %v5444 = vld [vmem:[%s5433 + $0x50] sm:$0xff]
        %v5445 = vld [vmem:[%s5433 + $0x58] sm:$0xff]
        %v5446 = vld [vmem:[%s5433 + $0x60] sm:$0xff]
        %v5447 = vld [vmem:[%s5433 + $0x68] sm:$0xff]
        %v5448 = vld [vmem:[%s5433 + $0x70] sm:$0xff]
        %v5449 = vld [vmem:[%s5433 + $0x78] sm:$0xff]
        %5450 = vmatprep.subr.mxu0 0.0
        %5451 = vmatpush1.msra.mxu0 %v5434
        %5452 = vmatprep.subr.mxu0 0.0
        %5453 = vmatpush1.msra.mxu0 %v5435
        %5454 = vmatprep.subr.mxu0 0.0
        %5455 = vmatpush1.msra.mxu0 %v5436
        %5456 = vmatprep.subr.mxu0 0.0
        %5457 = vmatpush1.msra.mxu0 %v5437
        %5458 = vmatprep.subr.mxu0 0.0
        %5459 = vmatpush1.msra.mxu0 %v5438
        %5460 = vmatprep.subr.mxu0 0.0
        %5461 = vmatpush1.msra.mxu0 %v5439
        %5462 = vmatprep.subr.mxu0 0.0
        %5463 = vmatpush1.msra.mxu0 %v5440
        %5464 = vmatprep.subr.mxu0 0.0
        %5465 = vmatpush1.msra.mxu0 %v5441
        %5466 = vmatprep.subr.mxu0 0.0
        %5467 = vmatpush1.msra.mxu0 %v5442
        %5468 = vmatprep.subr.mxu0 0.0
        %5469 = vmatpush1.msra.mxu0 %v5443
        %5470 = vmatprep.subr.mxu0 0.0
        %5471 = vmatpush1.msra.mxu0 %v5444
        %5472 = vmatprep.subr.mxu0 0.0
        %5473 = vmatpush1.msra.mxu0 %v5445
        %5474 = vmatprep.subr.mxu0 0.0
        %5475 = vmatpush1.msra.mxu0 %v5446
        %5476 = vmatprep.subr.mxu0 0.0
        %5477 = vmatpush1.msra.mxu0 %v5447
        %5478 = vmatprep.subr.mxu0 0.0
        %5479 = vmatpush1.msra.mxu0 %v5448
        %5480 = vmatprep.subr.mxu0 0.0
        %5481 = vmatpush1.msra.mxu0 %v5449
        %5482 = vmatprep.subr.mxu0 0.0
        %5483 = vmatpush1.msra.mxu0 0.0
        %5484 = vmatprep.subr.mxu0 0.0
        %5485 = vmatpush1.msra.mxu0 0.0
        %5486 = vmatprep.subr.mxu0 0.0
        %5487 = vmatpush1.msra.mxu0 0.0
        %5488 = vmatprep.subr.mxu0 0.0
        %5489 = vmatpush1.msra.mxu0 0.0
        %5490 = vmatprep.subr.mxu0 0.0
        %5491 = vmatpush1.msra.mxu0 0.0
        %5492 = vmatprep.subr.mxu0 0.0
        %5493 = vmatpush1.msra.mxu0 0.0
        %5494 = vmatprep.subr.mxu0 0.0
        %5495 = vmatpush1.msra.mxu0 0.0
        %5496 = vmatprep.subr.mxu0 0.0
        %5497 = vmatpush1.msra.mxu0 0.0
        %5498 = vmatprep.subr.mxu0 0.0
        %5499 = vmatpush1.msra.mxu0 0.0
        %5500 = vmatprep.subr.mxu0 0.0
        %5501 = vmatpush1.msra.mxu0 0.0
        %5502 = vmatprep.subr.mxu0 0.0
        %5503 = vmatpush1.msra.mxu0 0.0
        %5504 = vmatprep.subr.mxu0 0.0
        %5505 = vmatpush1.msra.mxu0 0.0
        %5506 = vmatprep.subr.mxu0 0.0
        %5507 = vmatpush1.msra.mxu0 0.0
        %5508 = vmatprep.subr.mxu0 0.0
        %5509 = vmatpush1.msra.mxu0 0.0
        %5510 = vmatprep.subr.mxu0 0.0
        %5511 = vmatpush1.msra.mxu0 0.0
        %5512 = vmatprep.subr.mxu0 0.0
        %5513 = vmatpush1.msra.mxu0 0.0
        %5514 = vmatprep.mubr.f32.mxu0 0.0
        %5515 = vmatmul.mubr.f32.gmra.mrb[0].mxu0 %v4853
        %v5516 = vpop.f32.mrb[0].mxu0
        %v5517 = vadd.f32 0.0, %v5516
        %v5518 = vpop.f32.mrb[0].mxu0
        %5519 = vmatprep.mubr.f32.mxu0 0.0
        %5520 = vmatmul.mubr.f32.gmra.mrb[0].mxu0 %v4854
        %v5521 = vpop.f32.mrb[0].mxu0
        %v5522 = vadd.f32 0.0, %v5521
        %v5523 = vpop.f32.mrb[0].mxu0
        %5524 = vmatprep.mubr.f32.mxu0 0.0
        %5525 = vmatmul.mubr.f32.gmra.mrb[0].mxu0 %v4855
        %v5526 = vpop.f32.mrb[0].mxu0
        %v5527 = vadd.f32 0.0, %v5526
        %v5528 = vpop.f32.mrb[0].mxu0
        %5529 = vmatprep.mubr.f32.mxu0 0.0
        %5530 = vmatmul.mubr.f32.gmra.mrb[0].mxu0 %v4856
        %v5531 = vpop.f32.mrb[0].mxu0
        %v5532 = vadd.f32 0.0, %v5531
        %v5533 = vpop.f32.mrb[0].mxu0
        %5534 = vmatprep.mubr.f32.mxu0 0.0
        %5535 = vmatmul.mubr.f32.gmra.mrb[0].mxu0 %v4857
        %v5536 = vpop.f32.mrb[0].mxu0
        %v5537 = vadd.f32 0.0, %v5536
        %v5538 = vpop.f32.mrb[0].mxu0
        %5539 = vmatprep.mubr.f32.mxu0 0.0
        %5540 = vmatmul.mubr.f32.gmra.mrb[0].mxu0 %v4858
        %v5541 = vpop.f32.mrb[0].mxu0
        %v5542 = vadd.f32 0.0, %v5541
        %v5543 = vpop.f32.mrb[0].mxu0
        %5544 = vmatprep.mubr.f32.mxu0 0.0
        %5545 = vmatmul.mubr.f32.gmra.mrb[0].mxu0 %v4859
        %v5546 = vpop.f32.mrb[0].mxu0
        %v5547 = vadd.f32 0.0, %v5546
        %v5548 = vpop.f32.mrb[0].mxu0
        %5549 = vmatprep.mubr.f32.mxu0 0.0
        %5550 = vmatmul.mubr.f32.gmra.mrb[0].mxu0 %v4860
        %v5551 = vpop.f32.mrb[0].mxu0
        %v5552 = vadd.f32 0.0, %v5551
        %v5553 = vpop.f32.mrb[0].mxu0
        %5554 = vmatprep.mubr.f32.mxu0 0.0
        %5555 = vmatmul.mubr.f32.gmra.mrb[0].mxu0 %v4861
        %v5556 = vpop.f32.mrb[0].mxu0
        %v5557 = vadd.f32 0.0, %v5556
        %v5558 = vpop.f32.mrb[0].mxu0
        %5559 = vmatprep.mubr.f32.mxu0 0.0
        %5560 = vmatmul.mubr.f32.gmra.mrb[0].mxu0 %v4862
        %v5561 = vpop.f32.mrb[0].mxu0
        %v5562 = vadd.f32 0.0, %v5561
        %v5563 = vpop.f32.mrb[0].mxu0
        %5564 = vmatprep.mubr.f32.mxu0 0.0
        %5565 = vmatmul.mubr.f32.gmra.mrb[0].mxu0 %v4863
        %v5566 = vpop.f32.mrb[0].mxu0
        %v5567 = vadd.f32 0.0, %v5566
        %v5568 = vpop.f32.mrb[0].mxu0
        %5569 = vmatprep.mubr.f32.mxu0 0.0
        %5570 = vmatmul.mubr.f32.gmra.mrb[0].mxu0 %v4864
        %v5571 = vpop.f32.mrb[0].mxu0
        %v5572 = vadd.f32 0.0, %v5571
        %v5573 = vpop.f32.mrb[0].mxu0
        %5574 = vmatprep.mubr.f32.mxu0 0.0
        %5575 = vmatmul.mubr.f32.gmra.mrb[0].mxu0 %v4865
        %v5576 = vpop.f32.mrb[0].mxu0
        %v5577 = vadd.f32 0.0, %v5576
        %v5578 = vpop.f32.mrb[0].mxu0
        %5579 = vmatprep.mubr.f32.mxu0 0.0
        %5580 = vmatmul.mubr.f32.gmra.mrb[0].mxu0 %v4866
        %v5581 = vpop.f32.mrb[0].mxu0
        %v5582 = vadd.f32 0.0, %v5581
        %v5583 = vpop.f32.mrb[0].mxu0
        %5584 = vmatprep.mubr.f32.mxu0 0.0
        %5585 = vmatmul.mubr.f32.gmra.mrb[0].mxu0 %v4867
        %v5586 = vpop.f32.mrb[0].mxu0
        %v5587 = vadd.f32 0.0, %v5586
        %v5588 = vpop.f32.mrb[0].mxu0
        %5589 = vmatprep.mubr.f32.mxu0 0.0
        %5590 = vmatmul.mubr.f32.gmra.mrb[0].mxu0 %v4868
        %v5591 = vpop.f32.mrb[0].mxu0
        %v5592 = vadd.f32 0.0, %v5591
        %v5593 = vpop.f32.mrb[0].mxu0
        %5594 = vmatprep.mubr.f32.mxu0 0.0
        %5595 = vmatmul.mubr.f32.gmra.mrb[0].mxu0 %v4869
        %v5596 = vpop.f32.mrb[0].mxu0
        %v5597 = vadd.f32 0.0, %v5596
        %v5598 = vpop.f32.mrb[0].mxu0
        %5599 = vmatprep.mubr.f32.mxu0 0.0
        %5600 = vmatmul.mubr.f32.gmra.mrb[0].mxu0 %v4870
        %v5601 = vpop.f32.mrb[0].mxu0
        %v5602 = vadd.f32 0.0, %v5601
        %v5603 = vpop.f32.mrb[0].mxu0
        %5604 = vmatprep.mubr.f32.mxu0 0.0
        %5605 = vmatmul.mubr.f32.gmra.mrb[0].mxu0 %v4871
        %v5606 = vpop.f32.mrb[0].mxu0
        %v5607 = vadd.f32 0.0, %v5606
        %v5608 = vpop.f32.mrb[0].mxu0
        %5609 = vmatprep.mubr.f32.mxu0 0.0
        %5610 = vmatmul.mubr.f32.gmra.mrb[0].mxu0 %v4872
        %v5611 = vpop.f32.mrb[0].mxu0
        %v5612 = vadd.f32 0.0, %v5611
        %v5613 = vpop.f32.mrb[0].mxu0
        %5614 = vmatprep.mubr.f32.mxu0 0.0
        %5615 = vmatmul.mubr.f32.gmra.mrb[0].mxu0 %v4873
        %v5616 = vpop.f32.mrb[0].mxu0
        %v5617 = vadd.f32 0.0, %v5616
        %v5618 = vpop.f32.mrb[0].mxu0
        %5619 = vmatprep.mubr.f32.mxu0 0.0
        %5620 = vmatmul.mubr.f32.gmra.mrb[0].mxu0 %v4874
        %v5621 = vpop.f32.mrb[0].mxu0
        %v5622 = vadd.f32 0.0, %v5621
        %v5623 = vpop.f32.mrb[0].mxu0
        %5624 = vmatprep.mubr.f32.mxu0 0.0
        %5625 = vmatmul.mubr.f32.gmra.mrb[0].mxu0 %v4875
        %v5626 = vpop.f32.mrb[0].mxu0
        %v5627 = vadd.f32 0.0, %v5626
        %v5628 = vpop.f32.mrb[0].mxu0
        %5629 = vmatprep.mubr.f32.mxu0 0.0
        %5630 = vmatmul.mubr.f32.gmra.mrb[0].mxu0 %v4876
        %v5631 = vpop.f32.mrb[0].mxu0
        %v5632 = vadd.f32 0.0, %v5631
        %v5633 = vpop.f32.mrb[0].mxu0
        %5634 = vmatprep.mubr.f32.mxu0 0.0
        %5635 = vmatmul.mubr.f32.gmra.mrb[0].mxu0 %v4877
        %v5636 = vpop.f32.mrb[0].mxu0
        %v5637 = vadd.f32 0.0, %v5636
        %v5638 = vpop.f32.mrb[0].mxu0
        %5639 = vmatprep.mubr.f32.mxu0 0.0
        %5640 = vmatmul.mubr.f32.gmra.mrb[0].mxu0 %v4878
        %v5641 = vpop.f32.mrb[0].mxu0
        %v5642 = vadd.f32 0.0, %v5641
        %v5643 = vpop.f32.mrb[0].mxu0
        %5644 = vmatprep.mubr.f32.mxu0 0.0
        %5645 = vmatmul.mubr.f32.gmra.mrb[0].mxu0 %v4879
        %v5646 = vpop.f32.mrb[0].mxu0
        %v5647 = vadd.f32 0.0, %v5646
        %v5648 = vpop.f32.mrb[0].mxu0
        %5649 = vmatprep.mubr.f32.mxu0 0.0
        %5650 = vmatmul.mubr.f32.gmra.mrb[0].mxu0 %v4880
        %v5651 = vpop.f32.mrb[0].mxu0
        %v5652 = vadd.f32 0.0, %v5651
        %v5653 = vpop.f32.mrb[0].mxu0
        %5654 = vmatprep.mubr.f32.mxu0 0.0
        %5655 = vmatmul.mubr.f32.gmra.mrb[0].mxu0 %v4881
        %v5656 = vpop.f32.mrb[0].mxu0
        %v5657 = vadd.f32 0.0, %v5656
        %v5658 = vpop.f32.mrb[0].mxu0
        %5659 = vmatprep.mubr.f32.mxu0 0.0
        %5660 = vmatmul.mubr.f32.gmra.mrb[0].mxu0 %v4882
        %v5661 = vpop.f32.mrb[0].mxu0
        %v5662 = vadd.f32 0.0, %v5661
        %v5663 = vpop.f32.mrb[0].mxu0
        %5664 = vmatprep.mubr.f32.mxu0 0.0
        %5665 = vmatmul.mubr.f32.gmra.mrb[0].mxu0 %v4883
        %v5666 = vpop.f32.mrb[0].mxu0
        %v5667 = vadd.f32 0.0, %v5666
        %v5668 = vpop.f32.mrb[0].mxu0
        %5669 = vmatprep.mubr.f32.mxu0 0.0
        %5670 = vmatmul.mubr.f32.gmra.mrb[0].mxu0 %v4884
        %v5671 = vpop.f32.mrb[0].mxu0
        %v5672 = vadd.f32 0.0, %v5671
        %v5673 = vpop.f32.mrb[0].mxu0
        %5674 = vdwg.mxu0
        %v5675 = vadd.f32 %v5401, %v5517
        %v5676 = vadd.f32 %v5402, %v5522
        %v5677 = vadd.f32 %v5403, %v5527
        %v5678 = vadd.f32 %v5404, %v5532
        %v5679 = vadd.f32 %v5405, %v5537
        %v5680 = vadd.f32 %v5406, %v5542
        %v5681 = vadd.f32 %v5407, %v5547
        %v5682 = vadd.f32 %v5408, %v5552
        %v5683 = vadd.f32 %v5409, %v5557
        %v5684 = vadd.f32 %v5410, %v5562
        %v5685 = vadd.f32 %v5411, %v5567
        %v5686 = vadd.f32 %v5412, %v5572
        %v5687 = vadd.f32 %v5413, %v5577
        %v5688 = vadd.f32 %v5414, %v5582
        %v5689 = vadd.f32 %v5415, %v5587
        %v5690 = vadd.f32 %v5416, %v5592
        %v5691 = vadd.f32 %v5417, %v5597
        %v5692 = vadd.f32 %v5418, %v5602
        %v5693 = vadd.f32 %v5419, %v5607
        %v5694 = vadd.f32 %v5420, %v5612
        %v5695 = vadd.f32 %v5421, %v5617
        %v5696 = vadd.f32 %v5422, %v5622
        %v5697 = vadd.f32 %v5423, %v5627
        %v5698 = vadd.f32 %v5424, %v5632
        %v5699 = vadd.f32 %v5425, %v5637
        %v5700 = vadd.f32 %v5426, %v5642
        %v5701 = vadd.f32 %v5427, %v5647
        %v5702 = vadd.f32 %v5428, %v5652
        %v5703 = vadd.f32 %v5429, %v5657
        %v5704 = vadd.f32 %v5430, %v5662
        %v5705 = vadd.f32 %v5431, %v5667
        %v5706 = vadd.f32 %v5432, %v5672
        %v5707 = vadd.f32 %v5675, %v5676
        %v5708 = vadd.f32 %v5707, %v5677
        %v5709 = vadd.f32 %v5708, %v5678
        %v5710 = vadd.f32 %v5709, %v5679
        %v5711 = vadd.f32 %v5710, %v5680
        %v5712 = vadd.f32 %v5711, %v5681
        %v5713 = vadd.f32 %v5712, %v5682
        %v5714 = vadd.f32 %v5713, %v5683
        %v5715 = vadd.f32 %v5714, %v5684
        %v5716 = vadd.f32 %v5715, %v5685
        %v5717 = vadd.f32 %v5716, %v5686
        %v5718 = vadd.f32 %v5717, %v5687
        %v5719 = vadd.f32 %v5718, %v5688
        %v5720 = vadd.f32 %v5719, %v5689
        %v5721 = vadd.f32 %v5720, %v5690
        %v5722 = vadd.f32 %v5721, %v5691
        %v5723 = vadd.f32 %v5722, %v5692
        %v5724 = vadd.f32 %v5723, %v5693
        %v5725 = vadd.f32 %v5724, %v5694
        %v5726 = vadd.f32 %v5725, %v5695
        %v5727 = vadd.f32 %v5726, %v5696
        %v5728 = vadd.f32 %v5727, %v5697
        %v5729 = vadd.f32 %v5728, %v5698
        %v5730 = vadd.f32 %v5729, %v5699
        %v5731 = vadd.f32 %v5730, %v5700
        %v5732 = vadd.f32 %v5731, %v5701
        %v5733 = vadd.f32 %v5732, %v5702
        %v5734 = vadd.f32 %v5733, %v5703
        %v5735 = vadd.f32 %v5734, %v5704
        %v5736 = vadd.f32 %v5735, %v5705
        %v5737 = vadd.f32 %v5736, %v5706
        %v5738 = vrot.slane %v5737, 4
        %v5739 = vadd.f32 %v5737, %v5738
        %v5740 = vrot.slane %v5739, 2
        %v5741 = vadd.f32 %v5739, %v5740
        %v5742 = vrot.slane %v5741, 1
        %v5743 = vadd.f32 %v5741, %v5742
        %v5744 = vmul.f32 %v5675, %v5675
        %v5745 = vmul.f32 %v5676, %v5676
        %v5746 = vmul.f32 %v5677, %v5677
        %v5747 = vmul.f32 %v5678, %v5678
        %v5748 = vmul.f32 %v5679, %v5679
        %v5749 = vmul.f32 %v5680, %v5680
        %v5750 = vmul.f32 %v5681, %v5681
        %v5751 = vmul.f32 %v5682, %v5682
        %v5752 = vmul.f32 %v5683, %v5683
        %v5753 = vmul.f32 %v5684, %v5684
        %v5754 = vmul.f32 %v5685, %v5685
        %v5755 = vmul.f32 %v5686, %v5686
        %v5756 = vmul.f32 %v5687, %v5687
        %v5757 = vmul.f32 %v5688, %v5688
        %v5758 = vmul.f32 %v5689, %v5689
        %v5759 = vmul.f32 %v5690, %v5690
        %v5760 = vmul.f32 %v5691, %v5691
        %v5761 = vmul.f32 %v5692, %v5692
        %v5762 = vmul.f32 %v5693, %v5693
        %v5763 = vmul.f32 %v5694, %v5694
        %v5764 = vmul.f32 %v5695, %v5695
        %v5765 = vmul.f32 %v5696, %v5696
        %v5766 = vmul.f32 %v5697, %v5697
        %v5767 = vmul.f32 %v5698, %v5698
        %v5768 = vmul.f32 %v5699, %v5699
        %v5769 = vmul.f32 %v5700, %v5700
        %v5770 = vmul.f32 %v5701, %v5701
        %v5771 = vmul.f32 %v5702, %v5702
        %v5772 = vmul.f32 %v5703, %v5703
        %v5773 = vmul.f32 %v5704, %v5704
        %v5774 = vmul.f32 %v5705, %v5705
        %v5775 = vmul.f32 %v5706, %v5706
        %v5776 = vadd.f32 %v5744, %v5745
        %v5777 = vadd.f32 %v5776, %v5746
        %v5778 = vadd.f32 %v5777, %v5747
        %v5779 = vadd.f32 %v5778, %v5748
        %v5780 = vadd.f32 %v5779, %v5749
        %v5781 = vadd.f32 %v5780, %v5750
        %v5782 = vadd.f32 %v5781, %v5751
        %v5783 = vadd.f32 %v5782, %v5752
        %v5784 = vadd.f32 %v5783, %v5753
        %v5785 = vadd.f32 %v5784, %v5754
        %v5786 = vadd.f32 %v5785, %v5755
        %v5787 = vadd.f32 %v5786, %v5756
        %v5788 = vadd.f32 %v5787, %v5757
        %v5789 = vadd.f32 %v5788, %v5758
        %v5790 = vadd.f32 %v5789, %v5759
        %v5791 = vadd.f32 %v5790, %v5760
        %v5792 = vadd.f32 %v5791, %v5761
        %v5793 = vadd.f32 %v5792, %v5762
        %v5794 = vadd.f32 %v5793, %v5763
        %v5795 = vadd.f32 %v5794, %v5764
        %v5796 = vadd.f32 %v5795, %v5765
        %v5797 = vadd.f32 %v5796, %v5766
        %v5798 = vadd.f32 %v5797, %v5767
        %v5799 = vadd.f32 %v5798, %v5768
        %v5800 = vadd.f32 %v5799, %v5769
        %v5801 = vadd.f32 %v5800, %v5770
        %v5802 = vadd.f32 %v5801, %v5771
        %v5803 = vadd.f32 %v5802, %v5772
        %v5804 = vadd.f32 %v5803, %v5773
        %v5805 = vadd.f32 %v5804, %v5774
        %v5806 = vadd.f32 %v5805, %v5775
        %v5807 = vrot.slane %v5806, 4
        %v5808 = vadd.f32 %v5806, %v5807
        %v5809 = vrot.slane %v5808, 2
        %v5810 = vadd.f32 %v5808, %v5809
        %v5811 = vrot.slane %v5810, 1
        %v5812 = vadd.f32 %v5810, %v5811
        %v5813 = vmul.f32 %v5743, 0.00390625
        %v5814 = vmul.f32 %v5812, 0.00390625
        %v5815 = vmul.f32 %v5813, %v5813
        %v5816 = vsub.f32 %v5814, %v5815
        %v5817 = vmax.f32 %v5816, 0.0
        %v5818 = vadd.f32 %v5817, 1e-05
        %v5819 = vrsqrt.pop %v5818
        %v5820 = vsub.f32 0.0, %v5813
        %v5821 = vmul.f32 %v5820, %v5819
        %v5822 = vmul.f32 %v5675, %v5819
        %v5823 = vmul.f32 %v5676, %v5819
        %v5824 = vmul.f32 %v5677, %v5819
        %v5825 = vmul.f32 %v5678, %v5819
        %v5826 = vmul.f32 %v5679, %v5819
        %v5827 = vmul.f32 %v5680, %v5819
        %v5828 = vmul.f32 %v5681, %v5819
        %v5829 = vmul.f32 %v5682, %v5819
        %v5830 = vmul.f32 %v5683, %v5819
        %v5831 = vmul.f32 %v5684, %v5819
        %v5832 = vmul.f32 %v5685, %v5819
        %v5833 = vmul.f32 %v5686, %v5819
        %v5834 = vmul.f32 %v5687, %v5819
        %v5835 = vmul.f32 %v5688, %v5819
        %v5836 = vmul.f32 %v5689, %v5819
        %v5837 = vmul.f32 %v5690, %v5819
        %v5838 = vmul.f32 %v5691, %v5819
        %v5839 = vmul.f32 %v5692, %v5819
        %v5840 = vmul.f32 %v5693, %v5819
        %v5841 = vmul.f32 %v5694, %v5819
        %v5842 = vmul.f32 %v5695, %v5819
        %v5843 = vmul.f32 %v5696, %v5819
        %v5844 = vmul.f32 %v5697, %v5819
        %v5845 = vmul.f32 %v5698, %v5819
        %v5846 = vmul.f32 %v5699, %v5819
        %v5847 = vmul.f32 %v5700, %v5819
        %v5848 = vmul.f32 %v5701, %v5819
        %v5849 = vmul.f32 %v5702, %v5819
        %v5850 = vmul.f32 %v5703, %v5819
        %v5851 = vmul.f32 %v5704, %v5819
        %v5852 = vmul.f32 %v5705, %v5819
        %v5853 = vmul.f32 %v5706, %v5819
        %v5854 = vadd.f32 %v5822, %v5821
        %v5855 = vadd.f32 %v5823, %v5821
        %v5856 = vadd.f32 %v5824, %v5821
        %v5857 = vadd.f32 %v5825, %v5821
        %v5858 = vadd.f32 %v5826, %v5821
        %v5859 = vadd.f32 %v5827, %v5821
        %v5860 = vadd.f32 %v5828, %v5821
        %v5861 = vadd.f32 %v5829, %v5821
        %v5862 = vadd.f32 %v5830, %v5821
        %v5863 = vadd.f32 %v5831, %v5821
        %v5864 = vadd.f32 %v5832, %v5821
        %v5865 = vadd.f32 %v5833, %v5821
        %v5866 = vadd.f32 %v5834, %v5821
        %v5867 = vadd.f32 %v5835, %v5821
        %v5868 = vadd.f32 %v5836, %v5821
        %v5869 = vadd.f32 %v5837, %v5821
        %v5870 = vadd.f32 %v5838, %v5821
        %v5871 = vadd.f32 %v5839, %v5821
        %v5872 = vadd.f32 %v5840, %v5821
        %v5873 = vadd.f32 %v5841, %v5821
        %v5874 = vadd.f32 %v5842, %v5821
        %v5875 = vadd.f32 %v5843, %v5821
        %v5876 = vadd.f32 %v5844, %v5821
        %v5877 = vadd.f32 %v5845, %v5821
        %v5878 = vadd.f32 %v5846, %v5821
        %v5879 = vadd.f32 %v5847, %v5821
        %v5880 = vadd.f32 %v5848, %v5821
        %v5881 = vadd.f32 %v5849, %v5821
        %v5882 = vadd.f32 %v5850, %v5821
        %v5883 = vadd.f32 %v5851, %v5821
        %v5884 = vadd.f32 %v5852, %v5821
        %v5885 = vadd.f32 %v5853, %v5821
        %v5886 = vadd.f32 %v218, %v5854
        %v5887 = vadd.f32 %v219, %v5855
        %v5888 = vadd.f32 %v220, %v5856
        %v5889 = vadd.f32 %v221, %v5857
        %v5890 = vadd.f32 %v222, %v5858
        %v5891 = vadd.f32 %v223, %v5859
        %v5892 = vadd.f32 %v224, %v5860
        %v5893 = vadd.f32 %v225, %v5861
        %v5894 = vadd.f32 %v226, %v5862
        %v5895 = vadd.f32 %v227, %v5863
        %v5896 = vadd.f32 %v228, %v5864
        %v5897 = vadd.f32 %v229, %v5865
        %v5898 = vadd.f32 %v230, %v5866
        %v5899 = vadd.f32 %v231, %v5867
        %v5900 = vadd.f32 %v232, %v5868
        %v5901 = vadd.f32 %v233, %v5869
        %v5902 = vadd.f32 %v234, %v5870
        %v5903 = vadd.f32 %v235, %v5871
        %v5904 = vadd.f32 %v236, %v5872
        %v5905 = vadd.f32 %v237, %v5873
        %v5906 = vadd.f32 %v238, %v5874
        %v5907 = vadd.f32 %v239, %v5875
        %v5908 = vadd.f32 %v240, %v5876
        %v5909 = vadd.f32 %v241, %v5877
        %v5910 = vadd.f32 %v242, %v5878
        %v5911 = vadd.f32 %v243, %v5879
        %v5912 = vadd.f32 %v244, %v5880
        %v5913 = vadd.f32 %v245, %v5881
        %v5914 = vadd.f32 %v246, %v5882
        %v5915 = vadd.f32 %v247, %v5883
        %v5916 = vadd.f32 %v248, %v5884
        %v5917 = vadd.f32 %v249, %v5885
        %5918 = vst [vmem:[%s217] sm:$0xff] %v5886
        %5919 = vst [vmem:[%s217 + $0x8] sm:$0xff] %v5887
        %5920 = vst [vmem:[%s217 + $0x10] sm:$0xff] %v5888
        %5921 = vst [vmem:[%s217 + $0x18] sm:$0xff] %v5889
        %5922 = vst [vmem:[%s217 + $0x20] sm:$0xff] %v5890
        %5923 = vst [vmem:[%s217 + $0x28] sm:$0xff] %v5891
        %5924 = vst [vmem:[%s217 + $0x30] sm:$0xff] %v5892
        %5925 = vst [vmem:[%s217 + $0x38] sm:$0xff] %v5893
        %5926 = vst [vmem:[%s217 + $0x40] sm:$0xff] %v5894
        %5927 = vst [vmem:[%s217 + $0x48] sm:$0xff] %v5895
        %5928 = vst [vmem:[%s217 + $0x50] sm:$0xff] %v5896
        %5929 = vst [vmem:[%s217 + $0x58] sm:$0xff] %v5897
        %5930 = vst [vmem:[%s217 + $0x60] sm:$0xff] %v5898
        %5931 = vst [vmem:[%s217 + $0x68] sm:$0xff] %v5899
        %5932 = vst [vmem:[%s217 + $0x70] sm:$0xff] %v5900
        %5933 = vst [vmem:[%s217 + $0x78] sm:$0xff] %v5901
        %5934 = vst [vmem:[%s217 + $0x80] sm:$0xff] %v5902
        %5935 = vst [vmem:[%s217 + $0x88] sm:$0xff] %v5903
        %5936 = vst [vmem:[%s217 + $0x90] sm:$0xff] %v5904
        %5937 = vst [vmem:[%s217 + $0x98] sm:$0xff] %v5905
        %5938 = vst [vmem:[%s217 + $0xa0] sm:$0xff] %v5906
        %5939 = vst [vmem:[%s217 + $0xa8] sm:$0xff] %v5907
        %5940 = vst [vmem:[%s217 + $0xb0] sm:$0xff] %v5908
        %5941 = vst [vmem:[%s217 + $0xb8] sm:$0xff] %v5909
        %5942 = vst [vmem:[%s217 + $0xc0] sm:$0xff] %v5910
        %5943 = vst [vmem:[%s217 + $0xc8] sm:$0xff] %v5911
        %5944 = vst [vmem:[%s217 + $0xd0] sm:$0xff] %v5912
        %5945 = vst [vmem:[%s217 + $0xd8] sm:$0xff] %v5913
        %5946 = vst [vmem:[%s217 + $0xe0] sm:$0xff] %v5914
        %5947 = vst [vmem:[%s217 + $0xe8] sm:$0xff] %v5915
        %5948 = vst [vmem:[%s217 + $0xf0] sm:$0xff] %v5916
        %5949 = vst [vmem:[%s217 + $0xf8] sm:$0xff] %v5917
        %s5950 = sand.u32 %s97, 1
        %s5951 = scalar_lea.sflag [#allocation5], %s5950
        %s5952 = sand.u32 %s97, 1
        %s5953 = smul.addr %s5952, 256
        %s5954 = scalar_lea.vmem [#allocation9], %s5953
        // Predicated region
        $region45: #{tpu_custom_call.1} parent=31 // pred_check
          %p5955 = pneg %p107
        $region46: #{tpu_custom_call.1} parent=31 // pred_check_branch
          %5957 = sbr.rel (%p5955) target = $region48
        $region47: #{tpu_custom_call.1} parent=31 // pred_region
          %s5959 = ssub.s32 4096, 4096
          %5960 = vsyncadd %s5951, %s5959
          %s5961 = smul.addr %s21, 32
          %s5962 = smul.addr %s5961, 128
          %s5963 = scalar_lea.hbm %s3, %s5962
          %s5964 = sshll.u32 %s5954, 4
          %s5965 = int_to_ptr.vmem [resolvable:$true] %s5964
          %5970 = dma.vmem_to_hbm [thread:$0]  %s5965, 4096, %s5963, %s5951, 128, 128, 8
        $region48: #{tpu_custom_call.1} parent=31 // pred_fallthru
          _
      $region32: #{tpu_custom_call.1} parent=5 // pred_fallthru
        _
      %p5971 = scmp.le.s32.totalorder 2, %s16
      // Predicated region
      $region49: #{tpu_custom_call.1} parent=5 // pred_check
        %p5972 = pneg %p5971
      $region50: #{tpu_custom_call.1} parent=5 // pred_check_branch
        %5974 = sbr.rel (%p5972) target = $region52
      $region51: #{tpu_custom_call.1} parent=5 // pred_region
        %s5975 = ssub.s32 %s16, 2
        // Predicated region
        $region53: #{tpu_custom_call.1} parent=51 // pred_check
          %p5976 = pneg %p113
        $region54: #{tpu_custom_call.1} parent=51 // pred_check_branch
          %5978 = sbr.rel (%p5976) target = $region56
        $region55: #{tpu_custom_call.1} parent=51 // pred_region
          %s5979 = sand.u32 %s98, 1
          %s5980 = scalar_lea.sflag [#allocation5], %s5979
          %s5981 = sand.u32 %s98, 1
          %s5982 = smul.addr %s5981, 256
          %s5983 = scalar_lea.vmem [#allocation9], %s5982
          %5984 = dma.done %s5980, 4096
        $region56: #{tpu_custom_call.1} parent=51 // pred_fallthru
          _
      $region52: #{tpu_custom_call.1} parent=5 // pred_fallthru
        _
    $region6: #{tpu_custom_call.1} parent=1 // loop_footer
      %s20 = sadd.s32 1, %s16
    $region7: #{tpu_custom_call.1} parent=1 // loop_footer_branch
      %15 = sbr.rel target = $region3
    $region8: #{tpu_custom_call.1} parent=1 // loop_exit
      _
    %5985 = vsyncpa [#allocation4], 1
    %s5986 = scalar_lea.sflag [#allocation4], 1
    %5987 = vsyncpa %s5986, 1
    %5988 = vsyncpa [#allocation7], 1
    %5989 = vsyncpa [#allocation5], 1
    %s5990 = scalar_lea.sflag [#allocation5], 1
    %5991 = vsyncpa %s5990, 1

</llo_original>
